<compile_context>
chip_gen: v6e
topology: v6e:2x2x1
jax: 0.10.0
libtpu: 0.0.40
codegen_flags: <defaults>
</compile_context>

<pallas_src>
import jax
import jax.numpy as jnp
from jax.experimental import pallas as pl
from jax.experimental.pallas import tpu as pltpu


def _round_up(x, m):
    return (x + m - 1) // m * m


# ---------------------------------------------------------------------------
# Parallel fused matmul+bias kernel: out = x @ w + b   (bf16 MXU, f32 acc)
# Reused for the hoisted input projection (x -> pre-gates) and the vocab Linear.
# ---------------------------------------------------------------------------
def _linear_bias_kernel(x_ref, w_ref, b_ref, o_ref):
    # Cast activations to bf16 *inside* the kernel (free VPU cast; avoids an
    # extra HBM round trip for a wrapper-side cast).  Weights arrive in bf16.
    acc = jnp.dot(x_ref[...].astype(jnp.bfloat16), w_ref[...],
                  preferred_element_type=jnp.float32)
    o_ref[...] = (acc + b_ref[...]).astype(o_ref.dtype)


def linear_pallas(x, w, b, *, out_dtype=jnp.float32, tm_target=512, tn_target=512):
    """x: (M, K) @ w: (K, N) + b: (1, N) -> (M, N) in `out_dtype`.

    M and N are padded up to tile multiples (never falls back to putting the
    whole weight in one VMEM block).  Grid order is (row_blocks, col_blocks):
    the x block is resident across the inner col loop, and large `tm` keeps the
    number of full weight re-streams (M/tm) small.  Both axes are 'parallel'.
    """
    M, K = x.shape
    Kw, N = w.shape
    assert K == Kw and b.shape[-1] == N

    # Pad output lanes to a 128 multiple, then to a tile multiple.
    Np = _round_up(N, 128)
    tn = min(tn_target, Np)
    Np = _round_up(Np, tn)
    b = b.reshape(1, N).astype(jnp.float32)
    if Np != N:
        w = jnp.pad(w, ((0, 0), (0, Np - N)))
        b = jnp.pad(b, ((0, 0), (0, Np - N)))

    # Pad rows to a 16-sublane multiple (safe for f32 and bf16), then to tm.
    Mp = _round_up(M, 16)
    tm = min(tm_target, Mp)
    Mp = _round_up(Mp, tm)
    if Mp != M:
        x = jnp.pad(x, ((0, Mp - M), (0, 0)))

    out = pl.pallas_call(
        _linear_bias_kernel,
        out_shape=jax.ShapeDtypeStruct((Mp, Np), out_dtype),
        grid_spec=pltpu.PrefetchScalarGridSpec(
            num_scalar_prefetch=0,
            grid=(Mp // tm, Np // tn),
            in_specs=[
                pl.BlockSpec((tm, K), lambda i, j: (i, 0)),
                pl.BlockSpec((K, tn), lambda i, j: (0, j)),
                pl.BlockSpec((1, tn), lambda i, j: (0, j)),
            ],
            out_specs=pl.BlockSpec((tm, tn), lambda i, j: (i, j)),
        ),
        compiler_params=pltpu.CompilerParams(
            dimension_semantics=("parallel", "parallel"),
            vmem_limit_bytes=64 * 1024 * 1024,
        ),
    )(x, w, b)
    return out[:M, :N]


# ---------------------------------------------------------------------------
# Sequential LSTM recurrence kernel (time-chunked, batch-major, projections
# hoisted out).  Only h_{t-1} @ W_hh + gate math lives inside the loop.
# ---------------------------------------------------------------------------
def _lstm_chunk_kernel(pg_ref, w_hh_ref, h_out_ref, h_scr, c_scr):
    """One grid step = `Tc` LSTM time steps for one batch block.

    pg_ref:    (Bc, Tc, 4H) bf16  precomputed x@W_ih + b_ih + b_hh
    w_hh_ref:  (H, 4H)      bf16  resident in VMEM (constant block index)
    h_out_ref: (Bc, Tc, H)  bf16  hidden states emitted for this chunk
    h_scr/c_scr: (Bc, H)    f32   recurrent state, persists across time chunks
    """
    @pl.when(pl.program_id(1) == 0)  # start of this batch block's time loop
    def _():
        h_scr[...] = jnp.zeros_like(h_scr)
        c_scr[...] = jnp.zeros_like(c_scr)

    H = h_scr.shape[-1]
    Tc = pg_ref.shape[1]
    w_hh = w_hh_ref[...]
    h = h_scr[...]
    c = c_scr[...]

    # Static unroll over the chunk (Tc is a small compile-time constant).
    for t in range(Tc):
        gates = pg_ref[:, t, :].astype(jnp.float32) + jnp.dot(
            h.astype(jnp.bfloat16), w_hh, preferred_element_type=jnp.float32)
        # PyTorch gate order [i, f, g, o]; i and f are adjacent -> one sigmoid
        # over the contiguous [:, :2H] slab (fewer EUP pushes).  H is a
        # multiple of 128 so all slices fall on lane-tile boundaries.
        if_g = jax.nn.sigmoid(gates[:, :2 * H])
        i_g = if_g[:, :H]
        f_g = if_g[:, H:]
        g_g = jnp.tanh(gates[:, 2 * H:3 * H])
        o_g = jax.nn.sigmoid(gates[:, 3 * H:])
        c = f_g * c + i_g * g_g
        h = o_g * jnp.tanh(c)
        h_out_ref[:, t, :] = h.astype(h_out_ref.dtype)

    h_scr[...] = h
    c_scr[...] = c


def lstm_recurrence_pallas(pre_gates, w_hh, *, time_chunk, batch_block):
    """pre_gates: (Bp, Tp, 4H) bf16, w_hh: (H, 4H) bf16 -> (Bp, Tp, H) bf16."""
    Bp, Tp, H4 = pre_gates.shape
    H = w_hh.shape[0]
    assert H4 == 4 * H and w_hh.shape[1] == H4
    assert Tp % time_chunk == 0 and Bp % batch_block == 0 and batch_block % 8 == 0

    return pl.pallas_call(
        _lstm_chunk_kernel,
        out_shape=jax.ShapeDtypeStruct((Bp, Tp, H), jnp.bfloat16),
        grid_spec=pltpu.PrefetchScalarGridSpec(
            num_scalar_prefetch=0,
            # Batch blocks are independent ("parallel": megacore split); time
            # chunks carry h/c and must stay sequential ("arbitrary").
            grid=(Bp // batch_block, Tp // time_chunk),
            in_specs=[
                pl.BlockSpec((batch_block, time_chunk, H4),
                             lambda b, t: (b, t, 0)),
                # Constant block index -> Pallas fetches W_hh once and keeps it
                # resident in VMEM for the whole grid (no manual DMA).
                pl.BlockSpec((H, H4), lambda b, t: (0, 0)),
            ],
            out_specs=pl.BlockSpec((batch_block, time_chunk, H),
                                   lambda b, t: (b, t, 0)),
            scratch_shapes=[
                pltpu.VMEM((batch_block, H), jnp.float32),  # h state
                pltpu.VMEM((batch_block, H), jnp.float32),  # c state
            ],
        ),
        compiler_params=pltpu.CompilerParams(
            dimension_semantics=("parallel", "arbitrary"),
            vmem_limit_bytes=64 * 1024 * 1024,
        ),
    )(pre_gates, w_hh)


# ---------------------------------------------------------------------------
# Full forward (matches RNNLM.forward) + parameter init + pure-JAX reference.
# ---------------------------------------------------------------------------
def init_params(key, n_items, hidden_size, in_dim):
    ks = jax.random.split(key, 7)
    scale = 0.1
    # Matmul weights are stored persistently in bf16 (they only ever feed bf16
    # MXU matmuls); biases and the embedding stay f32.
    return dict(
        emb=jax.random.normal(ks[0], (n_items, in_dim), jnp.float32),
        # PyTorch LSTM gate order [i, f, g, o]; stored already transposed.
        w_ih=(scale * jax.random.normal(ks[1], (in_dim, 4 * hidden_size),
                                        jnp.float32)).astype(jnp.bfloat16),
        w_hh=(scale * jax.random.normal(ks[2], (hidden_size, 4 * hidden_size),
                                        jnp.float32)).astype(jnp.bfloat16),
        b_ih=scale * jax.random.normal(ks[3], (1, 4 * hidden_size), jnp.float32),
        b_hh=scale * jax.random.normal(ks[4], (1, 4 * hidden_size), jnp.float32),
        w_lin=(scale * jax.random.normal(ks[5], (hidden_size, n_items),
                                         jnp.float32)).astype(jnp.bfloat16),
        b_lin=scale * jax.random.normal(ks[6], (1, n_items), jnp.float32),
    )


def rnnlm_forward(x_ids, params, *, time_chunk=16, batch_block_target=128):
    """Matches RNNLM.forward: x_ids (B, T) int32 -> logits (B*T, n_items) f32."""
    B, T = x_ids.shape
    H = params["w_hh"].shape[0]
    D = params["w_ih"].shape[0]

    # Embedding with max_norm=1: renormalize looked-up rows whose L2 norm > 1.
    # TODO(synk): PyTorch also mutates the embedding weight rows in place; that
    # training-time side effect is not reproduced here.
    tok = jnp.take(params["emb"], x_ids, axis=0)                   # (B, T, D)
    norms = jnp.linalg.norm(tok, axis=-1, keepdims=True)
    tok = jnp.where(norms > 1.0, tok / (norms + 1e-7), tok)

    # Batch-major throughout (no HBM transposes).  Pad batch/time to block
    # multiples; padded rows/steps are discarded after the recurrence.
    batch_block = min(_round_up(B, 8), batch_block_target)
    Bp = _round_up(B, batch_block)
    tc = min(time_chunk, _round_up(T, 8))
    Tp = _round_up(T, tc)
    tok = jnp.pad(tok, ((0, Bp - B), (0, Tp - T), (0, 0)))

    # 1) Input projection hoisted out of the recurrence: one big parallel
    #    matmul over all Bp*Tp rows; pre-gates emitted in bf16.
    b_comb = params["b_ih"] + params["b_hh"]                       # (1, 4H) f32
    pre_gates = linear_pallas(tok.reshape(Bp * Tp, D), params["w_ih"], b_comb,
                              out_dtype=jnp.bfloat16)
    pre_gates = pre_gates.reshape(Bp, Tp, 4 * H)

    # 2) Sequential LSTM recurrence (only h @ W_hh + gate math inside).
    h_seq = lstm_recurrence_pallas(pre_gates, params["w_hh"],
                                   time_chunk=tc, batch_block=batch_block)

    # 3) Vocab projection hoisted out of the recurrence (parallel, V-tiled).
    h_rows = h_seq[:B, :T].reshape(B * T, H)                       # bf16 rows
    logits = linear_pallas(h_rows, params["w_lin"], params["b_lin"],
                           out_dtype=jnp.float32)
    return logits                                                  # (B*T, V)


def rnnlm_forward_ref(x_ids, params):
    """Pure-JAX (non-Pallas) f32 reference for correctness checking."""
    w_ih = params["w_ih"].astype(jnp.float32)
    w_hh = params["w_hh"].astype(jnp.float32)
    w_lin = params["w_lin"].astype(jnp.float32)

    tok = jnp.take(params["emb"], x_ids, axis=0)
    norms = jnp.linalg.norm(tok, axis=-1, keepdims=True)
    tok = jnp.where(norms > 1.0, tok / (norms + 1e-7), tok)
    B, T, _ = tok.shape
    H = w_hh.shape[0]
    b = (params["b_ih"] + params["b_hh"])[0]

    def step(carry, x_t):
        h, c = carry
        g = x_t @ w_ih + h @ w_hh + b
        i = jax.nn.sigmoid(g[:, 0 * H:1 * H])
        f = jax.nn.sigmoid(g[:, 1 * H:2 * H])
        gg = jnp.tanh(g[:, 2 * H:3 * H])
        o = jax.nn.sigmoid(g[:, 3 * H:4 * H])
        c = f * c + i * gg
        h = o * jnp.tanh(c)
        return (h, c), h

    h0 = jnp.zeros((B, H), jnp.float32)
    (_, _), hs = jax.lax.scan(step, (h0, h0), jnp.transpose(tok, (1, 0, 2)))
    hs = jnp.transpose(hs, (1, 0, 2)).reshape(B * T, H)
    return hs @ w_lin + params["b_lin"]


if __name__ == "__main__":
    # Small but TPU-aligned demo shapes: H, D, V multiples of 128; batch/time
    # are padded to block multiples inside the wrapper.
    n_items, hidden_size, in_dim = 256, 128, 128
    B, T = 4, 16

    key = jax.random.PRNGKey(0)
    k_param, k_ids = jax.random.split(key)
    params = init_params(k_param, n_items, hidden_size, in_dim)
    x_ids = jax.random.randint(k_ids, (B, T), 0, n_items, dtype=jnp.int32)

    logits = jax.jit(rnnlm_forward)(x_ids, params)
    jax.block_until_ready(logits)
    assert logits.shape == (B * T, n_items), logits.shape

    ref = rnnlm_forward_ref(x_ids, params)
    err = float(jnp.max(jnp.abs(logits - ref)))
    assert err < 5e-2, f"mismatch vs pure-JAX reference: max abs err {err}"
    print("KERNEL_OK")
</pallas_src>

<mosaic_0001>
module attributes {stable_mosaic.version = 11 : i64} {
  func.func @_linear_bias_kernel(%arg0: i32, %arg1: i32, %arg2: memref<128x128xf32, #tpu.memory_space<vmem>>, %arg3: memref<128x512xbf16, #tpu.memory_space<vmem>>, %arg4: memref<1x512xf32, #tpu.memory_space<vmem>>, %arg5: memref<128x512xbf16, #tpu.memory_space<vmem>>) attributes {dimension_semantics = [#tpu.dimension_semantics<parallel>, #tpu.dimension_semantics<parallel>], iteration_bounds = array<i64: 1, 1>, scalar_prefetch = 0 : i64, scratch_operands = 0 : i64, tpu.core_type = #tpu.core_type<tc>, window_params = [{transform_indices = @transform_0, window_bounds = array<i64: 128, 128>}, {transform_indices = @transform_1, window_bounds = array<i64: 128, 512>}, {transform_indices = @transform_2, window_bounds = array<i64: 1, 512>}, {transform_indices = @transform_3, window_bounds = array<i64: 128, 512>}]} {
    %c0 = arith.constant 0 : index
    %c0_0 = arith.constant 0 : index
    %0 = vector.load %arg2[%c0, %c0_0] : memref<128x128xf32, #tpu.memory_space<vmem>>, vector<128x128xf32>
    %1 = arith.truncf %0 : vector<128x128xf32> to vector<128x128xbf16>
    %c0_1 = arith.constant 0 : index
    %c0_2 = arith.constant 0 : index
    %2 = vector.load %arg3[%c0_1, %c0_2] : memref<128x512xbf16, #tpu.memory_space<vmem>>, vector<128x512xbf16>
    %cst = arith.constant dense<0.000000e+00> : vector<128x512xf32>
    %3 = tpu.matmul %1, %2, %cst {dimension_numbers = #tpu.dot_dimension_numbers<[1], [0], [0], [1], [0, 0, 1, 1], [], []>} : vector<128x128xbf16>, vector<128x512xbf16>, vector<128x512xf32> -> vector<128x512xf32>
    %c0_3 = arith.constant 0 : index
    %c0_4 = arith.constant 0 : index
    %4 = vector.load %arg4[%c0_3, %c0_4] : memref<1x512xf32, #tpu.memory_space<vmem>>, vector<1x512xf32>
    %5 = vector.broadcast %4 : vector<1x512xf32> to vector<128x512xf32>
    %6 = arith.addf %3, %5 : vector<128x512xf32>
    %7 = arith.truncf %6 : vector<128x512xf32> to vector<128x512xbf16>
    %c0_5 = arith.constant 0 : index
    %c0_6 = arith.constant 0 : index
    %8 = vector.load %arg5[%c0_5, %c0_6] : memref<128x512xbf16, #tpu.memory_space<vmem>>, vector<128x512xbf16>
    tpu.vector_store %arg5[%c0_5, %c0_6], %7 {strides = array<i32>} : memref<128x512xbf16, #tpu.memory_space<vmem>>, vector<128x512xbf16>,
    return
  }
  func.func @transform_0(%arg0: i32, %arg1: i32) -> (i32, i32) {
    %c0_i32 = arith.constant 0 : i32
    %c0_i32_0 = arith.constant 0 : i32
    return %arg0, %c0_i32 : i32, i32
  }
  func.func @transform_1(%arg0: i32, %arg1: i32) -> (i32, i32) {
    %c0_i32 = arith.constant 0 : i32
    %c0_i32_0 = arith.constant 0 : i32
    return %c0_i32, %arg1 : i32, i32
  }
  func.func @transform_2(%arg0: i32, %arg1: i32) -> (i32, i32) {
    %c0_i32 = arith.constant 0 : i32
    %c0_i32_0 = arith.constant 0 : i32
    return %c0_i32, %arg1 : i32, i32
  }
  func.func @transform_3(%arg0: i32, %arg1: i32) -> (i32, i32) {
    %c0_i32 = arith.constant 0 : i32
    return %arg0, %arg1 : i32, i32
  }
}

module attributes {stable_mosaic.version = 11 : i64} {
  func.func @_linear_bias_kernel(%arg0: i32, %arg1: i32, %arg2: memref<64x128xbf16, #tpu.memory_space<vmem>>, %arg3: memref<128x256xbf16, #tpu.memory_space<vmem>>, %arg4: memref<1x256xf32, #tpu.memory_space<vmem>>, %arg5: memref<64x256xf32, #tpu.memory_space<vmem>>) attributes {dimension_semantics = [#tpu.dimension_semantics<parallel>, #tpu.dimension_semantics<parallel>], iteration_bounds = array<i64: 1, 1>, scalar_prefetch = 0 : i64, scratch_operands = 0 : i64, tpu.core_type = #tpu.core_type<tc>, window_params = [{transform_indices = @transform_0, window_bounds = array<i64: 64, 128>}, {transform_indices = @transform_1, window_bounds = array<i64: 128, 256>}, {transform_indices = @transform_2, window_bounds = array<i64: 1, 256>}, {transform_indices = @transform_3, window_bounds = array<i64: 64, 256>}]} {
    %c0 = arith.constant 0 : index
    %c0_0 = arith.constant 0 : index
    %0 = vector.load %arg2[%c0, %c0_0] : memref<64x128xbf16, #tpu.memory_space<vmem>>, vector<64x128xbf16>
    %c0_1 = arith.constant 0 : index
    %c0_2 = arith.constant 0 : index
    %1 = vector.load %arg3[%c0_1, %c0_2] : memref<128x256xbf16, #tpu.memory_space<vmem>>, vector<128x256xbf16>
    %cst = arith.constant dense<0.000000e+00> : vector<64x256xf32>
    %2 = tpu.matmul %0, %1, %cst {dimension_numbers = #tpu.dot_dimension_numbers<[1], [0], [0], [1], [0, 0, 1, 1], [], []>} : vector<64x128xbf16>, vector<128x256xbf16>, vector<64x256xf32> -> vector<64x256xf32>
    %c0_3 = arith.constant 0 : index
    %c0_4 = arith.constant 0 : index
    %3 = vector.load %arg4[%c0_3, %c0_4] : memref<1x256xf32, #tpu.memory_space<vmem>>, vector<1x256xf32>
    %4 = vector.broadcast %3 : vector<1x256xf32> to vector<64x256xf32>
    %5 = arith.addf %2, %4 : vector<64x256xf32>
    %c0_5 = arith.constant 0 : index
    %c0_6 = arith.constant 0 : index
    %6 = vector.load %arg5[%c0_5, %c0_6] : memref<64x256xf32, #tpu.memory_space<vmem>>, vector<64x256xf32>
    tpu.vector_store %arg5[%c0_5, %c0_6], %5 {strides = array<i32>} : memref<64x256xf32, #tpu.memory_space<vmem>>, vector<64x256xf32>,
    return
  }
  func.func @transform_0(%arg0: i32, %arg1: i32) -> (i32, i32) {
    %c0_i32 = arith.constant 0 : i32
    %c0_i32_0 = arith.constant 0 : i32
    return %arg0, %c0_i32 : i32, i32
  }
  func.func @transform_1(%arg0: i32, %arg1: i32) -> (i32, i32) {
    %c0_i32 = arith.constant 0 : i32
    %c0_i32_0 = arith.constant 0 : i32
    return %c0_i32, %arg1 : i32, i32
  }
  func.func @transform_2(%arg0: i32, %arg1: i32) -> (i32, i32) {
    %c0_i32 = arith.constant 0 : i32
    %c0_i32_0 = arith.constant 0 : i32
    return %c0_i32, %arg1 : i32, i32
  }
  func.func @transform_3(%arg0: i32, %arg1: i32) -> (i32, i32) {
    %c0_i32 = arith.constant 0 : i32
    return %arg0, %arg1 : i32, i32
  }
}

module attributes {stable_mosaic.version = 11 : i64} {
  func.func @_lstm_chunk_kernel(%arg0: i32, %arg1: i32, %arg2: memref<8x16x512xbf16, #tpu.memory_space<vmem>>, %arg3: memref<128x512xbf16, #tpu.memory_space<vmem>>, %arg4: memref<8x16x128xbf16, #tpu.memory_space<vmem>>, %arg5: memref<8x128xf32, #tpu.memory_space<vmem>>, %arg6: memref<8x128xf32, #tpu.memory_space<vmem>>) attributes {dimension_semantics = [#tpu.dimension_semantics<parallel>, #tpu.dimension_semantics<arbitrary>], iteration_bounds = array<i64: 1, 1>, scalar_prefetch = 0 : i64, scratch_operands = 2 : i64, tpu.core_type = #tpu.core_type<tc>, window_params = [{transform_indices = @transform_0, window_bounds = array<i64: 8, 16, 512>}, {pipeline_mode = #tpu.pipeline_mode<synchronous>, transform_indices = @transform_1, window_bounds = array<i64: 128, 512>}, {transform_indices = @transform_2, window_bounds = array<i64: 8, 16, 128>}]} {
    %c0_i32 = arith.constant 0 : i32
    %0 = arith.cmpi eq, %arg1, %c0_i32 : i32
    %1 = arith.extui %0 : i1 to i32
    %c0_i32_0 = arith.constant 0 : i32
    %2 = arith.cmpi ne, %1, %c0_i32_0 : i32
    scf.if %2 {
      %cst_138 = arith.constant 0.000000e+00 : f32
      %504 = vector.broadcast %cst_138 : f32 to vector<8x128xf32>
      %c0_139 = arith.constant 0 : index
      %c0_140 = arith.constant 0 : index
      %505 = vector.load %arg5[%c0_139, %c0_140] : memref<8x128xf32, #tpu.memory_space<vmem>>, vector<8x128xf32>
      tpu.vector_store %arg5[%c0_139, %c0_140], %504 {strides = array<i32>} : memref<8x128xf32, #tpu.memory_space<vmem>>, vector<8x128xf32>,
      %cst_141 = arith.constant 0.000000e+00 : f32
      %506 = vector.broadcast %cst_141 : f32 to vector<8x128xf32>
      %c0_142 = arith.constant 0 : index
      %c0_143 = arith.constant 0 : index
      %507 = vector.load %arg6[%c0_142, %c0_143] : memref<8x128xf32, #tpu.memory_space<vmem>>, vector<8x128xf32>
      tpu.vector_store %arg6[%c0_142, %c0_143], %506 {strides = array<i32>} : memref<8x128xf32, #tpu.memory_space<vmem>>, vector<8x128xf32>,
    } else {
    }
    %c0 = arith.constant 0 : index
    %c0_1 = arith.constant 0 : index
    %3 = vector.load %arg3[%c0, %c0_1] : memref<128x512xbf16, #tpu.memory_space<vmem>>, vector<128x512xbf16>
    %c0_2 = arith.constant 0 : index
    %c0_3 = arith.constant 0 : index
    %4 = vector.load %arg5[%c0_2, %c0_3] : memref<8x128xf32, #tpu.memory_space<vmem>>, vector<8x128xf32>
    %c0_4 = arith.constant 0 : index
    %c0_5 = arith.constant 0 : index
    %5 = vector.load %arg6[%c0_4, %c0_5] : memref<8x128xf32, #tpu.memory_space<vmem>>, vector<8x128xf32>
    %c0_6 = arith.constant 0 : index
    %c0_7 = arith.constant 0 : index
    %c0_8 = arith.constant 0 : index
    %6 = vector.load %arg2[%c0_6, %c0_7, %c0_8] : memref<8x16x512xbf16, #tpu.memory_space<vmem>>, vector<8x1x512xbf16>
    %7 = vector.shape_cast %6 : vector<8x1x512xbf16> to vector<8x512xbf16>
    %8 = arith.extf %7 : vector<8x512xbf16> to vector<8x512xf32>
    %9 = arith.truncf %4 : vector<8x128xf32> to vector<8x128xbf16>
    %cst = arith.constant dense<0.000000e+00> : vector<8x512xf32>
    %10 = tpu.matmul %9, %3, %cst {dimension_numbers = #tpu.dot_dimension_numbers<[1], [0], [0], [1], [0, 0, 1, 1], [], []>} : vector<8x128xbf16>, vector<128x512xbf16>, vector<8x512xf32> -> vector<8x512xf32>
    %11 = arith.addf %8, %10 : vector<8x512xf32>
    %12 = vector.extract_strided_slice %11 {offsets = [0, 0], sizes = [8, 256], strides = [1, 1]} : vector<8x512xf32> to vector<8x256xf32>
    %13 = arith.negf %12 : vector<8x256xf32>
    %14 = math.exp %13 : vector<8x256xf32>
    %cst_9 = arith.constant 1.000000e+00 : f32
    %15 = vector.broadcast %cst_9 : f32 to vector<8x256xf32>
    %16 = arith.addf %15, %14 : vector<8x256xf32>
    %17 = arith.divf %15, %16 : vector<8x256xf32>
    %18 = vector.extract_strided_slice %17 {offsets = [0, 0], sizes = [8, 128], strides = [1, 1]} : vector<8x256xf32> to vector<8x128xf32>
    %19 = vector.extract_strided_slice %17 {offsets = [0, 128], sizes = [8, 128], strides = [1, 1]} : vector<8x256xf32> to vector<8x128xf32>
    %20 = vector.extract_strided_slice %11 {offsets = [0, 256], sizes = [8, 128], strides = [1, 1]} : vector<8x512xf32> to vector<8x128xf32>
    %21 = math.tanh %20 : vector<8x128xf32>
    %22 = vector.extract_strided_slice %11 {offsets = [0, 384], sizes = [8, 128], strides = [1, 1]} : vector<8x512xf32> to vector<8x128xf32>
    %23 = arith.negf %22 : vector<8x128xf32>
    %24 = math.exp %23 : vector<8x128xf32>
    %cst_10 = arith.constant 1.000000e+00 : f32
    %25 = vector.broadcast %cst_10 : f32 to vector<8x128xf32>
    %26 = arith.addf %25, %24 : vector<8x128xf32>
    %27 = arith.divf %25, %26 : vector<8x128xf32>
    %28 = arith.mulf %19, %5 : vector<8x128xf32>
    %29 = arith.mulf %18, %21 : vector<8x128xf32>
    %30 = arith.addf %28, %29 : vector<8x128xf32>
    %31 = math.tanh %30 : vector<8x128xf32>
    %32 = arith.mulf %27, %31 : vector<8x128xf32>
    %33 = arith.truncf %32 : vector<8x128xf32> to vector<8x128xbf16>
    %c0_11 = arith.constant 0 : index
    %c0_12 = arith.constant 0 : index
    %c0_13 = arith.constant 0 : index
    %34 = vector.load %arg4[%c0_11, %c0_12, %c0_13] : memref<8x16x128xbf16, #tpu.memory_space<vmem>>, vector<8x1x128xbf16>
    %35 = vector.shape_cast %34 : vector<8x1x128xbf16> to vector<8x128xbf16>
    %36 = vector.shape_cast %33 : vector<8x128xbf16> to vector<8x1x128xbf16>
    tpu.vector_store %arg4[%c0_11, %c0_12, %c0_13], %36 {strides = array<i32>} : memref<8x16x128xbf16, #tpu.memory_space<vmem>>, vector<8x1x128xbf16>,
    %c0_14 = arith.constant 0 : index
    %c1 = arith.constant 1 : index
    %c0_15 = arith.constant 0 : index
    %37 = vector.load %arg2[%c0_14, %c1, %c0_15] : memref<8x16x512xbf16, #tpu.memory_space<vmem>>, vector<8x1x512xbf16>
    %38 = vector.shape_cast %37 : vector<8x1x512xbf16> to vector<8x512xbf16>
    %39 = arith.extf %38 : vector<8x512xbf16> to vector<8x512xf32>
    %40 = arith.truncf %32 : vector<8x128xf32> to vector<8x128xbf16>
    %cst_16 = arith.constant dense<0.000000e+00> : vector<8x512xf32>
    %41 = tpu.matmul %40, %3, %cst_16 {dimension_numbers = #tpu.dot_dimension_numbers<[1], [0], [0], [1], [0, 0, 1, 1], [], []>} : vector<8x128xbf16>, vector<128x512xbf16>, vector<8x512xf32> -> vector<8x512xf32>
    %42 = arith.addf %39, %41 : vector<8x512xf32>
    %43 = vector.extract_strided_slice %42 {offsets = [0, 0], sizes = [8, 256], strides = [1, 1]} : vector<8x512xf32> to vector<8x256xf32>
    %44 = arith.negf %43 : vector<8x256xf32>
    %45 = math.exp %44 : vector<8x256xf32>
    %cst_17 = arith.constant 1.000000e+00 : f32
    %46 = vector.broadcast %cst_17 : f32 to vector<8x256xf32>
    %47 = arith.addf %46, %45 : vector<8x256xf32>
    %48 = arith.divf %46, %47 : vector<8x256xf32>
    %49 = vector.extract_strided_slice %48 {offsets = [0, 0], sizes = [8, 128], strides = [1, 1]} : vector<8x256xf32> to vector<8x128xf32>
    %50 = vector.extract_strided_slice %48 {offsets = [0, 128], sizes = [8, 128], strides = [1, 1]} : vector<8x256xf32> to vector<8x128xf32>
    %51 = vector.extract_strided_slice %42 {offsets = [0, 256], sizes = [8, 128], strides = [1, 1]} : vector<8x512xf32> to vector<8x128xf32>
    %52 = math.tanh %51 : vector<8x128xf32>
    %53 = vector.extract_strided_slice %42 {offsets = [0, 384], sizes = [8, 128], strides = [1, 1]} : vector<8x512xf32> to vector<8x128xf32>
    %54 = arith.negf %53 : vector<8x128xf32>
    %55 = math.exp %54 : vector<8x128xf32>
    %cst_18 = arith.constant 1.000000e+00 : f32
    %56 = vector.broadcast %cst_18 : f32 to vector<8x128xf32>
    %57 = arith.addf %56, %55 : vector<8x128xf32>
    %58 = arith.divf %56, %57 : vector<8x128xf32>
    %59 = arith.mulf %50, %30 : vector<8x128xf32>
    %60 = arith.mulf %49, %52 : vector<8x128xf32>
    %61 = arith.addf %59, %60 : vector<8x128xf32>
    %62 = math.tanh %61 : vector<8x128xf32>
    %63 = arith.mulf %58, %62 : vector<8x128xf32>
    %64 = arith.truncf %63 : vector<8x128xf32> to vector<8x128xbf16>
    %c0_19 = arith.constant 0 : index
    %c1_20 = arith.constant 1 : index
    %c0_21 = arith.constant 0 : index
    %65 = vector.load %arg4[%c0_19, %c1_20, %c0_21] : memref<8x16x128xbf16, #tpu.memory_space<vmem>>, vector<8x1x128xbf16>
    %66 = vector.shape_cast %65 : vector<8x1x128xbf16> to vector<8x128xbf16>
    %67 = vector.shape_cast %64 : vector<8x128xbf16> to vector<8x1x128xbf16>
    tpu.vector_store %arg4[%c0_19, %c1_20, %c0_21], %67 {strides = array<i32>} : memref<8x16x128xbf16, #tpu.memory_space<vmem>>, vector<8x1x128xbf16>,
    %c0_22 = arith.constant 0 : index
    %c2 = arith.constant 2 : index
    %c0_23 = arith.constant 0 : index
    %68 = vector.load %arg2[%c0_22, %c2, %c0_23] : memref<8x16x512xbf16, #tpu.memory_space<vmem>>, vector<8x1x512xbf16>
    %69 = vector.shape_cast %68 : vector<8x1x512xbf16> to vector<8x512xbf16>
    %70 = arith.extf %69 : vector<8x512xbf16> to vector<8x512xf32>
    %71 = arith.truncf %63 : vector<8x128xf32> to vector<8x128xbf16>
    %cst_24 = arith.constant dense<0.000000e+00> : vector<8x512xf32>
    %72 = tpu.matmul %71, %3, %cst_24 {dimension_numbers = #tpu.dot_dimension_numbers<[1], [0], [0], [1], [0, 0, 1, 1], [], []>} : vector<8x128xbf16>, vector<128x512xbf16>, vector<8x512xf32> -> vector<8x512xf32>
    %73 = arith.addf %70, %72 : vector<8x512xf32>
    %74 = vector.extract_strided_slice %73 {offsets = [0, 0], sizes = [8, 256], strides = [1, 1]} : vector<8x512xf32> to vector<8x256xf32>
    %75 = arith.negf %74 : vector<8x256xf32>
    %76 = math.exp %75 : vector<8x256xf32>
    %cst_25 = arith.constant 1.000000e+00 : f32
    %77 = vector.broadcast %cst_25 : f32 to vector<8x256xf32>
    %78 = arith.addf %77, %76 : vector<8x256xf32>
    %79 = arith.divf %77, %78 : vector<8x256xf32>
    %80 = vector.extract_strided_slice %79 {offsets = [0, 0], sizes = [8, 128], strides = [1, 1]} : vector<8x256xf32> to vector<8x128xf32>
    %81 = vector.extract_strided_slice %79 {offsets = [0, 128], sizes = [8, 128], strides = [1, 1]} : vector<8x256xf32> to vector<8x128xf32>
    %82 = vector.extract_strided_slice %73 {offsets = [0, 256], sizes = [8, 128], strides = [1, 1]} : vector<8x512xf32> to vector<8x128xf32>
    %83 = math.tanh %82 : vector<8x128xf32>
    %84 = vector.extract_strided_slice %73 {offsets = [0, 384], sizes = [8, 128], strides = [1, 1]} : vector<8x512xf32> to vector<8x128xf32>
    %85 = arith.negf %84 : vector<8x128xf32>
    %86 = math.exp %85 : vector<8x128xf32>
    %cst_26 = arith.constant 1.000000e+00 : f32
    %87 = vector.broadcast %cst_26 : f32 to vector<8x128xf32>
    %88 = arith.addf %87, %86 : vector<8x128xf32>
    %89 = arith.divf %87, %88 : vector<8x128xf32>
    %90 = arith.mulf %81, %61 : vector<8x128xf32>
    %91 = arith.mulf %80, %83 : vector<8x128xf32>
    %92 = arith.addf %90, %91 : vector<8x128xf32>
    %93 = math.tanh %92 : vector<8x128xf32>
    %94 = arith.mulf %89, %93 : vector<8x128xf32>
    %95 = arith.truncf %94 : vector<8x128xf32> to vector<8x128xbf16>
    %c0_27 = arith.constant 0 : index
    %c2_28 = arith.constant 2 : index
    %c0_29 = arith.constant 0 : index
    %96 = vector.load %arg4[%c0_27, %c2_28, %c0_29] : memref<8x16x128xbf16, #tpu.memory_space<vmem>>, vector<8x1x128xbf16>
    %97 = vector.shape_cast %96 : vector<8x1x128xbf16> to vector<8x128xbf16>
    %98 = vector.shape_cast %95 : vector<8x128xbf16> to vector<8x1x128xbf16>
    tpu.vector_store %arg4[%c0_27, %c2_28, %c0_29], %98 {strides = array<i32>} : memref<8x16x128xbf16, #tpu.memory_space<vmem>>, vector<8x1x128xbf16>,
    %c0_30 = arith.constant 0 : index
    %c3 = arith.constant 3 : index
    %c0_31 = arith.constant 0 : index
    %99 = vector.load %arg2[%c0_30, %c3, %c0_31] : memref<8x16x512xbf16, #tpu.memory_space<vmem>>, vector<8x1x512xbf16>
    %100 = vector.shape_cast %99 : vector<8x1x512xbf16> to vector<8x512xbf16>
    %101 = arith.extf %100 : vector<8x512xbf16> to vector<8x512xf32>
    %102 = arith.truncf %94 : vector<8x128xf32> to vector<8x128xbf16>
    %cst_32 = arith.constant dense<0.000000e+00> : vector<8x512xf32>
    %103 = tpu.matmul %102, %3, %cst_32 {dimension_numbers = #tpu.dot_dimension_numbers<[1], [0], [0], [1], [0, 0, 1, 1], [], []>} : vector<8x128xbf16>, vector<128x512xbf16>, vector<8x512xf32> -> vector<8x512xf32>
    %104 = arith.addf %101, %103 : vector<8x512xf32>
    %105 = vector.extract_strided_slice %104 {offsets = [0, 0], sizes = [8, 256], strides = [1, 1]} : vector<8x512xf32> to vector<8x256xf32>
    %106 = arith.negf %105 : vector<8x256xf32>
    %107 = math.exp %106 : vector<8x256xf32>
    %cst_33 = arith.constant 1.000000e+00 : f32
    %108 = vector.broadcast %cst_33 : f32 to vector<8x256xf32>
    %109 = arith.addf %108, %107 : vector<8x256xf32>
    %110 = arith.divf %108, %109 : vector<8x256xf32>
    %111 = vector.extract_strided_slice %110 {offsets = [0, 0], sizes = [8, 128], strides = [1, 1]} : vector<8x256xf32> to vector<8x128xf32>
    %112 = vector.extract_strided_slice %110 {offsets = [0, 128], sizes = [8, 128], strides = [1, 1]} : vector<8x256xf32> to vector<8x128xf32>
    %113 = vector.extract_strided_slice %104 {offsets = [0, 256], sizes = [8, 128], strides = [1, 1]} : vector<8x512xf32> to vector<8x128xf32>
    %114 = math.tanh %113 : vector<8x128xf32>
    %115 = vector.extract_strided_slice %104 {offsets = [0, 384], sizes = [8, 128], strides = [1, 1]} : vector<8x512xf32> to vector<8x128xf32>
    %116 = arith.negf %115 : vector<8x128xf32>
    %117 = math.exp %116 : vector<8x128xf32>
    %cst_34 = arith.constant 1.000000e+00 : f32
    %118 = vector.broadcast %cst_34 : f32 to vector<8x128xf32>
    %119 = arith.addf %118, %117 : vector<8x128xf32>
    %120 = arith.divf %118, %119 : vector<8x128xf32>
    %121 = arith.mulf %112, %92 : vector<8x128xf32>
    %122 = arith.mulf %111, %114 : vector<8x128xf32>
    %123 = arith.addf %121, %122 : vector<8x128xf32>
    %124 = math.tanh %123 : vector<8x128xf32>
    %125 = arith.mulf %120, %124 : vector<8x128xf32>
    %126 = arith.truncf %125 : vector<8x128xf32> to vector<8x128xbf16>
    %c0_35 = arith.constant 0 : index
    %c3_36 = arith.constant 3 : index
    %c0_37 = arith.constant 0 : index
    %127 = vector.load %arg4[%c0_35, %c3_36, %c0_37] : memref<8x16x128xbf16, #tpu.memory_space<vmem>>, vector<8x1x128xbf16>
    %128 = vector.shape_cast %127 : vector<8x1x128xbf16> to vector<8x128xbf16>
    %129 = vector.shape_cast %126 : vector<8x128xbf16> to vector<8x1x128xbf16>
    tpu.vector_store %arg4[%c0_35, %c3_36, %c0_37], %129 {strides = array<i32>} : memref<8x16x128xbf16, #tpu.memory_space<vmem>>, vector<8x1x128xbf16>,
    %c0_38 = arith.constant 0 : index
    %c4 = arith.constant 4 : index
    %c0_39 = arith.constant 0 : index
    %130 = vector.load %arg2[%c0_38, %c4, %c0_39] : memref<8x16x512xbf16, #tpu.memory_space<vmem>>, vector<8x1x512xbf16>
    %131 = vector.shape_cast %130 : vector<8x1x512xbf16> to vector<8x512xbf16>
    %132 = arith.extf %131 : vector<8x512xbf16> to vector<8x512xf32>
    %133 = arith.truncf %125 : vector<8x128xf32> to vector<8x128xbf16>
    %cst_40 = arith.constant dense<0.000000e+00> : vector<8x512xf32>
    %134 = tpu.matmul %133, %3, %cst_40 {dimension_numbers = #tpu.dot_dimension_numbers<[1], [0], [0], [1], [0, 0, 1, 1], [], []>} : vector<8x128xbf16>, vector<128x512xbf16>, vector<8x512xf32> -> vector<8x512xf32>
    %135 = arith.addf %132, %134 : vector<8x512xf32>
    %136 = vector.extract_strided_slice %135 {offsets = [0, 0], sizes = [8, 256], strides = [1, 1]} : vector<8x512xf32> to vector<8x256xf32>
    %137 = arith.negf %136 : vector<8x256xf32>
    %138 = math.exp %137 : vector<8x256xf32>
    %cst_41 = arith.constant 1.000000e+00 : f32
    %139 = vector.broadcast %cst_41 : f32 to vector<8x256xf32>
    %140 = arith.addf %139, %138 : vector<8x256xf32>
    %141 = arith.divf %139, %140 : vector<8x256xf32>
    %142 = vector.extract_strided_slice %141 {offsets = [0, 0], sizes = [8, 128], strides = [1, 1]} : vector<8x256xf32> to vector<8x128xf32>
    %143 = vector.extract_strided_slice %141 {offsets = [0, 128], sizes = [8, 128], strides = [1, 1]} : vector<8x256xf32> to vector<8x128xf32>
    %144 = vector.extract_strided_slice %135 {offsets = [0, 256], sizes = [8, 128], strides = [1, 1]} : vector<8x512xf32> to vector<8x128xf32>
    %145 = math.tanh %144 : vector<8x128xf32>
    %146 = vector.extract_strided_slice %135 {offsets = [0, 384], sizes = [8, 128], strides = [1, 1]} : vector<8x512xf32> to vector<8x128xf32>
    %147 = arith.negf %146 : vector<8x128xf32>
    %148 = math.exp %147 : vector<8x128xf32>
    %cst_42 = arith.constant 1.000000e+00 : f32
    %149 = vector.broadcast %cst_42 : f32 to vector<8x128xf32>
    %150 = arith.addf %149, %148 : vector<8x128xf32>
    %151 = arith.divf %149, %150 : vector<8x128xf32>
    %152 = arith.mulf %143, %123 : vector<8x128xf32>
    %153 = arith.mulf %142, %145 : vector<8x128xf32>
    %154 = arith.addf %152, %153 : vector<8x128xf32>
    %155 = math.tanh %154 : vector<8x128xf32>
    %156 = arith.mulf %151, %155 : vector<8x128xf32>
    %157 = arith.truncf %156 : vector<8x128xf32> to vector<8x128xbf16>
    %c0_43 = arith.constant 0 : index
    %c4_44 = arith.constant 4 : index
    %c0_45 = arith.constant 0 : index
    %158 = vector.load %arg4[%c0_43, %c4_44, %c0_45] : memref<8x16x128xbf16, #tpu.memory_space<vmem>>, vector<8x1x128xbf16>
    %159 = vector.shape_cast %158 : vector<8x1x128xbf16> to vector<8x128xbf16>
    %160 = vector.shape_cast %157 : vector<8x128xbf16> to vector<8x1x128xbf16>
    tpu.vector_store %arg4[%c0_43, %c4_44, %c0_45], %160 {strides = array<i32>} : memref<8x16x128xbf16, #tpu.memory_space<vmem>>, vector<8x1x128xbf16>,
    %c0_46 = arith.constant 0 : index
    %c5 = arith.constant 5 : index
    %c0_47 = arith.constant 0 : index
    %161 = vector.load %arg2[%c0_46, %c5, %c0_47] : memref<8x16x512xbf16, #tpu.memory_space<vmem>>, vector<8x1x512xbf16>
    %162 = vector.shape_cast %161 : vector<8x1x512xbf16> to vector<8x512xbf16>
    %163 = arith.extf %162 : vector<8x512xbf16> to vector<8x512xf32>
    %164 = arith.truncf %156 : vector<8x128xf32> to vector<8x128xbf16>
    %cst_48 = arith.constant dense<0.000000e+00> : vector<8x512xf32>
    %165 = tpu.matmul %164, %3, %cst_48 {dimension_numbers = #tpu.dot_dimension_numbers<[1], [0], [0], [1], [0, 0, 1, 1], [], []>} : vector<8x128xbf16>, vector<128x512xbf16>, vector<8x512xf32> -> vector<8x512xf32>
    %166 = arith.addf %163, %165 : vector<8x512xf32>
    %167 = vector.extract_strided_slice %166 {offsets = [0, 0], sizes = [8, 256], strides = [1, 1]} : vector<8x512xf32> to vector<8x256xf32>
    %168 = arith.negf %167 : vector<8x256xf32>
    %169 = math.exp %168 : vector<8x256xf32>
    %cst_49 = arith.constant 1.000000e+00 : f32
    %170 = vector.broadcast %cst_49 : f32 to vector<8x256xf32>
    %171 = arith.addf %170, %169 : vector<8x256xf32>
    %172 = arith.divf %170, %171 : vector<8x256xf32>
    %173 = vector.extract_strided_slice %172 {offsets = [0, 0], sizes = [8, 128], strides = [1, 1]} : vector<8x256xf32> to vector<8x128xf32>
    %174 = vector.extract_strided_slice %172 {offsets = [0, 128], sizes = [8, 128], strides = [1, 1]} : vector<8x256xf32> to vector<8x128xf32>
    %175 = vector.extract_strided_slice %166 {offsets = [0, 256], sizes = [8, 128], strides = [1, 1]} : vector<8x512xf32> to vector<8x128xf32>
    %176 = math.tanh %175 : vector<8x128xf32>
    %177 = vector.extract_strided_slice %166 {offsets = [0, 384], sizes = [8, 128], strides = [1, 1]} : vector<8x512xf32> to vector<8x128xf32>
    %178 = arith.negf %177 : vector<8x128xf32>
    %179 = math.exp %178 : vector<8x128xf32>
    %cst_50 = arith.constant 1.000000e+00 : f32
    %180 = vector.broadcast %cst_50 : f32 to vector<8x128xf32>
    %181 = arith.addf %180, %179 : vector<8x128xf32>
    %182 = arith.divf %180, %181 : vector<8x128xf32>
    %183 = arith.mulf %174, %154 : vector<8x128xf32>
    %184 = arith.mulf %173, %176 : vector<8x128xf32>
    %185 = arith.addf %183, %184 : vector<8x128xf32>
    %186 = math.tanh %185 : vector<8x128xf32>
    %187 = arith.mulf %182, %186 : vector<8x128xf32>
    %188 = arith.truncf %187 : vector<8x128xf32> to vector<8x128xbf16>
    %c0_51 = arith.constant 0 : index
    %c5_52 = arith.constant 5 : index
    %c0_53 = arith.constant 0 : index
    %189 = vector.load %arg4[%c0_51, %c5_52, %c0_53] : memref<8x16x128xbf16, #tpu.memory_space<vmem>>, vector<8x1x128xbf16>
    %190 = vector.shape_cast %189 : vector<8x1x128xbf16> to vector<8x128xbf16>
    %191 = vector.shape_cast %188 : vector<8x128xbf16> to vector<8x1x128xbf16>
    tpu.vector_store %arg4[%c0_51, %c5_52, %c0_53], %191 {strides = array<i32>} : memref<8x16x128xbf16, #tpu.memory_space<vmem>>, vector<8x1x128xbf16>,
    %c0_54 = arith.constant 0 : index
    %c6 = arith.constant 6 : index
    %c0_55 = arith.constant 0 : index
    %192 = vector.load %arg2[%c0_54, %c6, %c0_55] : memref<8x16x512xbf16, #tpu.memory_space<vmem>>, vector<8x1x512xbf16>
    %193 = vector.shape_cast %192 : vector<8x1x512xbf16> to vector<8x512xbf16>
    %194 = arith.extf %193 : vector<8x512xbf16> to vector<8x512xf32>
    %195 = arith.truncf %187 : vector<8x128xf32> to vector<8x128xbf16>
    %cst_56 = arith.constant dense<0.000000e+00> : vector<8x512xf32>
    %196 = tpu.matmul %195, %3, %cst_56 {dimension_numbers = #tpu.dot_dimension_numbers<[1], [0], [0], [1], [0, 0, 1, 1], [], []>} : vector<8x128xbf16>, vector<128x512xbf16>, vector<8x512xf32> -> vector<8x512xf32>
    %197 = arith.addf %194, %196 : vector<8x512xf32>
    %198 = vector.extract_strided_slice %197 {offsets = [0, 0], sizes = [8, 256], strides = [1, 1]} : vector<8x512xf32> to vector<8x256xf32>
    %199 = arith.negf %198 : vector<8x256xf32>
    %200 = math.exp %199 : vector<8x256xf32>
    %cst_57 = arith.constant 1.000000e+00 : f32
    %201 = vector.broadcast %cst_57 : f32 to vector<8x256xf32>
    %202 = arith.addf %201, %200 : vector<8x256xf32>
    %203 = arith.divf %201, %202 : vector<8x256xf32>
    %204 = vector.extract_strided_slice %203 {offsets = [0, 0], sizes = [8, 128], strides = [1, 1]} : vector<8x256xf32> to vector<8x128xf32>
    %205 = vector.extract_strided_slice %203 {offsets = [0, 128], sizes = [8, 128], strides = [1, 1]} : vector<8x256xf32> to vector<8x128xf32>
    %206 = vector.extract_strided_slice %197 {offsets = [0, 256], sizes = [8, 128], strides = [1, 1]} : vector<8x512xf32> to vector<8x128xf32>
    %207 = math.tanh %206 : vector<8x128xf32>
    %208 = vector.extract_strided_slice %197 {offsets = [0, 384], sizes = [8, 128], strides = [1, 1]} : vector<8x512xf32> to vector<8x128xf32>
    %209 = arith.negf %208 : vector<8x128xf32>
    %210 = math.exp %209 : vector<8x128xf32>
    %cst_58 = arith.constant 1.000000e+00 : f32
    %211 = vector.broadcast %cst_58 : f32 to vector<8x128xf32>
    %212 = arith.addf %211, %210 : vector<8x128xf32>
    %213 = arith.divf %211, %212 : vector<8x128xf32>
    %214 = arith.mulf %205, %185 : vector<8x128xf32>
    %215 = arith.mulf %204, %207 : vector<8x128xf32>
    %216 = arith.addf %214, %215 : vector<8x128xf32>
    %217 = math.tanh %216 : vector<8x128xf32>
    %218 = arith.mulf %213, %217 : vector<8x128xf32>
    %219 = arith.truncf %218 : vector<8x128xf32> to vector<8x128xbf16>
    %c0_59 = arith.constant 0 : index
    %c6_60 = arith.constant 6 : index
    %c0_61 = arith.constant 0 : index
    %220 = vector.load %arg4[%c0_59, %c6_60, %c0_61] : memref<8x16x128xbf16, #tpu.memory_space<vmem>>, vector<8x1x128xbf16>
    %221 = vector.shape_cast %220 : vector<8x1x128xbf16> to vector<8x128xbf16>
    %222 = vector.shape_cast %219 : vector<8x128xbf16> to vector<8x1x128xbf16>
    tpu.vector_store %arg4[%c0_59, %c6_60, %c0_61], %222 {strides = array<i32>} : memref<8x16x128xbf16, #tpu.memory_space<vmem>>, vector<8x1x128xbf16>,
    %c0_62 = arith.constant 0 : index
    %c7 = arith.constant 7 : index
    %c0_63 = arith.constant 0 : index
    %223 = vector.load %arg2[%c0_62, %c7, %c0_63] : memref<8x16x512xbf16, #tpu.memory_space<vmem>>, vector<8x1x512xbf16>
    %224 = vector.shape_cast %223 : vector<8x1x512xbf16> to vector<8x512xbf16>
    %225 = arith.extf %224 : vector<8x512xbf16> to vector<8x512xf32>
    %226 = arith.truncf %218 : vector<8x128xf32> to vector<8x128xbf16>
    %cst_64 = arith.constant dense<0.000000e+00> : vector<8x512xf32>
    %227 = tpu.matmul %226, %3, %cst_64 {dimension_numbers = #tpu.dot_dimension_numbers<[1], [0], [0], [1], [0, 0, 1, 1], [], []>} : vector<8x128xbf16>, vector<128x512xbf16>, vector<8x512xf32> -> vector<8x512xf32>
    %228 = arith.addf %225, %227 : vector<8x512xf32>
    %229 = vector.extract_strided_slice %228 {offsets = [0, 0], sizes = [8, 256], strides = [1, 1]} : vector<8x512xf32> to vector<8x256xf32>
    %230 = arith.negf %229 : vector<8x256xf32>
    %231 = math.exp %230 : vector<8x256xf32>
    %cst_65 = arith.constant 1.000000e+00 : f32
    %232 = vector.broadcast %cst_65 : f32 to vector<8x256xf32>
    %233 = arith.addf %232, %231 : vector<8x256xf32>
    %234 = arith.divf %232, %233 : vector<8x256xf32>
    %235 = vector.extract_strided_slice %234 {offsets = [0, 0], sizes = [8, 128], strides = [1, 1]} : vector<8x256xf32> to vector<8x128xf32>
    %236 = vector.extract_strided_slice %234 {offsets = [0, 128], sizes = [8, 128], strides = [1, 1]} : vector<8x256xf32> to vector<8x128xf32>
    %237 = vector.extract_strided_slice %228 {offsets = [0, 256], sizes = [8, 128], strides = [1, 1]} : vector<8x512xf32> to vector<8x128xf32>
    %238 = math.tanh %237 : vector<8x128xf32>
    %239 = vector.extract_strided_slice %228 {offsets = [0, 384], sizes = [8, 128], strides = [1, 1]} : vector<8x512xf32> to vector<8x128xf32>
    %240 = arith.negf %239 : vector<8x128xf32>
    %241 = math.exp %240 : vector<8x128xf32>
    %cst_66 = arith.constant 1.000000e+00 : f32
    %242 = vector.broadcast %cst_66 : f32 to vector<8x128xf32>
    %243 = arith.addf %242, %241 : vector<8x128xf32>
    %244 = arith.divf %242, %243 : vector<8x128xf32>
    %245 = arith.mulf %236, %216 : vector<8x128xf32>
    %246 = arith.mulf %235, %238 : vector<8x128xf32>
    %247 = arith.addf %245, %246 : vector<8x128xf32>
    %248 = math.tanh %247 : vector<8x128xf32>
    %249 = arith.mulf %244, %248 : vector<8x128xf32>
    %250 = arith.truncf %249 : vector<8x128xf32> to vector<8x128xbf16>
    %c0_67 = arith.constant 0 : index
    %c7_68 = arith.constant 7 : index
    %c0_69 = arith.constant 0 : index
    %251 = vector.load %arg4[%c0_67, %c7_68, %c0_69] : memref<8x16x128xbf16, #tpu.memory_space<vmem>>, vector<8x1x128xbf16>
    %252 = vector.shape_cast %251 : vector<8x1x128xbf16> to vector<8x128xbf16>
    %253 = vector.shape_cast %250 : vector<8x128xbf16> to vector<8x1x128xbf16>
    tpu.vector_store %arg4[%c0_67, %c7_68, %c0_69], %253 {strides = array<i32>} : memref<8x16x128xbf16, #tpu.memory_space<vmem>>, vector<8x1x128xbf16>,
    %c0_70 = arith.constant 0 : index
    %c8 = arith.constant 8 : index
    %c0_71 = arith.constant 0 : index
    %254 = vector.load %arg2[%c0_70, %c8, %c0_71] : memref<8x16x512xbf16, #tpu.memory_space<vmem>>, vector<8x1x512xbf16>
    %255 = vector.shape_cast %254 : vector<8x1x512xbf16> to vector<8x512xbf16>
    %256 = arith.extf %255 : vector<8x512xbf16> to vector<8x512xf32>
    %257 = arith.truncf %249 : vector<8x128xf32> to vector<8x128xbf16>
    %cst_72 = arith.constant dense<0.000000e+00> : vector<8x512xf32>
    %258 = tpu.matmul %257, %3, %cst_72 {dimension_numbers = #tpu.dot_dimension_numbers<[1], [0], [0], [1], [0, 0, 1, 1], [], []>} : vector<8x128xbf16>, vector<128x512xbf16>, vector<8x512xf32> -> vector<8x512xf32>
    %259 = arith.addf %256, %258 : vector<8x512xf32>
    %260 = vector.extract_strided_slice %259 {offsets = [0, 0], sizes = [8, 256], strides = [1, 1]} : vector<8x512xf32> to vector<8x256xf32>
    %261 = arith.negf %260 : vector<8x256xf32>
    %262 = math.exp %261 : vector<8x256xf32>
    %cst_73 = arith.constant 1.000000e+00 : f32
    %263 = vector.broadcast %cst_73 : f32 to vector<8x256xf32>
    %264 = arith.addf %263, %262 : vector<8x256xf32>
    %265 = arith.divf %263, %264 : vector<8x256xf32>
    %266 = vector.extract_strided_slice %265 {offsets = [0, 0], sizes = [8, 128], strides = [1, 1]} : vector<8x256xf32> to vector<8x128xf32>
    %267 = vector.extract_strided_slice %265 {offsets = [0, 128], sizes = [8, 128], strides = [1, 1]} : vector<8x256xf32> to vector<8x128xf32>
    %268 = vector.extract_strided_slice %259 {offsets = [0, 256], sizes = [8, 128], strides = [1, 1]} : vector<8x512xf32> to vector<8x128xf32>
    %269 = math.tanh %268 : vector<8x128xf32>
    %270 = vector.extract_strided_slice %259 {offsets = [0, 384], sizes = [8, 128], strides = [1, 1]} : vector<8x512xf32> to vector<8x128xf32>
    %271 = arith.negf %270 : vector<8x128xf32>
    %272 = math.exp %271 : vector<8x128xf32>
    %cst_74 = arith.constant 1.000000e+00 : f32
    %273 = vector.broadcast %cst_74 : f32 to vector<8x128xf32>
    %274 = arith.addf %273, %272 : vector<8x128xf32>
    %275 = arith.divf %273, %274 : vector<8x128xf32>
    %276 = arith.mulf %267, %247 : vector<8x128xf32>
    %277 = arith.mulf %266, %269 : vector<8x128xf32>
    %278 = arith.addf %276, %277 : vector<8x128xf32>
    %279 = math.tanh %278 : vector<8x128xf32>
    %280 = arith.mulf %275, %279 : vector<8x128xf32>
    %281 = arith.truncf %280 : vector<8x128xf32> to vector<8x128xbf16>
    %c0_75 = arith.constant 0 : index
    %c8_76 = arith.constant 8 : index
    %c0_77 = arith.constant 0 : index
    %282 = vector.load %arg4[%c0_75, %c8_76, %c0_77] : memref<8x16x128xbf16, #tpu.memory_space<vmem>>, vector<8x1x128xbf16>
    %283 = vector.shape_cast %282 : vector<8x1x128xbf16> to vector<8x128xbf16>
    %284 = vector.shape_cast %281 : vector<8x128xbf16> to vector<8x1x128xbf16>
    tpu.vector_store %arg4[%c0_75, %c8_76, %c0_77], %284 {strides = array<i32>} : memref<8x16x128xbf16, #tpu.memory_space<vmem>>, vector<8x1x128xbf16>,
    %c0_78 = arith.constant 0 : index
    %c9 = arith.constant 9 : index
    %c0_79 = arith.constant 0 : index
    %285 = vector.load %arg2[%c0_78, %c9, %c0_79] : memref<8x16x512xbf16, #tpu.memory_space<vmem>>, vector<8x1x512xbf16>
    %286 = vector.shape_cast %285 : vector<8x1x512xbf16> to vector<8x512xbf16>
    %287 = arith.extf %286 : vector<8x512xbf16> to vector<8x512xf32>
    %288 = arith.truncf %280 : vector<8x128xf32> to vector<8x128xbf16>
    %cst_80 = arith.constant dense<0.000000e+00> : vector<8x512xf32>
    %289 = tpu.matmul %288, %3, %cst_80 {dimension_numbers = #tpu.dot_dimension_numbers<[1], [0], [0], [1], [0, 0, 1, 1], [], []>} : vector<8x128xbf16>, vector<128x512xbf16>, vector<8x512xf32> -> vector<8x512xf32>
    %290 = arith.addf %287, %289 : vector<8x512xf32>
    %291 = vector.extract_strided_slice %290 {offsets = [0, 0], sizes = [8, 256], strides = [1, 1]} : vector<8x512xf32> to vector<8x256xf32>
    %292 = arith.negf %291 : vector<8x256xf32>
    %293 = math.exp %292 : vector<8x256xf32>
    %cst_81 = arith.constant 1.000000e+00 : f32
    %294 = vector.broadcast %cst_81 : f32 to vector<8x256xf32>
    %295 = arith.addf %294, %293 : vector<8x256xf32>
    %296 = arith.divf %294, %295 : vector<8x256xf32>
    %297 = vector.extract_strided_slice %296 {offsets = [0, 0], sizes = [8, 128], strides = [1, 1]} : vector<8x256xf32> to vector<8x128xf32>
    %298 = vector.extract_strided_slice %296 {offsets = [0, 128], sizes = [8, 128], strides = [1, 1]} : vector<8x256xf32> to vector<8x128xf32>
    %299 = vector.extract_strided_slice %290 {offsets = [0, 256], sizes = [8, 128], strides = [1, 1]} : vector<8x512xf32> to vector<8x128xf32>
    %300 = math.tanh %299 : vector<8x128xf32>
    %301 = vector.extract_strided_slice %290 {offsets = [0, 384], sizes = [8, 128], strides = [1, 1]} : vector<8x512xf32> to vector<8x128xf32>
    %302 = arith.negf %301 : vector<8x128xf32>
    %303 = math.exp %302 : vector<8x128xf32>
    %cst_82 = arith.constant 1.000000e+00 : f32
    %304 = vector.broadcast %cst_82 : f32 to vector<8x128xf32>
    %305 = arith.addf %304, %303 : vector<8x128xf32>
    %306 = arith.divf %304, %305 : vector<8x128xf32>
    %307 = arith.mulf %298, %278 : vector<8x128xf32>
    %308 = arith.mulf %297, %300 : vector<8x128xf32>
    %309 = arith.addf %307, %308 : vector<8x128xf32>
    %310 = math.tanh %309 : vector<8x128xf32>
    %311 = arith.mulf %306, %310 : vector<8x128xf32>
    %312 = arith.truncf %311 : vector<8x128xf32> to vector<8x128xbf16>
    %c0_83 = arith.constant 0 : index
    %c9_84 = arith.constant 9 : index
    %c0_85 = arith.constant 0 : index
    %313 = vector.load %arg4[%c0_83, %c9_84, %c0_85] : memref<8x16x128xbf16, #tpu.memory_space<vmem>>, vector<8x1x128xbf16>
    %314 = vector.shape_cast %313 : vector<8x1x128xbf16> to vector<8x128xbf16>
    %315 = vector.shape_cast %312 : vector<8x128xbf16> to vector<8x1x128xbf16>
    tpu.vector_store %arg4[%c0_83, %c9_84, %c0_85], %315 {strides = array<i32>} : memref<8x16x128xbf16, #tpu.memory_space<vmem>>, vector<8x1x128xbf16>,
    %c0_86 = arith.constant 0 : index
    %c10 = arith.constant 10 : index
    %c0_87 = arith.constant 0 : index
    %316 = vector.load %arg2[%c0_86, %c10, %c0_87] : memref<8x16x512xbf16, #tpu.memory_space<vmem>>, vector<8x1x512xbf16>
    %317 = vector.shape_cast %316 : vector<8x1x512xbf16> to vector<8x512xbf16>
    %318 = arith.extf %317 : vector<8x512xbf16> to vector<8x512xf32>
    %319 = arith.truncf %311 : vector<8x128xf32> to vector<8x128xbf16>
    %cst_88 = arith.constant dense<0.000000e+00> : vector<8x512xf32>
    %320 = tpu.matmul %319, %3, %cst_88 {dimension_numbers = #tpu.dot_dimension_numbers<[1], [0], [0], [1], [0, 0, 1, 1], [], []>} : vector<8x128xbf16>, vector<128x512xbf16>, vector<8x512xf32> -> vector<8x512xf32>
    %321 = arith.addf %318, %320 : vector<8x512xf32>
    %322 = vector.extract_strided_slice %321 {offsets = [0, 0], sizes = [8, 256], strides = [1, 1]} : vector<8x512xf32> to vector<8x256xf32>
    %323 = arith.negf %322 : vector<8x256xf32>
    %324 = math.exp %323 : vector<8x256xf32>
    %cst_89 = arith.constant 1.000000e+00 : f32
    %325 = vector.broadcast %cst_89 : f32 to vector<8x256xf32>
    %326 = arith.addf %325, %324 : vector<8x256xf32>
    %327 = arith.divf %325, %326 : vector<8x256xf32>
    %328 = vector.extract_strided_slice %327 {offsets = [0, 0], sizes = [8, 128], strides = [1, 1]} : vector<8x256xf32> to vector<8x128xf32>
    %329 = vector.extract_strided_slice %327 {offsets = [0, 128], sizes = [8, 128], strides = [1, 1]} : vector<8x256xf32> to vector<8x128xf32>
    %330 = vector.extract_strided_slice %321 {offsets = [0, 256], sizes = [8, 128], strides = [1, 1]} : vector<8x512xf32> to vector<8x128xf32>
    %331 = math.tanh %330 : vector<8x128xf32>
    %332 = vector.extract_strided_slice %321 {offsets = [0, 384], sizes = [8, 128], strides = [1, 1]} : vector<8x512xf32> to vector<8x128xf32>
    %333 = arith.negf %332 : vector<8x128xf32>
    %334 = math.exp %333 : vector<8x128xf32>
    %cst_90 = arith.constant 1.000000e+00 : f32
    %335 = vector.broadcast %cst_90 : f32 to vector<8x128xf32>
    %336 = arith.addf %335, %334 : vector<8x128xf32>
    %337 = arith.divf %335, %336 : vector<8x128xf32>
    %338 = arith.mulf %329, %309 : vector<8x128xf32>
    %339 = arith.mulf %328, %331 : vector<8x128xf32>
    %340 = arith.addf %338, %339 : vector<8x128xf32>
    %341 = math.tanh %340 : vector<8x128xf32>
    %342 = arith.mulf %337, %341 : vector<8x128xf32>
    %343 = arith.truncf %342 : vector<8x128xf32> to vector<8x128xbf16>
    %c0_91 = arith.constant 0 : index
    %c10_92 = arith.constant 10 : index
    %c0_93 = arith.constant 0 : index
    %344 = vector.load %arg4[%c0_91, %c10_92, %c0_93] : memref<8x16x128xbf16, #tpu.memory_space<vmem>>, vector<8x1x128xbf16>
    %345 = vector.shape_cast %344 : vector<8x1x128xbf16> to vector<8x128xbf16>
    %346 = vector.shape_cast %343 : vector<8x128xbf16> to vector<8x1x128xbf16>
    tpu.vector_store %arg4[%c0_91, %c10_92, %c0_93], %346 {strides = array<i32>} : memref<8x16x128xbf16, #tpu.memory_space<vmem>>, vector<8x1x128xbf16>,
    %c0_94 = arith.constant 0 : index
    %c11 = arith.constant 11 : index
    %c0_95 = arith.constant 0 : index
    %347 = vector.load %arg2[%c0_94, %c11, %c0_95] : memref<8x16x512xbf16, #tpu.memory_space<vmem>>, vector<8x1x512xbf16>
    %348 = vector.shape_cast %347 : vector<8x1x512xbf16> to vector<8x512xbf16>
    %349 = arith.extf %348 : vector<8x512xbf16> to vector<8x512xf32>
    %350 = arith.truncf %342 : vector<8x128xf32> to vector<8x128xbf16>
    %cst_96 = arith.constant dense<0.000000e+00> : vector<8x512xf32>
    %351 = tpu.matmul %350, %3, %cst_96 {dimension_numbers = #tpu.dot_dimension_numbers<[1], [0], [0], [1], [0, 0, 1, 1], [], []>} : vector<8x128xbf16>, vector<128x512xbf16>, vector<8x512xf32> -> vector<8x512xf32>
    %352 = arith.addf %349, %351 : vector<8x512xf32>
    %353 = vector.extract_strided_slice %352 {offsets = [0, 0], sizes = [8, 256], strides = [1, 1]} : vector<8x512xf32> to vector<8x256xf32>
    %354 = arith.negf %353 : vector<8x256xf32>
    %355 = math.exp %354 : vector<8x256xf32>
    %cst_97 = arith.constant 1.000000e+00 : f32
    %356 = vector.broadcast %cst_97 : f32 to vector<8x256xf32>
    %357 = arith.addf %356, %355 : vector<8x256xf32>
    %358 = arith.divf %356, %357 : vector<8x256xf32>
    %359 = vector.extract_strided_slice %358 {offsets = [0, 0], sizes = [8, 128], strides = [1, 1]} : vector<8x256xf32> to vector<8x128xf32>
    %360 = vector.extract_strided_slice %358 {offsets = [0, 128], sizes = [8, 128], strides = [1, 1]} : vector<8x256xf32> to vector<8x128xf32>
    %361 = vector.extract_strided_slice %352 {offsets = [0, 256], sizes = [8, 128], strides = [1, 1]} : vector<8x512xf32> to vector<8x128xf32>
    %362 = math.tanh %361 : vector<8x128xf32>
    %363 = vector.extract_strided_slice %352 {offsets = [0, 384], sizes = [8, 128], strides = [1, 1]} : vector<8x512xf32> to vector<8x128xf32>
    %364 = arith.negf %363 : vector<8x128xf32>
    %365 = math.exp %364 : vector<8x128xf32>
    %cst_98 = arith.constant 1.000000e+00 : f32
    %366 = vector.broadcast %cst_98 : f32 to vector<8x128xf32>
    %367 = arith.addf %366, %365 : vector<8x128xf32>
    %368 = arith.divf %366, %367 : vector<8x128xf32>
    %369 = arith.mulf %360, %340 : vector<8x128xf32>
    %370 = arith.mulf %359, %362 : vector<8x128xf32>
    %371 = arith.addf %369, %370 : vector<8x128xf32>
    %372 = math.tanh %371 : vector<8x128xf32>
    %373 = arith.mulf %368, %372 : vector<8x128xf32>
    %374 = arith.truncf %373 : vector<8x128xf32> to vector<8x128xbf16>
    %c0_99 = arith.constant 0 : index
    %c11_100 = arith.constant 11 : index
    %c0_101 = arith.constant 0 : index
    %375 = vector.load %arg4[%c0_99, %c11_100, %c0_101] : memref<8x16x128xbf16, #tpu.memory_space<vmem>>, vector<8x1x128xbf16>
    %376 = vector.shape_cast %375 : vector<8x1x128xbf16> to vector<8x128xbf16>
    %377 = vector.shape_cast %374 : vector<8x128xbf16> to vector<8x1x128xbf16>
    tpu.vector_store %arg4[%c0_99, %c11_100, %c0_101], %377 {strides = array<i32>} : memref<8x16x128xbf16, #tpu.memory_space<vmem>>, vector<8x1x128xbf16>,
    %c0_102 = arith.constant 0 : index
    %c12 = arith.constant 12 : index
    %c0_103 = arith.constant 0 : index
    %378 = vector.load %arg2[%c0_102, %c12, %c0_103] : memref<8x16x512xbf16, #tpu.memory_space<vmem>>, vector<8x1x512xbf16>
    %379 = vector.shape_cast %378 : vector<8x1x512xbf16> to vector<8x512xbf16>
    %380 = arith.extf %379 : vector<8x512xbf16> to vector<8x512xf32>
    %381 = arith.truncf %373 : vector<8x128xf32> to vector<8x128xbf16>
    %cst_104 = arith.constant dense<0.000000e+00> : vector<8x512xf32>
    %382 = tpu.matmul %381, %3, %cst_104 {dimension_numbers = #tpu.dot_dimension_numbers<[1], [0], [0], [1], [0, 0, 1, 1], [], []>} : vector<8x128xbf16>, vector<128x512xbf16>, vector<8x512xf32> -> vector<8x512xf32>
    %383 = arith.addf %380, %382 : vector<8x512xf32>
    %384 = vector.extract_strided_slice %383 {offsets = [0, 0], sizes = [8, 256], strides = [1, 1]} : vector<8x512xf32> to vector<8x256xf32>
    %385 = arith.negf %384 : vector<8x256xf32>
    %386 = math.exp %385 : vector<8x256xf32>
    %cst_105 = arith.constant 1.000000e+00 : f32
    %387 = vector.broadcast %cst_105 : f32 to vector<8x256xf32>
    %388 = arith.addf %387, %386 : vector<8x256xf32>
    %389 = arith.divf %387, %388 : vector<8x256xf32>
    %390 = vector.extract_strided_slice %389 {offsets = [0, 0], sizes = [8, 128], strides = [1, 1]} : vector<8x256xf32> to vector<8x128xf32>
    %391 = vector.extract_strided_slice %389 {offsets = [0, 128], sizes = [8, 128], strides = [1, 1]} : vector<8x256xf32> to vector<8x128xf32>
    %392 = vector.extract_strided_slice %383 {offsets = [0, 256], sizes = [8, 128], strides = [1, 1]} : vector<8x512xf32> to vector<8x128xf32>
    %393 = math.tanh %392 : vector<8x128xf32>
    %394 = vector.extract_strided_slice %383 {offsets = [0, 384], sizes = [8, 128], strides = [1, 1]} : vector<8x512xf32> to vector<8x128xf32>
    %395 = arith.negf %394 : vector<8x128xf32>
    %396 = math.exp %395 : vector<8x128xf32>
    %cst_106 = arith.constant 1.000000e+00 : f32
    %397 = vector.broadcast %cst_106 : f32 to vector<8x128xf32>
    %398 = arith.addf %397, %396 : vector<8x128xf32>
    %399 = arith.divf %397, %398 : vector<8x128xf32>
    %400 = arith.mulf %391, %371 : vector<8x128xf32>
    %401 = arith.mulf %390, %393 : vector<8x128xf32>
    %402 = arith.addf %400, %401 : vector<8x128xf32>
    %403 = math.tanh %402 : vector<8x128xf32>
    %404 = arith.mulf %399, %403 : vector<8x128xf32>
    %405 = arith.truncf %404 : vector<8x128xf32> to vector<8x128xbf16>
    %c0_107 = arith.constant 0 : index
    %c12_108 = arith.constant 12 : index
    %c0_109 = arith.constant 0 : index
    %406 = vector.load %arg4[%c0_107, %c12_108, %c0_109] : memref<8x16x128xbf16, #tpu.memory_space<vmem>>, vector<8x1x128xbf16>
    %407 = vector.shape_cast %406 : vector<8x1x128xbf16> to vector<8x128xbf16>
    %408 = vector.shape_cast %405 : vector<8x128xbf16> to vector<8x1x128xbf16>
    tpu.vector_store %arg4[%c0_107, %c12_108, %c0_109], %408 {strides = array<i32>} : memref<8x16x128xbf16, #tpu.memory_space<vmem>>, vector<8x1x128xbf16>,
    %c0_110 = arith.constant 0 : index
    %c13 = arith.constant 13 : index
    %c0_111 = arith.constant 0 : index
    %409 = vector.load %arg2[%c0_110, %c13, %c0_111] : memref<8x16x512xbf16, #tpu.memory_space<vmem>>, vector<8x1x512xbf16>
    %410 = vector.shape_cast %409 : vector<8x1x512xbf16> to vector<8x512xbf16>
    %411 = arith.extf %410 : vector<8x512xbf16> to vector<8x512xf32>
    %412 = arith.truncf %404 : vector<8x128xf32> to vector<8x128xbf16>
    %cst_112 = arith.constant dense<0.000000e+00> : vector<8x512xf32>
    %413 = tpu.matmul %412, %3, %cst_112 {dimension_numbers = #tpu.dot_dimension_numbers<[1], [0], [0], [1], [0, 0, 1, 1], [], []>} : vector<8x128xbf16>, vector<128x512xbf16>, vector<8x512xf32> -> vector<8x512xf32>
    %414 = arith.addf %411, %413 : vector<8x512xf32>
    %415 = vector.extract_strided_slice %414 {offsets = [0, 0], sizes = [8, 256], strides = [1, 1]} : vector<8x512xf32> to vector<8x256xf32>
    %416 = arith.negf %415 : vector<8x256xf32>
    %417 = math.exp %416 : vector<8x256xf32>
    %cst_113 = arith.constant 1.000000e+00 : f32
    %418 = vector.broadcast %cst_113 : f32 to vector<8x256xf32>
    %419 = arith.addf %418, %417 : vector<8x256xf32>
    %420 = arith.divf %418, %419 : vector<8x256xf32>
    %421 = vector.extract_strided_slice %420 {offsets = [0, 0], sizes = [8, 128], strides = [1, 1]} : vector<8x256xf32> to vector<8x128xf32>
    %422 = vector.extract_strided_slice %420 {offsets = [0, 128], sizes = [8, 128], strides = [1, 1]} : vector<8x256xf32> to vector<8x128xf32>
    %423 = vector.extract_strided_slice %414 {offsets = [0, 256], sizes = [8, 128], strides = [1, 1]} : vector<8x512xf32> to vector<8x128xf32>
    %424 = math.tanh %423 : vector<8x128xf32>
    %425 = vector.extract_strided_slice %414 {offsets = [0, 384], sizes = [8, 128], strides = [1, 1]} : vector<8x512xf32> to vector<8x128xf32>
    %426 = arith.negf %425 : vector<8x128xf32>
    %427 = math.exp %426 : vector<8x128xf32>
    %cst_114 = arith.constant 1.000000e+00 : f32
    %428 = vector.broadcast %cst_114 : f32 to vector<8x128xf32>
    %429 = arith.addf %428, %427 : vector<8x128xf32>
    %430 = arith.divf %428, %429 : vector<8x128xf32>
    %431 = arith.mulf %422, %402 : vector<8x128xf32>
    %432 = arith.mulf %421, %424 : vector<8x128xf32>
    %433 = arith.addf %431, %432 : vector<8x128xf32>
    %434 = math.tanh %433 : vector<8x128xf32>
    %435 = arith.mulf %430, %434 : vector<8x128xf32>
    %436 = arith.truncf %435 : vector<8x128xf32> to vector<8x128xbf16>
    %c0_115 = arith.constant 0 : index
    %c13_116 = arith.constant 13 : index
    %c0_117 = arith.constant 0 : index
    %437 = vector.load %arg4[%c0_115, %c13_116, %c0_117] : memref<8x16x128xbf16, #tpu.memory_space<vmem>>, vector<8x1x128xbf16>
    %438 = vector.shape_cast %437 : vector<8x1x128xbf16> to vector<8x128xbf16>
    %439 = vector.shape_cast %436 : vector<8x128xbf16> to vector<8x1x128xbf16>
    tpu.vector_store %arg4[%c0_115, %c13_116, %c0_117], %439 {strides = array<i32>} : memref<8x16x128xbf16, #tpu.memory_space<vmem>>, vector<8x1x128xbf16>,
    %c0_118 = arith.constant 0 : index
    %c14 = arith.constant 14 : index
    %c0_119 = arith.constant 0 : index
    %440 = vector.load %arg2[%c0_118, %c14, %c0_119] : memref<8x16x512xbf16, #tpu.memory_space<vmem>>, vector<8x1x512xbf16>
    %441 = vector.shape_cast %440 : vector<8x1x512xbf16> to vector<8x512xbf16>
    %442 = arith.extf %441 : vector<8x512xbf16> to vector<8x512xf32>
    %443 = arith.truncf %435 : vector<8x128xf32> to vector<8x128xbf16>
    %cst_120 = arith.constant dense<0.000000e+00> : vector<8x512xf32>
    %444 = tpu.matmul %443, %3, %cst_120 {dimension_numbers = #tpu.dot_dimension_numbers<[1], [0], [0], [1], [0, 0, 1, 1], [], []>} : vector<8x128xbf16>, vector<128x512xbf16>, vector<8x512xf32> -> vector<8x512xf32>
    %445 = arith.addf %442, %444 : vector<8x512xf32>
    %446 = vector.extract_strided_slice %445 {offsets = [0, 0], sizes = [8, 256], strides = [1, 1]} : vector<8x512xf32> to vector<8x256xf32>
    %447 = arith.negf %446 : vector<8x256xf32>
    %448 = math.exp %447 : vector<8x256xf32>
    %cst_121 = arith.constant 1.000000e+00 : f32
    %449 = vector.broadcast %cst_121 : f32 to vector<8x256xf32>
    %450 = arith.addf %449, %448 : vector<8x256xf32>
    %451 = arith.divf %449, %450 : vector<8x256xf32>
    %452 = vector.extract_strided_slice %451 {offsets = [0, 0], sizes = [8, 128], strides = [1, 1]} : vector<8x256xf32> to vector<8x128xf32>
    %453 = vector.extract_strided_slice %451 {offsets = [0, 128], sizes = [8, 128], strides = [1, 1]} : vector<8x256xf32> to vector<8x128xf32>
    %454 = vector.extract_strided_slice %445 {offsets = [0, 256], sizes = [8, 128], strides = [1, 1]} : vector<8x512xf32> to vector<8x128xf32>
    %455 = math.tanh %454 : vector<8x128xf32>
    %456 = vector.extract_strided_slice %445 {offsets = [0, 384], sizes = [8, 128], strides = [1, 1]} : vector<8x512xf32> to vector<8x128xf32>
    %457 = arith.negf %456 : vector<8x128xf32>
    %458 = math.exp %457 : vector<8x128xf32>
    %cst_122 = arith.constant 1.000000e+00 : f32
    %459 = vector.broadcast %cst_122 : f32 to vector<8x128xf32>
    %460 = arith.addf %459, %458 : vector<8x128xf32>
    %461 = arith.divf %459, %460 : vector<8x128xf32>
    %462 = arith.mulf %453, %433 : vector<8x128xf32>
    %463 = arith.mulf %452, %455 : vector<8x128xf32>
    %464 = arith.addf %462, %463 : vector<8x128xf32>
    %465 = math.tanh %464 : vector<8x128xf32>
    %466 = arith.mulf %461, %465 : vector<8x128xf32>
    %467 = arith.truncf %466 : vector<8x128xf32> to vector<8x128xbf16>
    %c0_123 = arith.constant 0 : index
    %c14_124 = arith.constant 14 : index
    %c0_125 = arith.constant 0 : index
    %468 = vector.load %arg4[%c0_123, %c14_124, %c0_125] : memref<8x16x128xbf16, #tpu.memory_space<vmem>>, vector<8x1x128xbf16>
    %469 = vector.shape_cast %468 : vector<8x1x128xbf16> to vector<8x128xbf16>
    %470 = vector.shape_cast %467 : vector<8x128xbf16> to vector<8x1x128xbf16>
    tpu.vector_store %arg4[%c0_123, %c14_124, %c0_125], %470 {strides = array<i32>} : memref<8x16x128xbf16, #tpu.memory_space<vmem>>, vector<8x1x128xbf16>,
    %c0_126 = arith.constant 0 : index
    %c15 = arith.constant 15 : index
    %c0_127 = arith.constant 0 : index
    %471 = vector.load %arg2[%c0_126, %c15, %c0_127] : memref<8x16x512xbf16, #tpu.memory_space<vmem>>, vector<8x1x512xbf16>
    %472 = vector.shape_cast %471 : vector<8x1x512xbf16> to vector<8x512xbf16>
    %473 = arith.extf %472 : vector<8x512xbf16> to vector<8x512xf32>
    %474 = arith.truncf %466 : vector<8x128xf32> to vector<8x128xbf16>
    %cst_128 = arith.constant dense<0.000000e+00> : vector<8x512xf32>
    %475 = tpu.matmul %474, %3, %cst_128 {dimension_numbers = #tpu.dot_dimension_numbers<[1], [0], [0], [1], [0, 0, 1, 1], [], []>} : vector<8x128xbf16>, vector<128x512xbf16>, vector<8x512xf32> -> vector<8x512xf32>
    %476 = arith.addf %473, %475 : vector<8x512xf32>
    %477 = vector.extract_strided_slice %476 {offsets = [0, 0], sizes = [8, 256], strides = [1, 1]} : vector<8x512xf32> to vector<8x256xf32>
    %478 = arith.negf %477 : vector<8x256xf32>
    %479 = math.exp %478 : vector<8x256xf32>
    %cst_129 = arith.constant 1.000000e+00 : f32
    %480 = vector.broadcast %cst_129 : f32 to vector<8x256xf32>
    %481 = arith.addf %480, %479 : vector<8x256xf32>
    %482 = arith.divf %480, %481 : vector<8x256xf32>
    %483 = vector.extract_strided_slice %482 {offsets = [0, 0], sizes = [8, 128], strides = [1, 1]} : vector<8x256xf32> to vector<8x128xf32>
    %484 = vector.extract_strided_slice %482 {offsets = [0, 128], sizes = [8, 128], strides = [1, 1]} : vector<8x256xf32> to vector<8x128xf32>
    %485 = vector.extract_strided_slice %476 {offsets = [0, 256], sizes = [8, 128], strides = [1, 1]} : vector<8x512xf32> to vector<8x128xf32>
    %486 = math.tanh %485 : vector<8x128xf32>
    %487 = vector.extract_strided_slice %476 {offsets = [0, 384], sizes = [8, 128], strides = [1, 1]} : vector<8x512xf32> to vector<8x128xf32>
    %488 = arith.negf %487 : vector<8x128xf32>
    %489 = math.exp %488 : vector<8x128xf32>
    %cst_130 = arith.constant 1.000000e+00 : f32
    %490 = vector.broadcast %cst_130 : f32 to vector<8x128xf32>
    %491 = arith.addf %490, %489 : vector<8x128xf32>
    %492 = arith.divf %490, %491 : vector<8x128xf32>
    %493 = arith.mulf %484, %464 : vector<8x128xf32>
    %494 = arith.mulf %483, %486 : vector<8x128xf32>
    %495 = arith.addf %493, %494 : vector<8x128xf32>
    %496 = math.tanh %495 : vector<8x128xf32>
    %497 = arith.mulf %492, %496 : vector<8x128xf32>
    %498 = arith.truncf %497 : vector<8x128xf32> to vector<8x128xbf16>
    %c0_131 = arith.constant 0 : index
    %c15_132 = arith.constant 15 : index
    %c0_133 = arith.constant 0 : index
    %499 = vector.load %arg4[%c0_131, %c15_132, %c0_133] : memref<8x16x128xbf16, #tpu.memory_space<vmem>>, vector<8x1x128xbf16>
    %500 = vector.shape_cast %499 : vector<8x1x128xbf16> to vector<8x128xbf16>
    %501 = vector.shape_cast %498 : vector<8x128xbf16> to vector<8x1x128xbf16>
    tpu.vector_store %arg4[%c0_131, %c15_132, %c0_133], %501 {strides = array<i32>} : memref<8x16x128xbf16, #tpu.memory_space<vmem>>, vector<8x1x128xbf16>,
    %c0_134 = arith.constant 0 : index
    %c0_135 = arith.constant 0 : index
    %502 = vector.load %arg5[%c0_134, %c0_135] : memref<8x128xf32, #tpu.memory_space<vmem>>, vector<8x128xf32>
    tpu.vector_store %arg5[%c0_134, %c0_135], %497 {strides = array<i32>} : memref<8x128xf32, #tpu.memory_space<vmem>>, vector<8x128xf32>,
    %c0_136 = arith.constant 0 : index
    %c0_137 = arith.constant 0 : index
    %503 = vector.load %arg6[%c0_136, %c0_137] : memref<8x128xf32, #tpu.memory_space<vmem>>, vector<8x128xf32>
    tpu.vector_store %arg6[%c0_136, %c0_137], %495 {strides = array<i32>} : memref<8x128xf32, #tpu.memory_space<vmem>>, vector<8x128xf32>,
    return
  }
  func.func @transform_0(%arg0: i32, %arg1: i32) -> (i32, i32, i32) {
    %c0_i32 = arith.constant 0 : i32
    %c0_i32_0 = arith.constant 0 : i32
    return %arg0, %arg1, %c0_i32 : i32, i32, i32
  }
  func.func @transform_1(%arg0: i32, %arg1: i32) -> (i32, i32) {
    %c0_i32 = arith.constant 0 : i32
    %c0_i32_0 = arith.constant 0 : i32
    %c0_i32_1 = arith.constant 0 : i32
    return %c0_i32, %c0_i32_0 : i32, i32
  }
  func.func @transform_2(%arg0: i32, %arg1: i32) -> (i32, i32, i32) {
    %c0_i32 = arith.constant 0 : i32
    %c0_i32_0 = arith.constant 0 : i32
    return %arg0, %arg1, %c0_i32 : i32, i32, i32
  }
}

</mosaic_0001>

<llo_original>
// kernel: rnnlm_forward.5
$region0: #{rnnlm_forward.5}
  #allocation0 [shape = 'u32[]', space=smem, size = 0x4, offset = 0x4, fixed_abs, tag = 'smem constant byte address 0x4 - core index']
  #allocation1 [shape = 'u32[144,128]{1,0:T(1,128)}', space=vmem, size = 0x12000, scoped, tag = 'internal scratch']
  %s0 = inlined_call_operand.vmem [shape: bf16[64,128], index: 0, kind: input, shape index: {}]
  %s1 = inlined_call_operand.vmem [shape: bf16[128,256], index: 1, kind: input, shape index: {}]
  %s2 = inlined_call_operand.vmem [shape: f32[1,256], index: 2, kind: input, shape index: {}]
  %s3 = inlined_call_operand.hbm [shape: f32[64,256], index: 3, kind: output, shape index: {}]
  %s4 = sld [smem:[#allocation0]]
  $region22: #{rnnlm_forward.5} parent=0
    _
  %s6 = ssub.s32 1, %s4
  %s7 = scalar_select 0, %s6, %s4
  $region1: #{rnnlm_forward.5} parent=0
    #allocation2 [shape = 'u8[65536]{0}', space=vmem, size = 0x10000, scoped, tag = 'output window, operand 0, single buffered']
    #allocation3 [shape = 's32[1]{0}', space=sflag, size = 0x4, scoped, tag = 'scoped memory for rnnlm_forward.5']
    %8 = vsyncpa [#allocation3], 0
    // Predicated region
    $region2: #{rnnlm_forward.5} parent=1 // pred_check
      _
    $region3: #{rnnlm_forward.5} parent=1 // pred_check_branch
      %10 = sbr.rel (0) target = $region5
    $region4: #{rnnlm_forward.5} parent=1 // pred_region
      _
    $region5: #{rnnlm_forward.5} parent=1 // pred_fallthru
      _
    // Predicated region
    $region6: #{rnnlm_forward.5} parent=1 // pred_check
      _
    $region7: #{rnnlm_forward.5} parent=1 // pred_check_branch
      %12 = sbr.rel (0) target = $region9
    $region8: #{rnnlm_forward.5} parent=1 // pred_region
      _
    $region9: #{rnnlm_forward.5} parent=1 // pred_fallthru
      _
    // Predicated region
    $region10: #{rnnlm_forward.5} parent=1 // pred_check
      _
    $region11: #{rnnlm_forward.5} parent=1 // pred_check_branch
      %14 = sbr.rel (0) target = $region13
    $region12: #{rnnlm_forward.5} parent=1 // pred_region
      _
    $region13: #{rnnlm_forward.5} parent=1 // pred_fallthru
      _
    %v16 = vld [vmem:[%s0] sm:$0xf]
    %v17 = vld [vmem:[%s0 + $0x4] sm:$0xf]
    %v18 = vld [vmem:[%s0 + $0x8] sm:$0xf]
    %v19 = vld [vmem:[%s0 + $0xc] sm:$0xf]
    %v20 = vld [vmem:[%s0 + $0x10] sm:$0xf]
    %v21 = vld [vmem:[%s0 + $0x14] sm:$0xf]
    %v22 = vld [vmem:[%s0 + $0x18] sm:$0xf]
    %v23 = vld [vmem:[%s0 + $0x1c] sm:$0xf]
    %v24 = vld [vmem:[%s1] sm:$0xff]
    %v25 = vld [vmem:[%s1 + $0x8] sm:$0xff]
    %v26 = vld [vmem:[%s1 + $0x10] sm:$0xff]
    %v27 = vld [vmem:[%s1 + $0x18] sm:$0xff]
    %v28 = vld [vmem:[%s1 + $0x20] sm:$0xff]
    %v29 = vld [vmem:[%s1 + $0x28] sm:$0xff]
    %v30 = vld [vmem:[%s1 + $0x30] sm:$0xff]
    %v31 = vld [vmem:[%s1 + $0x38] sm:$0xff]
    %v32 = vld [vmem:[%s1 + $0x40] sm:$0xff]
    %v33 = vld [vmem:[%s1 + $0x48] sm:$0xff]
    %v34 = vld [vmem:[%s1 + $0x50] sm:$0xff]
    %v35 = vld [vmem:[%s1 + $0x58] sm:$0xff]
    %v36 = vld [vmem:[%s1 + $0x60] sm:$0xff]
    %v37 = vld [vmem:[%s1 + $0x68] sm:$0xff]
    %v38 = vld [vmem:[%s1 + $0x70] sm:$0xff]
    %v39 = vld [vmem:[%s1 + $0x78] sm:$0xff]
    %v40 = vld [vmem:[%s2] sm:$0x3]
    %v42 = vlaneseq
    %v43 = vshrl.u32 %v42, 7
    %v44 = vsub.s32 0, %v43
    %v45 = vrot.slane %v40, %v44
    %v46 = vlaneseq
    %v47 = vshrl.u32 %v46, 7
    %v48 = vsub.s32 1, %v47
    %v49 = vrot.slane %v40, %v48
    %v60 = vunpack.c.l.b16 %v16
    %v61 = vunpack.c.l.b16 %v17
    %v62 = vunpack.c.l.b16 %v18
    %v63 = vunpack.c.l.b16 %v19
    %v64 = vunpack.c.l.b16 %v20
    %v65 = vunpack.c.l.b16 %v21
    %v66 = vunpack.c.l.b16 %v22
    %v67 = vunpack.c.l.b16 %v23
    %v68 = vpack.c.b16 %v61, %v60
    %v69 = vpack.c.b16 %v63, %v62
    %v70 = vpack.c.b16 %v65, %v64
    %v71 = vpack.c.b16 %v67, %v66
    %v92 = vunpack.c.l.b16 %v24
    %v93 = vunpack.c.h.b16 %v24
    %v94 = vunpack.c.l.b16 %v25
    %v95 = vunpack.c.h.b16 %v25
    %v96 = vunpack.c.l.b16 %v26
    %v97 = vunpack.c.h.b16 %v26
    %v98 = vunpack.c.l.b16 %v27
    %v99 = vunpack.c.h.b16 %v27
    %v100 = vunpack.c.l.b16 %v28
    %v101 = vunpack.c.h.b16 %v28
    %v102 = vunpack.c.l.b16 %v29
    %v103 = vunpack.c.h.b16 %v29
    %v104 = vunpack.c.l.b16 %v30
    %v105 = vunpack.c.h.b16 %v30
    %v106 = vunpack.c.l.b16 %v31
    %v107 = vunpack.c.h.b16 %v31
    %v108 = vunpack.c.l.b16 %v32
    %v109 = vunpack.c.h.b16 %v32
    %v110 = vunpack.c.l.b16 %v33
    %v111 = vunpack.c.h.b16 %v33
    %v112 = vunpack.c.l.b16 %v34
    %v113 = vunpack.c.h.b16 %v34
    %v114 = vunpack.c.l.b16 %v35
    %v115 = vunpack.c.h.b16 %v35
    %v116 = vunpack.c.l.b16 %v36
    %v117 = vunpack.c.h.b16 %v36
    %v118 = vunpack.c.l.b16 %v37
    %v119 = vunpack.c.h.b16 %v37
    %v120 = vunpack.c.l.b16 %v38
    %v121 = vunpack.c.h.b16 %v38
    %v122 = vunpack.c.l.b16 %v39
    %v123 = vunpack.c.h.b16 %v39
    %v124 = vpack.c.b16 %v94, %v92
    %v125 = vpack.c.b16 %v95, %v93
    %v126 = vpack.c.b16 %v98, %v96
    %v127 = vpack.c.b16 %v99, %v97
    %v128 = vpack.c.b16 %v102, %v100
    %v129 = vpack.c.b16 %v103, %v101
    %v130 = vpack.c.b16 %v106, %v104
    %v131 = vpack.c.b16 %v107, %v105
    %v132 = vpack.c.b16 %v110, %v108
    %v133 = vpack.c.b16 %v111, %v109
    %v134 = vpack.c.b16 %v114, %v112
    %v135 = vpack.c.b16 %v115, %v113
    %v136 = vpack.c.b16 %v118, %v116
    %v137 = vpack.c.b16 %v119, %v117
    %v138 = vpack.c.b16 %v122, %v120
    %v139 = vpack.c.b16 %v123, %v121
    %156 = vmatprep.subr.bf16.mxu0 %v139
    %157 = vmatpush1.bf16.msra.mxu0 %v138
    %158 = vmatprep.subr.bf16.mxu0 %v137
    %159 = vmatpush1.bf16.msra.mxu0 %v136
    %160 = vmatprep.subr.bf16.mxu0 %v135
    %161 = vmatpush1.bf16.msra.mxu0 %v134
    %162 = vmatprep.subr.bf16.mxu0 %v133
    %163 = vmatpush1.bf16.msra.mxu0 %v132
    %164 = vmatprep.subr.bf16.mxu0 %v131
    %165 = vmatpush1.bf16.msra.mxu0 %v130
    %166 = vmatprep.subr.bf16.mxu0 %v129
    %167 = vmatpush1.bf16.msra.mxu0 %v128
    %168 = vmatprep.subr.bf16.mxu0 %v127
    %169 = vmatpush1.bf16.msra.mxu0 %v126
    %170 = vmatprep.subr.bf16.mxu0 %v125
    %171 = vmatpush1.bf16.msra.mxu0 %v124
    %172 = vmatprep.subr.bf16.mxu0 0
    %173 = vmatpush2.bf16.msra.mxu0 0
    %174 = vmatprep.subr.bf16.mxu0 0
    %175 = vmatpush2.bf16.msra.mxu0 0
    %176 = vmatprep.subr.bf16.mxu0 0
    %177 = vmatpush2.bf16.msra.mxu0 0
    %178 = vmatprep.subr.bf16.mxu0 0
    %179 = vmatpush2.bf16.msra.mxu0 0
    %180 = vmatprep.subr.bf16.mxu0 0
    %181 = vmatpush2.bf16.msra.mxu0 0
    %182 = vmatprep.subr.bf16.mxu0 0
    %183 = vmatpush2.bf16.msra.mxu0 0
    %184 = vmatprep.subr.bf16.mxu0 0
    %185 = vmatpush2.bf16.msra.mxu0 0
    %186 = vmatprep.subr.bf16.mxu0 0
    %187 = vmatpush2.bf16.msra.mxu0 0
    %188 = vmatprep.mubr.bf16.mxu0 0
    %189 = vmatmul.mubr.bf16.gmra.mxu0 %v68
    %v190 = vpop.f32.mrf.mxu0
    %v191 = vadd.f32 %v45, %v190
    %v192 = vpop.f32.mrf.mxu0
    %v193 = vadd.f32 %v49, %v192
    %v194 = vpop.f32.mrf.mxu0
    %v195 = vadd.f32 %v45, %v194
    %v196 = vpop.f32.mrf.mxu0
    %v197 = vadd.f32 %v49, %v196
    %198 = vmatprep.mubr.bf16.mxu0 0
    %199 = vmatmul.mubr.bf16.gmra.mxu0 %v69
    %v200 = vpop.f32.mrf.mxu0
    %v201 = vadd.f32 %v45, %v200
    %v202 = vpop.f32.mrf.mxu0
    %v203 = vadd.f32 %v49, %v202
    %v204 = vpop.f32.mrf.mxu0
    %v205 = vadd.f32 %v45, %v204
    %v206 = vpop.f32.mrf.mxu0
    %v207 = vadd.f32 %v49, %v206
    %208 = vmatprep.mubr.bf16.mxu0 0
    %209 = vmatmul.mubr.bf16.gmra.mxu0 %v70
    %v210 = vpop.f32.mrf.mxu0
    %v211 = vadd.f32 %v45, %v210
    %v212 = vpop.f32.mrf.mxu0
    %v213 = vadd.f32 %v49, %v212
    %v214 = vpop.f32.mrf.mxu0
    %v215 = vadd.f32 %v45, %v214
    %v216 = vpop.f32.mrf.mxu0
    %v217 = vadd.f32 %v49, %v216
    %218 = vmatprep.mubr.bf16.mxu0 0
    %219 = vmatmul.mubr.bf16.gmra.mxu0 %v71
    %v220 = vpop.f32.mrf.mxu0
    %v221 = vadd.f32 %v45, %v220
    %v222 = vpop.f32.mrf.mxu0
    %v223 = vadd.f32 %v49, %v222
    %v224 = vpop.f32.mrf.mxu0
    %v225 = vadd.f32 %v45, %v224
    %v226 = vpop.f32.mrf.mxu0
    %v227 = vadd.f32 %v49, %v226
    %228 = vdwg.mxu0
    %229 = vst [vmem:[#allocation2] sm:$0xff] %v191
    %230 = vst [vmem:[#allocation2 + $0x8] sm:$0xff] %v193
    %231 = vst [vmem:[#allocation2 + $0x10] sm:$0xff] %v195
    %232 = vst [vmem:[#allocation2 + $0x18] sm:$0xff] %v197
    %233 = vst [vmem:[#allocation2 + $0x20] sm:$0xff] %v201
    %234 = vst [vmem:[#allocation2 + $0x28] sm:$0xff] %v203
    %235 = vst [vmem:[#allocation2 + $0x30] sm:$0xff] %v205
    %236 = vst [vmem:[#allocation2 + $0x38] sm:$0xff] %v207
    %237 = vst [vmem:[#allocation2 + $0x40] sm:$0xff] %v211
    %238 = vst [vmem:[#allocation2 + $0x48] sm:$0xff] %v213
    %239 = vst [vmem:[#allocation2 + $0x50] sm:$0xff] %v215
    %240 = vst [vmem:[#allocation2 + $0x58] sm:$0xff] %v217
    %241 = vst [vmem:[#allocation2 + $0x60] sm:$0xff] %v221
    %242 = vst [vmem:[#allocation2 + $0x68] sm:$0xff] %v223
    %243 = vst [vmem:[#allocation2 + $0x70] sm:$0xff] %v225
    %244 = vst [vmem:[#allocation2 + $0x78] sm:$0xff] %v227
    // Predicated region
    $region14: #{rnnlm_forward.5} parent=1 // pred_check
      _
    $region15: #{rnnlm_forward.5} parent=1 // pred_check_branch
      %246 = sbr.rel (0) target = $region17
    $region16: #{rnnlm_forward.5} parent=1 // pred_region
      %s248 = ssub.s32 2048, 2048
      %249 = vsyncadd [#allocation3], %s248
      %s250 = sshll.u32 [#allocation2], 4
      %s251 = int_to_ptr.vmem [resolvable:$true] %s250
      %256 = dma.vmem_to_hbm [thread:$0]  %s251, 2048, %s3, [#allocation3], 256, 256, 16
    $region17: #{rnnlm_forward.5} parent=1 // pred_fallthru
      _
    // Predicated region
    $region18: #{rnnlm_forward.5} parent=1 // pred_check
      _
    $region19: #{rnnlm_forward.5} parent=1 // pred_check_branch
      %258 = sbr.rel (0) target = $region21
    $region20: #{rnnlm_forward.5} parent=1 // pred_region
      %259 = dma.done [#allocation3], 2048
    $region21: #{rnnlm_forward.5} parent=1 // pred_fallthru
      _
    %260 = vsyncpa [#allocation3], 1

// kernel: rnnlm_forward.3
$region0: #{rnnlm_forward.3}
  #allocation0 [shape = 'u32[]', space=smem, size = 0x4, offset = 0x4, fixed_abs, tag = 'smem constant byte address 0x4 - core index']
  #allocation1 [shape = 'u32[144,128]{1,0:T(1,128)}', space=vmem, size = 0x12000, scoped, tag = 'internal scratch']
  %s0 = inlined_call_operand.vmem [shape: f32[128,128], index: 0, kind: input, shape index: {}]
  %s1 = inlined_call_operand.vmem [shape: bf16[128,512], index: 1, kind: input, shape index: {}]
  %s2 = inlined_call_operand.vmem [shape: f32[1,512], index: 2, kind: input, shape index: {}]
  %s3 = inlined_call_operand.vmem [shape: bf16[128,512], index: 3, kind: output, shape index: {}]
  %s4 = sld [smem:[#allocation0]]
  $region22: #{rnnlm_forward.3} parent=0
    _
  %s6 = ssub.s32 1, %s4
  %s7 = scalar_select 0, %s6, %s4
  // Predicated region
  $region2: #{rnnlm_forward.3} parent=0 // pred_check
    _
  $region3: #{rnnlm_forward.3} parent=0 // pred_check_branch
    %9 = sbr.rel (0) target = $region5
  $region4: #{rnnlm_forward.3} parent=0 // pred_region
    _
  $region5: #{rnnlm_forward.3} parent=0 // pred_fallthru
    _
  // Predicated region
  $region6: #{rnnlm_forward.3} parent=0 // pred_check
    _
  $region7: #{rnnlm_forward.3} parent=0 // pred_check_branch
    %11 = sbr.rel (0) target = $region9
  $region8: #{rnnlm_forward.3} parent=0 // pred_region
    _
  $region9: #{rnnlm_forward.3} parent=0 // pred_fallthru
    _
  // Predicated region
  $region10: #{rnnlm_forward.3} parent=0 // pred_check
    _
  $region11: #{rnnlm_forward.3} parent=0 // pred_check_branch
    %13 = sbr.rel (0) target = $region13
  $region12: #{rnnlm_forward.3} parent=0 // pred_region
    _
  $region13: #{rnnlm_forward.3} parent=0 // pred_fallthru
    _
  %v15 = vld [vmem:[%s0] sm:$0xff]
  %v16 = vld [vmem:[%s0 + $0x8] sm:$0xff]
  %v17 = vld [vmem:[%s0 + $0x10] sm:$0xff]
  %v18 = vld [vmem:[%s0 + $0x18] sm:$0xff]
  %v19 = vld [vmem:[%s0 + $0x20] sm:$0xff]
  %v20 = vld [vmem:[%s0 + $0x28] sm:$0xff]
  %v21 = vld [vmem:[%s0 + $0x30] sm:$0xff]
  %v22 = vld [vmem:[%s0 + $0x38] sm:$0xff]
  %v23 = vld [vmem:[%s0 + $0x40] sm:$0xff]
  %v24 = vld [vmem:[%s0 + $0x48] sm:$0xff]
  %v25 = vld [vmem:[%s0 + $0x50] sm:$0xff]
  %v26 = vld [vmem:[%s0 + $0x58] sm:$0xff]
  %v27 = vld [vmem:[%s0 + $0x60] sm:$0xff]
  %v28 = vld [vmem:[%s0 + $0x68] sm:$0xff]
  %v29 = vld [vmem:[%s0 + $0x70] sm:$0xff]
  %v30 = vld [vmem:[%s0 + $0x78] sm:$0xff]
  %v31 = vpack.c.bf16 %v16, %v15
  %v32 = vpack.c.bf16 %v18, %v17
  %v33 = vpack.c.bf16 %v20, %v19
  %v34 = vpack.c.bf16 %v22, %v21
  %v35 = vpack.c.bf16 %v24, %v23
  %v36 = vpack.c.bf16 %v26, %v25
  %v37 = vpack.c.bf16 %v28, %v27
  %v38 = vpack.c.bf16 %v30, %v29
  %v39 = vld [vmem:[%s1] sm:$0xff]
  %v40 = vld [vmem:[%s1 + $0x8] sm:$0xff]
  %v41 = vld [vmem:[%s1 + $0x10] sm:$0xff]
  %v42 = vld [vmem:[%s1 + $0x18] sm:$0xff]
  %v43 = vld [vmem:[%s1 + $0x20] sm:$0xff]
  %v44 = vld [vmem:[%s1 + $0x28] sm:$0xff]
  %v45 = vld [vmem:[%s1 + $0x30] sm:$0xff]
  %v46 = vld [vmem:[%s1 + $0x38] sm:$0xff]
  %v47 = vld [vmem:[%s1 + $0x40] sm:$0xff]
  %v48 = vld [vmem:[%s1 + $0x48] sm:$0xff]
  %v49 = vld [vmem:[%s1 + $0x50] sm:$0xff]
  %v50 = vld [vmem:[%s1 + $0x58] sm:$0xff]
  %v51 = vld [vmem:[%s1 + $0x60] sm:$0xff]
  %v52 = vld [vmem:[%s1 + $0x68] sm:$0xff]
  %v53 = vld [vmem:[%s1 + $0x70] sm:$0xff]
  %v54 = vld [vmem:[%s1 + $0x78] sm:$0xff]
  %v55 = vld [vmem:[%s1 + $0x80] sm:$0xff]
  %v56 = vld [vmem:[%s1 + $0x88] sm:$0xff]
  %v57 = vld [vmem:[%s1 + $0x90] sm:$0xff]
  %v58 = vld [vmem:[%s1 + $0x98] sm:$0xff]
  %v59 = vld [vmem:[%s1 + $0xa0] sm:$0xff]
  %v60 = vld [vmem:[%s1 + $0xa8] sm:$0xff]
  %v61 = vld [vmem:[%s1 + $0xb0] sm:$0xff]
  %v62 = vld [vmem:[%s1 + $0xb8] sm:$0xff]
  %v63 = vld [vmem:[%s1 + $0xc0] sm:$0xff]
  %v64 = vld [vmem:[%s1 + $0xc8] sm:$0xff]
  %v65 = vld [vmem:[%s1 + $0xd0] sm:$0xff]
  %v66 = vld [vmem:[%s1 + $0xd8] sm:$0xff]
  %v67 = vld [vmem:[%s1 + $0xe0] sm:$0xff]
  %v68 = vld [vmem:[%s1 + $0xe8] sm:$0xff]
  %v69 = vld [vmem:[%s1 + $0xf0] sm:$0xff]
  %v70 = vld [vmem:[%s1 + $0xf8] sm:$0xff]
  %v71 = vld [vmem:[%s2] sm:$0xf]
  %v73 = vlaneseq
  %v74 = vshrl.u32 %v73, 7
  %v75 = vsub.s32 0, %v74
  %v76 = vrot.slane %v71, %v75
  %v77 = vlaneseq
  %v78 = vshrl.u32 %v77, 7
  %v79 = vsub.s32 1, %v78
  %v80 = vrot.slane %v71, %v79
  %v81 = vlaneseq
  %v82 = vshrl.u32 %v81, 7
  %v83 = vsub.s32 2, %v82
  %v84 = vrot.slane %v71, %v83
  %v85 = vlaneseq
  %v86 = vshrl.u32 %v85, 7
  %v87 = vsub.s32 3, %v86
  %v88 = vrot.slane %v71, %v87
  %v125 = vunpack.c.l.b16 %v39
  %v126 = vunpack.c.h.b16 %v39
  %v127 = vunpack.c.l.b16 %v40
  %v128 = vunpack.c.h.b16 %v40
  %v129 = vunpack.c.l.b16 %v41
  %v130 = vunpack.c.h.b16 %v41
  %v131 = vunpack.c.l.b16 %v42
  %v132 = vunpack.c.h.b16 %v42
  %v133 = vunpack.c.l.b16 %v43
  %v134 = vunpack.c.h.b16 %v43
  %v135 = vunpack.c.l.b16 %v44
  %v136 = vunpack.c.h.b16 %v44
  %v137 = vunpack.c.l.b16 %v45
  %v138 = vunpack.c.h.b16 %v45
  %v139 = vunpack.c.l.b16 %v46
  %v140 = vunpack.c.h.b16 %v46
  %v141 = vunpack.c.l.b16 %v47
  %v142 = vunpack.c.h.b16 %v47
  %v143 = vunpack.c.l.b16 %v48
  %v144 = vunpack.c.h.b16 %v48
  %v145 = vunpack.c.l.b16 %v49
  %v146 = vunpack.c.h.b16 %v49
  %v147 = vunpack.c.l.b16 %v50
  %v148 = vunpack.c.h.b16 %v50
  %v149 = vunpack.c.l.b16 %v51
  %v150 = vunpack.c.h.b16 %v51
  %v151 = vunpack.c.l.b16 %v52
  %v152 = vunpack.c.h.b16 %v52
  %v153 = vunpack.c.l.b16 %v53
  %v154 = vunpack.c.h.b16 %v53
  %v155 = vunpack.c.l.b16 %v54
  %v156 = vunpack.c.h.b16 %v54
  %v157 = vunpack.c.l.b16 %v55
  %v158 = vunpack.c.h.b16 %v55
  %v159 = vunpack.c.l.b16 %v56
  %v160 = vunpack.c.h.b16 %v56
  %v161 = vunpack.c.l.b16 %v57
  %v162 = vunpack.c.h.b16 %v57
  %v163 = vunpack.c.l.b16 %v58
  %v164 = vunpack.c.h.b16 %v58
  %v165 = vunpack.c.l.b16 %v59
  %v166 = vunpack.c.h.b16 %v59
  %v167 = vunpack.c.l.b16 %v60
  %v168 = vunpack.c.h.b16 %v60
  %v169 = vunpack.c.l.b16 %v61
  %v170 = vunpack.c.h.b16 %v61
  %v171 = vunpack.c.l.b16 %v62
  %v172 = vunpack.c.h.b16 %v62
  %v173 = vunpack.c.l.b16 %v63
  %v174 = vunpack.c.h.b16 %v63
  %v175 = vunpack.c.l.b16 %v64
  %v176 = vunpack.c.h.b16 %v64
  %v177 = vunpack.c.l.b16 %v65
  %v178 = vunpack.c.h.b16 %v65
  %v179 = vunpack.c.l.b16 %v66
  %v180 = vunpack.c.h.b16 %v66
  %v181 = vunpack.c.l.b16 %v67
  %v182 = vunpack.c.h.b16 %v67
  %v183 = vunpack.c.l.b16 %v68
  %v184 = vunpack.c.h.b16 %v68
  %v185 = vunpack.c.l.b16 %v69
  %v186 = vunpack.c.h.b16 %v69
  %v187 = vunpack.c.l.b16 %v70
  %v188 = vunpack.c.h.b16 %v70
  %v189 = vpack.c.b16 %v129, %v125
  %v190 = vpack.c.b16 %v130, %v126
  %v191 = vpack.c.b16 %v131, %v127
  %v192 = vpack.c.b16 %v132, %v128
  %v193 = vpack.c.b16 %v137, %v133
  %v194 = vpack.c.b16 %v138, %v134
  %v195 = vpack.c.b16 %v139, %v135
  %v196 = vpack.c.b16 %v140, %v136
  %v197 = vpack.c.b16 %v145, %v141
  %v198 = vpack.c.b16 %v146, %v142
  %v199 = vpack.c.b16 %v147, %v143
  %v200 = vpack.c.b16 %v148, %v144
  %v201 = vpack.c.b16 %v153, %v149
  %v202 = vpack.c.b16 %v154, %v150
  %v203 = vpack.c.b16 %v155, %v151
  %v204 = vpack.c.b16 %v156, %v152
  %v205 = vpack.c.b16 %v161, %v157
  %v206 = vpack.c.b16 %v162, %v158
  %v207 = vpack.c.b16 %v163, %v159
  %v208 = vpack.c.b16 %v164, %v160
  %v209 = vpack.c.b16 %v169, %v165
  %v210 = vpack.c.b16 %v170, %v166
  %v211 = vpack.c.b16 %v171, %v167
  %v212 = vpack.c.b16 %v172, %v168
  %v213 = vpack.c.b16 %v177, %v173
  %v214 = vpack.c.b16 %v178, %v174
  %v215 = vpack.c.b16 %v179, %v175
  %v216 = vpack.c.b16 %v180, %v176
  %v217 = vpack.c.b16 %v185, %v181
  %v218 = vpack.c.b16 %v186, %v182
  %v219 = vpack.c.b16 %v187, %v183
  %v220 = vpack.c.b16 %v188, %v184
  %253 = vmatprep.subr.bf16.mxu0 %v218
  %254 = vmatpush1.bf16.msra.mxu0 %v217
  %255 = vmatprep.subr.bf16.mxu0 %v214
  %256 = vmatpush1.bf16.msra.mxu0 %v213
  %257 = vmatprep.subr.bf16.mxu0 %v210
  %258 = vmatpush1.bf16.msra.mxu0 %v209
  %259 = vmatprep.subr.bf16.mxu0 %v206
  %260 = vmatpush1.bf16.msra.mxu0 %v205
  %261 = vmatprep.subr.bf16.mxu0 %v202
  %262 = vmatpush1.bf16.msra.mxu0 %v201
  %263 = vmatprep.subr.bf16.mxu0 %v198
  %264 = vmatpush1.bf16.msra.mxu0 %v197
  %265 = vmatprep.subr.bf16.mxu0 %v194
  %266 = vmatpush1.bf16.msra.mxu0 %v193
  %267 = vmatprep.subr.bf16.mxu0 %v190
  %268 = vmatpush1.bf16.msra.mxu0 %v189
  %269 = vmatprep.subr.bf16.mxu0 0
  %270 = vmatpush2.bf16.msra.mxu0 0
  %271 = vmatprep.subr.bf16.mxu0 0
  %272 = vmatpush2.bf16.msra.mxu0 0
  %273 = vmatprep.subr.bf16.mxu0 0
  %274 = vmatpush2.bf16.msra.mxu0 0
  %275 = vmatprep.subr.bf16.mxu0 0
  %276 = vmatpush2.bf16.msra.mxu0 0
  %277 = vmatprep.subr.bf16.mxu0 0
  %278 = vmatpush2.bf16.msra.mxu0 0
  %279 = vmatprep.subr.bf16.mxu0 0
  %280 = vmatpush2.bf16.msra.mxu0 0
  %281 = vmatprep.subr.bf16.mxu0 0
  %282 = vmatpush2.bf16.msra.mxu0 0
  %283 = vmatprep.subr.bf16.mxu0 0
  %284 = vmatpush2.bf16.msra.mxu0 0
  %285 = vmatprep.mubr.bf16.mxu0 0
  %286 = vmatmul.mubr.bf16.gmra.mxu0 %v31
  %v287 = vpop.f32.mrf.mxu0
  %v288 = vadd.f32 %v76, %v287
  %v289 = vpop.f32.mrf.mxu0
  %v290 = vadd.f32 %v80, %v289
  %v291 = vpop.f32.mrf.mxu0
  %v292 = vadd.f32 %v76, %v291
  %v293 = vpop.f32.mrf.mxu0
  %v294 = vadd.f32 %v80, %v293
  %295 = vmatprep.mubr.bf16.mxu0 0
  %296 = vmatmul.mubr.bf16.gmra.mxu0 %v32
  %v297 = vpop.f32.mrf.mxu0
  %v298 = vadd.f32 %v76, %v297
  %v299 = vpop.f32.mrf.mxu0
  %v300 = vadd.f32 %v80, %v299
  %v301 = vpop.f32.mrf.mxu0
  %v302 = vadd.f32 %v76, %v301
  %v303 = vpop.f32.mrf.mxu0
  %v304 = vadd.f32 %v80, %v303
  %305 = vmatprep.mubr.bf16.mxu0 0
  %306 = vmatmul.mubr.bf16.gmra.mxu0 %v33
  %v307 = vpop.f32.mrf.mxu0
  %v308 = vadd.f32 %v76, %v307
  %v309 = vpop.f32.mrf.mxu0
  %v310 = vadd.f32 %v80, %v309
  %v311 = vpop.f32.mrf.mxu0
  %v312 = vadd.f32 %v76, %v311
  %v313 = vpop.f32.mrf.mxu0
  %v314 = vadd.f32 %v80, %v313
  %315 = vmatprep.mubr.bf16.mxu0 0
  %316 = vmatmul.mubr.bf16.gmra.mxu0 %v34
  %v317 = vpop.f32.mrf.mxu0
  %v318 = vadd.f32 %v76, %v317
  %v319 = vpop.f32.mrf.mxu0
  %v320 = vadd.f32 %v80, %v319
  %v321 = vpop.f32.mrf.mxu0
  %v322 = vadd.f32 %v76, %v321
  %v323 = vpop.f32.mrf.mxu0
  %v324 = vadd.f32 %v80, %v323
  %325 = vmatprep.mubr.bf16.mxu0 0
  %326 = vmatmul.mubr.bf16.gmra.mxu0 %v35
  %v327 = vpop.f32.mrf.mxu0
  %v328 = vadd.f32 %v76, %v327
  %v329 = vpop.f32.mrf.mxu0
  %v330 = vadd.f32 %v80, %v329
  %v331 = vpop.f32.mrf.mxu0
  %v332 = vadd.f32 %v76, %v331
  %v333 = vpop.f32.mrf.mxu0
  %v334 = vadd.f32 %v80, %v333
  %335 = vmatprep.mubr.bf16.mxu0 0
  %336 = vmatmul.mubr.bf16.gmra.mxu0 %v36
  %v337 = vpop.f32.mrf.mxu0
  %v338 = vadd.f32 %v76, %v337
  %v339 = vpop.f32.mrf.mxu0
  %v340 = vadd.f32 %v80, %v339
  %v341 = vpop.f32.mrf.mxu0
  %v342 = vadd.f32 %v76, %v341
  %v343 = vpop.f32.mrf.mxu0
  %v344 = vadd.f32 %v80, %v343
  %345 = vmatprep.mubr.bf16.mxu0 0
  %346 = vmatmul.mubr.bf16.gmra.mxu0 %v37
  %v347 = vpop.f32.mrf.mxu0
  %v348 = vadd.f32 %v76, %v347
  %v349 = vpop.f32.mrf.mxu0
  %v350 = vadd.f32 %v80, %v349
  %v351 = vpop.f32.mrf.mxu0
  %v352 = vadd.f32 %v76, %v351
  %v353 = vpop.f32.mrf.mxu0
  %v354 = vadd.f32 %v80, %v353
  %355 = vmatprep.mubr.bf16.mxu0 0
  %356 = vmatmul.mubr.bf16.gmra.mxu0 %v38
  %v357 = vpop.f32.mrf.mxu0
  %v358 = vadd.f32 %v76, %v357
  %v359 = vpop.f32.mrf.mxu0
  %v360 = vadd.f32 %v80, %v359
  %v361 = vpop.f32.mrf.mxu0
  %v362 = vadd.f32 %v76, %v361
  %v363 = vpop.f32.mrf.mxu0
  %v364 = vadd.f32 %v80, %v363
  %365 = vdwg.mxu0
  %366 = vmatprep.subr.bf16.mxu0 %v220
  %367 = vmatpush1.bf16.msra.mxu0 %v219
  %368 = vmatprep.subr.bf16.mxu0 %v216
  %369 = vmatpush1.bf16.msra.mxu0 %v215
  %370 = vmatprep.subr.bf16.mxu0 %v212
  %371 = vmatpush1.bf16.msra.mxu0 %v211
  %372 = vmatprep.subr.bf16.mxu0 %v208
  %373 = vmatpush1.bf16.msra.mxu0 %v207
  %374 = vmatprep.subr.bf16.mxu0 %v204
  %375 = vmatpush1.bf16.msra.mxu0 %v203
  %376 = vmatprep.subr.bf16.mxu0 %v200
  %377 = vmatpush1.bf16.msra.mxu0 %v199
  %378 = vmatprep.subr.bf16.mxu0 %v196
  %379 = vmatpush1.bf16.msra.mxu0 %v195
  %380 = vmatprep.subr.bf16.mxu0 %v192
  %381 = vmatpush1.bf16.msra.mxu0 %v191
  %382 = vmatprep.subr.bf16.mxu0 0
  %383 = vmatpush2.bf16.msra.mxu0 0
  %384 = vmatprep.subr.bf16.mxu0 0
  %385 = vmatpush2.bf16.msra.mxu0 0
  %386 = vmatprep.subr.bf16.mxu0 0
  %387 = vmatpush2.bf16.msra.mxu0 0
  %388 = vmatprep.subr.bf16.mxu0 0
  %389 = vmatpush2.bf16.msra.mxu0 0
  %390 = vmatprep.subr.bf16.mxu0 0
  %391 = vmatpush2.bf16.msra.mxu0 0
  %392 = vmatprep.subr.bf16.mxu0 0
  %393 = vmatpush2.bf16.msra.mxu0 0
  %394 = vmatprep.subr.bf16.mxu0 0
  %395 = vmatpush2.bf16.msra.mxu0 0
  %396 = vmatprep.subr.bf16.mxu0 0
  %397 = vmatpush2.bf16.msra.mxu0 0
  %398 = vmatprep.mubr.bf16.mxu0 0
  %399 = vmatmul.mubr.bf16.gmra.mxu0 %v31
  %v400 = vpop.f32.mrf.mxu0
  %v401 = vadd.f32 %v84, %v400
  %v402 = vpop.f32.mrf.mxu0
  %v403 = vadd.f32 %v88, %v402
  %v404 = vpop.f32.mrf.mxu0
  %v405 = vadd.f32 %v84, %v404
  %v406 = vpop.f32.mrf.mxu0
  %v407 = vadd.f32 %v88, %v406
  %408 = vmatprep.mubr.bf16.mxu0 0
  %409 = vmatmul.mubr.bf16.gmra.mxu0 %v32
  %v410 = vpop.f32.mrf.mxu0
  %v411 = vadd.f32 %v84, %v410
  %v412 = vpop.f32.mrf.mxu0
  %v413 = vadd.f32 %v88, %v412
  %v414 = vpop.f32.mrf.mxu0
  %v415 = vadd.f32 %v84, %v414
  %v416 = vpop.f32.mrf.mxu0
  %v417 = vadd.f32 %v88, %v416
  %418 = vmatprep.mubr.bf16.mxu0 0
  %419 = vmatmul.mubr.bf16.gmra.mxu0 %v33
  %v420 = vpop.f32.mrf.mxu0
  %v421 = vadd.f32 %v84, %v420
  %v422 = vpop.f32.mrf.mxu0
  %v423 = vadd.f32 %v88, %v422
  %v424 = vpop.f32.mrf.mxu0
  %v425 = vadd.f32 %v84, %v424
  %v426 = vpop.f32.mrf.mxu0
  %v427 = vadd.f32 %v88, %v426
  %428 = vmatprep.mubr.bf16.mxu0 0
  %429 = vmatmul.mubr.bf16.gmra.mxu0 %v34
  %v430 = vpop.f32.mrf.mxu0
  %v431 = vadd.f32 %v84, %v430
  %v432 = vpop.f32.mrf.mxu0
  %v433 = vadd.f32 %v88, %v432
  %v434 = vpop.f32.mrf.mxu0
  %v435 = vadd.f32 %v84, %v434
  %v436 = vpop.f32.mrf.mxu0
  %v437 = vadd.f32 %v88, %v436
  %438 = vmatprep.mubr.bf16.mxu0 0
  %439 = vmatmul.mubr.bf16.gmra.mxu0 %v35
  %v440 = vpop.f32.mrf.mxu0
  %v441 = vadd.f32 %v84, %v440
  %v442 = vpop.f32.mrf.mxu0
  %v443 = vadd.f32 %v88, %v442
  %v444 = vpop.f32.mrf.mxu0
  %v445 = vadd.f32 %v84, %v444
  %v446 = vpop.f32.mrf.mxu0
  %v447 = vadd.f32 %v88, %v446
  %448 = vmatprep.mubr.bf16.mxu0 0
  %449 = vmatmul.mubr.bf16.gmra.mxu0 %v36
  %v450 = vpop.f32.mrf.mxu0
  %v451 = vadd.f32 %v84, %v450
  %v452 = vpop.f32.mrf.mxu0
  %v453 = vadd.f32 %v88, %v452
  %v454 = vpop.f32.mrf.mxu0
  %v455 = vadd.f32 %v84, %v454
  %v456 = vpop.f32.mrf.mxu0
  %v457 = vadd.f32 %v88, %v456
  %458 = vmatprep.mubr.bf16.mxu0 0
  %459 = vmatmul.mubr.bf16.gmra.mxu0 %v37
  %v460 = vpop.f32.mrf.mxu0
  %v461 = vadd.f32 %v84, %v460
  %v462 = vpop.f32.mrf.mxu0
  %v463 = vadd.f32 %v88, %v462
  %v464 = vpop.f32.mrf.mxu0
  %v465 = vadd.f32 %v84, %v464
  %v466 = vpop.f32.mrf.mxu0
  %v467 = vadd.f32 %v88, %v466
  %468 = vmatprep.mubr.bf16.mxu0 0
  %469 = vmatmul.mubr.bf16.gmra.mxu0 %v38
  %v470 = vpop.f32.mrf.mxu0
  %v471 = vadd.f32 %v84, %v470
  %v472 = vpop.f32.mrf.mxu0
  %v473 = vadd.f32 %v88, %v472
  %v474 = vpop.f32.mrf.mxu0
  %v475 = vadd.f32 %v84, %v474
  %v476 = vpop.f32.mrf.mxu0
  %v477 = vadd.f32 %v88, %v476
  %478 = vdwg.mxu0
  %v479 = vpack.c.bf16 %v292, %v288
  %v480 = vpack.c.bf16 %v294, %v290
  %v481 = vpack.c.bf16 %v405, %v401
  %v482 = vpack.c.bf16 %v407, %v403
  %v483 = vpack.c.bf16 %v302, %v298
  %v484 = vpack.c.bf16 %v304, %v300
  %v485 = vpack.c.bf16 %v415, %v411
  %v486 = vpack.c.bf16 %v417, %v413
  %v487 = vpack.c.bf16 %v312, %v308
  %v488 = vpack.c.bf16 %v314, %v310
  %v489 = vpack.c.bf16 %v425, %v421
  %v490 = vpack.c.bf16 %v427, %v423
  %v491 = vpack.c.bf16 %v322, %v318
  %v492 = vpack.c.bf16 %v324, %v320
  %v493 = vpack.c.bf16 %v435, %v431
  %v494 = vpack.c.bf16 %v437, %v433
  %v495 = vpack.c.bf16 %v332, %v328
  %v496 = vpack.c.bf16 %v334, %v330
  %v497 = vpack.c.bf16 %v445, %v441
  %v498 = vpack.c.bf16 %v447, %v443
  %v499 = vpack.c.bf16 %v342, %v338
  %v500 = vpack.c.bf16 %v344, %v340
  %v501 = vpack.c.bf16 %v455, %v451
  %v502 = vpack.c.bf16 %v457, %v453
  %v503 = vpack.c.bf16 %v352, %v348
  %v504 = vpack.c.bf16 %v354, %v350
  %v505 = vpack.c.bf16 %v465, %v461
  %v506 = vpack.c.bf16 %v467, %v463
  %v507 = vpack.c.bf16 %v362, %v358
  %v508 = vpack.c.bf16 %v364, %v360
  %v509 = vpack.c.bf16 %v475, %v471
  %v510 = vpack.c.bf16 %v477, %v473
  %v543 = vunpack.c.l.b16 %v479
  %v544 = vunpack.c.l.b16 %v480
  %v545 = vunpack.c.l.b16 %v481
  %v546 = vunpack.c.l.b16 %v482
  %v547 = vunpack.c.h.b16 %v479
  %v548 = vunpack.c.h.b16 %v480
  %v549 = vunpack.c.h.b16 %v481
  %v550 = vunpack.c.h.b16 %v482
  %v551 = vunpack.c.l.b16 %v483
  %v552 = vunpack.c.l.b16 %v484
  %v553 = vunpack.c.l.b16 %v485
  %v554 = vunpack.c.l.b16 %v486
  %v555 = vunpack.c.h.b16 %v483
  %v556 = vunpack.c.h.b16 %v484
  %v557 = vunpack.c.h.b16 %v485
  %v558 = vunpack.c.h.b16 %v486
  %v559 = vunpack.c.l.b16 %v487
  %v560 = vunpack.c.l.b16 %v488
  %v561 = vunpack.c.l.b16 %v489
  %v562 = vunpack.c.l.b16 %v490
  %v563 = vunpack.c.h.b16 %v487
  %v564 = vunpack.c.h.b16 %v488
  %v565 = vunpack.c.h.b16 %v489
  %v566 = vunpack.c.h.b16 %v490
  %v567 = vunpack.c.l.b16 %v491
  %v568 = vunpack.c.l.b16 %v492
  %v569 = vunpack.c.l.b16 %v493
  %v570 = vunpack.c.l.b16 %v494
  %v571 = vunpack.c.h.b16 %v491
  %v572 = vunpack.c.h.b16 %v492
  %v573 = vunpack.c.h.b16 %v493
  %v574 = vunpack.c.h.b16 %v494
  %v575 = vunpack.c.l.b16 %v495
  %v576 = vunpack.c.l.b16 %v496
  %v577 = vunpack.c.l.b16 %v497
  %v578 = vunpack.c.l.b16 %v498
  %v579 = vunpack.c.h.b16 %v495
  %v580 = vunpack.c.h.b16 %v496
  %v581 = vunpack.c.h.b16 %v497
  %v582 = vunpack.c.h.b16 %v498
  %v583 = vunpack.c.l.b16 %v499
  %v584 = vunpack.c.l.b16 %v500
  %v585 = vunpack.c.l.b16 %v501
  %v586 = vunpack.c.l.b16 %v502
  %v587 = vunpack.c.h.b16 %v499
  %v588 = vunpack.c.h.b16 %v500
  %v589 = vunpack.c.h.b16 %v501
  %v590 = vunpack.c.h.b16 %v502
  %v591 = vunpack.c.l.b16 %v503
  %v592 = vunpack.c.l.b16 %v504
  %v593 = vunpack.c.l.b16 %v505
  %v594 = vunpack.c.l.b16 %v506
  %v595 = vunpack.c.h.b16 %v503
  %v596 = vunpack.c.h.b16 %v504
  %v597 = vunpack.c.h.b16 %v505
  %v598 = vunpack.c.h.b16 %v506
  %v599 = vunpack.c.l.b16 %v507
  %v600 = vunpack.c.l.b16 %v508
  %v601 = vunpack.c.l.b16 %v509
  %v602 = vunpack.c.l.b16 %v510
  %v603 = vunpack.c.h.b16 %v507
  %v604 = vunpack.c.h.b16 %v508
  %v605 = vunpack.c.h.b16 %v509
  %v606 = vunpack.c.h.b16 %v510
  %v607 = vpack.c.b16 %v544, %v543
  %v608 = vpack.c.b16 %v546, %v545
  %v609 = vpack.c.b16 %v548, %v547
  %v610 = vpack.c.b16 %v550, %v549
  %v611 = vpack.c.b16 %v552, %v551
  %v612 = vpack.c.b16 %v554, %v553
  %v613 = vpack.c.b16 %v556, %v555
  %v614 = vpack.c.b16 %v558, %v557
  %v615 = vpack.c.b16 %v560, %v559
  %v616 = vpack.c.b16 %v562, %v561
  %v617 = vpack.c.b16 %v564, %v563
  %v618 = vpack.c.b16 %v566, %v565
  %v619 = vpack.c.b16 %v568, %v567
  %v620 = vpack.c.b16 %v570, %v569
  %v621 = vpack.c.b16 %v572, %v571
  %v622 = vpack.c.b16 %v574, %v573
  %v623 = vpack.c.b16 %v576, %v575
  %v624 = vpack.c.b16 %v578, %v577
  %v625 = vpack.c.b16 %v580, %v579
  %v626 = vpack.c.b16 %v582, %v581
  %v627 = vpack.c.b16 %v584, %v583
  %v628 = vpack.c.b16 %v586, %v585
  %v629 = vpack.c.b16 %v588, %v587
  %v630 = vpack.c.b16 %v590, %v589
  %v631 = vpack.c.b16 %v592, %v591
  %v632 = vpack.c.b16 %v594, %v593
  %v633 = vpack.c.b16 %v596, %v595
  %v634 = vpack.c.b16 %v598, %v597
  %v635 = vpack.c.b16 %v600, %v599
  %v636 = vpack.c.b16 %v602, %v601
  %v637 = vpack.c.b16 %v604, %v603
  %v638 = vpack.c.b16 %v606, %v605
  %671 = vst [vmem:[%s3] sm:$0xff] %v607
  %672 = vst [vmem:[%s3 + $0x8] sm:$0xff] %v608
  %673 = vst [vmem:[%s3 + $0x10] sm:$0xff] %v609
  %674 = vst [vmem:[%s3 + $0x18] sm:$0xff] %v610
  %675 = vst [vmem:[%s3 + $0x20] sm:$0xff] %v611
  %676 = vst [vmem:[%s3 + $0x28] sm:$0xff] %v612
  %677 = vst [vmem:[%s3 + $0x30] sm:$0xff] %v613
  %678 = vst [vmem:[%s3 + $0x38] sm:$0xff] %v614
  %679 = vst [vmem:[%s3 + $0x40] sm:$0xff] %v615
  %680 = vst [vmem:[%s3 + $0x48] sm:$0xff] %v616
  %681 = vst [vmem:[%s3 + $0x50] sm:$0xff] %v617
  %682 = vst [vmem:[%s3 + $0x58] sm:$0xff] %v618
  %683 = vst [vmem:[%s3 + $0x60] sm:$0xff] %v619
  %684 = vst [vmem:[%s3 + $0x68] sm:$0xff] %v620
  %685 = vst [vmem:[%s3 + $0x70] sm:$0xff] %v621
  %686 = vst [vmem:[%s3 + $0x78] sm:$0xff] %v622
  %687 = vst [vmem:[%s3 + $0x80] sm:$0xff] %v623
  %688 = vst [vmem:[%s3 + $0x88] sm:$0xff] %v624
  %689 = vst [vmem:[%s3 + $0x90] sm:$0xff] %v625
  %690 = vst [vmem:[%s3 + $0x98] sm:$0xff] %v626
  %691 = vst [vmem:[%s3 + $0xa0] sm:$0xff] %v627
  %692 = vst [vmem:[%s3 + $0xa8] sm:$0xff] %v628
  %693 = vst [vmem:[%s3 + $0xb0] sm:$0xff] %v629
  %694 = vst [vmem:[%s3 + $0xb8] sm:$0xff] %v630
  %695 = vst [vmem:[%s3 + $0xc0] sm:$0xff] %v631
  %696 = vst [vmem:[%s3 + $0xc8] sm:$0xff] %v632
  %697 = vst [vmem:[%s3 + $0xd0] sm:$0xff] %v633
  %698 = vst [vmem:[%s3 + $0xd8] sm:$0xff] %v634
  %699 = vst [vmem:[%s3 + $0xe0] sm:$0xff] %v635
  %700 = vst [vmem:[%s3 + $0xe8] sm:$0xff] %v636
  %701 = vst [vmem:[%s3 + $0xf0] sm:$0xff] %v637
  %702 = vst [vmem:[%s3 + $0xf8] sm:$0xff] %v638
  // Predicated region
  $region14: #{rnnlm_forward.3} parent=0 // pred_check
    _
  $region15: #{rnnlm_forward.3} parent=0 // pred_check_branch
    %704 = sbr.rel (0) target = $region17
  $region16: #{rnnlm_forward.3} parent=0 // pred_region
    _
  $region17: #{rnnlm_forward.3} parent=0 // pred_fallthru
    _
  // Predicated region
  $region18: #{rnnlm_forward.3} parent=0 // pred_check
    _
  $region19: #{rnnlm_forward.3} parent=0 // pred_check_branch
    %706 = sbr.rel (0) target = $region21
  $region20: #{rnnlm_forward.3} parent=0 // pred_region
    _
  $region21: #{rnnlm_forward.3} parent=0 // pred_fallthru
    _

// kernel: rnnlm_forward.4
$region0: #{rnnlm_forward.4}
  #allocation0 [shape = 'u32[]', space=smem, size = 0x4, offset = 0x4, fixed_abs, tag = 'smem constant byte address 0x4 - core index']
  #allocation1 [shape = 'u32[144,128]{1,0:T(1,128)}', space=vmem, size = 0x12000, scoped, tag = 'internal scratch']
  #allocation2 [shape = 'f32[8,128]{1,0:T(8,128)}', space=vmem, size = 0x1000, scoped, tag = 'scratch operand']
  #allocation3 [shape = 'f32[8,128]{1,0:T(8,128)}', space=vmem, size = 0x1000, scoped, tag = 'scratch operand']
  %s0 = inlined_call_operand.vmem [shape: bf16[8,16,512], index: 0, kind: input, shape index: {}]
  %s1 = inlined_call_operand.vmem [shape: bf16[128,512], index: 1, kind: input, shape index: {}]
  %s2 = inlined_call_operand.vmem [shape: bf16[8,16,128], index: 2, kind: output, shape index: {}]
  %s3 = sld [smem:[#allocation0]]
  $region22: #{rnnlm_forward.4} parent=0
    _
  %s5 = ssub.s32 1, %s3
  %s6 = scalar_select 0, %s5, %s3
  // Predicated region
  $region2: #{rnnlm_forward.4} parent=0 // pred_check
    _
  $region3: #{rnnlm_forward.4} parent=0 // pred_check_branch
    %8 = sbr.rel (0) target = $region5
  $region4: #{rnnlm_forward.4} parent=0 // pred_region
    _
  $region5: #{rnnlm_forward.4} parent=0 // pred_fallthru
    _
  // Predicated region
  $region6: #{rnnlm_forward.4} parent=0 // pred_check
    _
  $region7: #{rnnlm_forward.4} parent=0 // pred_check_branch
    %10 = sbr.rel (0) target = $region9
  $region8: #{rnnlm_forward.4} parent=0 // pred_region
    _
  $region9: #{rnnlm_forward.4} parent=0 // pred_fallthru
    _
  %p12 = scmp.eq.s32.totalorder 0, 0
  // Predicated region
  $region10: #{rnnlm_forward.4} parent=0 // pred_check
    %p13 = pneg %p12
  $region11: #{rnnlm_forward.4} parent=0 // pred_check_branch
    %15 = sbr.rel (%p13) target = $region13
  $region12: #{rnnlm_forward.4} parent=0 // pred_region
    %16 = vst [vmem:[#allocation2] sm:$0xff] 0.0
    %17 = vst [vmem:[#allocation3] sm:$0xff] 0.0
  $region13: #{rnnlm_forward.4} parent=0 // pred_fallthru
    _
  %v18 = vld [vmem:[%s1] sm:$0xff]
  %v19 = vld [vmem:[%s1 + $0x8] sm:$0xff]
  %v20 = vld [vmem:[%s1 + $0x10] sm:$0xff]
  %v21 = vld [vmem:[%s1 + $0x18] sm:$0xff]
  %v22 = vld [vmem:[%s1 + $0x20] sm:$0xff]
  %v23 = vld [vmem:[%s1 + $0x28] sm:$0xff]
  %v24 = vld [vmem:[%s1 + $0x30] sm:$0xff]
  %v25 = vld [vmem:[%s1 + $0x38] sm:$0xff]
  %v26 = vld [vmem:[%s1 + $0x40] sm:$0xff]
  %v27 = vld [vmem:[%s1 + $0x48] sm:$0xff]
  %v28 = vld [vmem:[%s1 + $0x50] sm:$0xff]
  %v29 = vld [vmem:[%s1 + $0x58] sm:$0xff]
  %v30 = vld [vmem:[%s1 + $0x60] sm:$0xff]
  %v31 = vld [vmem:[%s1 + $0x68] sm:$0xff]
  %v32 = vld [vmem:[%s1 + $0x70] sm:$0xff]
  %v33 = vld [vmem:[%s1 + $0x78] sm:$0xff]
  %v34 = vld [vmem:[%s1 + $0x80] sm:$0xff]
  %v35 = vld [vmem:[%s1 + $0x88] sm:$0xff]
  %v36 = vld [vmem:[%s1 + $0x90] sm:$0xff]
  %v37 = vld [vmem:[%s1 + $0x98] sm:$0xff]
  %v38 = vld [vmem:[%s1 + $0xa0] sm:$0xff]
  %v39 = vld [vmem:[%s1 + $0xa8] sm:$0xff]
  %v40 = vld [vmem:[%s1 + $0xb0] sm:$0xff]
  %v41 = vld [vmem:[%s1 + $0xb8] sm:$0xff]
  %v42 = vld [vmem:[%s1 + $0xc0] sm:$0xff]
  %v43 = vld [vmem:[%s1 + $0xc8] sm:$0xff]
  %v44 = vld [vmem:[%s1 + $0xd0] sm:$0xff]
  %v45 = vld [vmem:[%s1 + $0xd8] sm:$0xff]
  %v46 = vld [vmem:[%s1 + $0xe0] sm:$0xff]
  %v47 = vld [vmem:[%s1 + $0xe8] sm:$0xff]
  %v48 = vld [vmem:[%s1 + $0xf0] sm:$0xff]
  %v49 = vld [vmem:[%s1 + $0xf8] sm:$0xff]
  %v50 = vld [vmem:[#allocation2] sm:$0xff]
  %v51 = vld [vmem:[#allocation3] sm:$0xff]
  %v52 = vld [vmem:[%s0] sm:$0x11]
  %v53 = vld [vmem:[%s0 + $0x8] sm:$0x11]
  %v54 = vld [vmem:[%s0 + $0x20] sm:$0x11]
  %v55 = vld [vmem:[%s0 + $0x28] sm:$0x11]
  %v56 = vld [vmem:[%s0 + $0x40] sm:$0x11]
  %v57 = vld [vmem:[%s0 + $0x48] sm:$0x11]
  %v58 = vld [vmem:[%s0 + $0x60] sm:$0x11]
  %v59 = vld [vmem:[%s0 + $0x68] sm:$0x11]
  %v60 = vld [vmem:[%s0 + $0x80] sm:$0x11]
  %v61 = vld [vmem:[%s0 + $0x88] sm:$0x11]
  %v62 = vld [vmem:[%s0 + $0xa0] sm:$0x11]
  %v63 = vld [vmem:[%s0 + $0xa8] sm:$0x11]
  %v64 = vld [vmem:[%s0 + $0xc0] sm:$0x11]
  %v65 = vld [vmem:[%s0 + $0xc8] sm:$0x11]
  %v66 = vld [vmem:[%s0 + $0xe0] sm:$0x11]
  %v67 = vld [vmem:[%s0 + $0xe8] sm:$0x11]
  %v68 = vunpack.c.l.bf16 %v52
  %v69 = vunpack.c.h.bf16 %v52
  %v70 = vunpack.c.l.bf16 %v53
  %v71 = vunpack.c.h.bf16 %v53
  %v72 = vunpack.c.l.bf16 %v54
  %v73 = vunpack.c.h.bf16 %v54
  %v74 = vunpack.c.l.bf16 %v55
  %v75 = vunpack.c.h.bf16 %v55
  %v76 = vunpack.c.l.bf16 %v56
  %v77 = vunpack.c.h.bf16 %v56
  %v78 = vunpack.c.l.bf16 %v57
  %v79 = vunpack.c.h.bf16 %v57
  %v80 = vunpack.c.l.bf16 %v58
  %v81 = vunpack.c.h.bf16 %v58
  %v82 = vunpack.c.l.bf16 %v59
  %v83 = vunpack.c.h.bf16 %v59
  %v84 = vunpack.c.l.bf16 %v60
  %v85 = vunpack.c.h.bf16 %v60
  %v86 = vunpack.c.l.bf16 %v61
  %v87 = vunpack.c.h.bf16 %v61
  %v88 = vunpack.c.l.bf16 %v62
  %v89 = vunpack.c.h.bf16 %v62
  %v90 = vunpack.c.l.bf16 %v63
  %v91 = vunpack.c.h.bf16 %v63
  %v92 = vunpack.c.l.bf16 %v64
  %v93 = vunpack.c.h.bf16 %v64
  %v94 = vunpack.c.l.bf16 %v65
  %v95 = vunpack.c.h.bf16 %v65
  %v96 = vunpack.c.l.bf16 %v66
  %v97 = vunpack.c.h.bf16 %v66
  %v98 = vunpack.c.l.bf16 %v67
  %v99 = vunpack.c.h.bf16 %v67
  %v100 = vpack.c.bf16 %v50, %v50
  %v133 = vunpack.c.l.b16 %v18
  %v134 = vunpack.c.h.b16 %v18
  %v135 = vunpack.c.l.b16 %v19
  %v136 = vunpack.c.h.b16 %v19
  %v137 = vunpack.c.l.b16 %v20
  %v138 = vunpack.c.h.b16 %v20
  %v139 = vunpack.c.l.b16 %v21
  %v140 = vunpack.c.h.b16 %v21
  %v141 = vunpack.c.l.b16 %v22
  %v142 = vunpack.c.h.b16 %v22
  %v143 = vunpack.c.l.b16 %v23
  %v144 = vunpack.c.h.b16 %v23
  %v145 = vunpack.c.l.b16 %v24
  %v146 = vunpack.c.h.b16 %v24
  %v147 = vunpack.c.l.b16 %v25
  %v148 = vunpack.c.h.b16 %v25
  %v149 = vunpack.c.l.b16 %v26
  %v150 = vunpack.c.h.b16 %v26
  %v151 = vunpack.c.l.b16 %v27
  %v152 = vunpack.c.h.b16 %v27
  %v153 = vunpack.c.l.b16 %v28
  %v154 = vunpack.c.h.b16 %v28
  %v155 = vunpack.c.l.b16 %v29
  %v156 = vunpack.c.h.b16 %v29
  %v157 = vunpack.c.l.b16 %v30
  %v158 = vunpack.c.h.b16 %v30
  %v159 = vunpack.c.l.b16 %v31
  %v160 = vunpack.c.h.b16 %v31
  %v161 = vunpack.c.l.b16 %v32
  %v162 = vunpack.c.h.b16 %v32
  %v163 = vunpack.c.l.b16 %v33
  %v164 = vunpack.c.h.b16 %v33
  %v165 = vunpack.c.l.b16 %v34
  %v166 = vunpack.c.h.b16 %v34
  %v167 = vunpack.c.l.b16 %v35
  %v168 = vunpack.c.h.b16 %v35
  %v169 = vunpack.c.l.b16 %v36
  %v170 = vunpack.c.h.b16 %v36
  %v171 = vunpack.c.l.b16 %v37
  %v172 = vunpack.c.h.b16 %v37
  %v173 = vunpack.c.l.b16 %v38
  %v174 = vunpack.c.h.b16 %v38
  %v175 = vunpack.c.l.b16 %v39
  %v176 = vunpack.c.h.b16 %v39
  %v177 = vunpack.c.l.b16 %v40
  %v178 = vunpack.c.h.b16 %v40
  %v179 = vunpack.c.l.b16 %v41
  %v180 = vunpack.c.h.b16 %v41
  %v181 = vunpack.c.l.b16 %v42
  %v182 = vunpack.c.h.b16 %v42
  %v183 = vunpack.c.l.b16 %v43
  %v184 = vunpack.c.h.b16 %v43
  %v185 = vunpack.c.l.b16 %v44
  %v186 = vunpack.c.h.b16 %v44
  %v187 = vunpack.c.l.b16 %v45
  %v188 = vunpack.c.h.b16 %v45
  %v189 = vunpack.c.l.b16 %v46
  %v190 = vunpack.c.h.b16 %v46
  %v191 = vunpack.c.l.b16 %v47
  %v192 = vunpack.c.h.b16 %v47
  %v193 = vunpack.c.l.b16 %v48
  %v194 = vunpack.c.h.b16 %v48
  %v195 = vunpack.c.l.b16 %v49
  %v196 = vunpack.c.h.b16 %v49
  %v197 = vpack.c.b16 %v137, %v133
  %v198 = vpack.c.b16 %v138, %v134
  %v199 = vpack.c.b16 %v139, %v135
  %v200 = vpack.c.b16 %v140, %v136
  %v201 = vpack.c.b16 %v145, %v141
  %v202 = vpack.c.b16 %v146, %v142
  %v203 = vpack.c.b16 %v147, %v143
  %v204 = vpack.c.b16 %v148, %v144
  %v205 = vpack.c.b16 %v153, %v149
  %v206 = vpack.c.b16 %v154, %v150
  %v207 = vpack.c.b16 %v155, %v151
  %v208 = vpack.c.b16 %v156, %v152
  %v209 = vpack.c.b16 %v161, %v157
  %v210 = vpack.c.b16 %v162, %v158
  %v211 = vpack.c.b16 %v163, %v159
  %v212 = vpack.c.b16 %v164, %v160
  %v213 = vpack.c.b16 %v169, %v165
  %v214 = vpack.c.b16 %v170, %v166
  %v215 = vpack.c.b16 %v171, %v167
  %v216 = vpack.c.b16 %v172, %v168
  %v217 = vpack.c.b16 %v177, %v173
  %v218 = vpack.c.b16 %v178, %v174
  %v219 = vpack.c.b16 %v179, %v175
  %v220 = vpack.c.b16 %v180, %v176
  %v221 = vpack.c.b16 %v185, %v181
  %v222 = vpack.c.b16 %v186, %v182
  %v223 = vpack.c.b16 %v187, %v183
  %v224 = vpack.c.b16 %v188, %v184
  %v225 = vpack.c.b16 %v193, %v189
  %v226 = vpack.c.b16 %v194, %v190
  %v227 = vpack.c.b16 %v195, %v191
  %v228 = vpack.c.b16 %v196, %v192
  %261 = vmatprep.subr.bf16.mxu0 %v226
  %262 = vmatpush1.bf16.msra.mxu0 %v225
  %263 = vmatprep.subr.bf16.mxu0 %v222
  %264 = vmatpush1.bf16.msra.mxu0 %v221
  %265 = vmatprep.subr.bf16.mxu0 %v218
  %266 = vmatpush1.bf16.msra.mxu0 %v217
  %267 = vmatprep.subr.bf16.mxu0 %v214
  %268 = vmatpush1.bf16.msra.mxu0 %v213
  %269 = vmatprep.subr.bf16.mxu0 %v210
  %270 = vmatpush1.bf16.msra.mxu0 %v209
  %271 = vmatprep.subr.bf16.mxu0 %v206
  %272 = vmatpush1.bf16.msra.mxu0 %v205
  %273 = vmatprep.subr.bf16.mxu0 %v202
  %274 = vmatpush1.bf16.msra.mxu0 %v201
  %275 = vmatprep.subr.bf16.mxu0 %v198
  %276 = vmatpush1.bf16.msra.mxu0 %v197
  %277 = vmatprep.subr.bf16.mxu0 0
  %278 = vmatpush2.bf16.msra.mxu0 0
  %279 = vmatprep.subr.bf16.mxu0 0
  %280 = vmatpush2.bf16.msra.mxu0 0
  %281 = vmatprep.subr.bf16.mxu0 0
  %282 = vmatpush2.bf16.msra.mxu0 0
  %283 = vmatprep.subr.bf16.mxu0 0
  %284 = vmatpush2.bf16.msra.mxu0 0
  %285 = vmatprep.subr.bf16.mxu0 0
  %286 = vmatpush2.bf16.msra.mxu0 0
  %287 = vmatprep.subr.bf16.mxu0 0
  %288 = vmatpush2.bf16.msra.mxu0 0
  %289 = vmatprep.subr.bf16.mxu0 0
  %290 = vmatpush2.bf16.msra.mxu0 0
  %291 = vmatprep.subr.bf16.mxu0 0
  %292 = vmatpush2.bf16.msra.mxu0 0
  %293 = vmatprep.mubr.bf16.mxu0 0
  %294 = vmatmul.mubr.bf16.gmra.mxu0 %v100
  %v295 = vpop.f32.mrf.mxu0
  %v296 = vadd.f32 0.0, %v295
  %v297 = vpop.f32.mrf.mxu0
  %v298 = vadd.f32 0.0, %v297
  %v299 = vpop.f32.mrf.mxu0
  %v300 = vpop.f32.mrf.mxu0
  %301 = vdwg.mxu0
  %302 = vmatprep.subr.bf16.mxu0 %v228
  %303 = vmatpush1.bf16.msra.mxu0 %v227
  %304 = vmatprep.subr.bf16.mxu0 %v224
  %305 = vmatpush1.bf16.msra.mxu0 %v223
  %306 = vmatprep.subr.bf16.mxu0 %v220
  %307 = vmatpush1.bf16.msra.mxu0 %v219
  %308 = vmatprep.subr.bf16.mxu0 %v216
  %309 = vmatpush1.bf16.msra.mxu0 %v215
  %310 = vmatprep.subr.bf16.mxu0 %v212
  %311 = vmatpush1.bf16.msra.mxu0 %v211
  %312 = vmatprep.subr.bf16.mxu0 %v208
  %313 = vmatpush1.bf16.msra.mxu0 %v207
  %314 = vmatprep.subr.bf16.mxu0 %v204
  %315 = vmatpush1.bf16.msra.mxu0 %v203
  %316 = vmatprep.subr.bf16.mxu0 %v200
  %317 = vmatpush1.bf16.msra.mxu0 %v199
  %318 = vmatprep.subr.bf16.mxu0 0
  %319 = vmatpush2.bf16.msra.mxu0 0
  %320 = vmatprep.subr.bf16.mxu0 0
  %321 = vmatpush2.bf16.msra.mxu0 0
  %322 = vmatprep.subr.bf16.mxu0 0
  %323 = vmatpush2.bf16.msra.mxu0 0
  %324 = vmatprep.subr.bf16.mxu0 0
  %325 = vmatpush2.bf16.msra.mxu0 0
  %326 = vmatprep.subr.bf16.mxu0 0
  %327 = vmatpush2.bf16.msra.mxu0 0
  %328 = vmatprep.subr.bf16.mxu0 0
  %329 = vmatpush2.bf16.msra.mxu0 0
  %330 = vmatprep.subr.bf16.mxu0 0
  %331 = vmatpush2.bf16.msra.mxu0 0
  %332 = vmatprep.subr.bf16.mxu0 0
  %333 = vmatpush2.bf16.msra.mxu0 0
  %334 = vmatprep.mubr.bf16.mxu0 0
  %335 = vmatmul.mubr.bf16.gmra.mxu0 %v100
  %v336 = vpop.f32.mrf.mxu0
  %v337 = vadd.f32 0.0, %v336
  %v338 = vpop.f32.mrf.mxu0
  %v339 = vadd.f32 0.0, %v338
  %v340 = vpop.f32.mrf.mxu0
  %v341 = vpop.f32.mrf.mxu0
  %342 = vdwg.mxu0
  %v347 = vrot.slane %v296, 1
  %v348 = vrot.slane %v298, 1
  %v349 = vrot.slane %v337, 1
  %v350 = vrot.slane %v339, 1
  %v351 = vrot.slane %v296, 2
  %v352 = vrot.slane %v298, 2
  %v353 = vrot.slane %v337, 2
  %v354 = vrot.slane %v339, 2
  %v355 = vrot.slane %v296, 3
  %v356 = vrot.slane %v298, 3
  %v357 = vrot.slane %v337, 3
  %v358 = vrot.slane %v339, 3
  %v359 = vrot.slane %v296, 4
  %v360 = vrot.slane %v298, 4
  %v361 = vrot.slane %v337, 4
  %v362 = vrot.slane %v339, 4
  %v363 = vrot.slane %v296, 5
  %v364 = vrot.slane %v298, 5
  %v365 = vrot.slane %v337, 5
  %v366 = vrot.slane %v339, 5
  %v367 = vrot.slane %v296, 6
  %v368 = vrot.slane %v298, 6
  %v369 = vrot.slane %v337, 6
  %v370 = vrot.slane %v339, 6
  %v371 = vrot.slane %v296, 7
  %v372 = vrot.slane %v298, 7
  %v373 = vrot.slane %v337, 7
  %v374 = vrot.slane %v339, 7
  %v407 = vadd.f32 %v68, %v296
  %v408 = vadd.f32 %v69, %v298
  %v409 = vadd.f32 %v70, %v337
  %v410 = vadd.f32 %v71, %v339
  %v411 = vadd.f32 %v72, %v347
  %v412 = vadd.f32 %v73, %v348
  %v413 = vadd.f32 %v74, %v349
  %v414 = vadd.f32 %v75, %v350
  %v415 = vadd.f32 %v76, %v351
  %v416 = vadd.f32 %v77, %v352
  %v417 = vadd.f32 %v78, %v353
  %v418 = vadd.f32 %v79, %v354
  %v419 = vadd.f32 %v80, %v355
  %v420 = vadd.f32 %v81, %v356
  %v421 = vadd.f32 %v82, %v357
  %v422 = vadd.f32 %v83, %v358
  %v423 = vadd.f32 %v84, %v359
  %v424 = vadd.f32 %v85, %v360
  %v425 = vadd.f32 %v86, %v361
  %v426 = vadd.f32 %v87, %v362
  %v427 = vadd.f32 %v88, %v363
  %v428 = vadd.f32 %v89, %v364
  %v429 = vadd.f32 %v90, %v365
  %v430 = vadd.f32 %v91, %v366
  %v431 = vadd.f32 %v92, %v367
  %v432 = vadd.f32 %v93, %v368
  %v433 = vadd.f32 %v94, %v369
  %v434 = vadd.f32 %v95, %v370
  %v435 = vadd.f32 %v96, %v371
  %v436 = vadd.f32 %v97, %v372
  %v437 = vadd.f32 %v98, %v373
  %v438 = vadd.f32 %v99, %v374
  %v439 = vxor.u32 %v407, 2147483648
  %v440 = vxor.u32 %v408, 2147483648
  %v441 = vxor.u32 %v411, 2147483648
  %v442 = vxor.u32 %v412, 2147483648
  %v443 = vxor.u32 %v415, 2147483648
  %v444 = vxor.u32 %v416, 2147483648
  %v445 = vxor.u32 %v419, 2147483648
  %v446 = vxor.u32 %v420, 2147483648
  %v447 = vxor.u32 %v423, 2147483648
  %v448 = vxor.u32 %v424, 2147483648
  %v449 = vxor.u32 %v427, 2147483648
  %v450 = vxor.u32 %v428, 2147483648
  %v451 = vxor.u32 %v431, 2147483648
  %v452 = vxor.u32 %v432, 2147483648
  %v453 = vxor.u32 %v435, 2147483648
  %v454 = vxor.u32 %v436, 2147483648
  %v455 = vmul.f32 %v439, 1.442695
  %v456 = vpow.pop %v455
  %v457 = vmul.f32 %v440, 1.442695
  %v458 = vpow.pop %v457
  %v459 = vmul.f32 %v441, 1.442695
  %v460 = vpow.pop %v459
  %v461 = vmul.f32 %v442, 1.442695
  %v462 = vpow.pop %v461
  %v463 = vmul.f32 %v443, 1.442695
  %v464 = vpow.pop %v463
  %v465 = vmul.f32 %v444, 1.442695
  %v466 = vpow.pop %v465
  %v467 = vmul.f32 %v445, 1.442695
  %v468 = vpow.pop %v467
  %v469 = vmul.f32 %v446, 1.442695
  %v470 = vpow.pop %v469
  %v471 = vmul.f32 %v447, 1.442695
  %v472 = vpow.pop %v471
  %v473 = vmul.f32 %v448, 1.442695
  %v474 = vpow.pop %v473
  %v475 = vmul.f32 %v449, 1.442695
  %v476 = vpow.pop %v475
  %v477 = vmul.f32 %v450, 1.442695
  %v478 = vpow.pop %v477
  %v479 = vmul.f32 %v451, 1.442695
  %v480 = vpow.pop %v479
  %v481 = vmul.f32 %v452, 1.442695
  %v482 = vpow.pop %v481
  %v483 = vmul.f32 %v453, 1.442695
  %v484 = vpow.pop %v483
  %v485 = vmul.f32 %v454, 1.442695
  %v486 = vpow.pop %v485
  %v487 = vadd.f32 %v456, 1.0
  %v488 = vadd.f32 %v458, 1.0
  %v489 = vadd.f32 %v460, 1.0
  %v490 = vadd.f32 %v462, 1.0
  %v491 = vadd.f32 %v464, 1.0
  %v492 = vadd.f32 %v466, 1.0
  %v493 = vadd.f32 %v468, 1.0
  %v494 = vadd.f32 %v470, 1.0
  %v495 = vadd.f32 %v472, 1.0
  %v496 = vadd.f32 %v474, 1.0
  %v497 = vadd.f32 %v476, 1.0
  %v498 = vadd.f32 %v478, 1.0
  %v499 = vadd.f32 %v480, 1.0
  %v500 = vadd.f32 %v482, 1.0
  %v501 = vadd.f32 %v484, 1.0
  %v502 = vadd.f32 %v486, 1.0
  %v503 = vrcp.pop %v487
  %v504 = vmul.f32 1.0, %v503
  %v505 = vrcp.pop %v488
  %v506 = vmul.f32 1.0, %v505
  %v507 = vrcp.pop %v489
  %v508 = vmul.f32 1.0, %v507
  %v509 = vrcp.pop %v490
  %v510 = vmul.f32 1.0, %v509
  %v511 = vrcp.pop %v491
  %v512 = vmul.f32 1.0, %v511
  %v513 = vrcp.pop %v492
  %v514 = vmul.f32 1.0, %v513
  %v515 = vrcp.pop %v493
  %v516 = vmul.f32 1.0, %v515
  %v517 = vrcp.pop %v494
  %v518 = vmul.f32 1.0, %v517
  %v519 = vrcp.pop %v495
  %v520 = vmul.f32 1.0, %v519
  %v521 = vrcp.pop %v496
  %v522 = vmul.f32 1.0, %v521
  %v523 = vrcp.pop %v497
  %v524 = vmul.f32 1.0, %v523
  %v525 = vrcp.pop %v498
  %v526 = vmul.f32 1.0, %v525
  %v527 = vrcp.pop %v499
  %v528 = vmul.f32 1.0, %v527
  %v529 = vrcp.pop %v500
  %v530 = vmul.f32 1.0, %v529
  %v531 = vrcp.pop %v501
  %v532 = vmul.f32 1.0, %v531
  %v533 = vrcp.pop %v502
  %v534 = vmul.f32 1.0, %v533
  %v535 = vtanh.pop %v409
  %v536 = vtanh.pop %v413
  %v537 = vtanh.pop %v417
  %v538 = vtanh.pop %v421
  %v539 = vtanh.pop %v425
  %v540 = vtanh.pop %v429
  %v541 = vtanh.pop %v433
  %v542 = vtanh.pop %v437
  %v543 = vxor.u32 %v410, 2147483648
  %v544 = vxor.u32 %v414, 2147483648
  %v545 = vxor.u32 %v418, 2147483648
  %v546 = vxor.u32 %v422, 2147483648
  %v547 = vxor.u32 %v426, 2147483648
  %v548 = vxor.u32 %v430, 2147483648
  %v549 = vxor.u32 %v434, 2147483648
  %v550 = vxor.u32 %v438, 2147483648
  %v551 = vmul.f32 %v543, 1.442695
  %v552 = vpow.pop %v551
  %v553 = vmul.f32 %v544, 1.442695
  %v554 = vpow.pop %v553
  %v555 = vmul.f32 %v545, 1.442695
  %v556 = vpow.pop %v555
  %v557 = vmul.f32 %v546, 1.442695
  %v558 = vpow.pop %v557
  %v559 = vmul.f32 %v547, 1.442695
  %v560 = vpow.pop %v559
  %v561 = vmul.f32 %v548, 1.442695
  %v562 = vpow.pop %v561
  %v563 = vmul.f32 %v549, 1.442695
  %v564 = vpow.pop %v563
  %v565 = vmul.f32 %v550, 1.442695
  %v566 = vpow.pop %v565
  %v567 = vadd.f32 %v552, 1.0
  %v568 = vadd.f32 %v554, 1.0
  %v569 = vadd.f32 %v556, 1.0
  %v570 = vadd.f32 %v558, 1.0
  %v571 = vadd.f32 %v560, 1.0
  %v572 = vadd.f32 %v562, 1.0
  %v573 = vadd.f32 %v564, 1.0
  %v574 = vadd.f32 %v566, 1.0
  %v575 = vrcp.pop %v567
  %v576 = vmul.f32 1.0, %v575
  %v577 = vrcp.pop %v568
  %v578 = vmul.f32 1.0, %v577
  %v579 = vrcp.pop %v569
  %v580 = vmul.f32 1.0, %v579
  %v581 = vrcp.pop %v570
  %v582 = vmul.f32 1.0, %v581
  %v583 = vrcp.pop %v571
  %v584 = vmul.f32 1.0, %v583
  %v585 = vrcp.pop %v572
  %v586 = vmul.f32 1.0, %v585
  %v587 = vrcp.pop %v573
  %v588 = vmul.f32 1.0, %v587
  %v589 = vrcp.pop %v574
  %v590 = vmul.f32 1.0, %v589
  %v592 = vrot.slane %v51, 1
  %v593 = vrot.slane %v51, 2
  %v594 = vrot.slane %v51, 3
  %v595 = vrot.slane %v51, 4
  %v596 = vrot.slane %v51, 5
  %v597 = vrot.slane %v51, 6
  %v598 = vrot.slane %v51, 7
  %v607 = vmul.f32 %v506, %v51
  %v608 = vmul.f32 %v510, %v592
  %v609 = vmul.f32 %v514, %v593
  %v610 = vmul.f32 %v518, %v594
  %v611 = vmul.f32 %v522, %v595
  %v612 = vmul.f32 %v526, %v596
  %v613 = vmul.f32 %v530, %v597
  %v614 = vmul.f32 %v534, %v598
  %v615 = vmul.f32 %v504, %v535
  %v616 = vmul.f32 %v508, %v536
  %v617 = vmul.f32 %v512, %v537
  %v618 = vmul.f32 %v516, %v538
  %v619 = vmul.f32 %v520, %v539
  %v620 = vmul.f32 %v524, %v540
  %v621 = vmul.f32 %v528, %v541
  %v622 = vmul.f32 %v532, %v542
  %v623 = vadd.f32 %v607, %v615
  %v624 = vadd.f32 %v608, %v616
  %v625 = vadd.f32 %v609, %v617
  %v626 = vadd.f32 %v610, %v618
  %v627 = vadd.f32 %v611, %v619
  %v628 = vadd.f32 %v612, %v620
  %v629 = vadd.f32 %v613, %v621
  %v630 = vadd.f32 %v614, %v622
  %v631 = vtanh.pop %v623
  %v632 = vtanh.pop %v624
  %v633 = vtanh.pop %v625
  %v634 = vtanh.pop %v626
  %v635 = vtanh.pop %v627
  %v636 = vtanh.pop %v628
  %v637 = vtanh.pop %v629
  %v638 = vtanh.pop %v630
  %v639 = vmul.f32 %v576, %v631
  %v640 = vmul.f32 %v578, %v632
  %v641 = vmul.f32 %v580, %v633
  %v642 = vmul.f32 %v582, %v634
  %v643 = vmul.f32 %v584, %v635
  %v644 = vmul.f32 %v586, %v636
  %v645 = vmul.f32 %v588, %v637
  %v646 = vmul.f32 %v590, %v638
  %v647 = vpack.c.bf16 %v639, %v639
  %v648 = vpack.c.bf16 %v640, %v640
  %v649 = vpack.c.bf16 %v641, %v641
  %v650 = vpack.c.bf16 %v642, %v642
  %v651 = vpack.c.bf16 %v643, %v643
  %v652 = vpack.c.bf16 %v644, %v644
  %v653 = vpack.c.bf16 %v645, %v645
  %v654 = vpack.c.bf16 %v646, %v646
  %vm655 = vcmask 1040384
  %vm656 = vsmask.f32 256
  %vm657 = vmand %vm655, %vm656
  %v658 = vld [vmem:[%s2] sm:$0x1]
  %v659 = vsel %vm657, %v647, %v658
  %660 = vst [vmem:[%s2] sm:$0x1] %v659
  %v661 = vld [vmem:[%s2 + $0x8] sm:$0x1]
  %v662 = vsel %vm657, %v648, %v661
  %663 = vst [vmem:[%s2 + $0x8] sm:$0x1] %v662
  %v664 = vld [vmem:[%s2 + $0x10] sm:$0x1]
  %v665 = vsel %vm657, %v649, %v664
  %666 = vst [vmem:[%s2 + $0x10] sm:$0x1] %v665
  %v667 = vld [vmem:[%s2 + $0x18] sm:$0x1]
  %v668 = vsel %vm657, %v650, %v667
  %669 = vst [vmem:[%s2 + $0x18] sm:$0x1] %v668
  %v670 = vld [vmem:[%s2 + $0x20] sm:$0x1]
  %v671 = vsel %vm657, %v651, %v670
  %672 = vst [vmem:[%s2 + $0x20] sm:$0x1] %v671
  %v673 = vld [vmem:[%s2 + $0x28] sm:$0x1]
  %v674 = vsel %vm657, %v652, %v673
  %675 = vst [vmem:[%s2 + $0x28] sm:$0x1] %v674
  %v676 = vld [vmem:[%s2 + $0x30] sm:$0x1]
  %v677 = vsel %vm657, %v653, %v676
  %678 = vst [vmem:[%s2 + $0x30] sm:$0x1] %v677
  %v679 = vld [vmem:[%s2 + $0x38] sm:$0x1]
  %v680 = vsel %vm657, %v654, %v679
  %681 = vst [vmem:[%s2 + $0x38] sm:$0x1] %v680
  %v682 = vld [vmem:[%s0] sm:$0x11]
  %v683 = vld [vmem:[%s0 + $0x8] sm:$0x11]
  %v684 = vld [vmem:[%s0 + $0x20] sm:$0x11]
  %v685 = vld [vmem:[%s0 + $0x28] sm:$0x11]
  %v686 = vld [vmem:[%s0 + $0x40] sm:$0x11]
  %v687 = vld [vmem:[%s0 + $0x48] sm:$0x11]
  %v688 = vld [vmem:[%s0 + $0x60] sm:$0x11]
  %v689 = vld [vmem:[%s0 + $0x68] sm:$0x11]
  %v690 = vld [vmem:[%s0 + $0x80] sm:$0x11]
  %v691 = vld [vmem:[%s0 + $0x88] sm:$0x11]
  %v692 = vld [vmem:[%s0 + $0xa0] sm:$0x11]
  %v693 = vld [vmem:[%s0 + $0xa8] sm:$0x11]
  %v694 = vld [vmem:[%s0 + $0xc0] sm:$0x11]
  %v695 = vld [vmem:[%s0 + $0xc8] sm:$0x11]
  %v696 = vld [vmem:[%s0 + $0xe0] sm:$0x11]
  %v697 = vld [vmem:[%s0 + $0xe8] sm:$0x11]
  %v698 = vunpack.c.l.bf16 %v682
  %v699 = vunpack.c.h.bf16 %v682
  %v700 = vunpack.c.l.bf16 %v683
  %v701 = vunpack.c.h.bf16 %v683
  %v702 = vunpack.c.l.bf16 %v684
  %v703 = vunpack.c.h.bf16 %v684
  %v704 = vunpack.c.l.bf16 %v685
  %v705 = vunpack.c.h.bf16 %v685
  %v706 = vunpack.c.l.bf16 %v686
  %v707 = vunpack.c.h.bf16 %v686
  %v708 = vunpack.c.l.bf16 %v687
  %v709 = vunpack.c.h.bf16 %v687
  %v710 = vunpack.c.l.bf16 %v688
  %v711 = vunpack.c.h.bf16 %v688
  %v712 = vunpack.c.l.bf16 %v689
  %v713 = vunpack.c.h.bf16 %v689
  %v714 = vunpack.c.l.bf16 %v690
  %v715 = vunpack.c.h.bf16 %v690
  %v716 = vunpack.c.l.bf16 %v691
  %v717 = vunpack.c.h.bf16 %v691
  %v718 = vunpack.c.l.bf16 %v692
  %v719 = vunpack.c.h.bf16 %v692
  %v720 = vunpack.c.l.bf16 %v693
  %v721 = vunpack.c.h.bf16 %v693
  %v722 = vunpack.c.l.bf16 %v694
  %v723 = vunpack.c.h.bf16 %v694
  %v724 = vunpack.c.l.bf16 %v695
  %v725 = vunpack.c.h.bf16 %v695
  %v726 = vunpack.c.l.bf16 %v696
  %v727 = vunpack.c.h.bf16 %v696
  %v728 = vunpack.c.l.bf16 %v697
  %v729 = vunpack.c.h.bf16 %v697
  %v738 = vunpack.c.l.b16 %v647
  %v739 = vunpack.c.l.b16 %v648
  %v740 = vunpack.c.l.b16 %v649
  %v741 = vunpack.c.l.b16 %v650
  %v742 = vunpack.c.l.b16 %v651
  %v743 = vunpack.c.l.b16 %v652
  %v744 = vunpack.c.l.b16 %v653
  %v745 = vunpack.c.l.b16 %v654
  %v746 = vrot.slane %v739, 7
  %vm747 = vcmask 1041409
  %v748 = vsel %vm747, %v746, %v738
  %v749 = vrot.slane %v740, 6
  %vm750 = vcmask 1042434
  %v751 = vsel %vm750, %v749, %v748
  %v752 = vrot.slane %v741, 5
  %vm753 = vcmask 1043459
  %v754 = vsel %vm753, %v752, %v751
  %v755 = vrot.slane %v742, 4
  %vm756 = vcmask 1044484
  %v757 = vsel %vm756, %v755, %v754
  %v758 = vrot.slane %v743, 3
  %vm759 = vcmask 1045509
  %v760 = vsel %vm759, %v758, %v757
  %v761 = vrot.slane %v744, 2
  %vm762 = vcmask 1046534
  %v763 = vsel %vm762, %v761, %v760
  %v764 = vrot.slane %v745, 1
  %vm765 = vcmask 1047559
  %v766 = vsel %vm765, %v764, %v763
  %v767 = vpack.c.b16 %v766, %v766
  %769 = vmatprep.subr.bf16.mxu0 %v226
  %770 = vmatpush1.bf16.msra.mxu0 %v225
  %771 = vmatprep.subr.bf16.mxu0 %v222
  %772 = vmatpush1.bf16.msra.mxu0 %v221
  %773 = vmatprep.subr.bf16.mxu0 %v218
  %774 = vmatpush1.bf16.msra.mxu0 %v217
  %775 = vmatprep.subr.bf16.mxu0 %v214
  %776 = vmatpush1.bf16.msra.mxu0 %v213
  %777 = vmatprep.subr.bf16.mxu0 %v210
  %778 = vmatpush1.bf16.msra.mxu0 %v209
  %779 = vmatprep.subr.bf16.mxu0 %v206
  %780 = vmatpush1.bf16.msra.mxu0 %v205
  %781 = vmatprep.subr.bf16.mxu0 %v202
  %782 = vmatpush1.bf16.msra.mxu0 %v201
  %783 = vmatprep.subr.bf16.mxu0 %v198
  %784 = vmatpush1.bf16.msra.mxu0 %v197
  %785 = vmatprep.subr.bf16.mxu0 0
  %786 = vmatpush2.bf16.msra.mxu0 0
  %787 = vmatprep.subr.bf16.mxu0 0
  %788 = vmatpush2.bf16.msra.mxu0 0
  %789 = vmatprep.subr.bf16.mxu0 0
  %790 = vmatpush2.bf16.msra.mxu0 0
  %791 = vmatprep.subr.bf16.mxu0 0
  %792 = vmatpush2.bf16.msra.mxu0 0
  %793 = vmatprep.subr.bf16.mxu0 0
  %794 = vmatpush2.bf16.msra.mxu0 0
  %795 = vmatprep.subr.bf16.mxu0 0
  %796 = vmatpush2.bf16.msra.mxu0 0
  %797 = vmatprep.subr.bf16.mxu0 0
  %798 = vmatpush2.bf16.msra.mxu0 0
  %799 = vmatprep.subr.bf16.mxu0 0
  %800 = vmatpush2.bf16.msra.mxu0 0
  %801 = vmatprep.mubr.bf16.mxu0 0
  %802 = vmatmul.mubr.bf16.gmra.mxu0 %v767
  %v803 = vpop.f32.mrf.mxu0
  %v804 = vadd.f32 0.0, %v803
  %v805 = vpop.f32.mrf.mxu0
  %v806 = vadd.f32 0.0, %v805
  %v807 = vpop.f32.mrf.mxu0
  %v808 = vpop.f32.mrf.mxu0
  %809 = vdwg.mxu0
  %810 = vmatprep.subr.bf16.mxu0 %v228
  %811 = vmatpush1.bf16.msra.mxu0 %v227
  %812 = vmatprep.subr.bf16.mxu0 %v224
  %813 = vmatpush1.bf16.msra.mxu0 %v223
  %814 = vmatprep.subr.bf16.mxu0 %v220
  %815 = vmatpush1.bf16.msra.mxu0 %v219
  %816 = vmatprep.subr.bf16.mxu0 %v216
  %817 = vmatpush1.bf16.msra.mxu0 %v215
  %818 = vmatprep.subr.bf16.mxu0 %v212
  %819 = vmatpush1.bf16.msra.mxu0 %v211
  %820 = vmatprep.subr.bf16.mxu0 %v208
  %821 = vmatpush1.bf16.msra.mxu0 %v207
  %822 = vmatprep.subr.bf16.mxu0 %v204
  %823 = vmatpush1.bf16.msra.mxu0 %v203
  %824 = vmatprep.subr.bf16.mxu0 %v200
  %825 = vmatpush1.bf16.msra.mxu0 %v199
  %826 = vmatprep.subr.bf16.mxu0 0
  %827 = vmatpush2.bf16.msra.mxu0 0
  %828 = vmatprep.subr.bf16.mxu0 0
  %829 = vmatpush2.bf16.msra.mxu0 0
  %830 = vmatprep.subr.bf16.mxu0 0
  %831 = vmatpush2.bf16.msra.mxu0 0
  %832 = vmatprep.subr.bf16.mxu0 0
  %833 = vmatpush2.bf16.msra.mxu0 0
  %834 = vmatprep.subr.bf16.mxu0 0
  %835 = vmatpush2.bf16.msra.mxu0 0
  %836 = vmatprep.subr.bf16.mxu0 0
  %837 = vmatpush2.bf16.msra.mxu0 0
  %838 = vmatprep.subr.bf16.mxu0 0
  %839 = vmatpush2.bf16.msra.mxu0 0
  %840 = vmatprep.subr.bf16.mxu0 0
  %841 = vmatpush2.bf16.msra.mxu0 0
  %842 = vmatprep.mubr.bf16.mxu0 0
  %843 = vmatmul.mubr.bf16.gmra.mxu0 %v767
  %v844 = vpop.f32.mrf.mxu0
  %v845 = vadd.f32 0.0, %v844
  %v846 = vpop.f32.mrf.mxu0
  %v847 = vadd.f32 0.0, %v846
  %v848 = vpop.f32.mrf.mxu0
  %v849 = vpop.f32.mrf.mxu0
  %850 = vdwg.mxu0
  %v855 = vrot.slane %v804, 7
  %v856 = vrot.slane %v806, 7
  %v857 = vrot.slane %v845, 7
  %v858 = vrot.slane %v847, 7
  %v859 = vrot.slane %v804, 1
  %v860 = vrot.slane %v806, 1
  %v861 = vrot.slane %v845, 1
  %v862 = vrot.slane %v847, 1
  %v863 = vrot.slane %v804, 2
  %v864 = vrot.slane %v806, 2
  %v865 = vrot.slane %v845, 2
  %v866 = vrot.slane %v847, 2
  %v867 = vrot.slane %v804, 3
  %v868 = vrot.slane %v806, 3
  %v869 = vrot.slane %v845, 3
  %v870 = vrot.slane %v847, 3
  %v871 = vrot.slane %v804, 4
  %v872 = vrot.slane %v806, 4
  %v873 = vrot.slane %v845, 4
  %v874 = vrot.slane %v847, 4
  %v875 = vrot.slane %v804, 5
  %v876 = vrot.slane %v806, 5
  %v877 = vrot.slane %v845, 5
  %v878 = vrot.slane %v847, 5
  %v879 = vrot.slane %v804, 6
  %v880 = vrot.slane %v806, 6
  %v881 = vrot.slane %v845, 6
  %v882 = vrot.slane %v847, 6
  %v915 = vadd.f32 %v698, %v855
  %v916 = vadd.f32 %v699, %v856
  %v917 = vadd.f32 %v700, %v857
  %v918 = vadd.f32 %v701, %v858
  %v919 = vadd.f32 %v702, %v804
  %v920 = vadd.f32 %v703, %v806
  %v921 = vadd.f32 %v704, %v845
  %v922 = vadd.f32 %v705, %v847
  %v923 = vadd.f32 %v706, %v859
  %v924 = vadd.f32 %v707, %v860
  %v925 = vadd.f32 %v708, %v861
  %v926 = vadd.f32 %v709, %v862
  %v927 = vadd.f32 %v710, %v863
  %v928 = vadd.f32 %v711, %v864
  %v929 = vadd.f32 %v712, %v865
  %v930 = vadd.f32 %v713, %v866
  %v931 = vadd.f32 %v714, %v867
  %v932 = vadd.f32 %v715, %v868
  %v933 = vadd.f32 %v716, %v869
  %v934 = vadd.f32 %v717, %v870
  %v935 = vadd.f32 %v718, %v871
  %v936 = vadd.f32 %v719, %v872
  %v937 = vadd.f32 %v720, %v873
  %v938 = vadd.f32 %v721, %v874
  %v939 = vadd.f32 %v722, %v875
  %v940 = vadd.f32 %v723, %v876
  %v941 = vadd.f32 %v724, %v877
  %v942 = vadd.f32 %v725, %v878
  %v943 = vadd.f32 %v726, %v879
  %v944 = vadd.f32 %v727, %v880
  %v945 = vadd.f32 %v728, %v881
  %v946 = vadd.f32 %v729, %v882
  %v947 = vxor.u32 %v915, 2147483648
  %v948 = vxor.u32 %v916, 2147483648
  %v949 = vxor.u32 %v919, 2147483648
  %v950 = vxor.u32 %v920, 2147483648
  %v951 = vxor.u32 %v923, 2147483648
  %v952 = vxor.u32 %v924, 2147483648
  %v953 = vxor.u32 %v927, 2147483648
  %v954 = vxor.u32 %v928, 2147483648
  %v955 = vxor.u32 %v931, 2147483648
  %v956 = vxor.u32 %v932, 2147483648
  %v957 = vxor.u32 %v935, 2147483648
  %v958 = vxor.u32 %v936, 2147483648
  %v959 = vxor.u32 %v939, 2147483648
  %v960 = vxor.u32 %v940, 2147483648
  %v961 = vxor.u32 %v943, 2147483648
  %v962 = vxor.u32 %v944, 2147483648
  %v963 = vmul.f32 %v947, 1.442695
  %v964 = vpow.pop %v963
  %v965 = vmul.f32 %v948, 1.442695
  %v966 = vpow.pop %v965
  %v967 = vmul.f32 %v949, 1.442695
  %v968 = vpow.pop %v967
  %v969 = vmul.f32 %v950, 1.442695
  %v970 = vpow.pop %v969
  %v971 = vmul.f32 %v951, 1.442695
  %v972 = vpow.pop %v971
  %v973 = vmul.f32 %v952, 1.442695
  %v974 = vpow.pop %v973
  %v975 = vmul.f32 %v953, 1.442695
  %v976 = vpow.pop %v975
  %v977 = vmul.f32 %v954, 1.442695
  %v978 = vpow.pop %v977
  %v979 = vmul.f32 %v955, 1.442695
  %v980 = vpow.pop %v979
  %v981 = vmul.f32 %v956, 1.442695
  %v982 = vpow.pop %v981
  %v983 = vmul.f32 %v957, 1.442695
  %v984 = vpow.pop %v983
  %v985 = vmul.f32 %v958, 1.442695
  %v986 = vpow.pop %v985
  %v987 = vmul.f32 %v959, 1.442695
  %v988 = vpow.pop %v987
  %v989 = vmul.f32 %v960, 1.442695
  %v990 = vpow.pop %v989
  %v991 = vmul.f32 %v961, 1.442695
  %v992 = vpow.pop %v991
  %v993 = vmul.f32 %v962, 1.442695
  %v994 = vpow.pop %v993
  %v995 = vadd.f32 %v964, 1.0
  %v996 = vadd.f32 %v966, 1.0
  %v997 = vadd.f32 %v968, 1.0
  %v998 = vadd.f32 %v970, 1.0
  %v999 = vadd.f32 %v972, 1.0
  %v1000 = vadd.f32 %v974, 1.0
  %v1001 = vadd.f32 %v976, 1.0
  %v1002 = vadd.f32 %v978, 1.0
  %v1003 = vadd.f32 %v980, 1.0
  %v1004 = vadd.f32 %v982, 1.0
  %v1005 = vadd.f32 %v984, 1.0
  %v1006 = vadd.f32 %v986, 1.0
  %v1007 = vadd.f32 %v988, 1.0
  %v1008 = vadd.f32 %v990, 1.0
  %v1009 = vadd.f32 %v992, 1.0
  %v1010 = vadd.f32 %v994, 1.0
  %v1011 = vrcp.pop %v995
  %v1012 = vmul.f32 1.0, %v1011
  %v1013 = vrcp.pop %v996
  %v1014 = vmul.f32 1.0, %v1013
  %v1015 = vrcp.pop %v997
  %v1016 = vmul.f32 1.0, %v1015
  %v1017 = vrcp.pop %v998
  %v1018 = vmul.f32 1.0, %v1017
  %v1019 = vrcp.pop %v999
  %v1020 = vmul.f32 1.0, %v1019
  %v1021 = vrcp.pop %v1000
  %v1022 = vmul.f32 1.0, %v1021
  %v1023 = vrcp.pop %v1001
  %v1024 = vmul.f32 1.0, %v1023
  %v1025 = vrcp.pop %v1002
  %v1026 = vmul.f32 1.0, %v1025
  %v1027 = vrcp.pop %v1003
  %v1028 = vmul.f32 1.0, %v1027
  %v1029 = vrcp.pop %v1004
  %v1030 = vmul.f32 1.0, %v1029
  %v1031 = vrcp.pop %v1005
  %v1032 = vmul.f32 1.0, %v1031
  %v1033 = vrcp.pop %v1006
  %v1034 = vmul.f32 1.0, %v1033
  %v1035 = vrcp.pop %v1007
  %v1036 = vmul.f32 1.0, %v1035
  %v1037 = vrcp.pop %v1008
  %v1038 = vmul.f32 1.0, %v1037
  %v1039 = vrcp.pop %v1009
  %v1040 = vmul.f32 1.0, %v1039
  %v1041 = vrcp.pop %v1010
  %v1042 = vmul.f32 1.0, %v1041
  %v1043 = vtanh.pop %v917
  %v1044 = vtanh.pop %v921
  %v1045 = vtanh.pop %v925
  %v1046 = vtanh.pop %v929
  %v1047 = vtanh.pop %v933
  %v1048 = vtanh.pop %v937
  %v1049 = vtanh.pop %v941
  %v1050 = vtanh.pop %v945
  %v1051 = vxor.u32 %v918, 2147483648
  %v1052 = vxor.u32 %v922, 2147483648
  %v1053 = vxor.u32 %v926, 2147483648
  %v1054 = vxor.u32 %v930, 2147483648
  %v1055 = vxor.u32 %v934, 2147483648
  %v1056 = vxor.u32 %v938, 2147483648
  %v1057 = vxor.u32 %v942, 2147483648
  %v1058 = vxor.u32 %v946, 2147483648
  %v1059 = vmul.f32 %v1051, 1.442695
  %v1060 = vpow.pop %v1059
  %v1061 = vmul.f32 %v1052, 1.442695
  %v1062 = vpow.pop %v1061
  %v1063 = vmul.f32 %v1053, 1.442695
  %v1064 = vpow.pop %v1063
  %v1065 = vmul.f32 %v1054, 1.442695
  %v1066 = vpow.pop %v1065
  %v1067 = vmul.f32 %v1055, 1.442695
  %v1068 = vpow.pop %v1067
  %v1069 = vmul.f32 %v1056, 1.442695
  %v1070 = vpow.pop %v1069
  %v1071 = vmul.f32 %v1057, 1.442695
  %v1072 = vpow.pop %v1071
  %v1073 = vmul.f32 %v1058, 1.442695
  %v1074 = vpow.pop %v1073
  %v1075 = vadd.f32 %v1060, 1.0
  %v1076 = vadd.f32 %v1062, 1.0
  %v1077 = vadd.f32 %v1064, 1.0
  %v1078 = vadd.f32 %v1066, 1.0
  %v1079 = vadd.f32 %v1068, 1.0
  %v1080 = vadd.f32 %v1070, 1.0
  %v1081 = vadd.f32 %v1072, 1.0
  %v1082 = vadd.f32 %v1074, 1.0
  %v1083 = vrcp.pop %v1075
  %v1084 = vmul.f32 1.0, %v1083
  %v1085 = vrcp.pop %v1076
  %v1086 = vmul.f32 1.0, %v1085
  %v1087 = vrcp.pop %v1077
  %v1088 = vmul.f32 1.0, %v1087
  %v1089 = vrcp.pop %v1078
  %v1090 = vmul.f32 1.0, %v1089
  %v1091 = vrcp.pop %v1079
  %v1092 = vmul.f32 1.0, %v1091
  %v1093 = vrcp.pop %v1080
  %v1094 = vmul.f32 1.0, %v1093
  %v1095 = vrcp.pop %v1081
  %v1096 = vmul.f32 1.0, %v1095
  %v1097 = vrcp.pop %v1082
  %v1098 = vmul.f32 1.0, %v1097
  %v1107 = vrot.slane %v623, 7
  %v1108 = vrot.slane %v624, 7
  %v1109 = vrot.slane %v625, 7
  %v1110 = vrot.slane %v626, 7
  %v1111 = vrot.slane %v627, 7
  %v1112 = vrot.slane %v628, 7
  %v1113 = vrot.slane %v629, 7
  %v1114 = vrot.slane %v630, 7
  %v1123 = vmul.f32 %v1014, %v1107
  %v1124 = vmul.f32 %v1018, %v1108
  %v1125 = vmul.f32 %v1022, %v1109
  %v1126 = vmul.f32 %v1026, %v1110
  %v1127 = vmul.f32 %v1030, %v1111
  %v1128 = vmul.f32 %v1034, %v1112
  %v1129 = vmul.f32 %v1038, %v1113
  %v1130 = vmul.f32 %v1042, %v1114
  %v1131 = vmul.f32 %v1012, %v1043
  %v1132 = vmul.f32 %v1016, %v1044
  %v1133 = vmul.f32 %v1020, %v1045
  %v1134 = vmul.f32 %v1024, %v1046
  %v1135 = vmul.f32 %v1028, %v1047
  %v1136 = vmul.f32 %v1032, %v1048
  %v1137 = vmul.f32 %v1036, %v1049
  %v1138 = vmul.f32 %v1040, %v1050
  %v1139 = vadd.f32 %v1123, %v1131
  %v1140 = vadd.f32 %v1124, %v1132
  %v1141 = vadd.f32 %v1125, %v1133
  %v1142 = vadd.f32 %v1126, %v1134
  %v1143 = vadd.f32 %v1127, %v1135
  %v1144 = vadd.f32 %v1128, %v1136
  %v1145 = vadd.f32 %v1129, %v1137
  %v1146 = vadd.f32 %v1130, %v1138
  %v1147 = vtanh.pop %v1139
  %v1148 = vtanh.pop %v1140
  %v1149 = vtanh.pop %v1141
  %v1150 = vtanh.pop %v1142
  %v1151 = vtanh.pop %v1143
  %v1152 = vtanh.pop %v1144
  %v1153 = vtanh.pop %v1145
  %v1154 = vtanh.pop %v1146
  %v1155 = vmul.f32 %v1084, %v1147
  %v1156 = vmul.f32 %v1086, %v1148
  %v1157 = vmul.f32 %v1088, %v1149
  %v1158 = vmul.f32 %v1090, %v1150
  %v1159 = vmul.f32 %v1092, %v1151
  %v1160 = vmul.f32 %v1094, %v1152
  %v1161 = vmul.f32 %v1096, %v1153
  %v1162 = vmul.f32 %v1098, %v1154
  %v1163 = vpack.c.bf16 %v1155, %v1155
  %v1164 = vpack.c.bf16 %v1156, %v1156
  %v1165 = vpack.c.bf16 %v1157, %v1157
  %v1166 = vpack.c.bf16 %v1158, %v1158
  %v1167 = vpack.c.bf16 %v1159, %v1159
  %v1168 = vpack.c.bf16 %v1160, %v1160
  %v1169 = vpack.c.bf16 %v1161, %v1161
  %v1170 = vpack.c.bf16 %v1162, %v1162
  %vm1171 = vsmask.f32 7938
  %vm1172 = vmand %vm655, %vm1171
  %v1173 = vld [vmem:[%s2] sm:$0x1]
  %v1174 = vsel %vm1172, %v1163, %v1173
  %1175 = vst [vmem:[%s2] sm:$0x1] %v1174
  %v1176 = vld [vmem:[%s2 + $0x8] sm:$0x1]
  %v1177 = vsel %vm1172, %v1164, %v1176
  %1178 = vst [vmem:[%s2 + $0x8] sm:$0x1] %v1177
  %v1179 = vld [vmem:[%s2 + $0x10] sm:$0x1]
  %v1180 = vsel %vm1172, %v1165, %v1179
  %1181 = vst [vmem:[%s2 + $0x10] sm:$0x1] %v1180
  %v1182 = vld [vmem:[%s2 + $0x18] sm:$0x1]
  %v1183 = vsel %vm1172, %v1166, %v1182
  %1184 = vst [vmem:[%s2 + $0x18] sm:$0x1] %v1183
  %v1185 = vld [vmem:[%s2 + $0x20] sm:$0x1]
  %v1186 = vsel %vm1172, %v1167, %v1185
  %1187 = vst [vmem:[%s2 + $0x20] sm:$0x1] %v1186
  %v1188 = vld [vmem:[%s2 + $0x28] sm:$0x1]
  %v1189 = vsel %vm1172, %v1168, %v1188
  %1190 = vst [vmem:[%s2 + $0x28] sm:$0x1] %v1189
  %v1191 = vld [vmem:[%s2 + $0x30] sm:$0x1]
  %v1192 = vsel %vm1172, %v1169, %v1191
  %1193 = vst [vmem:[%s2 + $0x30] sm:$0x1] %v1192
  %v1194 = vld [vmem:[%s2 + $0x38] sm:$0x1]
  %v1195 = vsel %vm1172, %v1170, %v1194
  %1196 = vst [vmem:[%s2 + $0x38] sm:$0x1] %v1195
  %v1197 = vld [vmem:[%s0] sm:$0x22]
  %v1198 = vld [vmem:[%s0 + $0x8] sm:$0x22]
  %v1199 = vld [vmem:[%s0 + $0x20] sm:$0x22]
  %v1200 = vld [vmem:[%s0 + $0x28] sm:$0x22]
  %v1201 = vld [vmem:[%s0 + $0x40] sm:$0x22]
  %v1202 = vld [vmem:[%s0 + $0x48] sm:$0x22]
  %v1203 = vld [vmem:[%s0 + $0x60] sm:$0x22]
  %v1204 = vld [vmem:[%s0 + $0x68] sm:$0x22]
  %v1205 = vld [vmem:[%s0 + $0x80] sm:$0x22]
  %v1206 = vld [vmem:[%s0 + $0x88] sm:$0x22]
  %v1207 = vld [vmem:[%s0 + $0xa0] sm:$0x22]
  %v1208 = vld [vmem:[%s0 + $0xa8] sm:$0x22]
  %v1209 = vld [vmem:[%s0 + $0xc0] sm:$0x22]
  %v1210 = vld [vmem:[%s0 + $0xc8] sm:$0x22]
  %v1211 = vld [vmem:[%s0 + $0xe0] sm:$0x22]
  %v1212 = vld [vmem:[%s0 + $0xe8] sm:$0x22]
  %v1213 = vunpack.c.l.bf16 %v1197
  %v1214 = vunpack.c.h.bf16 %v1197
  %v1215 = vunpack.c.l.bf16 %v1198
  %v1216 = vunpack.c.h.bf16 %v1198
  %v1217 = vunpack.c.l.bf16 %v1199
  %v1218 = vunpack.c.h.bf16 %v1199
  %v1219 = vunpack.c.l.bf16 %v1200
  %v1220 = vunpack.c.h.bf16 %v1200
  %v1221 = vunpack.c.l.bf16 %v1201
  %v1222 = vunpack.c.h.bf16 %v1201
  %v1223 = vunpack.c.l.bf16 %v1202
  %v1224 = vunpack.c.h.bf16 %v1202
  %v1225 = vunpack.c.l.bf16 %v1203
  %v1226 = vunpack.c.h.bf16 %v1203
  %v1227 = vunpack.c.l.bf16 %v1204
  %v1228 = vunpack.c.h.bf16 %v1204
  %v1229 = vunpack.c.l.bf16 %v1205
  %v1230 = vunpack.c.h.bf16 %v1205
  %v1231 = vunpack.c.l.bf16 %v1206
  %v1232 = vunpack.c.h.bf16 %v1206
  %v1233 = vunpack.c.l.bf16 %v1207
  %v1234 = vunpack.c.h.bf16 %v1207
  %v1235 = vunpack.c.l.bf16 %v1208
  %v1236 = vunpack.c.h.bf16 %v1208
  %v1237 = vunpack.c.l.bf16 %v1209
  %v1238 = vunpack.c.h.bf16 %v1209
  %v1239 = vunpack.c.l.bf16 %v1210
  %v1240 = vunpack.c.h.bf16 %v1210
  %v1241 = vunpack.c.l.bf16 %v1211
  %v1242 = vunpack.c.h.bf16 %v1211
  %v1243 = vunpack.c.l.bf16 %v1212
  %v1244 = vunpack.c.h.bf16 %v1212
  %v1253 = vunpack.c.l.b16 %v1163
  %v1254 = vunpack.c.l.b16 %v1164
  %v1255 = vunpack.c.l.b16 %v1165
  %v1256 = vunpack.c.l.b16 %v1166
  %v1257 = vunpack.c.l.b16 %v1167
  %v1258 = vunpack.c.l.b16 %v1168
  %v1259 = vunpack.c.l.b16 %v1169
  %v1260 = vunpack.c.l.b16 %v1170
  %v1261 = vrot.slane %v1253, 1
  %v1262 = vsel %vm747, %v1254, %v1261
  %v1263 = vrot.slane %v1255, 7
  %v1264 = vsel %vm750, %v1263, %v1262
  %v1265 = vrot.slane %v1256, 6
  %v1266 = vsel %vm753, %v1265, %v1264
  %v1267 = vrot.slane %v1257, 5
  %v1268 = vsel %vm756, %v1267, %v1266
  %v1269 = vrot.slane %v1258, 4
  %v1270 = vsel %vm759, %v1269, %v1268
  %v1271 = vrot.slane %v1259, 3
  %v1272 = vsel %vm762, %v1271, %v1270
  %v1273 = vrot.slane %v1260, 2
  %v1274 = vsel %vm765, %v1273, %v1272
  %v1275 = vpack.c.b16 %v1274, %v1274
  %1277 = vmatprep.subr.bf16.mxu0 %v226
  %1278 = vmatpush1.bf16.msra.mxu0 %v225
  %1279 = vmatprep.subr.bf16.mxu0 %v222
  %1280 = vmatpush1.bf16.msra.mxu0 %v221
  %1281 = vmatprep.subr.bf16.mxu0 %v218
  %1282 = vmatpush1.bf16.msra.mxu0 %v217
  %1283 = vmatprep.subr.bf16.mxu0 %v214
  %1284 = vmatpush1.bf16.msra.mxu0 %v213
  %1285 = vmatprep.subr.bf16.mxu0 %v210
  %1286 = vmatpush1.bf16.msra.mxu0 %v209
  %1287 = vmatprep.subr.bf16.mxu0 %v206
  %1288 = vmatpush1.bf16.msra.mxu0 %v205
  %1289 = vmatprep.subr.bf16.mxu0 %v202
  %1290 = vmatpush1.bf16.msra.mxu0 %v201
  %1291 = vmatprep.subr.bf16.mxu0 %v198
  %1292 = vmatpush1.bf16.msra.mxu0 %v197
  %1293 = vmatprep.subr.bf16.mxu0 0
  %1294 = vmatpush2.bf16.msra.mxu0 0
  %1295 = vmatprep.subr.bf16.mxu0 0
  %1296 = vmatpush2.bf16.msra.mxu0 0
  %1297 = vmatprep.subr.bf16.mxu0 0
  %1298 = vmatpush2.bf16.msra.mxu0 0
  %1299 = vmatprep.subr.bf16.mxu0 0
  %1300 = vmatpush2.bf16.msra.mxu0 0
  %1301 = vmatprep.subr.bf16.mxu0 0
  %1302 = vmatpush2.bf16.msra.mxu0 0
  %1303 = vmatprep.subr.bf16.mxu0 0
  %1304 = vmatpush2.bf16.msra.mxu0 0
  %1305 = vmatprep.subr.bf16.mxu0 0
  %1306 = vmatpush2.bf16.msra.mxu0 0
  %1307 = vmatprep.subr.bf16.mxu0 0
  %1308 = vmatpush2.bf16.msra.mxu0 0
  %1309 = vmatprep.mubr.bf16.mxu0 0
  %1310 = vmatmul.mubr.bf16.gmra.mxu0 %v1275
  %v1311 = vpop.f32.mrf.mxu0
  %v1312 = vadd.f32 0.0, %v1311
  %v1313 = vpop.f32.mrf.mxu0
  %v1314 = vadd.f32 0.0, %v1313
  %v1315 = vpop.f32.mrf.mxu0
  %v1316 = vpop.f32.mrf.mxu0
  %1317 = vdwg.mxu0
  %1318 = vmatprep.subr.bf16.mxu0 %v228
  %1319 = vmatpush1.bf16.msra.mxu0 %v227
  %1320 = vmatprep.subr.bf16.mxu0 %v224
  %1321 = vmatpush1.bf16.msra.mxu0 %v223
  %1322 = vmatprep.subr.bf16.mxu0 %v220
  %1323 = vmatpush1.bf16.msra.mxu0 %v219
  %1324 = vmatprep.subr.bf16.mxu0 %v216
  %1325 = vmatpush1.bf16.msra.mxu0 %v215
  %1326 = vmatprep.subr.bf16.mxu0 %v212
  %1327 = vmatpush1.bf16.msra.mxu0 %v211
  %1328 = vmatprep.subr.bf16.mxu0 %v208
  %1329 = vmatpush1.bf16.msra.mxu0 %v207
  %1330 = vmatprep.subr.bf16.mxu0 %v204
  %1331 = vmatpush1.bf16.msra.mxu0 %v203
  %1332 = vmatprep.subr.bf16.mxu0 %v200
  %1333 = vmatpush1.bf16.msra.mxu0 %v199
  %1334 = vmatprep.subr.bf16.mxu0 0
  %1335 = vmatpush2.bf16.msra.mxu0 0
  %1336 = vmatprep.subr.bf16.mxu0 0
  %1337 = vmatpush2.bf16.msra.mxu0 0
  %1338 = vmatprep.subr.bf16.mxu0 0
  %1339 = vmatpush2.bf16.msra.mxu0 0
  %1340 = vmatprep.subr.bf16.mxu0 0
  %1341 = vmatpush2.bf16.msra.mxu0 0
  %1342 = vmatprep.subr.bf16.mxu0 0
  %1343 = vmatpush2.bf16.msra.mxu0 0
  %1344 = vmatprep.subr.bf16.mxu0 0
  %1345 = vmatpush2.bf16.msra.mxu0 0
  %1346 = vmatprep.subr.bf16.mxu0 0
  %1347 = vmatpush2.bf16.msra.mxu0 0
  %1348 = vmatprep.subr.bf16.mxu0 0
  %1349 = vmatpush2.bf16.msra.mxu0 0
  %1350 = vmatprep.mubr.bf16.mxu0 0
  %1351 = vmatmul.mubr.bf16.gmra.mxu0 %v1275
  %v1352 = vpop.f32.mrf.mxu0
  %v1353 = vadd.f32 0.0, %v1352
  %v1354 = vpop.f32.mrf.mxu0
  %v1355 = vadd.f32 0.0, %v1354
  %v1356 = vpop.f32.mrf.mxu0
  %v1357 = vpop.f32.mrf.mxu0
  %1358 = vdwg.mxu0
  %v1363 = vrot.slane %v1312, 6
  %v1364 = vrot.slane %v1314, 6
  %v1365 = vrot.slane %v1353, 6
  %v1366 = vrot.slane %v1355, 6
  %v1367 = vrot.slane %v1312, 7
  %v1368 = vrot.slane %v1314, 7
  %v1369 = vrot.slane %v1353, 7
  %v1370 = vrot.slane %v1355, 7
  %v1371 = vrot.slane %v1312, 1
  %v1372 = vrot.slane %v1314, 1
  %v1373 = vrot.slane %v1353, 1
  %v1374 = vrot.slane %v1355, 1
  %v1375 = vrot.slane %v1312, 2
  %v1376 = vrot.slane %v1314, 2
  %v1377 = vrot.slane %v1353, 2
  %v1378 = vrot.slane %v1355, 2
  %v1379 = vrot.slane %v1312, 3
  %v1380 = vrot.slane %v1314, 3
  %v1381 = vrot.slane %v1353, 3
  %v1382 = vrot.slane %v1355, 3
  %v1383 = vrot.slane %v1312, 4
  %v1384 = vrot.slane %v1314, 4
  %v1385 = vrot.slane %v1353, 4
  %v1386 = vrot.slane %v1355, 4
  %v1387 = vrot.slane %v1312, 5
  %v1388 = vrot.slane %v1314, 5
  %v1389 = vrot.slane %v1353, 5
  %v1390 = vrot.slane %v1355, 5
  %v1423 = vadd.f32 %v1213, %v1363
  %v1424 = vadd.f32 %v1214, %v1364
  %v1425 = vadd.f32 %v1215, %v1365
  %v1426 = vadd.f32 %v1216, %v1366
  %v1427 = vadd.f32 %v1217, %v1367
  %v1428 = vadd.f32 %v1218, %v1368
  %v1429 = vadd.f32 %v1219, %v1369
  %v1430 = vadd.f32 %v1220, %v1370
  %v1431 = vadd.f32 %v1221, %v1312
  %v1432 = vadd.f32 %v1222, %v1314
  %v1433 = vadd.f32 %v1223, %v1353
  %v1434 = vadd.f32 %v1224, %v1355
  %v1435 = vadd.f32 %v1225, %v1371
  %v1436 = vadd.f32 %v1226, %v1372
  %v1437 = vadd.f32 %v1227, %v1373
  %v1438 = vadd.f32 %v1228, %v1374
  %v1439 = vadd.f32 %v1229, %v1375
  %v1440 = vadd.f32 %v1230, %v1376
  %v1441 = vadd.f32 %v1231, %v1377
  %v1442 = vadd.f32 %v1232, %v1378
  %v1443 = vadd.f32 %v1233, %v1379
  %v1444 = vadd.f32 %v1234, %v1380
  %v1445 = vadd.f32 %v1235, %v1381
  %v1446 = vadd.f32 %v1236, %v1382
  %v1447 = vadd.f32 %v1237, %v1383
  %v1448 = vadd.f32 %v1238, %v1384
  %v1449 = vadd.f32 %v1239, %v1385
  %v1450 = vadd.f32 %v1240, %v1386
  %v1451 = vadd.f32 %v1241, %v1387
  %v1452 = vadd.f32 %v1242, %v1388
  %v1453 = vadd.f32 %v1243, %v1389
  %v1454 = vadd.f32 %v1244, %v1390
  %v1455 = vxor.u32 %v1423, 2147483648
  %v1456 = vxor.u32 %v1424, 2147483648
  %v1457 = vxor.u32 %v1427, 2147483648
  %v1458 = vxor.u32 %v1428, 2147483648
  %v1459 = vxor.u32 %v1431, 2147483648
  %v1460 = vxor.u32 %v1432, 2147483648
  %v1461 = vxor.u32 %v1435, 2147483648
  %v1462 = vxor.u32 %v1436, 2147483648
  %v1463 = vxor.u32 %v1439, 2147483648
  %v1464 = vxor.u32 %v1440, 2147483648
  %v1465 = vxor.u32 %v1443, 2147483648
  %v1466 = vxor.u32 %v1444, 2147483648
  %v1467 = vxor.u32 %v1447, 2147483648
  %v1468 = vxor.u32 %v1448, 2147483648
  %v1469 = vxor.u32 %v1451, 2147483648
  %v1470 = vxor.u32 %v1452, 2147483648
  %v1471 = vmul.f32 %v1455, 1.442695
  %v1472 = vpow.pop %v1471
  %v1473 = vmul.f32 %v1456, 1.442695
  %v1474 = vpow.pop %v1473
  %v1475 = vmul.f32 %v1457, 1.442695
  %v1476 = vpow.pop %v1475
  %v1477 = vmul.f32 %v1458, 1.442695
  %v1478 = vpow.pop %v1477
  %v1479 = vmul.f32 %v1459, 1.442695
  %v1480 = vpow.pop %v1479
  %v1481 = vmul.f32 %v1460, 1.442695
  %v1482 = vpow.pop %v1481
  %v1483 = vmul.f32 %v1461, 1.442695
  %v1484 = vpow.pop %v1483
  %v1485 = vmul.f32 %v1462, 1.442695
  %v1486 = vpow.pop %v1485
  %v1487 = vmul.f32 %v1463, 1.442695
  %v1488 = vpow.pop %v1487
  %v1489 = vmul.f32 %v1464, 1.442695
  %v1490 = vpow.pop %v1489
  %v1491 = vmul.f32 %v1465, 1.442695
  %v1492 = vpow.pop %v1491
  %v1493 = vmul.f32 %v1466, 1.442695
  %v1494 = vpow.pop %v1493
  %v1495 = vmul.f32 %v1467, 1.442695
  %v1496 = vpow.pop %v1495
  %v1497 = vmul.f32 %v1468, 1.442695
  %v1498 = vpow.pop %v1497
  %v1499 = vmul.f32 %v1469, 1.442695
  %v1500 = vpow.pop %v1499
  %v1501 = vmul.f32 %v1470, 1.442695
  %v1502 = vpow.pop %v1501
  %v1503 = vadd.f32 %v1472, 1.0
  %v1504 = vadd.f32 %v1474, 1.0
  %v1505 = vadd.f32 %v1476, 1.0
  %v1506 = vadd.f32 %v1478, 1.0
  %v1507 = vadd.f32 %v1480, 1.0
  %v1508 = vadd.f32 %v1482, 1.0
  %v1509 = vadd.f32 %v1484, 1.0
  %v1510 = vadd.f32 %v1486, 1.0
  %v1511 = vadd.f32 %v1488, 1.0
  %v1512 = vadd.f32 %v1490, 1.0
  %v1513 = vadd.f32 %v1492, 1.0
  %v1514 = vadd.f32 %v1494, 1.0
  %v1515 = vadd.f32 %v1496, 1.0
  %v1516 = vadd.f32 %v1498, 1.0
  %v1517 = vadd.f32 %v1500, 1.0
  %v1518 = vadd.f32 %v1502, 1.0
  %v1519 = vrcp.pop %v1503
  %v1520 = vmul.f32 1.0, %v1519
  %v1521 = vrcp.pop %v1504
  %v1522 = vmul.f32 1.0, %v1521
  %v1523 = vrcp.pop %v1505
  %v1524 = vmul.f32 1.0, %v1523
  %v1525 = vrcp.pop %v1506
  %v1526 = vmul.f32 1.0, %v1525
  %v1527 = vrcp.pop %v1507
  %v1528 = vmul.f32 1.0, %v1527
  %v1529 = vrcp.pop %v1508
  %v1530 = vmul.f32 1.0, %v1529
  %v1531 = vrcp.pop %v1509
  %v1532 = vmul.f32 1.0, %v1531
  %v1533 = vrcp.pop %v1510
  %v1534 = vmul.f32 1.0, %v1533
  %v1535 = vrcp.pop %v1511
  %v1536 = vmul.f32 1.0, %v1535
  %v1537 = vrcp.pop %v1512
  %v1538 = vmul.f32 1.0, %v1537
  %v1539 = vrcp.pop %v1513
  %v1540 = vmul.f32 1.0, %v1539
  %v1541 = vrcp.pop %v1514
  %v1542 = vmul.f32 1.0, %v1541
  %v1543 = vrcp.pop %v1515
  %v1544 = vmul.f32 1.0, %v1543
  %v1545 = vrcp.pop %v1516
  %v1546 = vmul.f32 1.0, %v1545
  %v1547 = vrcp.pop %v1517
  %v1548 = vmul.f32 1.0, %v1547
  %v1549 = vrcp.pop %v1518
  %v1550 = vmul.f32 1.0, %v1549
  %v1551 = vtanh.pop %v1425
  %v1552 = vtanh.pop %v1429
  %v1553 = vtanh.pop %v1433
  %v1554 = vtanh.pop %v1437
  %v1555 = vtanh.pop %v1441
  %v1556 = vtanh.pop %v1445
  %v1557 = vtanh.pop %v1449
  %v1558 = vtanh.pop %v1453
  %v1559 = vxor.u32 %v1426, 2147483648
  %v1560 = vxor.u32 %v1430, 2147483648
  %v1561 = vxor.u32 %v1434, 2147483648
  %v1562 = vxor.u32 %v1438, 2147483648
  %v1563 = vxor.u32 %v1442, 2147483648
  %v1564 = vxor.u32 %v1446, 2147483648
  %v1565 = vxor.u32 %v1450, 2147483648
  %v1566 = vxor.u32 %v1454, 2147483648
  %v1567 = vmul.f32 %v1559, 1.442695
  %v1568 = vpow.pop %v1567
  %v1569 = vmul.f32 %v1560, 1.442695
  %v1570 = vpow.pop %v1569
  %v1571 = vmul.f32 %v1561, 1.442695
  %v1572 = vpow.pop %v1571
  %v1573 = vmul.f32 %v1562, 1.442695
  %v1574 = vpow.pop %v1573
  %v1575 = vmul.f32 %v1563, 1.442695
  %v1576 = vpow.pop %v1575
  %v1577 = vmul.f32 %v1564, 1.442695
  %v1578 = vpow.pop %v1577
  %v1579 = vmul.f32 %v1565, 1.442695
  %v1580 = vpow.pop %v1579
  %v1581 = vmul.f32 %v1566, 1.442695
  %v1582 = vpow.pop %v1581
  %v1583 = vadd.f32 %v1568, 1.0
  %v1584 = vadd.f32 %v1570, 1.0
  %v1585 = vadd.f32 %v1572, 1.0
  %v1586 = vadd.f32 %v1574, 1.0
  %v1587 = vadd.f32 %v1576, 1.0
  %v1588 = vadd.f32 %v1578, 1.0
  %v1589 = vadd.f32 %v1580, 1.0
  %v1590 = vadd.f32 %v1582, 1.0
  %v1591 = vrcp.pop %v1583
  %v1592 = vmul.f32 1.0, %v1591
  %v1593 = vrcp.pop %v1584
  %v1594 = vmul.f32 1.0, %v1593
  %v1595 = vrcp.pop %v1585
  %v1596 = vmul.f32 1.0, %v1595
  %v1597 = vrcp.pop %v1586
  %v1598 = vmul.f32 1.0, %v1597
  %v1599 = vrcp.pop %v1587
  %v1600 = vmul.f32 1.0, %v1599
  %v1601 = vrcp.pop %v1588
  %v1602 = vmul.f32 1.0, %v1601
  %v1603 = vrcp.pop %v1589
  %v1604 = vmul.f32 1.0, %v1603
  %v1605 = vrcp.pop %v1590
  %v1606 = vmul.f32 1.0, %v1605
  %v1615 = vrot.slane %v1139, 7
  %v1616 = vrot.slane %v1140, 7
  %v1617 = vrot.slane %v1141, 7
  %v1618 = vrot.slane %v1142, 7
  %v1619 = vrot.slane %v1143, 7
  %v1620 = vrot.slane %v1144, 7
  %v1621 = vrot.slane %v1145, 7
  %v1622 = vrot.slane %v1146, 7
  %v1631 = vmul.f32 %v1522, %v1615
  %v1632 = vmul.f32 %v1526, %v1616
  %v1633 = vmul.f32 %v1530, %v1617
  %v1634 = vmul.f32 %v1534, %v1618
  %v1635 = vmul.f32 %v1538, %v1619
  %v1636 = vmul.f32 %v1542, %v1620
  %v1637 = vmul.f32 %v1546, %v1621
  %v1638 = vmul.f32 %v1550, %v1622
  %v1639 = vmul.f32 %v1520, %v1551
  %v1640 = vmul.f32 %v1524, %v1552
  %v1641 = vmul.f32 %v1528, %v1553
  %v1642 = vmul.f32 %v1532, %v1554
  %v1643 = vmul.f32 %v1536, %v1555
  %v1644 = vmul.f32 %v1540, %v1556
  %v1645 = vmul.f32 %v1544, %v1557
  %v1646 = vmul.f32 %v1548, %v1558
  %v1647 = vadd.f32 %v1631, %v1639
  %v1648 = vadd.f32 %v1632, %v1640
  %v1649 = vadd.f32 %v1633, %v1641
  %v1650 = vadd.f32 %v1634, %v1642
  %v1651 = vadd.f32 %v1635, %v1643
  %v1652 = vadd.f32 %v1636, %v1644
  %v1653 = vadd.f32 %v1637, %v1645
  %v1654 = vadd.f32 %v1638, %v1646
  %v1655 = vtanh.pop %v1647
  %v1656 = vtanh.pop %v1648
  %v1657 = vtanh.pop %v1649
  %v1658 = vtanh.pop %v1650
  %v1659 = vtanh.pop %v1651
  %v1660 = vtanh.pop %v1652
  %v1661 = vtanh.pop %v1653
  %v1662 = vtanh.pop %v1654
  %v1663 = vmul.f32 %v1592, %v1655
  %v1664 = vmul.f32 %v1594, %v1656
  %v1665 = vmul.f32 %v1596, %v1657
  %v1666 = vmul.f32 %v1598, %v1658
  %v1667 = vmul.f32 %v1600, %v1659
  %v1668 = vmul.f32 %v1602, %v1660
  %v1669 = vmul.f32 %v1604, %v1661
  %v1670 = vmul.f32 %v1606, %v1662
  %v1671 = vpack.c.bf16 %v1663, %v1663
  %v1672 = vpack.c.bf16 %v1664, %v1664
  %v1673 = vpack.c.bf16 %v1665, %v1665
  %v1674 = vpack.c.bf16 %v1666, %v1666
  %v1675 = vpack.c.bf16 %v1667, %v1667
  %v1676 = vpack.c.bf16 %v1668, %v1668
  %v1677 = vpack.c.bf16 %v1669, %v1669
  %v1678 = vpack.c.bf16 %v1670, %v1670
  %vm1679 = vcmask 1041409
  %vm1680 = vsmask.f32 1280
  %vm1681 = vmand %vm1679, %vm1680
  %v1682 = vld [vmem:[%s2] sm:$0x2]
  %v1683 = vsel %vm1681, %v1671, %v1682
  %1684 = vst [vmem:[%s2] sm:$0x2] %v1683
  %v1685 = vld [vmem:[%s2 + $0x8] sm:$0x2]
  %v1686 = vsel %vm1681, %v1672, %v1685
  %1687 = vst [vmem:[%s2 + $0x8] sm:$0x2] %v1686
  %v1688 = vld [vmem:[%s2 + $0x10] sm:$0x2]
  %v1689 = vsel %vm1681, %v1673, %v1688
  %1690 = vst [vmem:[%s2 + $0x10] sm:$0x2] %v1689
  %v1691 = vld [vmem:[%s2 + $0x18] sm:$0x2]
  %v1692 = vsel %vm1681, %v1674, %v1691
  %1693 = vst [vmem:[%s2 + $0x18] sm:$0x2] %v1692
  %v1694 = vld [vmem:[%s2 + $0x20] sm:$0x2]
  %v1695 = vsel %vm1681, %v1675, %v1694
  %1696 = vst [vmem:[%s2 + $0x20] sm:$0x2] %v1695
  %v1697 = vld [vmem:[%s2 + $0x28] sm:$0x2]
  %v1698 = vsel %vm1681, %v1676, %v1697
  %1699 = vst [vmem:[%s2 + $0x28] sm:$0x2] %v1698
  %v1700 = vld [vmem:[%s2 + $0x30] sm:$0x2]
  %v1701 = vsel %vm1681, %v1677, %v1700
  %1702 = vst [vmem:[%s2 + $0x30] sm:$0x2] %v1701
  %v1703 = vld [vmem:[%s2 + $0x38] sm:$0x2]
  %v1704 = vsel %vm1681, %v1678, %v1703
  %1705 = vst [vmem:[%s2 + $0x38] sm:$0x2] %v1704
  %v1706 = vld [vmem:[%s0] sm:$0x22]
  %v1707 = vld [vmem:[%s0 + $0x8] sm:$0x22]
  %v1708 = vld [vmem:[%s0 + $0x20] sm:$0x22]
  %v1709 = vld [vmem:[%s0 + $0x28] sm:$0x22]
  %v1710 = vld [vmem:[%s0 + $0x40] sm:$0x22]
  %v1711 = vld [vmem:[%s0 + $0x48] sm:$0x22]
  %v1712 = vld [vmem:[%s0 + $0x60] sm:$0x22]
  %v1713 = vld [vmem:[%s0 + $0x68] sm:$0x22]
  %v1714 = vld [vmem:[%s0 + $0x80] sm:$0x22]
  %v1715 = vld [vmem:[%s0 + $0x88] sm:$0x22]
  %v1716 = vld [vmem:[%s0 + $0xa0] sm:$0x22]
  %v1717 = vld [vmem:[%s0 + $0xa8] sm:$0x22]
  %v1718 = vld [vmem:[%s0 + $0xc0] sm:$0x22]
  %v1719 = vld [vmem:[%s0 + $0xc8] sm:$0x22]
  %v1720 = vld [vmem:[%s0 + $0xe0] sm:$0x22]
  %v1721 = vld [vmem:[%s0 + $0xe8] sm:$0x22]
  %v1722 = vunpack.c.l.bf16 %v1706
  %v1723 = vunpack.c.h.bf16 %v1706
  %v1724 = vunpack.c.l.bf16 %v1707
  %v1725 = vunpack.c.h.bf16 %v1707
  %v1726 = vunpack.c.l.bf16 %v1708
  %v1727 = vunpack.c.h.bf16 %v1708
  %v1728 = vunpack.c.l.bf16 %v1709
  %v1729 = vunpack.c.h.bf16 %v1709
  %v1730 = vunpack.c.l.bf16 %v1710
  %v1731 = vunpack.c.h.bf16 %v1710
  %v1732 = vunpack.c.l.bf16 %v1711
  %v1733 = vunpack.c.h.bf16 %v1711
  %v1734 = vunpack.c.l.bf16 %v1712
  %v1735 = vunpack.c.h.bf16 %v1712
  %v1736 = vunpack.c.l.bf16 %v1713
  %v1737 = vunpack.c.h.bf16 %v1713
  %v1738 = vunpack.c.l.bf16 %v1714
  %v1739 = vunpack.c.h.bf16 %v1714
  %v1740 = vunpack.c.l.bf16 %v1715
  %v1741 = vunpack.c.h.bf16 %v1715
  %v1742 = vunpack.c.l.bf16 %v1716
  %v1743 = vunpack.c.h.bf16 %v1716
  %v1744 = vunpack.c.l.bf16 %v1717
  %v1745 = vunpack.c.h.bf16 %v1717
  %v1746 = vunpack.c.l.bf16 %v1718
  %v1747 = vunpack.c.h.bf16 %v1718
  %v1748 = vunpack.c.l.bf16 %v1719
  %v1749 = vunpack.c.h.bf16 %v1719
  %v1750 = vunpack.c.l.bf16 %v1720
  %v1751 = vunpack.c.h.bf16 %v1720
  %v1752 = vunpack.c.l.bf16 %v1721
  %v1753 = vunpack.c.h.bf16 %v1721
  %v1762 = vunpack.c.l.b16 %v1671
  %v1763 = vunpack.c.l.b16 %v1672
  %v1764 = vunpack.c.l.b16 %v1673
  %v1765 = vunpack.c.l.b16 %v1674
  %v1766 = vunpack.c.l.b16 %v1675
  %v1767 = vunpack.c.l.b16 %v1676
  %v1768 = vunpack.c.l.b16 %v1677
  %v1769 = vunpack.c.l.b16 %v1678
  %v1770 = vrot.slane %v1762, 2
  %v1771 = vrot.slane %v1763, 1
  %v1772 = vsel %vm747, %v1771, %v1770
  %v1773 = vsel %vm750, %v1764, %v1772
  %v1774 = vrot.slane %v1765, 7
  %v1775 = vsel %vm753, %v1774, %v1773
  %v1776 = vrot.slane %v1766, 6
  %v1777 = vsel %vm756, %v1776, %v1775
  %v1778 = vrot.slane %v1767, 5
  %v1779 = vsel %vm759, %v1778, %v1777
  %v1780 = vrot.slane %v1768, 4
  %v1781 = vsel %vm762, %v1780, %v1779
  %v1782 = vrot.slane %v1769, 3
  %v1783 = vsel %vm765, %v1782, %v1781
  %v1784 = vpack.c.b16 %v1783, %v1783
  %1786 = vmatprep.subr.bf16.mxu0 %v226
  %1787 = vmatpush1.bf16.msra.mxu0 %v225
  %1788 = vmatprep.subr.bf16.mxu0 %v222
  %1789 = vmatpush1.bf16.msra.mxu0 %v221
  %1790 = vmatprep.subr.bf16.mxu0 %v218
  %1791 = vmatpush1.bf16.msra.mxu0 %v217
  %1792 = vmatprep.subr.bf16.mxu0 %v214
  %1793 = vmatpush1.bf16.msra.mxu0 %v213
  %1794 = vmatprep.subr.bf16.mxu0 %v210
  %1795 = vmatpush1.bf16.msra.mxu0 %v209
  %1796 = vmatprep.subr.bf16.mxu0 %v206
  %1797 = vmatpush1.bf16.msra.mxu0 %v205
  %1798 = vmatprep.subr.bf16.mxu0 %v202
  %1799 = vmatpush1.bf16.msra.mxu0 %v201
  %1800 = vmatprep.subr.bf16.mxu0 %v198
  %1801 = vmatpush1.bf16.msra.mxu0 %v197
  %1802 = vmatprep.subr.bf16.mxu0 0
  %1803 = vmatpush2.bf16.msra.mxu0 0
  %1804 = vmatprep.subr.bf16.mxu0 0
  %1805 = vmatpush2.bf16.msra.mxu0 0
  %1806 = vmatprep.subr.bf16.mxu0 0
  %1807 = vmatpush2.bf16.msra.mxu0 0
  %1808 = vmatprep.subr.bf16.mxu0 0
  %1809 = vmatpush2.bf16.msra.mxu0 0
  %1810 = vmatprep.subr.bf16.mxu0 0
  %1811 = vmatpush2.bf16.msra.mxu0 0
  %1812 = vmatprep.subr.bf16.mxu0 0
  %1813 = vmatpush2.bf16.msra.mxu0 0
  %1814 = vmatprep.subr.bf16.mxu0 0
  %1815 = vmatpush2.bf16.msra.mxu0 0
  %1816 = vmatprep.subr.bf16.mxu0 0
  %1817 = vmatpush2.bf16.msra.mxu0 0
  %1818 = vmatprep.mubr.bf16.mxu0 0
  %1819 = vmatmul.mubr.bf16.gmra.mxu0 %v1784
  %v1820 = vpop.f32.mrf.mxu0
  %v1821 = vadd.f32 0.0, %v1820
  %v1822 = vpop.f32.mrf.mxu0
  %v1823 = vadd.f32 0.0, %v1822
  %v1824 = vpop.f32.mrf.mxu0
  %v1825 = vpop.f32.mrf.mxu0
  %1826 = vdwg.mxu0
  %1827 = vmatprep.subr.bf16.mxu0 %v228
  %1828 = vmatpush1.bf16.msra.mxu0 %v227
  %1829 = vmatprep.subr.bf16.mxu0 %v224
  %1830 = vmatpush1.bf16.msra.mxu0 %v223
  %1831 = vmatprep.subr.bf16.mxu0 %v220
  %1832 = vmatpush1.bf16.msra.mxu0 %v219
  %1833 = vmatprep.subr.bf16.mxu0 %v216
  %1834 = vmatpush1.bf16.msra.mxu0 %v215
  %1835 = vmatprep.subr.bf16.mxu0 %v212
  %1836 = vmatpush1.bf16.msra.mxu0 %v211
  %1837 = vmatprep.subr.bf16.mxu0 %v208
  %1838 = vmatpush1.bf16.msra.mxu0 %v207
  %1839 = vmatprep.subr.bf16.mxu0 %v204
  %1840 = vmatpush1.bf16.msra.mxu0 %v203
  %1841 = vmatprep.subr.bf16.mxu0 %v200
  %1842 = vmatpush1.bf16.msra.mxu0 %v199
  %1843 = vmatprep.subr.bf16.mxu0 0
  %1844 = vmatpush2.bf16.msra.mxu0 0
  %1845 = vmatprep.subr.bf16.mxu0 0
  %1846 = vmatpush2.bf16.msra.mxu0 0
  %1847 = vmatprep.subr.bf16.mxu0 0
  %1848 = vmatpush2.bf16.msra.mxu0 0
  %1849 = vmatprep.subr.bf16.mxu0 0
  %1850 = vmatpush2.bf16.msra.mxu0 0
  %1851 = vmatprep.subr.bf16.mxu0 0
  %1852 = vmatpush2.bf16.msra.mxu0 0
  %1853 = vmatprep.subr.bf16.mxu0 0
  %1854 = vmatpush2.bf16.msra.mxu0 0
  %1855 = vmatprep.subr.bf16.mxu0 0
  %1856 = vmatpush2.bf16.msra.mxu0 0
  %1857 = vmatprep.subr.bf16.mxu0 0
  %1858 = vmatpush2.bf16.msra.mxu0 0
  %1859 = vmatprep.mubr.bf16.mxu0 0
  %1860 = vmatmul.mubr.bf16.gmra.mxu0 %v1784
  %v1861 = vpop.f32.mrf.mxu0
  %v1862 = vadd.f32 0.0, %v1861
  %v1863 = vpop.f32.mrf.mxu0
  %v1864 = vadd.f32 0.0, %v1863
  %v1865 = vpop.f32.mrf.mxu0
  %v1866 = vpop.f32.mrf.mxu0
  %1867 = vdwg.mxu0
  %v1872 = vrot.slane %v1821, 5
  %v1873 = vrot.slane %v1823, 5
  %v1874 = vrot.slane %v1862, 5
  %v1875 = vrot.slane %v1864, 5
  %v1876 = vrot.slane %v1821, 6
  %v1877 = vrot.slane %v1823, 6
  %v1878 = vrot.slane %v1862, 6
  %v1879 = vrot.slane %v1864, 6
  %v1880 = vrot.slane %v1821, 7
  %v1881 = vrot.slane %v1823, 7
  %v1882 = vrot.slane %v1862, 7
  %v1883 = vrot.slane %v1864, 7
  %v1884 = vrot.slane %v1821, 1
  %v1885 = vrot.slane %v1823, 1
  %v1886 = vrot.slane %v1862, 1
  %v1887 = vrot.slane %v1864, 1
  %v1888 = vrot.slane %v1821, 2
  %v1889 = vrot.slane %v1823, 2
  %v1890 = vrot.slane %v1862, 2
  %v1891 = vrot.slane %v1864, 2
  %v1892 = vrot.slane %v1821, 3
  %v1893 = vrot.slane %v1823, 3
  %v1894 = vrot.slane %v1862, 3
  %v1895 = vrot.slane %v1864, 3
  %v1896 = vrot.slane %v1821, 4
  %v1897 = vrot.slane %v1823, 4
  %v1898 = vrot.slane %v1862, 4
  %v1899 = vrot.slane %v1864, 4
  %v1932 = vadd.f32 %v1722, %v1872
  %v1933 = vadd.f32 %v1723, %v1873
  %v1934 = vadd.f32 %v1724, %v1874
  %v1935 = vadd.f32 %v1725, %v1875
  %v1936 = vadd.f32 %v1726, %v1876
  %v1937 = vadd.f32 %v1727, %v1877
  %v1938 = vadd.f32 %v1728, %v1878
  %v1939 = vadd.f32 %v1729, %v1879
  %v1940 = vadd.f32 %v1730, %v1880
  %v1941 = vadd.f32 %v1731, %v1881
  %v1942 = vadd.f32 %v1732, %v1882
  %v1943 = vadd.f32 %v1733, %v1883
  %v1944 = vadd.f32 %v1734, %v1821
  %v1945 = vadd.f32 %v1735, %v1823
  %v1946 = vadd.f32 %v1736, %v1862
  %v1947 = vadd.f32 %v1737, %v1864
  %v1948 = vadd.f32 %v1738, %v1884
  %v1949 = vadd.f32 %v1739, %v1885
  %v1950 = vadd.f32 %v1740, %v1886
  %v1951 = vadd.f32 %v1741, %v1887
  %v1952 = vadd.f32 %v1742, %v1888
  %v1953 = vadd.f32 %v1743, %v1889
  %v1954 = vadd.f32 %v1744, %v1890
  %v1955 = vadd.f32 %v1745, %v1891
  %v1956 = vadd.f32 %v1746, %v1892
  %v1957 = vadd.f32 %v1747, %v1893
  %v1958 = vadd.f32 %v1748, %v1894
  %v1959 = vadd.f32 %v1749, %v1895
  %v1960 = vadd.f32 %v1750, %v1896
  %v1961 = vadd.f32 %v1751, %v1897
  %v1962 = vadd.f32 %v1752, %v1898
  %v1963 = vadd.f32 %v1753, %v1899
  %v1964 = vxor.u32 %v1932, 2147483648
  %v1965 = vxor.u32 %v1933, 2147483648
  %v1966 = vxor.u32 %v1936, 2147483648
  %v1967 = vxor.u32 %v1937, 2147483648
  %v1968 = vxor.u32 %v1940, 2147483648
  %v1969 = vxor.u32 %v1941, 2147483648
  %v1970 = vxor.u32 %v1944, 2147483648
  %v1971 = vxor.u32 %v1945, 2147483648
  %v1972 = vxor.u32 %v1948, 2147483648
  %v1973 = vxor.u32 %v1949, 2147483648
  %v1974 = vxor.u32 %v1952, 2147483648
  %v1975 = vxor.u32 %v1953, 2147483648
  %v1976 = vxor.u32 %v1956, 2147483648
  %v1977 = vxor.u32 %v1957, 2147483648
  %v1978 = vxor.u32 %v1960, 2147483648
  %v1979 = vxor.u32 %v1961, 2147483648
  %v1980 = vmul.f32 %v1964, 1.442695
  %v1981 = vpow.pop %v1980
  %v1982 = vmul.f32 %v1965, 1.442695
  %v1983 = vpow.pop %v1982
  %v1984 = vmul.f32 %v1966, 1.442695
  %v1985 = vpow.pop %v1984
  %v1986 = vmul.f32 %v1967, 1.442695
  %v1987 = vpow.pop %v1986
  %v1988 = vmul.f32 %v1968, 1.442695
  %v1989 = vpow.pop %v1988
  %v1990 = vmul.f32 %v1969, 1.442695
  %v1991 = vpow.pop %v1990
  %v1992 = vmul.f32 %v1970, 1.442695
  %v1993 = vpow.pop %v1992
  %v1994 = vmul.f32 %v1971, 1.442695
  %v1995 = vpow.pop %v1994
  %v1996 = vmul.f32 %v1972, 1.442695
  %v1997 = vpow.pop %v1996
  %v1998 = vmul.f32 %v1973, 1.442695
  %v1999 = vpow.pop %v1998
  %v2000 = vmul.f32 %v1974, 1.442695
  %v2001 = vpow.pop %v2000
  %v2002 = vmul.f32 %v1975, 1.442695
  %v2003 = vpow.pop %v2002
  %v2004 = vmul.f32 %v1976, 1.442695
  %v2005 = vpow.pop %v2004
  %v2006 = vmul.f32 %v1977, 1.442695
  %v2007 = vpow.pop %v2006
  %v2008 = vmul.f32 %v1978, 1.442695
  %v2009 = vpow.pop %v2008
  %v2010 = vmul.f32 %v1979, 1.442695
  %v2011 = vpow.pop %v2010
  %v2012 = vadd.f32 %v1981, 1.0
  %v2013 = vadd.f32 %v1983, 1.0
  %v2014 = vadd.f32 %v1985, 1.0
  %v2015 = vadd.f32 %v1987, 1.0
  %v2016 = vadd.f32 %v1989, 1.0
  %v2017 = vadd.f32 %v1991, 1.0
  %v2018 = vadd.f32 %v1993, 1.0
  %v2019 = vadd.f32 %v1995, 1.0
  %v2020 = vadd.f32 %v1997, 1.0
  %v2021 = vadd.f32 %v1999, 1.0
  %v2022 = vadd.f32 %v2001, 1.0
  %v2023 = vadd.f32 %v2003, 1.0
  %v2024 = vadd.f32 %v2005, 1.0
  %v2025 = vadd.f32 %v2007, 1.0
  %v2026 = vadd.f32 %v2009, 1.0
  %v2027 = vadd.f32 %v2011, 1.0
  %v2028 = vrcp.pop %v2012
  %v2029 = vmul.f32 1.0, %v2028
  %v2030 = vrcp.pop %v2013
  %v2031 = vmul.f32 1.0, %v2030
  %v2032 = vrcp.pop %v2014
  %v2033 = vmul.f32 1.0, %v2032
  %v2034 = vrcp.pop %v2015
  %v2035 = vmul.f32 1.0, %v2034
  %v2036 = vrcp.pop %v2016
  %v2037 = vmul.f32 1.0, %v2036
  %v2038 = vrcp.pop %v2017
  %v2039 = vmul.f32 1.0, %v2038
  %v2040 = vrcp.pop %v2018
  %v2041 = vmul.f32 1.0, %v2040
  %v2042 = vrcp.pop %v2019
  %v2043 = vmul.f32 1.0, %v2042
  %v2044 = vrcp.pop %v2020
  %v2045 = vmul.f32 1.0, %v2044
  %v2046 = vrcp.pop %v2021
  %v2047 = vmul.f32 1.0, %v2046
  %v2048 = vrcp.pop %v2022
  %v2049 = vmul.f32 1.0, %v2048
  %v2050 = vrcp.pop %v2023
  %v2051 = vmul.f32 1.0, %v2050
  %v2052 = vrcp.pop %v2024
  %v2053 = vmul.f32 1.0, %v2052
  %v2054 = vrcp.pop %v2025
  %v2055 = vmul.f32 1.0, %v2054
  %v2056 = vrcp.pop %v2026
  %v2057 = vmul.f32 1.0, %v2056
  %v2058 = vrcp.pop %v2027
  %v2059 = vmul.f32 1.0, %v2058
  %v2060 = vtanh.pop %v1934
  %v2061 = vtanh.pop %v1938
  %v2062 = vtanh.pop %v1942
  %v2063 = vtanh.pop %v1946
  %v2064 = vtanh.pop %v1950
  %v2065 = vtanh.pop %v1954
  %v2066 = vtanh.pop %v1958
  %v2067 = vtanh.pop %v1962
  %v2068 = vxor.u32 %v1935, 2147483648
  %v2069 = vxor.u32 %v1939, 2147483648
  %v2070 = vxor.u32 %v1943, 2147483648
  %v2071 = vxor.u32 %v1947, 2147483648
  %v2072 = vxor.u32 %v1951, 2147483648
  %v2073 = vxor.u32 %v1955, 2147483648
  %v2074 = vxor.u32 %v1959, 2147483648
  %v2075 = vxor.u32 %v1963, 2147483648
  %v2076 = vmul.f32 %v2068, 1.442695
  %v2077 = vpow.pop %v2076
  %v2078 = vmul.f32 %v2069, 1.442695
  %v2079 = vpow.pop %v2078
  %v2080 = vmul.f32 %v2070, 1.442695
  %v2081 = vpow.pop %v2080
  %v2082 = vmul.f32 %v2071, 1.442695
  %v2083 = vpow.pop %v2082
  %v2084 = vmul.f32 %v2072, 1.442695
  %v2085 = vpow.pop %v2084
  %v2086 = vmul.f32 %v2073, 1.442695
  %v2087 = vpow.pop %v2086
  %v2088 = vmul.f32 %v2074, 1.442695
  %v2089 = vpow.pop %v2088
  %v2090 = vmul.f32 %v2075, 1.442695
  %v2091 = vpow.pop %v2090
  %v2092 = vadd.f32 %v2077, 1.0
  %v2093 = vadd.f32 %v2079, 1.0
  %v2094 = vadd.f32 %v2081, 1.0
  %v2095 = vadd.f32 %v2083, 1.0
  %v2096 = vadd.f32 %v2085, 1.0
  %v2097 = vadd.f32 %v2087, 1.0
  %v2098 = vadd.f32 %v2089, 1.0
  %v2099 = vadd.f32 %v2091, 1.0
  %v2100 = vrcp.pop %v2092
  %v2101 = vmul.f32 1.0, %v2100
  %v2102 = vrcp.pop %v2093
  %v2103 = vmul.f32 1.0, %v2102
  %v2104 = vrcp.pop %v2094
  %v2105 = vmul.f32 1.0, %v2104
  %v2106 = vrcp.pop %v2095
  %v2107 = vmul.f32 1.0, %v2106
  %v2108 = vrcp.pop %v2096
  %v2109 = vmul.f32 1.0, %v2108
  %v2110 = vrcp.pop %v2097
  %v2111 = vmul.f32 1.0, %v2110
  %v2112 = vrcp.pop %v2098
  %v2113 = vmul.f32 1.0, %v2112
  %v2114 = vrcp.pop %v2099
  %v2115 = vmul.f32 1.0, %v2114
  %v2124 = vrot.slane %v1647, 7
  %v2125 = vrot.slane %v1648, 7
  %v2126 = vrot.slane %v1649, 7
  %v2127 = vrot.slane %v1650, 7
  %v2128 = vrot.slane %v1651, 7
  %v2129 = vrot.slane %v1652, 7
  %v2130 = vrot.slane %v1653, 7
  %v2131 = vrot.slane %v1654, 7
  %v2140 = vmul.f32 %v2031, %v2124
  %v2141 = vmul.f32 %v2035, %v2125
  %v2142 = vmul.f32 %v2039, %v2126
  %v2143 = vmul.f32 %v2043, %v2127
  %v2144 = vmul.f32 %v2047, %v2128
  %v2145 = vmul.f32 %v2051, %v2129
  %v2146 = vmul.f32 %v2055, %v2130
  %v2147 = vmul.f32 %v2059, %v2131
  %v2148 = vmul.f32 %v2029, %v2060
  %v2149 = vmul.f32 %v2033, %v2061
  %v2150 = vmul.f32 %v2037, %v2062
  %v2151 = vmul.f32 %v2041, %v2063
  %v2152 = vmul.f32 %v2045, %v2064
  %v2153 = vmul.f32 %v2049, %v2065
  %v2154 = vmul.f32 %v2053, %v2066
  %v2155 = vmul.f32 %v2057, %v2067
  %v2156 = vadd.f32 %v2140, %v2148
  %v2157 = vadd.f32 %v2141, %v2149
  %v2158 = vadd.f32 %v2142, %v2150
  %v2159 = vadd.f32 %v2143, %v2151
  %v2160 = vadd.f32 %v2144, %v2152
  %v2161 = vadd.f32 %v2145, %v2153
  %v2162 = vadd.f32 %v2146, %v2154
  %v2163 = vadd.f32 %v2147, %v2155
  %v2164 = vtanh.pop %v2156
  %v2165 = vtanh.pop %v2157
  %v2166 = vtanh.pop %v2158
  %v2167 = vtanh.pop %v2159
  %v2168 = vtanh.pop %v2160
  %v2169 = vtanh.pop %v2161
  %v2170 = vtanh.pop %v2162
  %v2171 = vtanh.pop %v2163
  %v2172 = vmul.f32 %v2101, %v2164
  %v2173 = vmul.f32 %v2103, %v2165
  %v2174 = vmul.f32 %v2105, %v2166
  %v2175 = vmul.f32 %v2107, %v2167
  %v2176 = vmul.f32 %v2109, %v2168
  %v2177 = vmul.f32 %v2111, %v2169
  %v2178 = vmul.f32 %v2113, %v2170
  %v2179 = vmul.f32 %v2115, %v2171
  %v2180 = vpack.c.bf16 %v2172, %v2172
  %v2181 = vpack.c.bf16 %v2173, %v2173
  %v2182 = vpack.c.bf16 %v2174, %v2174
  %v2183 = vpack.c.bf16 %v2175, %v2175
  %v2184 = vpack.c.bf16 %v2176, %v2176
  %v2185 = vpack.c.bf16 %v2177, %v2177
  %v2186 = vpack.c.bf16 %v2178, %v2178
  %v2187 = vpack.c.bf16 %v2179, %v2179
  %vm2188 = vsmask.f32 7942
  %vm2189 = vmand %vm1679, %vm2188
  %v2190 = vld [vmem:[%s2] sm:$0x2]
  %v2191 = vsel %vm2189, %v2180, %v2190
  %2192 = vst [vmem:[%s2] sm:$0x2] %v2191
  %v2193 = vld [vmem:[%s2 + $0x8] sm:$0x2]
  %v2194 = vsel %vm2189, %v2181, %v2193
  %2195 = vst [vmem:[%s2 + $0x8] sm:$0x2] %v2194
  %v2196 = vld [vmem:[%s2 + $0x10] sm:$0x2]
  %v2197 = vsel %vm2189, %v2182, %v2196
  %2198 = vst [vmem:[%s2 + $0x10] sm:$0x2] %v2197
  %v2199 = vld [vmem:[%s2 + $0x18] sm:$0x2]
  %v2200 = vsel %vm2189, %v2183, %v2199
  %2201 = vst [vmem:[%s2 + $0x18] sm:$0x2] %v2200
  %v2202 = vld [vmem:[%s2 + $0x20] sm:$0x2]
  %v2203 = vsel %vm2189, %v2184, %v2202
  %2204 = vst [vmem:[%s2 + $0x20] sm:$0x2] %v2203
  %v2205 = vld [vmem:[%s2 + $0x28] sm:$0x2]
  %v2206 = vsel %vm2189, %v2185, %v2205
  %2207 = vst [vmem:[%s2 + $0x28] sm:$0x2] %v2206
  %v2208 = vld [vmem:[%s2 + $0x30] sm:$0x2]
  %v2209 = vsel %vm2189, %v2186, %v2208
  %2210 = vst [vmem:[%s2 + $0x30] sm:$0x2] %v2209
  %v2211 = vld [vmem:[%s2 + $0x38] sm:$0x2]
  %v2212 = vsel %vm2189, %v2187, %v2211
  %2213 = vst [vmem:[%s2 + $0x38] sm:$0x2] %v2212
  %v2214 = vld [vmem:[%s0] sm:$0x44]
  %v2215 = vld [vmem:[%s0 + $0x8] sm:$0x44]
  %v2216 = vld [vmem:[%s0 + $0x20] sm:$0x44]
  %v2217 = vld [vmem:[%s0 + $0x28] sm:$0x44]
  %v2218 = vld [vmem:[%s0 + $0x40] sm:$0x44]
  %v2219 = vld [vmem:[%s0 + $0x48] sm:$0x44]
  %v2220 = vld [vmem:[%s0 + $0x60] sm:$0x44]
  %v2221 = vld [vmem:[%s0 + $0x68] sm:$0x44]
  %v2222 = vld [vmem:[%s0 + $0x80] sm:$0x44]
  %v2223 = vld [vmem:[%s0 + $0x88] sm:$0x44]
  %v2224 = vld [vmem:[%s0 + $0xa0] sm:$0x44]
  %v2225 = vld [vmem:[%s0 + $0xa8] sm:$0x44]
  %v2226 = vld [vmem:[%s0 + $0xc0] sm:$0x44]
  %v2227 = vld [vmem:[%s0 + $0xc8] sm:$0x44]
  %v2228 = vld [vmem:[%s0 + $0xe0] sm:$0x44]
  %v2229 = vld [vmem:[%s0 + $0xe8] sm:$0x44]
  %v2230 = vunpack.c.l.bf16 %v2214
  %v2231 = vunpack.c.h.bf16 %v2214
  %v2232 = vunpack.c.l.bf16 %v2215
  %v2233 = vunpack.c.h.bf16 %v2215
  %v2234 = vunpack.c.l.bf16 %v2216
  %v2235 = vunpack.c.h.bf16 %v2216
  %v2236 = vunpack.c.l.bf16 %v2217
  %v2237 = vunpack.c.h.bf16 %v2217
  %v2238 = vunpack.c.l.bf16 %v2218
  %v2239 = vunpack.c.h.bf16 %v2218
  %v2240 = vunpack.c.l.bf16 %v2219
  %v2241 = vunpack.c.h.bf16 %v2219
  %v2242 = vunpack.c.l.bf16 %v2220
  %v2243 = vunpack.c.h.bf16 %v2220
  %v2244 = vunpack.c.l.bf16 %v2221
  %v2245 = vunpack.c.h.bf16 %v2221
  %v2246 = vunpack.c.l.bf16 %v2222
  %v2247 = vunpack.c.h.bf16 %v2222
  %v2248 = vunpack.c.l.bf16 %v2223
  %v2249 = vunpack.c.h.bf16 %v2223
  %v2250 = vunpack.c.l.bf16 %v2224
  %v2251 = vunpack.c.h.bf16 %v2224
  %v2252 = vunpack.c.l.bf16 %v2225
  %v2253 = vunpack.c.h.bf16 %v2225
  %v2254 = vunpack.c.l.bf16 %v2226
  %v2255 = vunpack.c.h.bf16 %v2226
  %v2256 = vunpack.c.l.bf16 %v2227
  %v2257 = vunpack.c.h.bf16 %v2227
  %v2258 = vunpack.c.l.bf16 %v2228
  %v2259 = vunpack.c.h.bf16 %v2228
  %v2260 = vunpack.c.l.bf16 %v2229
  %v2261 = vunpack.c.h.bf16 %v2229
  %v2270 = vunpack.c.l.b16 %v2180
  %v2271 = vunpack.c.l.b16 %v2181
  %v2272 = vunpack.c.l.b16 %v2182
  %v2273 = vunpack.c.l.b16 %v2183
  %v2274 = vunpack.c.l.b16 %v2184
  %v2275 = vunpack.c.l.b16 %v2185
  %v2276 = vunpack.c.l.b16 %v2186
  %v2277 = vunpack.c.l.b16 %v2187
  %v2278 = vrot.slane %v2270, 3
  %v2279 = vrot.slane %v2271, 2
  %v2280 = vsel %vm747, %v2279, %v2278
  %v2281 = vrot.slane %v2272, 1
  %v2282 = vsel %vm750, %v2281, %v2280
  %v2283 = vsel %vm753, %v2273, %v2282
  %v2284 = vrot.slane %v2274, 7
  %v2285 = vsel %vm756, %v2284, %v2283
  %v2286 = vrot.slane %v2275, 6
  %v2287 = vsel %vm759, %v2286, %v2285
  %v2288 = vrot.slane %v2276, 5
  %v2289 = vsel %vm762, %v2288, %v2287
  %v2290 = vrot.slane %v2277, 4
  %v2291 = vsel %vm765, %v2290, %v2289
  %v2292 = vpack.c.b16 %v2291, %v2291
  %2294 = vmatprep.subr.bf16.mxu0 %v226
  %2295 = vmatpush1.bf16.msra.mxu0 %v225
  %2296 = vmatprep.subr.bf16.mxu0 %v222
  %2297 = vmatpush1.bf16.msra.mxu0 %v221
  %2298 = vmatprep.subr.bf16.mxu0 %v218
  %2299 = vmatpush1.bf16.msra.mxu0 %v217
  %2300 = vmatprep.subr.bf16.mxu0 %v214
  %2301 = vmatpush1.bf16.msra.mxu0 %v213
  %2302 = vmatprep.subr.bf16.mxu0 %v210
  %2303 = vmatpush1.bf16.msra.mxu0 %v209
  %2304 = vmatprep.subr.bf16.mxu0 %v206
  %2305 = vmatpush1.bf16.msra.mxu0 %v205
  %2306 = vmatprep.subr.bf16.mxu0 %v202
  %2307 = vmatpush1.bf16.msra.mxu0 %v201
  %2308 = vmatprep.subr.bf16.mxu0 %v198
  %2309 = vmatpush1.bf16.msra.mxu0 %v197
  %2310 = vmatprep.subr.bf16.mxu0 0
  %2311 = vmatpush2.bf16.msra.mxu0 0
  %2312 = vmatprep.subr.bf16.mxu0 0
  %2313 = vmatpush2.bf16.msra.mxu0 0
  %2314 = vmatprep.subr.bf16.mxu0 0
  %2315 = vmatpush2.bf16.msra.mxu0 0
  %2316 = vmatprep.subr.bf16.mxu0 0
  %2317 = vmatpush2.bf16.msra.mxu0 0
  %2318 = vmatprep.subr.bf16.mxu0 0
  %2319 = vmatpush2.bf16.msra.mxu0 0
  %2320 = vmatprep.subr.bf16.mxu0 0
  %2321 = vmatpush2.bf16.msra.mxu0 0
  %2322 = vmatprep.subr.bf16.mxu0 0
  %2323 = vmatpush2.bf16.msra.mxu0 0
  %2324 = vmatprep.subr.bf16.mxu0 0
  %2325 = vmatpush2.bf16.msra.mxu0 0
  %2326 = vmatprep.mubr.bf16.mxu0 0
  %2327 = vmatmul.mubr.bf16.gmra.mxu0 %v2292
  %v2328 = vpop.f32.mrf.mxu0
  %v2329 = vadd.f32 0.0, %v2328
  %v2330 = vpop.f32.mrf.mxu0
  %v2331 = vadd.f32 0.0, %v2330
  %v2332 = vpop.f32.mrf.mxu0
  %v2333 = vpop.f32.mrf.mxu0
  %2334 = vdwg.mxu0
  %2335 = vmatprep.subr.bf16.mxu0 %v228
  %2336 = vmatpush1.bf16.msra.mxu0 %v227
  %2337 = vmatprep.subr.bf16.mxu0 %v224
  %2338 = vmatpush1.bf16.msra.mxu0 %v223
  %2339 = vmatprep.subr.bf16.mxu0 %v220
  %2340 = vmatpush1.bf16.msra.mxu0 %v219
  %2341 = vmatprep.subr.bf16.mxu0 %v216
  %2342 = vmatpush1.bf16.msra.mxu0 %v215
  %2343 = vmatprep.subr.bf16.mxu0 %v212
  %2344 = vmatpush1.bf16.msra.mxu0 %v211
  %2345 = vmatprep.subr.bf16.mxu0 %v208
  %2346 = vmatpush1.bf16.msra.mxu0 %v207
  %2347 = vmatprep.subr.bf16.mxu0 %v204
  %2348 = vmatpush1.bf16.msra.mxu0 %v203
  %2349 = vmatprep.subr.bf16.mxu0 %v200
  %2350 = vmatpush1.bf16.msra.mxu0 %v199
  %2351 = vmatprep.subr.bf16.mxu0 0
  %2352 = vmatpush2.bf16.msra.mxu0 0
  %2353 = vmatprep.subr.bf16.mxu0 0
  %2354 = vmatpush2.bf16.msra.mxu0 0
  %2355 = vmatprep.subr.bf16.mxu0 0
  %2356 = vmatpush2.bf16.msra.mxu0 0
  %2357 = vmatprep.subr.bf16.mxu0 0
  %2358 = vmatpush2.bf16.msra.mxu0 0
  %2359 = vmatprep.subr.bf16.mxu0 0
  %2360 = vmatpush2.bf16.msra.mxu0 0
  %2361 = vmatprep.subr.bf16.mxu0 0
  %2362 = vmatpush2.bf16.msra.mxu0 0
  %2363 = vmatprep.subr.bf16.mxu0 0
  %2364 = vmatpush2.bf16.msra.mxu0 0
  %2365 = vmatprep.subr.bf16.mxu0 0
  %2366 = vmatpush2.bf16.msra.mxu0 0
  %2367 = vmatprep.mubr.bf16.mxu0 0
  %2368 = vmatmul.mubr.bf16.gmra.mxu0 %v2292
  %v2369 = vpop.f32.mrf.mxu0
  %v2370 = vadd.f32 0.0, %v2369
  %v2371 = vpop.f32.mrf.mxu0
  %v2372 = vadd.f32 0.0, %v2371
  %v2373 = vpop.f32.mrf.mxu0
  %v2374 = vpop.f32.mrf.mxu0
  %2375 = vdwg.mxu0
  %v2380 = vrot.slane %v2329, 4
  %v2381 = vrot.slane %v2331, 4
  %v2382 = vrot.slane %v2370, 4
  %v2383 = vrot.slane %v2372, 4
  %v2384 = vrot.slane %v2329, 5
  %v2385 = vrot.slane %v2331, 5
  %v2386 = vrot.slane %v2370, 5
  %v2387 = vrot.slane %v2372, 5
  %v2388 = vrot.slane %v2329, 6
  %v2389 = vrot.slane %v2331, 6
  %v2390 = vrot.slane %v2370, 6
  %v2391 = vrot.slane %v2372, 6
  %v2392 = vrot.slane %v2329, 7
  %v2393 = vrot.slane %v2331, 7
  %v2394 = vrot.slane %v2370, 7
  %v2395 = vrot.slane %v2372, 7
  %v2396 = vrot.slane %v2329, 1
  %v2397 = vrot.slane %v2331, 1
  %v2398 = vrot.slane %v2370, 1
  %v2399 = vrot.slane %v2372, 1
  %v2400 = vrot.slane %v2329, 2
  %v2401 = vrot.slane %v2331, 2
  %v2402 = vrot.slane %v2370, 2
  %v2403 = vrot.slane %v2372, 2
  %v2404 = vrot.slane %v2329, 3
  %v2405 = vrot.slane %v2331, 3
  %v2406 = vrot.slane %v2370, 3
  %v2407 = vrot.slane %v2372, 3
  %v2440 = vadd.f32 %v2230, %v2380
  %v2441 = vadd.f32 %v2231, %v2381
  %v2442 = vadd.f32 %v2232, %v2382
  %v2443 = vadd.f32 %v2233, %v2383
  %v2444 = vadd.f32 %v2234, %v2384
  %v2445 = vadd.f32 %v2235, %v2385
  %v2446 = vadd.f32 %v2236, %v2386
  %v2447 = vadd.f32 %v2237, %v2387
  %v2448 = vadd.f32 %v2238, %v2388
  %v2449 = vadd.f32 %v2239, %v2389
  %v2450 = vadd.f32 %v2240, %v2390
  %v2451 = vadd.f32 %v2241, %v2391
  %v2452 = vadd.f32 %v2242, %v2392
  %v2453 = vadd.f32 %v2243, %v2393
  %v2454 = vadd.f32 %v2244, %v2394
  %v2455 = vadd.f32 %v2245, %v2395
  %v2456 = vadd.f32 %v2246, %v2329
  %v2457 = vadd.f32 %v2247, %v2331
  %v2458 = vadd.f32 %v2248, %v2370
  %v2459 = vadd.f32 %v2249, %v2372
  %v2460 = vadd.f32 %v2250, %v2396
  %v2461 = vadd.f32 %v2251, %v2397
  %v2462 = vadd.f32 %v2252, %v2398
  %v2463 = vadd.f32 %v2253, %v2399
  %v2464 = vadd.f32 %v2254, %v2400
  %v2465 = vadd.f32 %v2255, %v2401
  %v2466 = vadd.f32 %v2256, %v2402
  %v2467 = vadd.f32 %v2257, %v2403
  %v2468 = vadd.f32 %v2258, %v2404
  %v2469 = vadd.f32 %v2259, %v2405
  %v2470 = vadd.f32 %v2260, %v2406
  %v2471 = vadd.f32 %v2261, %v2407
  %v2472 = vxor.u32 %v2440, 2147483648
  %v2473 = vxor.u32 %v2441, 2147483648
  %v2474 = vxor.u32 %v2444, 2147483648
  %v2475 = vxor.u32 %v2445, 2147483648
  %v2476 = vxor.u32 %v2448, 2147483648
  %v2477 = vxor.u32 %v2449, 2147483648
  %v2478 = vxor.u32 %v2452, 2147483648
  %v2479 = vxor.u32 %v2453, 2147483648
  %v2480 = vxor.u32 %v2456, 2147483648
  %v2481 = vxor.u32 %v2457, 2147483648
  %v2482 = vxor.u32 %v2460, 2147483648
  %v2483 = vxor.u32 %v2461, 2147483648
  %v2484 = vxor.u32 %v2464, 2147483648
  %v2485 = vxor.u32 %v2465, 2147483648
  %v2486 = vxor.u32 %v2468, 2147483648
  %v2487 = vxor.u32 %v2469, 2147483648
  %v2488 = vmul.f32 %v2472, 1.442695
  %v2489 = vpow.pop %v2488
  %v2490 = vmul.f32 %v2473, 1.442695
  %v2491 = vpow.pop %v2490
  %v2492 = vmul.f32 %v2474, 1.442695
  %v2493 = vpow.pop %v2492
  %v2494 = vmul.f32 %v2475, 1.442695
  %v2495 = vpow.pop %v2494
  %v2496 = vmul.f32 %v2476, 1.442695
  %v2497 = vpow.pop %v2496
  %v2498 = vmul.f32 %v2477, 1.442695
  %v2499 = vpow.pop %v2498
  %v2500 = vmul.f32 %v2478, 1.442695
  %v2501 = vpow.pop %v2500
  %v2502 = vmul.f32 %v2479, 1.442695
  %v2503 = vpow.pop %v2502
  %v2504 = vmul.f32 %v2480, 1.442695
  %v2505 = vpow.pop %v2504
  %v2506 = vmul.f32 %v2481, 1.442695
  %v2507 = vpow.pop %v2506
  %v2508 = vmul.f32 %v2482, 1.442695
  %v2509 = vpow.pop %v2508
  %v2510 = vmul.f32 %v2483, 1.442695
  %v2511 = vpow.pop %v2510
  %v2512 = vmul.f32 %v2484, 1.442695
  %v2513 = vpow.pop %v2512
  %v2514 = vmul.f32 %v2485, 1.442695
  %v2515 = vpow.pop %v2514
  %v2516 = vmul.f32 %v2486, 1.442695
  %v2517 = vpow.pop %v2516
  %v2518 = vmul.f32 %v2487, 1.442695
  %v2519 = vpow.pop %v2518
  %v2520 = vadd.f32 %v2489, 1.0
  %v2521 = vadd.f32 %v2491, 1.0
  %v2522 = vadd.f32 %v2493, 1.0
  %v2523 = vadd.f32 %v2495, 1.0
  %v2524 = vadd.f32 %v2497, 1.0
  %v2525 = vadd.f32 %v2499, 1.0
  %v2526 = vadd.f32 %v2501, 1.0
  %v2527 = vadd.f32 %v2503, 1.0
  %v2528 = vadd.f32 %v2505, 1.0
  %v2529 = vadd.f32 %v2507, 1.0
  %v2530 = vadd.f32 %v2509, 1.0
  %v2531 = vadd.f32 %v2511, 1.0
  %v2532 = vadd.f32 %v2513, 1.0
  %v2533 = vadd.f32 %v2515, 1.0
  %v2534 = vadd.f32 %v2517, 1.0
  %v2535 = vadd.f32 %v2519, 1.0
  %v2536 = vrcp.pop %v2520
  %v2537 = vmul.f32 1.0, %v2536
  %v2538 = vrcp.pop %v2521
  %v2539 = vmul.f32 1.0, %v2538
  %v2540 = vrcp.pop %v2522
  %v2541 = vmul.f32 1.0, %v2540
  %v2542 = vrcp.pop %v2523
  %v2543 = vmul.f32 1.0, %v2542
  %v2544 = vrcp.pop %v2524
  %v2545 = vmul.f32 1.0, %v2544
  %v2546 = vrcp.pop %v2525
  %v2547 = vmul.f32 1.0, %v2546
  %v2548 = vrcp.pop %v2526
  %v2549 = vmul.f32 1.0, %v2548
  %v2550 = vrcp.pop %v2527
  %v2551 = vmul.f32 1.0, %v2550
  %v2552 = vrcp.pop %v2528
  %v2553 = vmul.f32 1.0, %v2552
  %v2554 = vrcp.pop %v2529
  %v2555 = vmul.f32 1.0, %v2554
  %v2556 = vrcp.pop %v2530
  %v2557 = vmul.f32 1.0, %v2556
  %v2558 = vrcp.pop %v2531
  %v2559 = vmul.f32 1.0, %v2558
  %v2560 = vrcp.pop %v2532
  %v2561 = vmul.f32 1.0, %v2560
  %v2562 = vrcp.pop %v2533
  %v2563 = vmul.f32 1.0, %v2562
  %v2564 = vrcp.pop %v2534
  %v2565 = vmul.f32 1.0, %v2564
  %v2566 = vrcp.pop %v2535
  %v2567 = vmul.f32 1.0, %v2566
  %v2568 = vtanh.pop %v2442
  %v2569 = vtanh.pop %v2446
  %v2570 = vtanh.pop %v2450
  %v2571 = vtanh.pop %v2454
  %v2572 = vtanh.pop %v2458
  %v2573 = vtanh.pop %v2462
  %v2574 = vtanh.pop %v2466
  %v2575 = vtanh.pop %v2470
  %v2576 = vxor.u32 %v2443, 2147483648
  %v2577 = vxor.u32 %v2447, 2147483648
  %v2578 = vxor.u32 %v2451, 2147483648
  %v2579 = vxor.u32 %v2455, 2147483648
  %v2580 = vxor.u32 %v2459, 2147483648
  %v2581 = vxor.u32 %v2463, 2147483648
  %v2582 = vxor.u32 %v2467, 2147483648
  %v2583 = vxor.u32 %v2471, 2147483648
  %v2584 = vmul.f32 %v2576, 1.442695
  %v2585 = vpow.pop %v2584
  %v2586 = vmul.f32 %v2577, 1.442695
  %v2587 = vpow.pop %v2586
  %v2588 = vmul.f32 %v2578, 1.442695
  %v2589 = vpow.pop %v2588
  %v2590 = vmul.f32 %v2579, 1.442695
  %v2591 = vpow.pop %v2590
  %v2592 = vmul.f32 %v2580, 1.442695
  %v2593 = vpow.pop %v2592
  %v2594 = vmul.f32 %v2581, 1.442695
  %v2595 = vpow.pop %v2594
  %v2596 = vmul.f32 %v2582, 1.442695
  %v2597 = vpow.pop %v2596
  %v2598 = vmul.f32 %v2583, 1.442695
  %v2599 = vpow.pop %v2598
  %v2600 = vadd.f32 %v2585, 1.0
  %v2601 = vadd.f32 %v2587, 1.0
  %v2602 = vadd.f32 %v2589, 1.0
  %v2603 = vadd.f32 %v2591, 1.0
  %v2604 = vadd.f32 %v2593, 1.0
  %v2605 = vadd.f32 %v2595, 1.0
  %v2606 = vadd.f32 %v2597, 1.0
  %v2607 = vadd.f32 %v2599, 1.0
  %v2608 = vrcp.pop %v2600
  %v2609 = vmul.f32 1.0, %v2608
  %v2610 = vrcp.pop %v2601
  %v2611 = vmul.f32 1.0, %v2610
  %v2612 = vrcp.pop %v2602
  %v2613 = vmul.f32 1.0, %v2612
  %v2614 = vrcp.pop %v2603
  %v2615 = vmul.f32 1.0, %v2614
  %v2616 = vrcp.pop %v2604
  %v2617 = vmul.f32 1.0, %v2616
  %v2618 = vrcp.pop %v2605
  %v2619 = vmul.f32 1.0, %v2618
  %v2620 = vrcp.pop %v2606
  %v2621 = vmul.f32 1.0, %v2620
  %v2622 = vrcp.pop %v2607
  %v2623 = vmul.f32 1.0, %v2622
  %v2632 = vrot.slane %v2156, 7
  %v2633 = vrot.slane %v2157, 7
  %v2634 = vrot.slane %v2158, 7
  %v2635 = vrot.slane %v2159, 7
  %v2636 = vrot.slane %v2160, 7
  %v2637 = vrot.slane %v2161, 7
  %v2638 = vrot.slane %v2162, 7
  %v2639 = vrot.slane %v2163, 7
  %v2648 = vmul.f32 %v2539, %v2632
  %v2649 = vmul.f32 %v2543, %v2633
  %v2650 = vmul.f32 %v2547, %v2634
  %v2651 = vmul.f32 %v2551, %v2635
  %v2652 = vmul.f32 %v2555, %v2636
  %v2653 = vmul.f32 %v2559, %v2637
  %v2654 = vmul.f32 %v2563, %v2638
  %v2655 = vmul.f32 %v2567, %v2639
  %v2656 = vmul.f32 %v2537, %v2568
  %v2657 = vmul.f32 %v2541, %v2569
  %v2658 = vmul.f32 %v2545, %v2570
  %v2659 = vmul.f32 %v2549, %v2571
  %v2660 = vmul.f32 %v2553, %v2572
  %v2661 = vmul.f32 %v2557, %v2573
  %v2662 = vmul.f32 %v2561, %v2574
  %v2663 = vmul.f32 %v2565, %v2575
  %v2664 = vadd.f32 %v2648, %v2656
  %v2665 = vadd.f32 %v2649, %v2657
  %v2666 = vadd.f32 %v2650, %v2658
  %v2667 = vadd.f32 %v2651, %v2659
  %v2668 = vadd.f32 %v2652, %v2660
  %v2669 = vadd.f32 %v2653, %v2661
  %v2670 = vadd.f32 %v2654, %v2662
  %v2671 = vadd.f32 %v2655, %v2663
  %v2672 = vtanh.pop %v2664
  %v2673 = vtanh.pop %v2665
  %v2674 = vtanh.pop %v2666
  %v2675 = vtanh.pop %v2667
  %v2676 = vtanh.pop %v2668
  %v2677 = vtanh.pop %v2669
  %v2678 = vtanh.pop %v2670
  %v2679 = vtanh.pop %v2671
  %v2680 = vmul.f32 %v2609, %v2672
  %v2681 = vmul.f32 %v2611, %v2673
  %v2682 = vmul.f32 %v2613, %v2674
  %v2683 = vmul.f32 %v2615, %v2675
  %v2684 = vmul.f32 %v2617, %v2676
  %v2685 = vmul.f32 %v2619, %v2677
  %v2686 = vmul.f32 %v2621, %v2678
  %v2687 = vmul.f32 %v2623, %v2679
  %v2688 = vpack.c.bf16 %v2680, %v2680
  %v2689 = vpack.c.bf16 %v2681, %v2681
  %v2690 = vpack.c.bf16 %v2682, %v2682
  %v2691 = vpack.c.bf16 %v2683, %v2683
  %v2692 = vpack.c.bf16 %v2684, %v2684
  %v2693 = vpack.c.bf16 %v2685, %v2685
  %v2694 = vpack.c.bf16 %v2686, %v2686
  %v2695 = vpack.c.bf16 %v2687, %v2687
  %vm2696 = vcmask 1042434
  %vm2697 = vsmask.f32 2304
  %vm2698 = vmand %vm2696, %vm2697
  %v2699 = vld [vmem:[%s2] sm:$0x4]
  %v2700 = vsel %vm2698, %v2688, %v2699
  %2701 = vst [vmem:[%s2] sm:$0x4] %v2700
  %v2702 = vld [vmem:[%s2 + $0x8] sm:$0x4]
  %v2703 = vsel %vm2698, %v2689, %v2702
  %2704 = vst [vmem:[%s2 + $0x8] sm:$0x4] %v2703
  %v2705 = vld [vmem:[%s2 + $0x10] sm:$0x4]
  %v2706 = vsel %vm2698, %v2690, %v2705
  %2707 = vst [vmem:[%s2 + $0x10] sm:$0x4] %v2706
  %v2708 = vld [vmem:[%s2 + $0x18] sm:$0x4]
  %v2709 = vsel %vm2698, %v2691, %v2708
  %2710 = vst [vmem:[%s2 + $0x18] sm:$0x4] %v2709
  %v2711 = vld [vmem:[%s2 + $0x20] sm:$0x4]
  %v2712 = vsel %vm2698, %v2692, %v2711
  %2713 = vst [vmem:[%s2 + $0x20] sm:$0x4] %v2712
  %v2714 = vld [vmem:[%s2 + $0x28] sm:$0x4]
  %v2715 = vsel %vm2698, %v2693, %v2714
  %2716 = vst [vmem:[%s2 + $0x28] sm:$0x4] %v2715
  %v2717 = vld [vmem:[%s2 + $0x30] sm:$0x4]
  %v2718 = vsel %vm2698, %v2694, %v2717
  %2719 = vst [vmem:[%s2 + $0x30] sm:$0x4] %v2718
  %v2720 = vld [vmem:[%s2 + $0x38] sm:$0x4]
  %v2721 = vsel %vm2698, %v2695, %v2720
  %2722 = vst [vmem:[%s2 + $0x38] sm:$0x4] %v2721
  %v2723 = vld [vmem:[%s0] sm:$0x44]
  %v2724 = vld [vmem:[%s0 + $0x8] sm:$0x44]
  %v2725 = vld [vmem:[%s0 + $0x20] sm:$0x44]
  %v2726 = vld [vmem:[%s0 + $0x28] sm:$0x44]
  %v2727 = vld [vmem:[%s0 + $0x40] sm:$0x44]
  %v2728 = vld [vmem:[%s0 + $0x48] sm:$0x44]
  %v2729 = vld [vmem:[%s0 + $0x60] sm:$0x44]
  %v2730 = vld [vmem:[%s0 + $0x68] sm:$0x44]
  %v2731 = vld [vmem:[%s0 + $0x80] sm:$0x44]
  %v2732 = vld [vmem:[%s0 + $0x88] sm:$0x44]
  %v2733 = vld [vmem:[%s0 + $0xa0] sm:$0x44]
  %v2734 = vld [vmem:[%s0 + $0xa8] sm:$0x44]
  %v2735 = vld [vmem:[%s0 + $0xc0] sm:$0x44]
  %v2736 = vld [vmem:[%s0 + $0xc8] sm:$0x44]
  %v2737 = vld [vmem:[%s0 + $0xe0] sm:$0x44]
  %v2738 = vld [vmem:[%s0 + $0xe8] sm:$0x44]
  %v2739 = vunpack.c.l.bf16 %v2723
  %v2740 = vunpack.c.h.bf16 %v2723
  %v2741 = vunpack.c.l.bf16 %v2724
  %v2742 = vunpack.c.h.bf16 %v2724
  %v2743 = vunpack.c.l.bf16 %v2725
  %v2744 = vunpack.c.h.bf16 %v2725
  %v2745 = vunpack.c.l.bf16 %v2726
  %v2746 = vunpack.c.h.bf16 %v2726
  %v2747 = vunpack.c.l.bf16 %v2727
  %v2748 = vunpack.c.h.bf16 %v2727
  %v2749 = vunpack.c.l.bf16 %v2728
  %v2750 = vunpack.c.h.bf16 %v2728
  %v2751 = vunpack.c.l.bf16 %v2729
  %v2752 = vunpack.c.h.bf16 %v2729
  %v2753 = vunpack.c.l.bf16 %v2730
  %v2754 = vunpack.c.h.bf16 %v2730
  %v2755 = vunpack.c.l.bf16 %v2731
  %v2756 = vunpack.c.h.bf16 %v2731
  %v2757 = vunpack.c.l.bf16 %v2732
  %v2758 = vunpack.c.h.bf16 %v2732
  %v2759 = vunpack.c.l.bf16 %v2733
  %v2760 = vunpack.c.h.bf16 %v2733
  %v2761 = vunpack.c.l.bf16 %v2734
  %v2762 = vunpack.c.h.bf16 %v2734
  %v2763 = vunpack.c.l.bf16 %v2735
  %v2764 = vunpack.c.h.bf16 %v2735
  %v2765 = vunpack.c.l.bf16 %v2736
  %v2766 = vunpack.c.h.bf16 %v2736
  %v2767 = vunpack.c.l.bf16 %v2737
  %v2768 = vunpack.c.h.bf16 %v2737
  %v2769 = vunpack.c.l.bf16 %v2738
  %v2770 = vunpack.c.h.bf16 %v2738
  %v2779 = vunpack.c.l.b16 %v2688
  %v2780 = vunpack.c.l.b16 %v2689
  %v2781 = vunpack.c.l.b16 %v2690
  %v2782 = vunpack.c.l.b16 %v2691
  %v2783 = vunpack.c.l.b16 %v2692
  %v2784 = vunpack.c.l.b16 %v2693
  %v2785 = vunpack.c.l.b16 %v2694
  %v2786 = vunpack.c.l.b16 %v2695
  %v2787 = vrot.slane %v2779, 4
  %v2788 = vrot.slane %v2780, 3
  %v2789 = vsel %vm747, %v2788, %v2787
  %v2790 = vrot.slane %v2781, 2
  %v2791 = vsel %vm750, %v2790, %v2789
  %v2792 = vrot.slane %v2782, 1
  %v2793 = vsel %vm753, %v2792, %v2791
  %v2794 = vsel %vm756, %v2783, %v2793
  %v2795 = vrot.slane %v2784, 7
  %v2796 = vsel %vm759, %v2795, %v2794
  %v2797 = vrot.slane %v2785, 6
  %v2798 = vsel %vm762, %v2797, %v2796
  %v2799 = vrot.slane %v2786, 5
  %v2800 = vsel %vm765, %v2799, %v2798
  %v2801 = vpack.c.b16 %v2800, %v2800
  %2803 = vmatprep.subr.bf16.mxu0 %v226
  %2804 = vmatpush1.bf16.msra.mxu0 %v225
  %2805 = vmatprep.subr.bf16.mxu0 %v222
  %2806 = vmatpush1.bf16.msra.mxu0 %v221
  %2807 = vmatprep.subr.bf16.mxu0 %v218
  %2808 = vmatpush1.bf16.msra.mxu0 %v217
  %2809 = vmatprep.subr.bf16.mxu0 %v214
  %2810 = vmatpush1.bf16.msra.mxu0 %v213
  %2811 = vmatprep.subr.bf16.mxu0 %v210
  %2812 = vmatpush1.bf16.msra.mxu0 %v209
  %2813 = vmatprep.subr.bf16.mxu0 %v206
  %2814 = vmatpush1.bf16.msra.mxu0 %v205
  %2815 = vmatprep.subr.bf16.mxu0 %v202
  %2816 = vmatpush1.bf16.msra.mxu0 %v201
  %2817 = vmatprep.subr.bf16.mxu0 %v198
  %2818 = vmatpush1.bf16.msra.mxu0 %v197
  %2819 = vmatprep.subr.bf16.mxu0 0
  %2820 = vmatpush2.bf16.msra.mxu0 0
  %2821 = vmatprep.subr.bf16.mxu0 0
  %2822 = vmatpush2.bf16.msra.mxu0 0
  %2823 = vmatprep.subr.bf16.mxu0 0
  %2824 = vmatpush2.bf16.msra.mxu0 0
  %2825 = vmatprep.subr.bf16.mxu0 0
  %2826 = vmatpush2.bf16.msra.mxu0 0
  %2827 = vmatprep.subr.bf16.mxu0 0
  %2828 = vmatpush2.bf16.msra.mxu0 0
  %2829 = vmatprep.subr.bf16.mxu0 0
  %2830 = vmatpush2.bf16.msra.mxu0 0
  %2831 = vmatprep.subr.bf16.mxu0 0
  %2832 = vmatpush2.bf16.msra.mxu0 0
  %2833 = vmatprep.subr.bf16.mxu0 0
  %2834 = vmatpush2.bf16.msra.mxu0 0
  %2835 = vmatprep.mubr.bf16.mxu0 0
  %2836 = vmatmul.mubr.bf16.gmra.mxu0 %v2801
  %v2837 = vpop.f32.mrf.mxu0
  %v2838 = vadd.f32 0.0, %v2837
  %v2839 = vpop.f32.mrf.mxu0
  %v2840 = vadd.f32 0.0, %v2839
  %v2841 = vpop.f32.mrf.mxu0
  %v2842 = vpop.f32.mrf.mxu0
  %2843 = vdwg.mxu0
  %2844 = vmatprep.subr.bf16.mxu0 %v228
  %2845 = vmatpush1.bf16.msra.mxu0 %v227
  %2846 = vmatprep.subr.bf16.mxu0 %v224
  %2847 = vmatpush1.bf16.msra.mxu0 %v223
  %2848 = vmatprep.subr.bf16.mxu0 %v220
  %2849 = vmatpush1.bf16.msra.mxu0 %v219
  %2850 = vmatprep.subr.bf16.mxu0 %v216
  %2851 = vmatpush1.bf16.msra.mxu0 %v215
  %2852 = vmatprep.subr.bf16.mxu0 %v212
  %2853 = vmatpush1.bf16.msra.mxu0 %v211
  %2854 = vmatprep.subr.bf16.mxu0 %v208
  %2855 = vmatpush1.bf16.msra.mxu0 %v207
  %2856 = vmatprep.subr.bf16.mxu0 %v204
  %2857 = vmatpush1.bf16.msra.mxu0 %v203
  %2858 = vmatprep.subr.bf16.mxu0 %v200
  %2859 = vmatpush1.bf16.msra.mxu0 %v199
  %2860 = vmatprep.subr.bf16.mxu0 0
  %2861 = vmatpush2.bf16.msra.mxu0 0
  %2862 = vmatprep.subr.bf16.mxu0 0
  %2863 = vmatpush2.bf16.msra.mxu0 0
  %2864 = vmatprep.subr.bf16.mxu0 0
  %2865 = vmatpush2.bf16.msra.mxu0 0
  %2866 = vmatprep.subr.bf16.mxu0 0
  %2867 = vmatpush2.bf16.msra.mxu0 0
  %2868 = vmatprep.subr.bf16.mxu0 0
  %2869 = vmatpush2.bf16.msra.mxu0 0
  %2870 = vmatprep.subr.bf16.mxu0 0
  %2871 = vmatpush2.bf16.msra.mxu0 0
  %2872 = vmatprep.subr.bf16.mxu0 0
  %2873 = vmatpush2.bf16.msra.mxu0 0
  %2874 = vmatprep.subr.bf16.mxu0 0
  %2875 = vmatpush2.bf16.msra.mxu0 0
  %2876 = vmatprep.mubr.bf16.mxu0 0
  %2877 = vmatmul.mubr.bf16.gmra.mxu0 %v2801
  %v2878 = vpop.f32.mrf.mxu0
  %v2879 = vadd.f32 0.0, %v2878
  %v2880 = vpop.f32.mrf.mxu0
  %v2881 = vadd.f32 0.0, %v2880
  %v2882 = vpop.f32.mrf.mxu0
  %v2883 = vpop.f32.mrf.mxu0
  %2884 = vdwg.mxu0
  %v2889 = vrot.slane %v2838, 3
  %v2890 = vrot.slane %v2840, 3
  %v2891 = vrot.slane %v2879, 3
  %v2892 = vrot.slane %v2881, 3
  %v2893 = vrot.slane %v2838, 4
  %v2894 = vrot.slane %v2840, 4
  %v2895 = vrot.slane %v2879, 4
  %v2896 = vrot.slane %v2881, 4
  %v2897 = vrot.slane %v2838, 5
  %v2898 = vrot.slane %v2840, 5
  %v2899 = vrot.slane %v2879, 5
  %v2900 = vrot.slane %v2881, 5
  %v2901 = vrot.slane %v2838, 6
  %v2902 = vrot.slane %v2840, 6
  %v2903 = vrot.slane %v2879, 6
  %v2904 = vrot.slane %v2881, 6
  %v2905 = vrot.slane %v2838, 7
  %v2906 = vrot.slane %v2840, 7
  %v2907 = vrot.slane %v2879, 7
  %v2908 = vrot.slane %v2881, 7
  %v2909 = vrot.slane %v2838, 1
  %v2910 = vrot.slane %v2840, 1
  %v2911 = vrot.slane %v2879, 1
  %v2912 = vrot.slane %v2881, 1
  %v2913 = vrot.slane %v2838, 2
  %v2914 = vrot.slane %v2840, 2
  %v2915 = vrot.slane %v2879, 2
  %v2916 = vrot.slane %v2881, 2
  %v2949 = vadd.f32 %v2739, %v2889
  %v2950 = vadd.f32 %v2740, %v2890
  %v2951 = vadd.f32 %v2741, %v2891
  %v2952 = vadd.f32 %v2742, %v2892
  %v2953 = vadd.f32 %v2743, %v2893
  %v2954 = vadd.f32 %v2744, %v2894
  %v2955 = vadd.f32 %v2745, %v2895
  %v2956 = vadd.f32 %v2746, %v2896
  %v2957 = vadd.f32 %v2747, %v2897
  %v2958 = vadd.f32 %v2748, %v2898
  %v2959 = vadd.f32 %v2749, %v2899
  %v2960 = vadd.f32 %v2750, %v2900
  %v2961 = vadd.f32 %v2751, %v2901
  %v2962 = vadd.f32 %v2752, %v2902
  %v2963 = vadd.f32 %v2753, %v2903
  %v2964 = vadd.f32 %v2754, %v2904
  %v2965 = vadd.f32 %v2755, %v2905
  %v2966 = vadd.f32 %v2756, %v2906
  %v2967 = vadd.f32 %v2757, %v2907
  %v2968 = vadd.f32 %v2758, %v2908
  %v2969 = vadd.f32 %v2759, %v2838
  %v2970 = vadd.f32 %v2760, %v2840
  %v2971 = vadd.f32 %v2761, %v2879
  %v2972 = vadd.f32 %v2762, %v2881
  %v2973 = vadd.f32 %v2763, %v2909
  %v2974 = vadd.f32 %v2764, %v2910
  %v2975 = vadd.f32 %v2765, %v2911
  %v2976 = vadd.f32 %v2766, %v2912
  %v2977 = vadd.f32 %v2767, %v2913
  %v2978 = vadd.f32 %v2768, %v2914
  %v2979 = vadd.f32 %v2769, %v2915
  %v2980 = vadd.f32 %v2770, %v2916
  %v2981 = vxor.u32 %v2949, 2147483648
  %v2982 = vxor.u32 %v2950, 2147483648
  %v2983 = vxor.u32 %v2953, 2147483648
  %v2984 = vxor.u32 %v2954, 2147483648
  %v2985 = vxor.u32 %v2957, 2147483648
  %v2986 = vxor.u32 %v2958, 2147483648
  %v2987 = vxor.u32 %v2961, 2147483648
  %v2988 = vxor.u32 %v2962, 2147483648
  %v2989 = vxor.u32 %v2965, 2147483648
  %v2990 = vxor.u32 %v2966, 2147483648
  %v2991 = vxor.u32 %v2969, 2147483648
  %v2992 = vxor.u32 %v2970, 2147483648
  %v2993 = vxor.u32 %v2973, 2147483648
  %v2994 = vxor.u32 %v2974, 2147483648
  %v2995 = vxor.u32 %v2977, 2147483648
  %v2996 = vxor.u32 %v2978, 2147483648
  %v2997 = vmul.f32 %v2981, 1.442695
  %v2998 = vpow.pop %v2997
  %v2999 = vmul.f32 %v2982, 1.442695
  %v3000 = vpow.pop %v2999
  %v3001 = vmul.f32 %v2983, 1.442695
  %v3002 = vpow.pop %v3001
  %v3003 = vmul.f32 %v2984, 1.442695
  %v3004 = vpow.pop %v3003
  %v3005 = vmul.f32 %v2985, 1.442695
  %v3006 = vpow.pop %v3005
  %v3007 = vmul.f32 %v2986, 1.442695
  %v3008 = vpow.pop %v3007
  %v3009 = vmul.f32 %v2987, 1.442695
  %v3010 = vpow.pop %v3009
  %v3011 = vmul.f32 %v2988, 1.442695
  %v3012 = vpow.pop %v3011
  %v3013 = vmul.f32 %v2989, 1.442695
  %v3014 = vpow.pop %v3013
  %v3015 = vmul.f32 %v2990, 1.442695
  %v3016 = vpow.pop %v3015
  %v3017 = vmul.f32 %v2991, 1.442695
  %v3018 = vpow.pop %v3017
  %v3019 = vmul.f32 %v2992, 1.442695
  %v3020 = vpow.pop %v3019
  %v3021 = vmul.f32 %v2993, 1.442695
  %v3022 = vpow.pop %v3021
  %v3023 = vmul.f32 %v2994, 1.442695
  %v3024 = vpow.pop %v3023
  %v3025 = vmul.f32 %v2995, 1.442695
  %v3026 = vpow.pop %v3025
  %v3027 = vmul.f32 %v2996, 1.442695
  %v3028 = vpow.pop %v3027
  %v3029 = vadd.f32 %v2998, 1.0
  %v3030 = vadd.f32 %v3000, 1.0
  %v3031 = vadd.f32 %v3002, 1.0
  %v3032 = vadd.f32 %v3004, 1.0
  %v3033 = vadd.f32 %v3006, 1.0
  %v3034 = vadd.f32 %v3008, 1.0
  %v3035 = vadd.f32 %v3010, 1.0
  %v3036 = vadd.f32 %v3012, 1.0
  %v3037 = vadd.f32 %v3014, 1.0
  %v3038 = vadd.f32 %v3016, 1.0
  %v3039 = vadd.f32 %v3018, 1.0
  %v3040 = vadd.f32 %v3020, 1.0
  %v3041 = vadd.f32 %v3022, 1.0
  %v3042 = vadd.f32 %v3024, 1.0
  %v3043 = vadd.f32 %v3026, 1.0
  %v3044 = vadd.f32 %v3028, 1.0
  %v3045 = vrcp.pop %v3029
  %v3046 = vmul.f32 1.0, %v3045
  %v3047 = vrcp.pop %v3030
  %v3048 = vmul.f32 1.0, %v3047
  %v3049 = vrcp.pop %v3031
  %v3050 = vmul.f32 1.0, %v3049
  %v3051 = vrcp.pop %v3032
  %v3052 = vmul.f32 1.0, %v3051
  %v3053 = vrcp.pop %v3033
  %v3054 = vmul.f32 1.0, %v3053
  %v3055 = vrcp.pop %v3034
  %v3056 = vmul.f32 1.0, %v3055
  %v3057 = vrcp.pop %v3035
  %v3058 = vmul.f32 1.0, %v3057
  %v3059 = vrcp.pop %v3036
  %v3060 = vmul.f32 1.0, %v3059
  %v3061 = vrcp.pop %v3037
  %v3062 = vmul.f32 1.0, %v3061
  %v3063 = vrcp.pop %v3038
  %v3064 = vmul.f32 1.0, %v3063
  %v3065 = vrcp.pop %v3039
  %v3066 = vmul.f32 1.0, %v3065
  %v3067 = vrcp.pop %v3040
  %v3068 = vmul.f32 1.0, %v3067
  %v3069 = vrcp.pop %v3041
  %v3070 = vmul.f32 1.0, %v3069
  %v3071 = vrcp.pop %v3042
  %v3072 = vmul.f32 1.0, %v3071
  %v3073 = vrcp.pop %v3043
  %v3074 = vmul.f32 1.0, %v3073
  %v3075 = vrcp.pop %v3044
  %v3076 = vmul.f32 1.0, %v3075
  %v3077 = vtanh.pop %v2951
  %v3078 = vtanh.pop %v2955
  %v3079 = vtanh.pop %v2959
  %v3080 = vtanh.pop %v2963
  %v3081 = vtanh.pop %v2967
  %v3082 = vtanh.pop %v2971
  %v3083 = vtanh.pop %v2975
  %v3084 = vtanh.pop %v2979
  %v3085 = vxor.u32 %v2952, 2147483648
  %v3086 = vxor.u32 %v2956, 2147483648
  %v3087 = vxor.u32 %v2960, 2147483648
  %v3088 = vxor.u32 %v2964, 2147483648
  %v3089 = vxor.u32 %v2968, 2147483648
  %v3090 = vxor.u32 %v2972, 2147483648
  %v3091 = vxor.u32 %v2976, 2147483648
  %v3092 = vxor.u32 %v2980, 2147483648
  %v3093 = vmul.f32 %v3085, 1.442695
  %v3094 = vpow.pop %v3093
  %v3095 = vmul.f32 %v3086, 1.442695
  %v3096 = vpow.pop %v3095
  %v3097 = vmul.f32 %v3087, 1.442695
  %v3098 = vpow.pop %v3097
  %v3099 = vmul.f32 %v3088, 1.442695
  %v3100 = vpow.pop %v3099
  %v3101 = vmul.f32 %v3089, 1.442695
  %v3102 = vpow.pop %v3101
  %v3103 = vmul.f32 %v3090, 1.442695
  %v3104 = vpow.pop %v3103
  %v3105 = vmul.f32 %v3091, 1.442695
  %v3106 = vpow.pop %v3105
  %v3107 = vmul.f32 %v3092, 1.442695
  %v3108 = vpow.pop %v3107
  %v3109 = vadd.f32 %v3094, 1.0
  %v3110 = vadd.f32 %v3096, 1.0
  %v3111 = vadd.f32 %v3098, 1.0
  %v3112 = vadd.f32 %v3100, 1.0
  %v3113 = vadd.f32 %v3102, 1.0
  %v3114 = vadd.f32 %v3104, 1.0
  %v3115 = vadd.f32 %v3106, 1.0
  %v3116 = vadd.f32 %v3108, 1.0
  %v3117 = vrcp.pop %v3109
  %v3118 = vmul.f32 1.0, %v3117
  %v3119 = vrcp.pop %v3110
  %v3120 = vmul.f32 1.0, %v3119
  %v3121 = vrcp.pop %v3111
  %v3122 = vmul.f32 1.0, %v3121
  %v3123 = vrcp.pop %v3112
  %v3124 = vmul.f32 1.0, %v3123
  %v3125 = vrcp.pop %v3113
  %v3126 = vmul.f32 1.0, %v3125
  %v3127 = vrcp.pop %v3114
  %v3128 = vmul.f32 1.0, %v3127
  %v3129 = vrcp.pop %v3115
  %v3130 = vmul.f32 1.0, %v3129
  %v3131 = vrcp.pop %v3116
  %v3132 = vmul.f32 1.0, %v3131
  %v3141 = vrot.slane %v2664, 7
  %v3142 = vrot.slane %v2665, 7
  %v3143 = vrot.slane %v2666, 7
  %v3144 = vrot.slane %v2667, 7
  %v3145 = vrot.slane %v2668, 7
  %v3146 = vrot.slane %v2669, 7
  %v3147 = vrot.slane %v2670, 7
  %v3148 = vrot.slane %v2671, 7
  %v3157 = vmul.f32 %v3048, %v3141
  %v3158 = vmul.f32 %v3052, %v3142
  %v3159 = vmul.f32 %v3056, %v3143
  %v3160 = vmul.f32 %v3060, %v3144
  %v3161 = vmul.f32 %v3064, %v3145
  %v3162 = vmul.f32 %v3068, %v3146
  %v3163 = vmul.f32 %v3072, %v3147
  %v3164 = vmul.f32 %v3076, %v3148
  %v3165 = vmul.f32 %v3046, %v3077
  %v3166 = vmul.f32 %v3050, %v3078
  %v3167 = vmul.f32 %v3054, %v3079
  %v3168 = vmul.f32 %v3058, %v3080
  %v3169 = vmul.f32 %v3062, %v3081
  %v3170 = vmul.f32 %v3066, %v3082
  %v3171 = vmul.f32 %v3070, %v3083
  %v3172 = vmul.f32 %v3074, %v3084
  %v3173 = vadd.f32 %v3157, %v3165
  %v3174 = vadd.f32 %v3158, %v3166
  %v3175 = vadd.f32 %v3159, %v3167
  %v3176 = vadd.f32 %v3160, %v3168
  %v3177 = vadd.f32 %v3161, %v3169
  %v3178 = vadd.f32 %v3162, %v3170
  %v3179 = vadd.f32 %v3163, %v3171
  %v3180 = vadd.f32 %v3164, %v3172
  %v3181 = vtanh.pop %v3173
  %v3182 = vtanh.pop %v3174
  %v3183 = vtanh.pop %v3175
  %v3184 = vtanh.pop %v3176
  %v3185 = vtanh.pop %v3177
  %v3186 = vtanh.pop %v3178
  %v3187 = vtanh.pop %v3179
  %v3188 = vtanh.pop %v3180
  %v3189 = vmul.f32 %v3118, %v3181
  %v3190 = vmul.f32 %v3120, %v3182
  %v3191 = vmul.f32 %v3122, %v3183
  %v3192 = vmul.f32 %v3124, %v3184
  %v3193 = vmul.f32 %v3126, %v3185
  %v3194 = vmul.f32 %v3128, %v3186
  %v3195 = vmul.f32 %v3130, %v3187
  %v3196 = vmul.f32 %v3132, %v3188
  %v3197 = vpack.c.bf16 %v3189, %v3189
  %v3198 = vpack.c.bf16 %v3190, %v3190
  %v3199 = vpack.c.bf16 %v3191, %v3191
  %v3200 = vpack.c.bf16 %v3192, %v3192
  %v3201 = vpack.c.bf16 %v3193, %v3193
  %v3202 = vpack.c.bf16 %v3194, %v3194
  %v3203 = vpack.c.bf16 %v3195, %v3195
  %v3204 = vpack.c.bf16 %v3196, %v3196
  %vm3205 = vsmask.f32 7946
  %vm3206 = vmand %vm2696, %vm3205
  %v3207 = vld [vmem:[%s2] sm:$0x4]
  %v3208 = vsel %vm3206, %v3197, %v3207
  %3209 = vst [vmem:[%s2] sm:$0x4] %v3208
  %v3210 = vld [vmem:[%s2 + $0x8] sm:$0x4]
  %v3211 = vsel %vm3206, %v3198, %v3210
  %3212 = vst [vmem:[%s2 + $0x8] sm:$0x4] %v3211
  %v3213 = vld [vmem:[%s2 + $0x10] sm:$0x4]
  %v3214 = vsel %vm3206, %v3199, %v3213
  %3215 = vst [vmem:[%s2 + $0x10] sm:$0x4] %v3214
  %v3216 = vld [vmem:[%s2 + $0x18] sm:$0x4]
  %v3217 = vsel %vm3206, %v3200, %v3216
  %3218 = vst [vmem:[%s2 + $0x18] sm:$0x4] %v3217
  %v3219 = vld [vmem:[%s2 + $0x20] sm:$0x4]
  %v3220 = vsel %vm3206, %v3201, %v3219
  %3221 = vst [vmem:[%s2 + $0x20] sm:$0x4] %v3220
  %v3222 = vld [vmem:[%s2 + $0x28] sm:$0x4]
  %v3223 = vsel %vm3206, %v3202, %v3222
  %3224 = vst [vmem:[%s2 + $0x28] sm:$0x4] %v3223
  %v3225 = vld [vmem:[%s2 + $0x30] sm:$0x4]
  %v3226 = vsel %vm3206, %v3203, %v3225
  %3227 = vst [vmem:[%s2 + $0x30] sm:$0x4] %v3226
  %v3228 = vld [vmem:[%s2 + $0x38] sm:$0x4]
  %v3229 = vsel %vm3206, %v3204, %v3228
  %3230 = vst [vmem:[%s2 + $0x38] sm:$0x4] %v3229
  %v3231 = vld [vmem:[%s0] sm:$0x88]
  %v3232 = vld [vmem:[%s0 + $0x8] sm:$0x88]
  %v3233 = vld [vmem:[%s0 + $0x20] sm:$0x88]
  %v3234 = vld [vmem:[%s0 + $0x28] sm:$0x88]
  %v3235 = vld [vmem:[%s0 + $0x40] sm:$0x88]
  %v3236 = vld [vmem:[%s0 + $0x48] sm:$0x88]
  %v3237 = vld [vmem:[%s0 + $0x60] sm:$0x88]
  %v3238 = vld [vmem:[%s0 + $0x68] sm:$0x88]
  %v3239 = vld [vmem:[%s0 + $0x80] sm:$0x88]
  %v3240 = vld [vmem:[%s0 + $0x88] sm:$0x88]
  %v3241 = vld [vmem:[%s0 + $0xa0] sm:$0x88]
  %v3242 = vld [vmem:[%s0 + $0xa8] sm:$0x88]
  %v3243 = vld [vmem:[%s0 + $0xc0] sm:$0x88]
  %v3244 = vld [vmem:[%s0 + $0xc8] sm:$0x88]
  %v3245 = vld [vmem:[%s0 + $0xe0] sm:$0x88]
  %v3246 = vld [vmem:[%s0 + $0xe8] sm:$0x88]
  %v3247 = vunpack.c.l.bf16 %v3231
  %v3248 = vunpack.c.h.bf16 %v3231
  %v3249 = vunpack.c.l.bf16 %v3232
  %v3250 = vunpack.c.h.bf16 %v3232
  %v3251 = vunpack.c.l.bf16 %v3233
  %v3252 = vunpack.c.h.bf16 %v3233
  %v3253 = vunpack.c.l.bf16 %v3234
  %v3254 = vunpack.c.h.bf16 %v3234
  %v3255 = vunpack.c.l.bf16 %v3235
  %v3256 = vunpack.c.h.bf16 %v3235
  %v3257 = vunpack.c.l.bf16 %v3236
  %v3258 = vunpack.c.h.bf16 %v3236
  %v3259 = vunpack.c.l.bf16 %v3237
  %v3260 = vunpack.c.h.bf16 %v3237
  %v3261 = vunpack.c.l.bf16 %v3238
  %v3262 = vunpack.c.h.bf16 %v3238
  %v3263 = vunpack.c.l.bf16 %v3239
  %v3264 = vunpack.c.h.bf16 %v3239
  %v3265 = vunpack.c.l.bf16 %v3240
  %v3266 = vunpack.c.h.bf16 %v3240
  %v3267 = vunpack.c.l.bf16 %v3241
  %v3268 = vunpack.c.h.bf16 %v3241
  %v3269 = vunpack.c.l.bf16 %v3242
  %v3270 = vunpack.c.h.bf16 %v3242
  %v3271 = vunpack.c.l.bf16 %v3243
  %v3272 = vunpack.c.h.bf16 %v3243
  %v3273 = vunpack.c.l.bf16 %v3244
  %v3274 = vunpack.c.h.bf16 %v3244
  %v3275 = vunpack.c.l.bf16 %v3245
  %v3276 = vunpack.c.h.bf16 %v3245
  %v3277 = vunpack.c.l.bf16 %v3246
  %v3278 = vunpack.c.h.bf16 %v3246
  %v3287 = vunpack.c.l.b16 %v3197
  %v3288 = vunpack.c.l.b16 %v3198
  %v3289 = vunpack.c.l.b16 %v3199
  %v3290 = vunpack.c.l.b16 %v3200
  %v3291 = vunpack.c.l.b16 %v3201
  %v3292 = vunpack.c.l.b16 %v3202
  %v3293 = vunpack.c.l.b16 %v3203
  %v3294 = vunpack.c.l.b16 %v3204
  %v3295 = vrot.slane %v3287, 5
  %v3296 = vrot.slane %v3288, 4
  %v3297 = vsel %vm747, %v3296, %v3295
  %v3298 = vrot.slane %v3289, 3
  %v3299 = vsel %vm750, %v3298, %v3297
  %v3300 = vrot.slane %v3290, 2
  %v3301 = vsel %vm753, %v3300, %v3299
  %v3302 = vrot.slane %v3291, 1
  %v3303 = vsel %vm756, %v3302, %v3301
  %v3304 = vsel %vm759, %v3292, %v3303
  %v3305 = vrot.slane %v3293, 7
  %v3306 = vsel %vm762, %v3305, %v3304
  %v3307 = vrot.slane %v3294, 6
  %v3308 = vsel %vm765, %v3307, %v3306
  %v3309 = vpack.c.b16 %v3308, %v3308
  %3311 = vmatprep.subr.bf16.mxu0 %v226
  %3312 = vmatpush1.bf16.msra.mxu0 %v225
  %3313 = vmatprep.subr.bf16.mxu0 %v222
  %3314 = vmatpush1.bf16.msra.mxu0 %v221
  %3315 = vmatprep.subr.bf16.mxu0 %v218
  %3316 = vmatpush1.bf16.msra.mxu0 %v217
  %3317 = vmatprep.subr.bf16.mxu0 %v214
  %3318 = vmatpush1.bf16.msra.mxu0 %v213
  %3319 = vmatprep.subr.bf16.mxu0 %v210
  %3320 = vmatpush1.bf16.msra.mxu0 %v209
  %3321 = vmatprep.subr.bf16.mxu0 %v206
  %3322 = vmatpush1.bf16.msra.mxu0 %v205
  %3323 = vmatprep.subr.bf16.mxu0 %v202
  %3324 = vmatpush1.bf16.msra.mxu0 %v201
  %3325 = vmatprep.subr.bf16.mxu0 %v198
  %3326 = vmatpush1.bf16.msra.mxu0 %v197
  %3327 = vmatprep.subr.bf16.mxu0 0
  %3328 = vmatpush2.bf16.msra.mxu0 0
  %3329 = vmatprep.subr.bf16.mxu0 0
  %3330 = vmatpush2.bf16.msra.mxu0 0
  %3331 = vmatprep.subr.bf16.mxu0 0
  %3332 = vmatpush2.bf16.msra.mxu0 0
  %3333 = vmatprep.subr.bf16.mxu0 0
  %3334 = vmatpush2.bf16.msra.mxu0 0
  %3335 = vmatprep.subr.bf16.mxu0 0
  %3336 = vmatpush2.bf16.msra.mxu0 0
  %3337 = vmatprep.subr.bf16.mxu0 0
  %3338 = vmatpush2.bf16.msra.mxu0 0
  %3339 = vmatprep.subr.bf16.mxu0 0
  %3340 = vmatpush2.bf16.msra.mxu0 0
  %3341 = vmatprep.subr.bf16.mxu0 0
  %3342 = vmatpush2.bf16.msra.mxu0 0
  %3343 = vmatprep.mubr.bf16.mxu0 0
  %3344 = vmatmul.mubr.bf16.gmra.mxu0 %v3309
  %v3345 = vpop.f32.mrf.mxu0
  %v3346 = vadd.f32 0.0, %v3345
  %v3347 = vpop.f32.mrf.mxu0
  %v3348 = vadd.f32 0.0, %v3347
  %v3349 = vpop.f32.mrf.mxu0
  %v3350 = vpop.f32.mrf.mxu0
  %3351 = vdwg.mxu0
  %3352 = vmatprep.subr.bf16.mxu0 %v228
  %3353 = vmatpush1.bf16.msra.mxu0 %v227
  %3354 = vmatprep.subr.bf16.mxu0 %v224
  %3355 = vmatpush1.bf16.msra.mxu0 %v223
  %3356 = vmatprep.subr.bf16.mxu0 %v220
  %3357 = vmatpush1.bf16.msra.mxu0 %v219
  %3358 = vmatprep.subr.bf16.mxu0 %v216
  %3359 = vmatpush1.bf16.msra.mxu0 %v215
  %3360 = vmatprep.subr.bf16.mxu0 %v212
  %3361 = vmatpush1.bf16.msra.mxu0 %v211
  %3362 = vmatprep.subr.bf16.mxu0 %v208
  %3363 = vmatpush1.bf16.msra.mxu0 %v207
  %3364 = vmatprep.subr.bf16.mxu0 %v204
  %3365 = vmatpush1.bf16.msra.mxu0 %v203
  %3366 = vmatprep.subr.bf16.mxu0 %v200
  %3367 = vmatpush1.bf16.msra.mxu0 %v199
  %3368 = vmatprep.subr.bf16.mxu0 0
  %3369 = vmatpush2.bf16.msra.mxu0 0
  %3370 = vmatprep.subr.bf16.mxu0 0
  %3371 = vmatpush2.bf16.msra.mxu0 0
  %3372 = vmatprep.subr.bf16.mxu0 0
  %3373 = vmatpush2.bf16.msra.mxu0 0
  %3374 = vmatprep.subr.bf16.mxu0 0
  %3375 = vmatpush2.bf16.msra.mxu0 0
  %3376 = vmatprep.subr.bf16.mxu0 0
  %3377 = vmatpush2.bf16.msra.mxu0 0
  %3378 = vmatprep.subr.bf16.mxu0 0
  %3379 = vmatpush2.bf16.msra.mxu0 0
  %3380 = vmatprep.subr.bf16.mxu0 0
  %3381 = vmatpush2.bf16.msra.mxu0 0
  %3382 = vmatprep.subr.bf16.mxu0 0
  %3383 = vmatpush2.bf16.msra.mxu0 0
  %3384 = vmatprep.mubr.bf16.mxu0 0
  %3385 = vmatmul.mubr.bf16.gmra.mxu0 %v3309
  %v3386 = vpop.f32.mrf.mxu0
  %v3387 = vadd.f32 0.0, %v3386
  %v3388 = vpop.f32.mrf.mxu0
  %v3389 = vadd.f32 0.0, %v3388
  %v3390 = vpop.f32.mrf.mxu0
  %v3391 = vpop.f32.mrf.mxu0
  %3392 = vdwg.mxu0
  %v3397 = vrot.slane %v3346, 2
  %v3398 = vrot.slane %v3348, 2
  %v3399 = vrot.slane %v3387, 2
  %v3400 = vrot.slane %v3389, 2
  %v3401 = vrot.slane %v3346, 3
  %v3402 = vrot.slane %v3348, 3
  %v3403 = vrot.slane %v3387, 3
  %v3404 = vrot.slane %v3389, 3
  %v3405 = vrot.slane %v3346, 4
  %v3406 = vrot.slane %v3348, 4
  %v3407 = vrot.slane %v3387, 4
  %v3408 = vrot.slane %v3389, 4
  %v3409 = vrot.slane %v3346, 5
  %v3410 = vrot.slane %v3348, 5
  %v3411 = vrot.slane %v3387, 5
  %v3412 = vrot.slane %v3389, 5
  %v3413 = vrot.slane %v3346, 6
  %v3414 = vrot.slane %v3348, 6
  %v3415 = vrot.slane %v3387, 6
  %v3416 = vrot.slane %v3389, 6
  %v3417 = vrot.slane %v3346, 7
  %v3418 = vrot.slane %v3348, 7
  %v3419 = vrot.slane %v3387, 7
  %v3420 = vrot.slane %v3389, 7
  %v3421 = vrot.slane %v3346, 1
  %v3422 = vrot.slane %v3348, 1
  %v3423 = vrot.slane %v3387, 1
  %v3424 = vrot.slane %v3389, 1
  %v3457 = vadd.f32 %v3247, %v3397
  %v3458 = vadd.f32 %v3248, %v3398
  %v3459 = vadd.f32 %v3249, %v3399
  %v3460 = vadd.f32 %v3250, %v3400
  %v3461 = vadd.f32 %v3251, %v3401
  %v3462 = vadd.f32 %v3252, %v3402
  %v3463 = vadd.f32 %v3253, %v3403
  %v3464 = vadd.f32 %v3254, %v3404
  %v3465 = vadd.f32 %v3255, %v3405
  %v3466 = vadd.f32 %v3256, %v3406
  %v3467 = vadd.f32 %v3257, %v3407
  %v3468 = vadd.f32 %v3258, %v3408
  %v3469 = vadd.f32 %v3259, %v3409
  %v3470 = vadd.f32 %v3260, %v3410
  %v3471 = vadd.f32 %v3261, %v3411
  %v3472 = vadd.f32 %v3262, %v3412
  %v3473 = vadd.f32 %v3263, %v3413
  %v3474 = vadd.f32 %v3264, %v3414
  %v3475 = vadd.f32 %v3265, %v3415
  %v3476 = vadd.f32 %v3266, %v3416
  %v3477 = vadd.f32 %v3267, %v3417
  %v3478 = vadd.f32 %v3268, %v3418
  %v3479 = vadd.f32 %v3269, %v3419
  %v3480 = vadd.f32 %v3270, %v3420
  %v3481 = vadd.f32 %v3271, %v3346
  %v3482 = vadd.f32 %v3272, %v3348
  %v3483 = vadd.f32 %v3273, %v3387
  %v3484 = vadd.f32 %v3274, %v3389
  %v3485 = vadd.f32 %v3275, %v3421
  %v3486 = vadd.f32 %v3276, %v3422
  %v3487 = vadd.f32 %v3277, %v3423
  %v3488 = vadd.f32 %v3278, %v3424
  %v3489 = vxor.u32 %v3457, 2147483648
  %v3490 = vxor.u32 %v3458, 2147483648
  %v3491 = vxor.u32 %v3461, 2147483648
  %v3492 = vxor.u32 %v3462, 2147483648
  %v3493 = vxor.u32 %v3465, 2147483648
  %v3494 = vxor.u32 %v3466, 2147483648
  %v3495 = vxor.u32 %v3469, 2147483648
  %v3496 = vxor.u32 %v3470, 2147483648
  %v3497 = vxor.u32 %v3473, 2147483648
  %v3498 = vxor.u32 %v3474, 2147483648
  %v3499 = vxor.u32 %v3477, 2147483648
  %v3500 = vxor.u32 %v3478, 2147483648
  %v3501 = vxor.u32 %v3481, 2147483648
  %v3502 = vxor.u32 %v3482, 2147483648
  %v3503 = vxor.u32 %v3485, 2147483648
  %v3504 = vxor.u32 %v3486, 2147483648
  %v3505 = vmul.f32 %v3489, 1.442695
  %v3506 = vpow.pop %v3505
  %v3507 = vmul.f32 %v3490, 1.442695
  %v3508 = vpow.pop %v3507
  %v3509 = vmul.f32 %v3491, 1.442695
  %v3510 = vpow.pop %v3509
  %v3511 = vmul.f32 %v3492, 1.442695
  %v3512 = vpow.pop %v3511
  %v3513 = vmul.f32 %v3493, 1.442695
  %v3514 = vpow.pop %v3513
  %v3515 = vmul.f32 %v3494, 1.442695
  %v3516 = vpow.pop %v3515
  %v3517 = vmul.f32 %v3495, 1.442695
  %v3518 = vpow.pop %v3517
  %v3519 = vmul.f32 %v3496, 1.442695
  %v3520 = vpow.pop %v3519
  %v3521 = vmul.f32 %v3497, 1.442695
  %v3522 = vpow.pop %v3521
  %v3523 = vmul.f32 %v3498, 1.442695
  %v3524 = vpow.pop %v3523
  %v3525 = vmul.f32 %v3499, 1.442695
  %v3526 = vpow.pop %v3525
  %v3527 = vmul.f32 %v3500, 1.442695
  %v3528 = vpow.pop %v3527
  %v3529 = vmul.f32 %v3501, 1.442695
  %v3530 = vpow.pop %v3529
  %v3531 = vmul.f32 %v3502, 1.442695
  %v3532 = vpow.pop %v3531
  %v3533 = vmul.f32 %v3503, 1.442695
  %v3534 = vpow.pop %v3533
  %v3535 = vmul.f32 %v3504, 1.442695
  %v3536 = vpow.pop %v3535
  %v3537 = vadd.f32 %v3506, 1.0
  %v3538 = vadd.f32 %v3508, 1.0
  %v3539 = vadd.f32 %v3510, 1.0
  %v3540 = vadd.f32 %v3512, 1.0
  %v3541 = vadd.f32 %v3514, 1.0
  %v3542 = vadd.f32 %v3516, 1.0
  %v3543 = vadd.f32 %v3518, 1.0
  %v3544 = vadd.f32 %v3520, 1.0
  %v3545 = vadd.f32 %v3522, 1.0
  %v3546 = vadd.f32 %v3524, 1.0
  %v3547 = vadd.f32 %v3526, 1.0
  %v3548 = vadd.f32 %v3528, 1.0
  %v3549 = vadd.f32 %v3530, 1.0
  %v3550 = vadd.f32 %v3532, 1.0
  %v3551 = vadd.f32 %v3534, 1.0
  %v3552 = vadd.f32 %v3536, 1.0
  %v3553 = vrcp.pop %v3537
  %v3554 = vmul.f32 1.0, %v3553
  %v3555 = vrcp.pop %v3538
  %v3556 = vmul.f32 1.0, %v3555
  %v3557 = vrcp.pop %v3539
  %v3558 = vmul.f32 1.0, %v3557
  %v3559 = vrcp.pop %v3540
  %v3560 = vmul.f32 1.0, %v3559
  %v3561 = vrcp.pop %v3541
  %v3562 = vmul.f32 1.0, %v3561
  %v3563 = vrcp.pop %v3542
  %v3564 = vmul.f32 1.0, %v3563
  %v3565 = vrcp.pop %v3543
  %v3566 = vmul.f32 1.0, %v3565
  %v3567 = vrcp.pop %v3544
  %v3568 = vmul.f32 1.0, %v3567
  %v3569 = vrcp.pop %v3545
  %v3570 = vmul.f32 1.0, %v3569
  %v3571 = vrcp.pop %v3546
  %v3572 = vmul.f32 1.0, %v3571
  %v3573 = vrcp.pop %v3547
  %v3574 = vmul.f32 1.0, %v3573
  %v3575 = vrcp.pop %v3548
  %v3576 = vmul.f32 1.0, %v3575
  %v3577 = vrcp.pop %v3549
  %v3578 = vmul.f32 1.0, %v3577
  %v3579 = vrcp.pop %v3550
  %v3580 = vmul.f32 1.0, %v3579
  %v3581 = vrcp.pop %v3551
  %v3582 = vmul.f32 1.0, %v3581
  %v3583 = vrcp.pop %v3552
  %v3584 = vmul.f32 1.0, %v3583
  %v3585 = vtanh.pop %v3459
  %v3586 = vtanh.pop %v3463
  %v3587 = vtanh.pop %v3467
  %v3588 = vtanh.pop %v3471
  %v3589 = vtanh.pop %v3475
  %v3590 = vtanh.pop %v3479
  %v3591 = vtanh.pop %v3483
  %v3592 = vtanh.pop %v3487
  %v3593 = vxor.u32 %v3460, 2147483648
  %v3594 = vxor.u32 %v3464, 2147483648
  %v3595 = vxor.u32 %v3468, 2147483648
  %v3596 = vxor.u32 %v3472, 2147483648
  %v3597 = vxor.u32 %v3476, 2147483648
  %v3598 = vxor.u32 %v3480, 2147483648
  %v3599 = vxor.u32 %v3484, 2147483648
  %v3600 = vxor.u32 %v3488, 2147483648
  %v3601 = vmul.f32 %v3593, 1.442695
  %v3602 = vpow.pop %v3601
  %v3603 = vmul.f32 %v3594, 1.442695
  %v3604 = vpow.pop %v3603
  %v3605 = vmul.f32 %v3595, 1.442695
  %v3606 = vpow.pop %v3605
  %v3607 = vmul.f32 %v3596, 1.442695
  %v3608 = vpow.pop %v3607
  %v3609 = vmul.f32 %v3597, 1.442695
  %v3610 = vpow.pop %v3609
  %v3611 = vmul.f32 %v3598, 1.442695
  %v3612 = vpow.pop %v3611
  %v3613 = vmul.f32 %v3599, 1.442695
  %v3614 = vpow.pop %v3613
  %v3615 = vmul.f32 %v3600, 1.442695
  %v3616 = vpow.pop %v3615
  %v3617 = vadd.f32 %v3602, 1.0
  %v3618 = vadd.f32 %v3604, 1.0
  %v3619 = vadd.f32 %v3606, 1.0
  %v3620 = vadd.f32 %v3608, 1.0
  %v3621 = vadd.f32 %v3610, 1.0
  %v3622 = vadd.f32 %v3612, 1.0
  %v3623 = vadd.f32 %v3614, 1.0
  %v3624 = vadd.f32 %v3616, 1.0
  %v3625 = vrcp.pop %v3617
  %v3626 = vmul.f32 1.0, %v3625
  %v3627 = vrcp.pop %v3618
  %v3628 = vmul.f32 1.0, %v3627
  %v3629 = vrcp.pop %v3619
  %v3630 = vmul.f32 1.0, %v3629
  %v3631 = vrcp.pop %v3620
  %v3632 = vmul.f32 1.0, %v3631
  %v3633 = vrcp.pop %v3621
  %v3634 = vmul.f32 1.0, %v3633
  %v3635 = vrcp.pop %v3622
  %v3636 = vmul.f32 1.0, %v3635
  %v3637 = vrcp.pop %v3623
  %v3638 = vmul.f32 1.0, %v3637
  %v3639 = vrcp.pop %v3624
  %v3640 = vmul.f32 1.0, %v3639
  %v3649 = vrot.slane %v3173, 7
  %v3650 = vrot.slane %v3174, 7
  %v3651 = vrot.slane %v3175, 7
  %v3652 = vrot.slane %v3176, 7
  %v3653 = vrot.slane %v3177, 7
  %v3654 = vrot.slane %v3178, 7
  %v3655 = vrot.slane %v3179, 7
  %v3656 = vrot.slane %v3180, 7
  %v3665 = vmul.f32 %v3556, %v3649
  %v3666 = vmul.f32 %v3560, %v3650
  %v3667 = vmul.f32 %v3564, %v3651
  %v3668 = vmul.f32 %v3568, %v3652
  %v3669 = vmul.f32 %v3572, %v3653
  %v3670 = vmul.f32 %v3576, %v3654
  %v3671 = vmul.f32 %v3580, %v3655
  %v3672 = vmul.f32 %v3584, %v3656
  %v3673 = vmul.f32 %v3554, %v3585
  %v3674 = vmul.f32 %v3558, %v3586
  %v3675 = vmul.f32 %v3562, %v3587
  %v3676 = vmul.f32 %v3566, %v3588
  %v3677 = vmul.f32 %v3570, %v3589
  %v3678 = vmul.f32 %v3574, %v3590
  %v3679 = vmul.f32 %v3578, %v3591
  %v3680 = vmul.f32 %v3582, %v3592
  %v3681 = vadd.f32 %v3665, %v3673
  %v3682 = vadd.f32 %v3666, %v3674
  %v3683 = vadd.f32 %v3667, %v3675
  %v3684 = vadd.f32 %v3668, %v3676
  %v3685 = vadd.f32 %v3669, %v3677
  %v3686 = vadd.f32 %v3670, %v3678
  %v3687 = vadd.f32 %v3671, %v3679
  %v3688 = vadd.f32 %v3672, %v3680
  %v3689 = vtanh.pop %v3681
  %v3690 = vtanh.pop %v3682
  %v3691 = vtanh.pop %v3683
  %v3692 = vtanh.pop %v3684
  %v3693 = vtanh.pop %v3685
  %v3694 = vtanh.pop %v3686
  %v3695 = vtanh.pop %v3687
  %v3696 = vtanh.pop %v3688
  %v3697 = vmul.f32 %v3626, %v3689
  %v3698 = vmul.f32 %v3628, %v3690
  %v3699 = vmul.f32 %v3630, %v3691
  %v3700 = vmul.f32 %v3632, %v3692
  %v3701 = vmul.f32 %v3634, %v3693
  %v3702 = vmul.f32 %v3636, %v3694
  %v3703 = vmul.f32 %v3638, %v3695
  %v3704 = vmul.f32 %v3640, %v3696
  %v3705 = vpack.c.bf16 %v3697, %v3697
  %v3706 = vpack.c.bf16 %v3698, %v3698
  %v3707 = vpack.c.bf16 %v3699, %v3699
  %v3708 = vpack.c.bf16 %v3700, %v3700
  %v3709 = vpack.c.bf16 %v3701, %v3701
  %v3710 = vpack.c.bf16 %v3702, %v3702
  %v3711 = vpack.c.bf16 %v3703, %v3703
  %v3712 = vpack.c.bf16 %v3704, %v3704
  %vm3713 = vcmask 1043459
  %vm3714 = vsmask.f32 3328
  %vm3715 = vmand %vm3713, %vm3714
  %v3716 = vld [vmem:[%s2] sm:$0x8]
  %v3717 = vsel %vm3715, %v3705, %v3716
  %3718 = vst [vmem:[%s2] sm:$0x8] %v3717
  %v3719 = vld [vmem:[%s2 + $0x8] sm:$0x8]
  %v3720 = vsel %vm3715, %v3706, %v3719
  %3721 = vst [vmem:[%s2 + $0x8] sm:$0x8] %v3720
  %v3722 = vld [vmem:[%s2 + $0x10] sm:$0x8]
  %v3723 = vsel %vm3715, %v3707, %v3722
  %3724 = vst [vmem:[%s2 + $0x10] sm:$0x8] %v3723
  %v3725 = vld [vmem:[%s2 + $0x18] sm:$0x8]
  %v3726 = vsel %vm3715, %v3708, %v3725
  %3727 = vst [vmem:[%s2 + $0x18] sm:$0x8] %v3726
  %v3728 = vld [vmem:[%s2 + $0x20] sm:$0x8]
  %v3729 = vsel %vm3715, %v3709, %v3728
  %3730 = vst [vmem:[%s2 + $0x20] sm:$0x8] %v3729
  %v3731 = vld [vmem:[%s2 + $0x28] sm:$0x8]
  %v3732 = vsel %vm3715, %v3710, %v3731
  %3733 = vst [vmem:[%s2 + $0x28] sm:$0x8] %v3732
  %v3734 = vld [vmem:[%s2 + $0x30] sm:$0x8]
  %v3735 = vsel %vm3715, %v3711, %v3734
  %3736 = vst [vmem:[%s2 + $0x30] sm:$0x8] %v3735
  %v3737 = vld [vmem:[%s2 + $0x38] sm:$0x8]
  %v3738 = vsel %vm3715, %v3712, %v3737
  %3739 = vst [vmem:[%s2 + $0x38] sm:$0x8] %v3738
  %v3740 = vld [vmem:[%s0] sm:$0x88]
  %v3741 = vld [vmem:[%s0 + $0x8] sm:$0x88]
  %v3742 = vld [vmem:[%s0 + $0x20] sm:$0x88]
  %v3743 = vld [vmem:[%s0 + $0x28] sm:$0x88]
  %v3744 = vld [vmem:[%s0 + $0x40] sm:$0x88]
  %v3745 = vld [vmem:[%s0 + $0x48] sm:$0x88]
  %v3746 = vld [vmem:[%s0 + $0x60] sm:$0x88]
  %v3747 = vld [vmem:[%s0 + $0x68] sm:$0x88]
  %v3748 = vld [vmem:[%s0 + $0x80] sm:$0x88]
  %v3749 = vld [vmem:[%s0 + $0x88] sm:$0x88]
  %v3750 = vld [vmem:[%s0 + $0xa0] sm:$0x88]
  %v3751 = vld [vmem:[%s0 + $0xa8] sm:$0x88]
  %v3752 = vld [vmem:[%s0 + $0xc0] sm:$0x88]
  %v3753 = vld [vmem:[%s0 + $0xc8] sm:$0x88]
  %v3754 = vld [vmem:[%s0 + $0xe0] sm:$0x88]
  %v3755 = vld [vmem:[%s0 + $0xe8] sm:$0x88]
  %v3756 = vunpack.c.l.bf16 %v3740
  %v3757 = vunpack.c.h.bf16 %v3740
  %v3758 = vunpack.c.l.bf16 %v3741
  %v3759 = vunpack.c.h.bf16 %v3741
  %v3760 = vunpack.c.l.bf16 %v3742
  %v3761 = vunpack.c.h.bf16 %v3742
  %v3762 = vunpack.c.l.bf16 %v3743
  %v3763 = vunpack.c.h.bf16 %v3743
  %v3764 = vunpack.c.l.bf16 %v3744
  %v3765 = vunpack.c.h.bf16 %v3744
  %v3766 = vunpack.c.l.bf16 %v3745
  %v3767 = vunpack.c.h.bf16 %v3745
  %v3768 = vunpack.c.l.bf16 %v3746
  %v3769 = vunpack.c.h.bf16 %v3746
  %v3770 = vunpack.c.l.bf16 %v3747
  %v3771 = vunpack.c.h.bf16 %v3747
  %v3772 = vunpack.c.l.bf16 %v3748
  %v3773 = vunpack.c.h.bf16 %v3748
  %v3774 = vunpack.c.l.bf16 %v3749
  %v3775 = vunpack.c.h.bf16 %v3749
  %v3776 = vunpack.c.l.bf16 %v3750
  %v3777 = vunpack.c.h.bf16 %v3750
  %v3778 = vunpack.c.l.bf16 %v3751
  %v3779 = vunpack.c.h.bf16 %v3751
  %v3780 = vunpack.c.l.bf16 %v3752
  %v3781 = vunpack.c.h.bf16 %v3752
  %v3782 = vunpack.c.l.bf16 %v3753
  %v3783 = vunpack.c.h.bf16 %v3753
  %v3784 = vunpack.c.l.bf16 %v3754
  %v3785 = vunpack.c.h.bf16 %v3754
  %v3786 = vunpack.c.l.bf16 %v3755
  %v3787 = vunpack.c.h.bf16 %v3755
  %v3796 = vunpack.c.l.b16 %v3705
  %v3797 = vunpack.c.l.b16 %v3706
  %v3798 = vunpack.c.l.b16 %v3707
  %v3799 = vunpack.c.l.b16 %v3708
  %v3800 = vunpack.c.l.b16 %v3709
  %v3801 = vunpack.c.l.b16 %v3710
  %v3802 = vunpack.c.l.b16 %v3711
  %v3803 = vunpack.c.l.b16 %v3712
  %v3804 = vrot.slane %v3796, 6
  %v3805 = vrot.slane %v3797, 5
  %v3806 = vsel %vm747, %v3805, %v3804
  %v3807 = vrot.slane %v3798, 4
  %v3808 = vsel %vm750, %v3807, %v3806
  %v3809 = vrot.slane %v3799, 3
  %v3810 = vsel %vm753, %v3809, %v3808
  %v3811 = vrot.slane %v3800, 2
  %v3812 = vsel %vm756, %v3811, %v3810
  %v3813 = vrot.slane %v3801, 1
  %v3814 = vsel %vm759, %v3813, %v3812
  %v3815 = vsel %vm762, %v3802, %v3814
  %v3816 = vrot.slane %v3803, 7
  %v3817 = vsel %vm765, %v3816, %v3815
  %v3818 = vpack.c.b16 %v3817, %v3817
  %3820 = vmatprep.subr.bf16.mxu0 %v226
  %3821 = vmatpush1.bf16.msra.mxu0 %v225
  %3822 = vmatprep.subr.bf16.mxu0 %v222
  %3823 = vmatpush1.bf16.msra.mxu0 %v221
  %3824 = vmatprep.subr.bf16.mxu0 %v218
  %3825 = vmatpush1.bf16.msra.mxu0 %v217
  %3826 = vmatprep.subr.bf16.mxu0 %v214
  %3827 = vmatpush1.bf16.msra.mxu0 %v213
  %3828 = vmatprep.subr.bf16.mxu0 %v210
  %3829 = vmatpush1.bf16.msra.mxu0 %v209
  %3830 = vmatprep.subr.bf16.mxu0 %v206
  %3831 = vmatpush1.bf16.msra.mxu0 %v205
  %3832 = vmatprep.subr.bf16.mxu0 %v202
  %3833 = vmatpush1.bf16.msra.mxu0 %v201
  %3834 = vmatprep.subr.bf16.mxu0 %v198
  %3835 = vmatpush1.bf16.msra.mxu0 %v197
  %3836 = vmatprep.subr.bf16.mxu0 0
  %3837 = vmatpush2.bf16.msra.mxu0 0
  %3838 = vmatprep.subr.bf16.mxu0 0
  %3839 = vmatpush2.bf16.msra.mxu0 0
  %3840 = vmatprep.subr.bf16.mxu0 0
  %3841 = vmatpush2.bf16.msra.mxu0 0
  %3842 = vmatprep.subr.bf16.mxu0 0
  %3843 = vmatpush2.bf16.msra.mxu0 0
  %3844 = vmatprep.subr.bf16.mxu0 0
  %3845 = vmatpush2.bf16.msra.mxu0 0
  %3846 = vmatprep.subr.bf16.mxu0 0
  %3847 = vmatpush2.bf16.msra.mxu0 0
  %3848 = vmatprep.subr.bf16.mxu0 0
  %3849 = vmatpush2.bf16.msra.mxu0 0
  %3850 = vmatprep.subr.bf16.mxu0 0
  %3851 = vmatpush2.bf16.msra.mxu0 0
  %3852 = vmatprep.mubr.bf16.mxu0 0
  %3853 = vmatmul.mubr.bf16.gmra.mxu0 %v3818
  %v3854 = vpop.f32.mrf.mxu0
  %v3855 = vadd.f32 0.0, %v3854
  %v3856 = vpop.f32.mrf.mxu0
  %v3857 = vadd.f32 0.0, %v3856
  %v3858 = vpop.f32.mrf.mxu0
  %v3859 = vpop.f32.mrf.mxu0
  %3860 = vdwg.mxu0
  %3861 = vmatprep.subr.bf16.mxu0 %v228
  %3862 = vmatpush1.bf16.msra.mxu0 %v227
  %3863 = vmatprep.subr.bf16.mxu0 %v224
  %3864 = vmatpush1.bf16.msra.mxu0 %v223
  %3865 = vmatprep.subr.bf16.mxu0 %v220
  %3866 = vmatpush1.bf16.msra.mxu0 %v219
  %3867 = vmatprep.subr.bf16.mxu0 %v216
  %3868 = vmatpush1.bf16.msra.mxu0 %v215
  %3869 = vmatprep.subr.bf16.mxu0 %v212
  %3870 = vmatpush1.bf16.msra.mxu0 %v211
  %3871 = vmatprep.subr.bf16.mxu0 %v208
  %3872 = vmatpush1.bf16.msra.mxu0 %v207
  %3873 = vmatprep.subr.bf16.mxu0 %v204
  %3874 = vmatpush1.bf16.msra.mxu0 %v203
  %3875 = vmatprep.subr.bf16.mxu0 %v200
  %3876 = vmatpush1.bf16.msra.mxu0 %v199
  %3877 = vmatprep.subr.bf16.mxu0 0
  %3878 = vmatpush2.bf16.msra.mxu0 0
  %3879 = vmatprep.subr.bf16.mxu0 0
  %3880 = vmatpush2.bf16.msra.mxu0 0
  %3881 = vmatprep.subr.bf16.mxu0 0
  %3882 = vmatpush2.bf16.msra.mxu0 0
  %3883 = vmatprep.subr.bf16.mxu0 0
  %3884 = vmatpush2.bf16.msra.mxu0 0
  %3885 = vmatprep.subr.bf16.mxu0 0
  %3886 = vmatpush2.bf16.msra.mxu0 0
  %3887 = vmatprep.subr.bf16.mxu0 0
  %3888 = vmatpush2.bf16.msra.mxu0 0
  %3889 = vmatprep.subr.bf16.mxu0 0
  %3890 = vmatpush2.bf16.msra.mxu0 0
  %3891 = vmatprep.subr.bf16.mxu0 0
  %3892 = vmatpush2.bf16.msra.mxu0 0
  %3893 = vmatprep.mubr.bf16.mxu0 0
  %3894 = vmatmul.mubr.bf16.gmra.mxu0 %v3818
  %v3895 = vpop.f32.mrf.mxu0
  %v3896 = vadd.f32 0.0, %v3895
  %v3897 = vpop.f32.mrf.mxu0
  %v3898 = vadd.f32 0.0, %v3897
  %v3899 = vpop.f32.mrf.mxu0
  %v3900 = vpop.f32.mrf.mxu0
  %3901 = vdwg.mxu0
  %v3906 = vrot.slane %v3855, 1
  %v3907 = vrot.slane %v3857, 1
  %v3908 = vrot.slane %v3896, 1
  %v3909 = vrot.slane %v3898, 1
  %v3910 = vrot.slane %v3855, 2
  %v3911 = vrot.slane %v3857, 2
  %v3912 = vrot.slane %v3896, 2
  %v3913 = vrot.slane %v3898, 2
  %v3914 = vrot.slane %v3855, 3
  %v3915 = vrot.slane %v3857, 3
  %v3916 = vrot.slane %v3896, 3
  %v3917 = vrot.slane %v3898, 3
  %v3918 = vrot.slane %v3855, 4
  %v3919 = vrot.slane %v3857, 4
  %v3920 = vrot.slane %v3896, 4
  %v3921 = vrot.slane %v3898, 4
  %v3922 = vrot.slane %v3855, 5
  %v3923 = vrot.slane %v3857, 5
  %v3924 = vrot.slane %v3896, 5
  %v3925 = vrot.slane %v3898, 5
  %v3926 = vrot.slane %v3855, 6
  %v3927 = vrot.slane %v3857, 6
  %v3928 = vrot.slane %v3896, 6
  %v3929 = vrot.slane %v3898, 6
  %v3930 = vrot.slane %v3855, 7
  %v3931 = vrot.slane %v3857, 7
  %v3932 = vrot.slane %v3896, 7
  %v3933 = vrot.slane %v3898, 7
  %v3966 = vadd.f32 %v3756, %v3906
  %v3967 = vadd.f32 %v3757, %v3907
  %v3968 = vadd.f32 %v3758, %v3908
  %v3969 = vadd.f32 %v3759, %v3909
  %v3970 = vadd.f32 %v3760, %v3910
  %v3971 = vadd.f32 %v3761, %v3911
  %v3972 = vadd.f32 %v3762, %v3912
  %v3973 = vadd.f32 %v3763, %v3913
  %v3974 = vadd.f32 %v3764, %v3914
  %v3975 = vadd.f32 %v3765, %v3915
  %v3976 = vadd.f32 %v3766, %v3916
  %v3977 = vadd.f32 %v3767, %v3917
  %v3978 = vadd.f32 %v3768, %v3918
  %v3979 = vadd.f32 %v3769, %v3919
  %v3980 = vadd.f32 %v3770, %v3920
  %v3981 = vadd.f32 %v3771, %v3921
  %v3982 = vadd.f32 %v3772, %v3922
  %v3983 = vadd.f32 %v3773, %v3923
  %v3984 = vadd.f32 %v3774, %v3924
  %v3985 = vadd.f32 %v3775, %v3925
  %v3986 = vadd.f32 %v3776, %v3926
  %v3987 = vadd.f32 %v3777, %v3927
  %v3988 = vadd.f32 %v3778, %v3928
  %v3989 = vadd.f32 %v3779, %v3929
  %v3990 = vadd.f32 %v3780, %v3930
  %v3991 = vadd.f32 %v3781, %v3931
  %v3992 = vadd.f32 %v3782, %v3932
  %v3993 = vadd.f32 %v3783, %v3933
  %v3994 = vadd.f32 %v3784, %v3855
  %v3995 = vadd.f32 %v3785, %v3857
  %v3996 = vadd.f32 %v3786, %v3896
  %v3997 = vadd.f32 %v3787, %v3898
  %v3998 = vxor.u32 %v3966, 2147483648
  %v3999 = vxor.u32 %v3967, 2147483648
  %v4000 = vxor.u32 %v3970, 2147483648
  %v4001 = vxor.u32 %v3971, 2147483648
  %v4002 = vxor.u32 %v3974, 2147483648
  %v4003 = vxor.u32 %v3975, 2147483648
  %v4004 = vxor.u32 %v3978, 2147483648
  %v4005 = vxor.u32 %v3979, 2147483648
  %v4006 = vxor.u32 %v3982, 2147483648
  %v4007 = vxor.u32 %v3983, 2147483648
  %v4008 = vxor.u32 %v3986, 2147483648
  %v4009 = vxor.u32 %v3987, 2147483648
  %v4010 = vxor.u32 %v3990, 2147483648
  %v4011 = vxor.u32 %v3991, 2147483648
  %v4012 = vxor.u32 %v3994, 2147483648
  %v4013 = vxor.u32 %v3995, 2147483648
  %v4014 = vmul.f32 %v3998, 1.442695
  %v4015 = vpow.pop %v4014
  %v4016 = vmul.f32 %v3999, 1.442695
  %v4017 = vpow.pop %v4016
  %v4018 = vmul.f32 %v4000, 1.442695
  %v4019 = vpow.pop %v4018
  %v4020 = vmul.f32 %v4001, 1.442695
  %v4021 = vpow.pop %v4020
  %v4022 = vmul.f32 %v4002, 1.442695
  %v4023 = vpow.pop %v4022
  %v4024 = vmul.f32 %v4003, 1.442695
  %v4025 = vpow.pop %v4024
  %v4026 = vmul.f32 %v4004, 1.442695
  %v4027 = vpow.pop %v4026
  %v4028 = vmul.f32 %v4005, 1.442695
  %v4029 = vpow.pop %v4028
  %v4030 = vmul.f32 %v4006, 1.442695
  %v4031 = vpow.pop %v4030
  %v4032 = vmul.f32 %v4007, 1.442695
  %v4033 = vpow.pop %v4032
  %v4034 = vmul.f32 %v4008, 1.442695
  %v4035 = vpow.pop %v4034
  %v4036 = vmul.f32 %v4009, 1.442695
  %v4037 = vpow.pop %v4036
  %v4038 = vmul.f32 %v4010, 1.442695
  %v4039 = vpow.pop %v4038
  %v4040 = vmul.f32 %v4011, 1.442695
  %v4041 = vpow.pop %v4040
  %v4042 = vmul.f32 %v4012, 1.442695
  %v4043 = vpow.pop %v4042
  %v4044 = vmul.f32 %v4013, 1.442695
  %v4045 = vpow.pop %v4044
  %v4046 = vadd.f32 %v4015, 1.0
  %v4047 = vadd.f32 %v4017, 1.0
  %v4048 = vadd.f32 %v4019, 1.0
  %v4049 = vadd.f32 %v4021, 1.0
  %v4050 = vadd.f32 %v4023, 1.0
  %v4051 = vadd.f32 %v4025, 1.0
  %v4052 = vadd.f32 %v4027, 1.0
  %v4053 = vadd.f32 %v4029, 1.0
  %v4054 = vadd.f32 %v4031, 1.0
  %v4055 = vadd.f32 %v4033, 1.0
  %v4056 = vadd.f32 %v4035, 1.0
  %v4057 = vadd.f32 %v4037, 1.0
  %v4058 = vadd.f32 %v4039, 1.0
  %v4059 = vadd.f32 %v4041, 1.0
  %v4060 = vadd.f32 %v4043, 1.0
  %v4061 = vadd.f32 %v4045, 1.0
  %v4062 = vrcp.pop %v4046
  %v4063 = vmul.f32 1.0, %v4062
  %v4064 = vrcp.pop %v4047
  %v4065 = vmul.f32 1.0, %v4064
  %v4066 = vrcp.pop %v4048
  %v4067 = vmul.f32 1.0, %v4066
  %v4068 = vrcp.pop %v4049
  %v4069 = vmul.f32 1.0, %v4068
  %v4070 = vrcp.pop %v4050
  %v4071 = vmul.f32 1.0, %v4070
  %v4072 = vrcp.pop %v4051
  %v4073 = vmul.f32 1.0, %v4072
  %v4074 = vrcp.pop %v4052
  %v4075 = vmul.f32 1.0, %v4074
  %v4076 = vrcp.pop %v4053
  %v4077 = vmul.f32 1.0, %v4076
  %v4078 = vrcp.pop %v4054
  %v4079 = vmul.f32 1.0, %v4078
  %v4080 = vrcp.pop %v4055
  %v4081 = vmul.f32 1.0, %v4080
  %v4082 = vrcp.pop %v4056
  %v4083 = vmul.f32 1.0, %v4082
  %v4084 = vrcp.pop %v4057
  %v4085 = vmul.f32 1.0, %v4084
  %v4086 = vrcp.pop %v4058
  %v4087 = vmul.f32 1.0, %v4086
  %v4088 = vrcp.pop %v4059
  %v4089 = vmul.f32 1.0, %v4088
  %v4090 = vrcp.pop %v4060
  %v4091 = vmul.f32 1.0, %v4090
  %v4092 = vrcp.pop %v4061
  %v4093 = vmul.f32 1.0, %v4092
  %v4094 = vtanh.pop %v3968
  %v4095 = vtanh.pop %v3972
  %v4096 = vtanh.pop %v3976
  %v4097 = vtanh.pop %v3980
  %v4098 = vtanh.pop %v3984
  %v4099 = vtanh.pop %v3988
  %v4100 = vtanh.pop %v3992
  %v4101 = vtanh.pop %v3996
  %v4102 = vxor.u32 %v3969, 2147483648
  %v4103 = vxor.u32 %v3973, 2147483648
  %v4104 = vxor.u32 %v3977, 2147483648
  %v4105 = vxor.u32 %v3981, 2147483648
  %v4106 = vxor.u32 %v3985, 2147483648
  %v4107 = vxor.u32 %v3989, 2147483648
  %v4108 = vxor.u32 %v3993, 2147483648
  %v4109 = vxor.u32 %v3997, 2147483648
  %v4110 = vmul.f32 %v4102, 1.442695
  %v4111 = vpow.pop %v4110
  %v4112 = vmul.f32 %v4103, 1.442695
  %v4113 = vpow.pop %v4112
  %v4114 = vmul.f32 %v4104, 1.442695
  %v4115 = vpow.pop %v4114
  %v4116 = vmul.f32 %v4105, 1.442695
  %v4117 = vpow.pop %v4116
  %v4118 = vmul.f32 %v4106, 1.442695
  %v4119 = vpow.pop %v4118
  %v4120 = vmul.f32 %v4107, 1.442695
  %v4121 = vpow.pop %v4120
  %v4122 = vmul.f32 %v4108, 1.442695
  %v4123 = vpow.pop %v4122
  %v4124 = vmul.f32 %v4109, 1.442695
  %v4125 = vpow.pop %v4124
  %v4126 = vadd.f32 %v4111, 1.0
  %v4127 = vadd.f32 %v4113, 1.0
  %v4128 = vadd.f32 %v4115, 1.0
  %v4129 = vadd.f32 %v4117, 1.0
  %v4130 = vadd.f32 %v4119, 1.0
  %v4131 = vadd.f32 %v4121, 1.0
  %v4132 = vadd.f32 %v4123, 1.0
  %v4133 = vadd.f32 %v4125, 1.0
  %v4134 = vrcp.pop %v4126
  %v4135 = vmul.f32 1.0, %v4134
  %v4136 = vrcp.pop %v4127
  %v4137 = vmul.f32 1.0, %v4136
  %v4138 = vrcp.pop %v4128
  %v4139 = vmul.f32 1.0, %v4138
  %v4140 = vrcp.pop %v4129
  %v4141 = vmul.f32 1.0, %v4140
  %v4142 = vrcp.pop %v4130
  %v4143 = vmul.f32 1.0, %v4142
  %v4144 = vrcp.pop %v4131
  %v4145 = vmul.f32 1.0, %v4144
  %v4146 = vrcp.pop %v4132
  %v4147 = vmul.f32 1.0, %v4146
  %v4148 = vrcp.pop %v4133
  %v4149 = vmul.f32 1.0, %v4148
  %v4158 = vrot.slane %v3681, 7
  %v4159 = vrot.slane %v3682, 7
  %v4160 = vrot.slane %v3683, 7
  %v4161 = vrot.slane %v3684, 7
  %v4162 = vrot.slane %v3685, 7
  %v4163 = vrot.slane %v3686, 7
  %v4164 = vrot.slane %v3687, 7
  %v4165 = vrot.slane %v3688, 7
  %v4174 = vmul.f32 %v4065, %v4158
  %v4175 = vmul.f32 %v4069, %v4159
  %v4176 = vmul.f32 %v4073, %v4160
  %v4177 = vmul.f32 %v4077, %v4161
  %v4178 = vmul.f32 %v4081, %v4162
  %v4179 = vmul.f32 %v4085, %v4163
  %v4180 = vmul.f32 %v4089, %v4164
  %v4181 = vmul.f32 %v4093, %v4165
  %v4182 = vmul.f32 %v4063, %v4094
  %v4183 = vmul.f32 %v4067, %v4095
  %v4184 = vmul.f32 %v4071, %v4096
  %v4185 = vmul.f32 %v4075, %v4097
  %v4186 = vmul.f32 %v4079, %v4098
  %v4187 = vmul.f32 %v4083, %v4099
  %v4188 = vmul.f32 %v4087, %v4100
  %v4189 = vmul.f32 %v4091, %v4101
  %v4190 = vadd.f32 %v4174, %v4182
  %v4191 = vadd.f32 %v4175, %v4183
  %v4192 = vadd.f32 %v4176, %v4184
  %v4193 = vadd.f32 %v4177, %v4185
  %v4194 = vadd.f32 %v4178, %v4186
  %v4195 = vadd.f32 %v4179, %v4187
  %v4196 = vadd.f32 %v4180, %v4188
  %v4197 = vadd.f32 %v4181, %v4189
  %v4198 = vtanh.pop %v4190
  %v4199 = vtanh.pop %v4191
  %v4200 = vtanh.pop %v4192
  %v4201 = vtanh.pop %v4193
  %v4202 = vtanh.pop %v4194
  %v4203 = vtanh.pop %v4195
  %v4204 = vtanh.pop %v4196
  %v4205 = vtanh.pop %v4197
  %v4206 = vmul.f32 %v4135, %v4198
  %v4207 = vmul.f32 %v4137, %v4199
  %v4208 = vmul.f32 %v4139, %v4200
  %v4209 = vmul.f32 %v4141, %v4201
  %v4210 = vmul.f32 %v4143, %v4202
  %v4211 = vmul.f32 %v4145, %v4203
  %v4212 = vmul.f32 %v4147, %v4204
  %v4213 = vmul.f32 %v4149, %v4205
  %v4214 = vpack.c.bf16 %v4206, %v4206
  %v4215 = vpack.c.bf16 %v4207, %v4207
  %v4216 = vpack.c.bf16 %v4208, %v4208
  %v4217 = vpack.c.bf16 %v4209, %v4209
  %v4218 = vpack.c.bf16 %v4210, %v4210
  %v4219 = vpack.c.bf16 %v4211, %v4211
  %v4220 = vpack.c.bf16 %v4212, %v4212
  %v4221 = vpack.c.bf16 %v4213, %v4213
  %vm4222 = vsmask.f32 7950
  %vm4223 = vmand %vm3713, %vm4222
  %v4224 = vld [vmem:[%s2] sm:$0x8]
  %v4225 = vsel %vm4223, %v4214, %v4224
  %4226 = vst [vmem:[%s2] sm:$0x8] %v4225
  %v4227 = vld [vmem:[%s2 + $0x8] sm:$0x8]
  %v4228 = vsel %vm4223, %v4215, %v4227
  %4229 = vst [vmem:[%s2 + $0x8] sm:$0x8] %v4228
  %v4230 = vld [vmem:[%s2 + $0x10] sm:$0x8]
  %v4231 = vsel %vm4223, %v4216, %v4230
  %4232 = vst [vmem:[%s2 + $0x10] sm:$0x8] %v4231
  %v4233 = vld [vmem:[%s2 + $0x18] sm:$0x8]
  %v4234 = vsel %vm4223, %v4217, %v4233
  %4235 = vst [vmem:[%s2 + $0x18] sm:$0x8] %v4234
  %v4236 = vld [vmem:[%s2 + $0x20] sm:$0x8]
  %v4237 = vsel %vm4223, %v4218, %v4236
  %4238 = vst [vmem:[%s2 + $0x20] sm:$0x8] %v4237
  %v4239 = vld [vmem:[%s2 + $0x28] sm:$0x8]
  %v4240 = vsel %vm4223, %v4219, %v4239
  %4241 = vst [vmem:[%s2 + $0x28] sm:$0x8] %v4240
  %v4242 = vld [vmem:[%s2 + $0x30] sm:$0x8]
  %v4243 = vsel %vm4223, %v4220, %v4242
  %4244 = vst [vmem:[%s2 + $0x30] sm:$0x8] %v4243
  %v4245 = vld [vmem:[%s2 + $0x38] sm:$0x8]
  %v4246 = vsel %vm4223, %v4221, %v4245
  %4247 = vst [vmem:[%s2 + $0x38] sm:$0x8] %v4246
  %v4248 = vld [vmem:[%s0 + $0x10] sm:$0x11]
  %v4249 = vld [vmem:[%s0 + $0x18] sm:$0x11]
  %v4250 = vld [vmem:[%s0 + $0x30] sm:$0x11]
  %v4251 = vld [vmem:[%s0 + $0x38] sm:$0x11]
  %v4252 = vld [vmem:[%s0 + $0x50] sm:$0x11]
  %v4253 = vld [vmem:[%s0 + $0x58] sm:$0x11]
  %v4254 = vld [vmem:[%s0 + $0x70] sm:$0x11]
  %v4255 = vld [vmem:[%s0 + $0x78] sm:$0x11]
  %v4256 = vld [vmem:[%s0 + $0x90] sm:$0x11]
  %v4257 = vld [vmem:[%s0 + $0x98] sm:$0x11]
  %v4258 = vld [vmem:[%s0 + $0xb0] sm:$0x11]
  %v4259 = vld [vmem:[%s0 + $0xb8] sm:$0x11]
  %v4260 = vld [vmem:[%s0 + $0xd0] sm:$0x11]
  %v4261 = vld [vmem:[%s0 + $0xd8] sm:$0x11]
  %v4262 = vld [vmem:[%s0 + $0xf0] sm:$0x11]
  %v4263 = vld [vmem:[%s0 + $0xf8] sm:$0x11]
  %v4264 = vunpack.c.l.bf16 %v4248
  %v4265 = vunpack.c.h.bf16 %v4248
  %v4266 = vunpack.c.l.bf16 %v4249
  %v4267 = vunpack.c.h.bf16 %v4249
  %v4268 = vunpack.c.l.bf16 %v4250
  %v4269 = vunpack.c.h.bf16 %v4250
  %v4270 = vunpack.c.l.bf16 %v4251
  %v4271 = vunpack.c.h.bf16 %v4251
  %v4272 = vunpack.c.l.bf16 %v4252
  %v4273 = vunpack.c.h.bf16 %v4252
  %v4274 = vunpack.c.l.bf16 %v4253
  %v4275 = vunpack.c.h.bf16 %v4253
  %v4276 = vunpack.c.l.bf16 %v4254
  %v4277 = vunpack.c.h.bf16 %v4254
  %v4278 = vunpack.c.l.bf16 %v4255
  %v4279 = vunpack.c.h.bf16 %v4255
  %v4280 = vunpack.c.l.bf16 %v4256
  %v4281 = vunpack.c.h.bf16 %v4256
  %v4282 = vunpack.c.l.bf16 %v4257
  %v4283 = vunpack.c.h.bf16 %v4257
  %v4284 = vunpack.c.l.bf16 %v4258
  %v4285 = vunpack.c.h.bf16 %v4258
  %v4286 = vunpack.c.l.bf16 %v4259
  %v4287 = vunpack.c.h.bf16 %v4259
  %v4288 = vunpack.c.l.bf16 %v4260
  %v4289 = vunpack.c.h.bf16 %v4260
  %v4290 = vunpack.c.l.bf16 %v4261
  %v4291 = vunpack.c.h.bf16 %v4261
  %v4292 = vunpack.c.l.bf16 %v4262
  %v4293 = vunpack.c.h.bf16 %v4262
  %v4294 = vunpack.c.l.bf16 %v4263
  %v4295 = vunpack.c.h.bf16 %v4263
  %v4304 = vunpack.c.l.b16 %v4214
  %v4305 = vunpack.c.l.b16 %v4215
  %v4306 = vunpack.c.l.b16 %v4216
  %v4307 = vunpack.c.l.b16 %v4217
  %v4308 = vunpack.c.l.b16 %v4218
  %v4309 = vunpack.c.l.b16 %v4219
  %v4310 = vunpack.c.l.b16 %v4220
  %v4311 = vunpack.c.l.b16 %v4221
  %v4312 = vrot.slane %v4304, 7
  %v4313 = vrot.slane %v4305, 6
  %v4314 = vsel %vm747, %v4313, %v4312
  %v4315 = vrot.slane %v4306, 5
  %v4316 = vsel %vm750, %v4315, %v4314
  %v4317 = vrot.slane %v4307, 4
  %v4318 = vsel %vm753, %v4317, %v4316
  %v4319 = vrot.slane %v4308, 3
  %v4320 = vsel %vm756, %v4319, %v4318
  %v4321 = vrot.slane %v4309, 2
  %v4322 = vsel %vm759, %v4321, %v4320
  %v4323 = vrot.slane %v4310, 1
  %v4324 = vsel %vm762, %v4323, %v4322
  %v4325 = vsel %vm765, %v4311, %v4324
  %v4326 = vpack.c.b16 %v4325, %v4325
  %4328 = vmatprep.subr.bf16.mxu0 %v226
  %4329 = vmatpush1.bf16.msra.mxu0 %v225
  %4330 = vmatprep.subr.bf16.mxu0 %v222
  %4331 = vmatpush1.bf16.msra.mxu0 %v221
  %4332 = vmatprep.subr.bf16.mxu0 %v218
  %4333 = vmatpush1.bf16.msra.mxu0 %v217
  %4334 = vmatprep.subr.bf16.mxu0 %v214
  %4335 = vmatpush1.bf16.msra.mxu0 %v213
  %4336 = vmatprep.subr.bf16.mxu0 %v210
  %4337 = vmatpush1.bf16.msra.mxu0 %v209
  %4338 = vmatprep.subr.bf16.mxu0 %v206
  %4339 = vmatpush1.bf16.msra.mxu0 %v205
  %4340 = vmatprep.subr.bf16.mxu0 %v202
  %4341 = vmatpush1.bf16.msra.mxu0 %v201
  %4342 = vmatprep.subr.bf16.mxu0 %v198
  %4343 = vmatpush1.bf16.msra.mxu0 %v197
  %4344 = vmatprep.subr.bf16.mxu0 0
  %4345 = vmatpush2.bf16.msra.mxu0 0
  %4346 = vmatprep.subr.bf16.mxu0 0
  %4347 = vmatpush2.bf16.msra.mxu0 0
  %4348 = vmatprep.subr.bf16.mxu0 0
  %4349 = vmatpush2.bf16.msra.mxu0 0
  %4350 = vmatprep.subr.bf16.mxu0 0
  %4351 = vmatpush2.bf16.msra.mxu0 0
  %4352 = vmatprep.subr.bf16.mxu0 0
  %4353 = vmatpush2.bf16.msra.mxu0 0
  %4354 = vmatprep.subr.bf16.mxu0 0
  %4355 = vmatpush2.bf16.msra.mxu0 0
  %4356 = vmatprep.subr.bf16.mxu0 0
  %4357 = vmatpush2.bf16.msra.mxu0 0
  %4358 = vmatprep.subr.bf16.mxu0 0
  %4359 = vmatpush2.bf16.msra.mxu0 0
  %4360 = vmatprep.mubr.bf16.mxu0 0
  %4361 = vmatmul.mubr.bf16.gmra.mxu0 %v4326
  %v4362 = vpop.f32.mrf.mxu0
  %v4363 = vadd.f32 0.0, %v4362
  %v4364 = vpop.f32.mrf.mxu0
  %v4365 = vadd.f32 0.0, %v4364
  %v4366 = vpop.f32.mrf.mxu0
  %v4367 = vpop.f32.mrf.mxu0
  %4368 = vdwg.mxu0
  %4369 = vmatprep.subr.bf16.mxu0 %v228
  %4370 = vmatpush1.bf16.msra.mxu0 %v227
  %4371 = vmatprep.subr.bf16.mxu0 %v224
  %4372 = vmatpush1.bf16.msra.mxu0 %v223
  %4373 = vmatprep.subr.bf16.mxu0 %v220
  %4374 = vmatpush1.bf16.msra.mxu0 %v219
  %4375 = vmatprep.subr.bf16.mxu0 %v216
  %4376 = vmatpush1.bf16.msra.mxu0 %v215
  %4377 = vmatprep.subr.bf16.mxu0 %v212
  %4378 = vmatpush1.bf16.msra.mxu0 %v211
  %4379 = vmatprep.subr.bf16.mxu0 %v208
  %4380 = vmatpush1.bf16.msra.mxu0 %v207
  %4381 = vmatprep.subr.bf16.mxu0 %v204
  %4382 = vmatpush1.bf16.msra.mxu0 %v203
  %4383 = vmatprep.subr.bf16.mxu0 %v200
  %4384 = vmatpush1.bf16.msra.mxu0 %v199
  %4385 = vmatprep.subr.bf16.mxu0 0
  %4386 = vmatpush2.bf16.msra.mxu0 0
  %4387 = vmatprep.subr.bf16.mxu0 0
  %4388 = vmatpush2.bf16.msra.mxu0 0
  %4389 = vmatprep.subr.bf16.mxu0 0
  %4390 = vmatpush2.bf16.msra.mxu0 0
  %4391 = vmatprep.subr.bf16.mxu0 0
  %4392 = vmatpush2.bf16.msra.mxu0 0
  %4393 = vmatprep.subr.bf16.mxu0 0
  %4394 = vmatpush2.bf16.msra.mxu0 0
  %4395 = vmatprep.subr.bf16.mxu0 0
  %4396 = vmatpush2.bf16.msra.mxu0 0
  %4397 = vmatprep.subr.bf16.mxu0 0
  %4398 = vmatpush2.bf16.msra.mxu0 0
  %4399 = vmatprep.subr.bf16.mxu0 0
  %4400 = vmatpush2.bf16.msra.mxu0 0
  %4401 = vmatprep.mubr.bf16.mxu0 0
  %4402 = vmatmul.mubr.bf16.gmra.mxu0 %v4326
  %v4403 = vpop.f32.mrf.mxu0
  %v4404 = vadd.f32 0.0, %v4403
  %v4405 = vpop.f32.mrf.mxu0
  %v4406 = vadd.f32 0.0, %v4405
  %v4407 = vpop.f32.mrf.mxu0
  %v4408 = vpop.f32.mrf.mxu0
  %4409 = vdwg.mxu0
  %v4414 = vrot.slane %v4363, 1
  %v4415 = vrot.slane %v4365, 1
  %v4416 = vrot.slane %v4404, 1
  %v4417 = vrot.slane %v4406, 1
  %v4418 = vrot.slane %v4363, 2
  %v4419 = vrot.slane %v4365, 2
  %v4420 = vrot.slane %v4404, 2
  %v4421 = vrot.slane %v4406, 2
  %v4422 = vrot.slane %v4363, 3
  %v4423 = vrot.slane %v4365, 3
  %v4424 = vrot.slane %v4404, 3
  %v4425 = vrot.slane %v4406, 3
  %v4426 = vrot.slane %v4363, 4
  %v4427 = vrot.slane %v4365, 4
  %v4428 = vrot.slane %v4404, 4
  %v4429 = vrot.slane %v4406, 4
  %v4430 = vrot.slane %v4363, 5
  %v4431 = vrot.slane %v4365, 5
  %v4432 = vrot.slane %v4404, 5
  %v4433 = vrot.slane %v4406, 5
  %v4434 = vrot.slane %v4363, 6
  %v4435 = vrot.slane %v4365, 6
  %v4436 = vrot.slane %v4404, 6
  %v4437 = vrot.slane %v4406, 6
  %v4438 = vrot.slane %v4363, 7
  %v4439 = vrot.slane %v4365, 7
  %v4440 = vrot.slane %v4404, 7
  %v4441 = vrot.slane %v4406, 7
  %v4474 = vadd.f32 %v4264, %v4363
  %v4475 = vadd.f32 %v4265, %v4365
  %v4476 = vadd.f32 %v4266, %v4404
  %v4477 = vadd.f32 %v4267, %v4406
  %v4478 = vadd.f32 %v4268, %v4414
  %v4479 = vadd.f32 %v4269, %v4415
  %v4480 = vadd.f32 %v4270, %v4416
  %v4481 = vadd.f32 %v4271, %v4417
  %v4482 = vadd.f32 %v4272, %v4418
  %v4483 = vadd.f32 %v4273, %v4419
  %v4484 = vadd.f32 %v4274, %v4420
  %v4485 = vadd.f32 %v4275, %v4421
  %v4486 = vadd.f32 %v4276, %v4422
  %v4487 = vadd.f32 %v4277, %v4423
  %v4488 = vadd.f32 %v4278, %v4424
  %v4489 = vadd.f32 %v4279, %v4425
  %v4490 = vadd.f32 %v4280, %v4426
  %v4491 = vadd.f32 %v4281, %v4427
  %v4492 = vadd.f32 %v4282, %v4428
  %v4493 = vadd.f32 %v4283, %v4429
  %v4494 = vadd.f32 %v4284, %v4430
  %v4495 = vadd.f32 %v4285, %v4431
  %v4496 = vadd.f32 %v4286, %v4432
  %v4497 = vadd.f32 %v4287, %v4433
  %v4498 = vadd.f32 %v4288, %v4434
  %v4499 = vadd.f32 %v4289, %v4435
  %v4500 = vadd.f32 %v4290, %v4436
  %v4501 = vadd.f32 %v4291, %v4437
  %v4502 = vadd.f32 %v4292, %v4438
  %v4503 = vadd.f32 %v4293, %v4439
  %v4504 = vadd.f32 %v4294, %v4440
  %v4505 = vadd.f32 %v4295, %v4441
  %v4506 = vxor.u32 %v4474, 2147483648
  %v4507 = vxor.u32 %v4475, 2147483648
  %v4508 = vxor.u32 %v4478, 2147483648
  %v4509 = vxor.u32 %v4479, 2147483648
  %v4510 = vxor.u32 %v4482, 2147483648
  %v4511 = vxor.u32 %v4483, 2147483648
  %v4512 = vxor.u32 %v4486, 2147483648
  %v4513 = vxor.u32 %v4487, 2147483648
  %v4514 = vxor.u32 %v4490, 2147483648
  %v4515 = vxor.u32 %v4491, 2147483648
  %v4516 = vxor.u32 %v4494, 2147483648
  %v4517 = vxor.u32 %v4495, 2147483648
  %v4518 = vxor.u32 %v4498, 2147483648
  %v4519 = vxor.u32 %v4499, 2147483648
  %v4520 = vxor.u32 %v4502, 2147483648
  %v4521 = vxor.u32 %v4503, 2147483648
  %v4522 = vmul.f32 %v4506, 1.442695
  %v4523 = vpow.pop %v4522
  %v4524 = vmul.f32 %v4507, 1.442695
  %v4525 = vpow.pop %v4524
  %v4526 = vmul.f32 %v4508, 1.442695
  %v4527 = vpow.pop %v4526
  %v4528 = vmul.f32 %v4509, 1.442695
  %v4529 = vpow.pop %v4528
  %v4530 = vmul.f32 %v4510, 1.442695
  %v4531 = vpow.pop %v4530
  %v4532 = vmul.f32 %v4511, 1.442695
  %v4533 = vpow.pop %v4532
  %v4534 = vmul.f32 %v4512, 1.442695
  %v4535 = vpow.pop %v4534
  %v4536 = vmul.f32 %v4513, 1.442695
  %v4537 = vpow.pop %v4536
  %v4538 = vmul.f32 %v4514, 1.442695
  %v4539 = vpow.pop %v4538
  %v4540 = vmul.f32 %v4515, 1.442695
  %v4541 = vpow.pop %v4540
  %v4542 = vmul.f32 %v4516, 1.442695
  %v4543 = vpow.pop %v4542
  %v4544 = vmul.f32 %v4517, 1.442695
  %v4545 = vpow.pop %v4544
  %v4546 = vmul.f32 %v4518, 1.442695
  %v4547 = vpow.pop %v4546
  %v4548 = vmul.f32 %v4519, 1.442695
  %v4549 = vpow.pop %v4548
  %v4550 = vmul.f32 %v4520, 1.442695
  %v4551 = vpow.pop %v4550
  %v4552 = vmul.f32 %v4521, 1.442695
  %v4553 = vpow.pop %v4552
  %v4554 = vadd.f32 %v4523, 1.0
  %v4555 = vadd.f32 %v4525, 1.0
  %v4556 = vadd.f32 %v4527, 1.0
  %v4557 = vadd.f32 %v4529, 1.0
  %v4558 = vadd.f32 %v4531, 1.0
  %v4559 = vadd.f32 %v4533, 1.0
  %v4560 = vadd.f32 %v4535, 1.0
  %v4561 = vadd.f32 %v4537, 1.0
  %v4562 = vadd.f32 %v4539, 1.0
  %v4563 = vadd.f32 %v4541, 1.0
  %v4564 = vadd.f32 %v4543, 1.0
  %v4565 = vadd.f32 %v4545, 1.0
  %v4566 = vadd.f32 %v4547, 1.0
  %v4567 = vadd.f32 %v4549, 1.0
  %v4568 = vadd.f32 %v4551, 1.0
  %v4569 = vadd.f32 %v4553, 1.0
  %v4570 = vrcp.pop %v4554
  %v4571 = vmul.f32 1.0, %v4570
  %v4572 = vrcp.pop %v4555
  %v4573 = vmul.f32 1.0, %v4572
  %v4574 = vrcp.pop %v4556
  %v4575 = vmul.f32 1.0, %v4574
  %v4576 = vrcp.pop %v4557
  %v4577 = vmul.f32 1.0, %v4576
  %v4578 = vrcp.pop %v4558
  %v4579 = vmul.f32 1.0, %v4578
  %v4580 = vrcp.pop %v4559
  %v4581 = vmul.f32 1.0, %v4580
  %v4582 = vrcp.pop %v4560
  %v4583 = vmul.f32 1.0, %v4582
  %v4584 = vrcp.pop %v4561
  %v4585 = vmul.f32 1.0, %v4584
  %v4586 = vrcp.pop %v4562
  %v4587 = vmul.f32 1.0, %v4586
  %v4588 = vrcp.pop %v4563
  %v4589 = vmul.f32 1.0, %v4588
  %v4590 = vrcp.pop %v4564
  %v4591 = vmul.f32 1.0, %v4590
  %v4592 = vrcp.pop %v4565
  %v4593 = vmul.f32 1.0, %v4592
  %v4594 = vrcp.pop %v4566
  %v4595 = vmul.f32 1.0, %v4594
  %v4596 = vrcp.pop %v4567
  %v4597 = vmul.f32 1.0, %v4596
  %v4598 = vrcp.pop %v4568
  %v4599 = vmul.f32 1.0, %v4598
  %v4600 = vrcp.pop %v4569
  %v4601 = vmul.f32 1.0, %v4600
  %v4602 = vtanh.pop %v4476
  %v4603 = vtanh.pop %v4480
  %v4604 = vtanh.pop %v4484
  %v4605 = vtanh.pop %v4488
  %v4606 = vtanh.pop %v4492
  %v4607 = vtanh.pop %v4496
  %v4608 = vtanh.pop %v4500
  %v4609 = vtanh.pop %v4504
  %v4610 = vxor.u32 %v4477, 2147483648
  %v4611 = vxor.u32 %v4481, 2147483648
  %v4612 = vxor.u32 %v4485, 2147483648
  %v4613 = vxor.u32 %v4489, 2147483648
  %v4614 = vxor.u32 %v4493, 2147483648
  %v4615 = vxor.u32 %v4497, 2147483648
  %v4616 = vxor.u32 %v4501, 2147483648
  %v4617 = vxor.u32 %v4505, 2147483648
  %v4618 = vmul.f32 %v4610, 1.442695
  %v4619 = vpow.pop %v4618
  %v4620 = vmul.f32 %v4611, 1.442695
  %v4621 = vpow.pop %v4620
  %v4622 = vmul.f32 %v4612, 1.442695
  %v4623 = vpow.pop %v4622
  %v4624 = vmul.f32 %v4613, 1.442695
  %v4625 = vpow.pop %v4624
  %v4626 = vmul.f32 %v4614, 1.442695
  %v4627 = vpow.pop %v4626
  %v4628 = vmul.f32 %v4615, 1.442695
  %v4629 = vpow.pop %v4628
  %v4630 = vmul.f32 %v4616, 1.442695
  %v4631 = vpow.pop %v4630
  %v4632 = vmul.f32 %v4617, 1.442695
  %v4633 = vpow.pop %v4632
  %v4634 = vadd.f32 %v4619, 1.0
  %v4635 = vadd.f32 %v4621, 1.0
  %v4636 = vadd.f32 %v4623, 1.0
  %v4637 = vadd.f32 %v4625, 1.0
  %v4638 = vadd.f32 %v4627, 1.0
  %v4639 = vadd.f32 %v4629, 1.0
  %v4640 = vadd.f32 %v4631, 1.0
  %v4641 = vadd.f32 %v4633, 1.0
  %v4642 = vrcp.pop %v4634
  %v4643 = vmul.f32 1.0, %v4642
  %v4644 = vrcp.pop %v4635
  %v4645 = vmul.f32 1.0, %v4644
  %v4646 = vrcp.pop %v4636
  %v4647 = vmul.f32 1.0, %v4646
  %v4648 = vrcp.pop %v4637
  %v4649 = vmul.f32 1.0, %v4648
  %v4650 = vrcp.pop %v4638
  %v4651 = vmul.f32 1.0, %v4650
  %v4652 = vrcp.pop %v4639
  %v4653 = vmul.f32 1.0, %v4652
  %v4654 = vrcp.pop %v4640
  %v4655 = vmul.f32 1.0, %v4654
  %v4656 = vrcp.pop %v4641
  %v4657 = vmul.f32 1.0, %v4656
  %v4666 = vrot.slane %v4190, 7
  %v4667 = vrot.slane %v4191, 7
  %v4668 = vrot.slane %v4192, 7
  %v4669 = vrot.slane %v4193, 7
  %v4670 = vrot.slane %v4194, 7
  %v4671 = vrot.slane %v4195, 7
  %v4672 = vrot.slane %v4196, 7
  %v4673 = vrot.slane %v4197, 7
  %v4682 = vmul.f32 %v4573, %v4666
  %v4683 = vmul.f32 %v4577, %v4667
  %v4684 = vmul.f32 %v4581, %v4668
  %v4685 = vmul.f32 %v4585, %v4669
  %v4686 = vmul.f32 %v4589, %v4670
  %v4687 = vmul.f32 %v4593, %v4671
  %v4688 = vmul.f32 %v4597, %v4672
  %v4689 = vmul.f32 %v4601, %v4673
  %v4690 = vmul.f32 %v4571, %v4602
  %v4691 = vmul.f32 %v4575, %v4603
  %v4692 = vmul.f32 %v4579, %v4604
  %v4693 = vmul.f32 %v4583, %v4605
  %v4694 = vmul.f32 %v4587, %v4606
  %v4695 = vmul.f32 %v4591, %v4607
  %v4696 = vmul.f32 %v4595, %v4608
  %v4697 = vmul.f32 %v4599, %v4609
  %v4698 = vadd.f32 %v4682, %v4690
  %v4699 = vadd.f32 %v4683, %v4691
  %v4700 = vadd.f32 %v4684, %v4692
  %v4701 = vadd.f32 %v4685, %v4693
  %v4702 = vadd.f32 %v4686, %v4694
  %v4703 = vadd.f32 %v4687, %v4695
  %v4704 = vadd.f32 %v4688, %v4696
  %v4705 = vadd.f32 %v4689, %v4697
  %v4706 = vtanh.pop %v4698
  %v4707 = vtanh.pop %v4699
  %v4708 = vtanh.pop %v4700
  %v4709 = vtanh.pop %v4701
  %v4710 = vtanh.pop %v4702
  %v4711 = vtanh.pop %v4703
  %v4712 = vtanh.pop %v4704
  %v4713 = vtanh.pop %v4705
  %v4714 = vmul.f32 %v4643, %v4706
  %v4715 = vmul.f32 %v4645, %v4707
  %v4716 = vmul.f32 %v4647, %v4708
  %v4717 = vmul.f32 %v4649, %v4709
  %v4718 = vmul.f32 %v4651, %v4710
  %v4719 = vmul.f32 %v4653, %v4711
  %v4720 = vmul.f32 %v4655, %v4712
  %v4721 = vmul.f32 %v4657, %v4713
  %v4722 = vpack.c.bf16 %v4714, %v4714
  %v4723 = vpack.c.bf16 %v4715, %v4715
  %v4724 = vpack.c.bf16 %v4716, %v4716
  %v4725 = vpack.c.bf16 %v4717, %v4717
  %v4726 = vpack.c.bf16 %v4718, %v4718
  %v4727 = vpack.c.bf16 %v4719, %v4719
  %v4728 = vpack.c.bf16 %v4720, %v4720
  %v4729 = vpack.c.bf16 %v4721, %v4721
  %v4730 = vld [vmem:[%s2 + $0x4] sm:$0x1]
  %v4731 = vsel %vm657, %v4722, %v4730
  %4732 = vst [vmem:[%s2 + $0x4] sm:$0x1] %v4731
  %v4733 = vld [vmem:[%s2 + $0xc] sm:$0x1]
  %v4734 = vsel %vm657, %v4723, %v4733
  %4735 = vst [vmem:[%s2 + $0xc] sm:$0x1] %v4734
  %v4736 = vld [vmem:[%s2 + $0x14] sm:$0x1]
  %v4737 = vsel %vm657, %v4724, %v4736
  %4738 = vst [vmem:[%s2 + $0x14] sm:$0x1] %v4737
  %v4739 = vld [vmem:[%s2 + $0x1c] sm:$0x1]
  %v4740 = vsel %vm657, %v4725, %v4739
  %4741 = vst [vmem:[%s2 + $0x1c] sm:$0x1] %v4740
  %v4742 = vld [vmem:[%s2 + $0x24] sm:$0x1]
  %v4743 = vsel %vm657, %v4726, %v4742
  %4744 = vst [vmem:[%s2 + $0x24] sm:$0x1] %v4743
  %v4745 = vld [vmem:[%s2 + $0x2c] sm:$0x1]
  %v4746 = vsel %vm657, %v4727, %v4745
  %4747 = vst [vmem:[%s2 + $0x2c] sm:$0x1] %v4746
  %v4748 = vld [vmem:[%s2 + $0x34] sm:$0x1]
  %v4749 = vsel %vm657, %v4728, %v4748
  %4750 = vst [vmem:[%s2 + $0x34] sm:$0x1] %v4749
  %v4751 = vld [vmem:[%s2 + $0x3c] sm:$0x1]
  %v4752 = vsel %vm657, %v4729, %v4751
  %4753 = vst [vmem:[%s2 + $0x3c] sm:$0x1] %v4752
  %v4754 = vld [vmem:[%s0 + $0x10] sm:$0x11]
  %v4755 = vld [vmem:[%s0 + $0x18] sm:$0x11]
  %v4756 = vld [vmem:[%s0 + $0x30] sm:$0x11]
  %v4757 = vld [vmem:[%s0 + $0x38] sm:$0x11]
  %v4758 = vld [vmem:[%s0 + $0x50] sm:$0x11]
  %v4759 = vld [vmem:[%s0 + $0x58] sm:$0x11]
  %v4760 = vld [vmem:[%s0 + $0x70] sm:$0x11]
  %v4761 = vld [vmem:[%s0 + $0x78] sm:$0x11]
  %v4762 = vld [vmem:[%s0 + $0x90] sm:$0x11]
  %v4763 = vld [vmem:[%s0 + $0x98] sm:$0x11]
  %v4764 = vld [vmem:[%s0 + $0xb0] sm:$0x11]
  %v4765 = vld [vmem:[%s0 + $0xb8] sm:$0x11]
  %v4766 = vld [vmem:[%s0 + $0xd0] sm:$0x11]
  %v4767 = vld [vmem:[%s0 + $0xd8] sm:$0x11]
  %v4768 = vld [vmem:[%s0 + $0xf0] sm:$0x11]
  %v4769 = vld [vmem:[%s0 + $0xf8] sm:$0x11]
  %v4770 = vunpack.c.l.bf16 %v4754
  %v4771 = vunpack.c.h.bf16 %v4754
  %v4772 = vunpack.c.l.bf16 %v4755
  %v4773 = vunpack.c.h.bf16 %v4755
  %v4774 = vunpack.c.l.bf16 %v4756
  %v4775 = vunpack.c.h.bf16 %v4756
  %v4776 = vunpack.c.l.bf16 %v4757
  %v4777 = vunpack.c.h.bf16 %v4757
  %v4778 = vunpack.c.l.bf16 %v4758
  %v4779 = vunpack.c.h.bf16 %v4758
  %v4780 = vunpack.c.l.bf16 %v4759
  %v4781 = vunpack.c.h.bf16 %v4759
  %v4782 = vunpack.c.l.bf16 %v4760
  %v4783 = vunpack.c.h.bf16 %v4760
  %v4784 = vunpack.c.l.bf16 %v4761
  %v4785 = vunpack.c.h.bf16 %v4761
  %v4786 = vunpack.c.l.bf16 %v4762
  %v4787 = vunpack.c.h.bf16 %v4762
  %v4788 = vunpack.c.l.bf16 %v4763
  %v4789 = vunpack.c.h.bf16 %v4763
  %v4790 = vunpack.c.l.bf16 %v4764
  %v4791 = vunpack.c.h.bf16 %v4764
  %v4792 = vunpack.c.l.bf16 %v4765
  %v4793 = vunpack.c.h.bf16 %v4765
  %v4794 = vunpack.c.l.bf16 %v4766
  %v4795 = vunpack.c.h.bf16 %v4766
  %v4796 = vunpack.c.l.bf16 %v4767
  %v4797 = vunpack.c.h.bf16 %v4767
  %v4798 = vunpack.c.l.bf16 %v4768
  %v4799 = vunpack.c.h.bf16 %v4768
  %v4800 = vunpack.c.l.bf16 %v4769
  %v4801 = vunpack.c.h.bf16 %v4769
  %v4810 = vunpack.c.l.b16 %v4722
  %v4811 = vunpack.c.l.b16 %v4723
  %v4812 = vunpack.c.l.b16 %v4724
  %v4813 = vunpack.c.l.b16 %v4725
  %v4814 = vunpack.c.l.b16 %v4726
  %v4815 = vunpack.c.l.b16 %v4727
  %v4816 = vunpack.c.l.b16 %v4728
  %v4817 = vunpack.c.l.b16 %v4729
  %v4818 = vrot.slane %v4811, 7
  %v4819 = vsel %vm747, %v4818, %v4810
  %v4820 = vrot.slane %v4812, 6
  %v4821 = vsel %vm750, %v4820, %v4819
  %v4822 = vrot.slane %v4813, 5
  %v4823 = vsel %vm753, %v4822, %v4821
  %v4824 = vrot.slane %v4814, 4
  %v4825 = vsel %vm756, %v4824, %v4823
  %v4826 = vrot.slane %v4815, 3
  %v4827 = vsel %vm759, %v4826, %v4825
  %v4828 = vrot.slane %v4816, 2
  %v4829 = vsel %vm762, %v4828, %v4827
  %v4830 = vrot.slane %v4817, 1
  %v4831 = vsel %vm765, %v4830, %v4829
  %v4832 = vpack.c.b16 %v4831, %v4831
  %4834 = vmatprep.subr.bf16.mxu0 %v226
  %4835 = vmatpush1.bf16.msra.mxu0 %v225
  %4836 = vmatprep.subr.bf16.mxu0 %v222
  %4837 = vmatpush1.bf16.msra.mxu0 %v221
  %4838 = vmatprep.subr.bf16.mxu0 %v218
  %4839 = vmatpush1.bf16.msra.mxu0 %v217
  %4840 = vmatprep.subr.bf16.mxu0 %v214
  %4841 = vmatpush1.bf16.msra.mxu0 %v213
  %4842 = vmatprep.subr.bf16.mxu0 %v210
  %4843 = vmatpush1.bf16.msra.mxu0 %v209
  %4844 = vmatprep.subr.bf16.mxu0 %v206
  %4845 = vmatpush1.bf16.msra.mxu0 %v205
  %4846 = vmatprep.subr.bf16.mxu0 %v202
  %4847 = vmatpush1.bf16.msra.mxu0 %v201
  %4848 = vmatprep.subr.bf16.mxu0 %v198
  %4849 = vmatpush1.bf16.msra.mxu0 %v197
  %4850 = vmatprep.subr.bf16.mxu0 0
  %4851 = vmatpush2.bf16.msra.mxu0 0
  %4852 = vmatprep.subr.bf16.mxu0 0
  %4853 = vmatpush2.bf16.msra.mxu0 0
  %4854 = vmatprep.subr.bf16.mxu0 0
  %4855 = vmatpush2.bf16.msra.mxu0 0
  %4856 = vmatprep.subr.bf16.mxu0 0
  %4857 = vmatpush2.bf16.msra.mxu0 0
  %4858 = vmatprep.subr.bf16.mxu0 0
  %4859 = vmatpush2.bf16.msra.mxu0 0
  %4860 = vmatprep.subr.bf16.mxu0 0
  %4861 = vmatpush2.bf16.msra.mxu0 0
  %4862 = vmatprep.subr.bf16.mxu0 0
  %4863 = vmatpush2.bf16.msra.mxu0 0
  %4864 = vmatprep.subr.bf16.mxu0 0
  %4865 = vmatpush2.bf16.msra.mxu0 0
  %4866 = vmatprep.mubr.bf16.mxu0 0
  %4867 = vmatmul.mubr.bf16.gmra.mxu0 %v4832
  %v4868 = vpop.f32.mrf.mxu0
  %v4869 = vadd.f32 0.0, %v4868
  %v4870 = vpop.f32.mrf.mxu0
  %v4871 = vadd.f32 0.0, %v4870
  %v4872 = vpop.f32.mrf.mxu0
  %v4873 = vpop.f32.mrf.mxu0
  %4874 = vdwg.mxu0
  %4875 = vmatprep.subr.bf16.mxu0 %v228
  %4876 = vmatpush1.bf16.msra.mxu0 %v227
  %4877 = vmatprep.subr.bf16.mxu0 %v224
  %4878 = vmatpush1.bf16.msra.mxu0 %v223
  %4879 = vmatprep.subr.bf16.mxu0 %v220
  %4880 = vmatpush1.bf16.msra.mxu0 %v219
  %4881 = vmatprep.subr.bf16.mxu0 %v216
  %4882 = vmatpush1.bf16.msra.mxu0 %v215
  %4883 = vmatprep.subr.bf16.mxu0 %v212
  %4884 = vmatpush1.bf16.msra.mxu0 %v211
  %4885 = vmatprep.subr.bf16.mxu0 %v208
  %4886 = vmatpush1.bf16.msra.mxu0 %v207
  %4887 = vmatprep.subr.bf16.mxu0 %v204
  %4888 = vmatpush1.bf16.msra.mxu0 %v203
  %4889 = vmatprep.subr.bf16.mxu0 %v200
  %4890 = vmatpush1.bf16.msra.mxu0 %v199
  %4891 = vmatprep.subr.bf16.mxu0 0
  %4892 = vmatpush2.bf16.msra.mxu0 0
  %4893 = vmatprep.subr.bf16.mxu0 0
  %4894 = vmatpush2.bf16.msra.mxu0 0
  %4895 = vmatprep.subr.bf16.mxu0 0
  %4896 = vmatpush2.bf16.msra.mxu0 0
  %4897 = vmatprep.subr.bf16.mxu0 0
  %4898 = vmatpush2.bf16.msra.mxu0 0
  %4899 = vmatprep.subr.bf16.mxu0 0
  %4900 = vmatpush2.bf16.msra.mxu0 0
  %4901 = vmatprep.subr.bf16.mxu0 0
  %4902 = vmatpush2.bf16.msra.mxu0 0
  %4903 = vmatprep.subr.bf16.mxu0 0
  %4904 = vmatpush2.bf16.msra.mxu0 0
  %4905 = vmatprep.subr.bf16.mxu0 0
  %4906 = vmatpush2.bf16.msra.mxu0 0
  %4907 = vmatprep.mubr.bf16.mxu0 0
  %4908 = vmatmul.mubr.bf16.gmra.mxu0 %v4832
  %v4909 = vpop.f32.mrf.mxu0
  %v4910 = vadd.f32 0.0, %v4909
  %v4911 = vpop.f32.mrf.mxu0
  %v4912 = vadd.f32 0.0, %v4911
  %v4913 = vpop.f32.mrf.mxu0
  %v4914 = vpop.f32.mrf.mxu0
  %4915 = vdwg.mxu0
  %v4920 = vrot.slane %v4869, 7
  %v4921 = vrot.slane %v4871, 7
  %v4922 = vrot.slane %v4910, 7
  %v4923 = vrot.slane %v4912, 7
  %v4924 = vrot.slane %v4869, 1
  %v4925 = vrot.slane %v4871, 1
  %v4926 = vrot.slane %v4910, 1
  %v4927 = vrot.slane %v4912, 1
  %v4928 = vrot.slane %v4869, 2
  %v4929 = vrot.slane %v4871, 2
  %v4930 = vrot.slane %v4910, 2
  %v4931 = vrot.slane %v4912, 2
  %v4932 = vrot.slane %v4869, 3
  %v4933 = vrot.slane %v4871, 3
  %v4934 = vrot.slane %v4910, 3
  %v4935 = vrot.slane %v4912, 3
  %v4936 = vrot.slane %v4869, 4
  %v4937 = vrot.slane %v4871, 4
  %v4938 = vrot.slane %v4910, 4
  %v4939 = vrot.slane %v4912, 4
  %v4940 = vrot.slane %v4869, 5
  %v4941 = vrot.slane %v4871, 5
  %v4942 = vrot.slane %v4910, 5
  %v4943 = vrot.slane %v4912, 5
  %v4944 = vrot.slane %v4869, 6
  %v4945 = vrot.slane %v4871, 6
  %v4946 = vrot.slane %v4910, 6
  %v4947 = vrot.slane %v4912, 6
  %v4980 = vadd.f32 %v4770, %v4920
  %v4981 = vadd.f32 %v4771, %v4921
  %v4982 = vadd.f32 %v4772, %v4922
  %v4983 = vadd.f32 %v4773, %v4923
  %v4984 = vadd.f32 %v4774, %v4869
  %v4985 = vadd.f32 %v4775, %v4871
  %v4986 = vadd.f32 %v4776, %v4910
  %v4987 = vadd.f32 %v4777, %v4912
  %v4988 = vadd.f32 %v4778, %v4924
  %v4989 = vadd.f32 %v4779, %v4925
  %v4990 = vadd.f32 %v4780, %v4926
  %v4991 = vadd.f32 %v4781, %v4927
  %v4992 = vadd.f32 %v4782, %v4928
  %v4993 = vadd.f32 %v4783, %v4929
  %v4994 = vadd.f32 %v4784, %v4930
  %v4995 = vadd.f32 %v4785, %v4931
  %v4996 = vadd.f32 %v4786, %v4932
  %v4997 = vadd.f32 %v4787, %v4933
  %v4998 = vadd.f32 %v4788, %v4934
  %v4999 = vadd.f32 %v4789, %v4935
  %v5000 = vadd.f32 %v4790, %v4936
  %v5001 = vadd.f32 %v4791, %v4937
  %v5002 = vadd.f32 %v4792, %v4938
  %v5003 = vadd.f32 %v4793, %v4939
  %v5004 = vadd.f32 %v4794, %v4940
  %v5005 = vadd.f32 %v4795, %v4941
  %v5006 = vadd.f32 %v4796, %v4942
  %v5007 = vadd.f32 %v4797, %v4943
  %v5008 = vadd.f32 %v4798, %v4944
  %v5009 = vadd.f32 %v4799, %v4945
  %v5010 = vadd.f32 %v4800, %v4946
  %v5011 = vadd.f32 %v4801, %v4947
  %v5012 = vxor.u32 %v4980, 2147483648
  %v5013 = vxor.u32 %v4981, 2147483648
  %v5014 = vxor.u32 %v4984, 2147483648
  %v5015 = vxor.u32 %v4985, 2147483648
  %v5016 = vxor.u32 %v4988, 2147483648
  %v5017 = vxor.u32 %v4989, 2147483648
  %v5018 = vxor.u32 %v4992, 2147483648
  %v5019 = vxor.u32 %v4993, 2147483648
  %v5020 = vxor.u32 %v4996, 2147483648
  %v5021 = vxor.u32 %v4997, 2147483648
  %v5022 = vxor.u32 %v5000, 2147483648
  %v5023 = vxor.u32 %v5001, 2147483648
  %v5024 = vxor.u32 %v5004, 2147483648
  %v5025 = vxor.u32 %v5005, 2147483648
  %v5026 = vxor.u32 %v5008, 2147483648
  %v5027 = vxor.u32 %v5009, 2147483648
  %v5028 = vmul.f32 %v5012, 1.442695
  %v5029 = vpow.pop %v5028
  %v5030 = vmul.f32 %v5013, 1.442695
  %v5031 = vpow.pop %v5030
  %v5032 = vmul.f32 %v5014, 1.442695
  %v5033 = vpow.pop %v5032
  %v5034 = vmul.f32 %v5015, 1.442695
  %v5035 = vpow.pop %v5034
  %v5036 = vmul.f32 %v5016, 1.442695
  %v5037 = vpow.pop %v5036
  %v5038 = vmul.f32 %v5017, 1.442695
  %v5039 = vpow.pop %v5038
  %v5040 = vmul.f32 %v5018, 1.442695
  %v5041 = vpow.pop %v5040
  %v5042 = vmul.f32 %v5019, 1.442695
  %v5043 = vpow.pop %v5042
  %v5044 = vmul.f32 %v5020, 1.442695
  %v5045 = vpow.pop %v5044
  %v5046 = vmul.f32 %v5021, 1.442695
  %v5047 = vpow.pop %v5046
  %v5048 = vmul.f32 %v5022, 1.442695
  %v5049 = vpow.pop %v5048
  %v5050 = vmul.f32 %v5023, 1.442695
  %v5051 = vpow.pop %v5050
  %v5052 = vmul.f32 %v5024, 1.442695
  %v5053 = vpow.pop %v5052
  %v5054 = vmul.f32 %v5025, 1.442695
  %v5055 = vpow.pop %v5054
  %v5056 = vmul.f32 %v5026, 1.442695
  %v5057 = vpow.pop %v5056
  %v5058 = vmul.f32 %v5027, 1.442695
  %v5059 = vpow.pop %v5058
  %v5060 = vadd.f32 %v5029, 1.0
  %v5061 = vadd.f32 %v5031, 1.0
  %v5062 = vadd.f32 %v5033, 1.0
  %v5063 = vadd.f32 %v5035, 1.0
  %v5064 = vadd.f32 %v5037, 1.0
  %v5065 = vadd.f32 %v5039, 1.0
  %v5066 = vadd.f32 %v5041, 1.0
  %v5067 = vadd.f32 %v5043, 1.0
  %v5068 = vadd.f32 %v5045, 1.0
  %v5069 = vadd.f32 %v5047, 1.0
  %v5070 = vadd.f32 %v5049, 1.0
  %v5071 = vadd.f32 %v5051, 1.0
  %v5072 = vadd.f32 %v5053, 1.0
  %v5073 = vadd.f32 %v5055, 1.0
  %v5074 = vadd.f32 %v5057, 1.0
  %v5075 = vadd.f32 %v5059, 1.0
  %v5076 = vrcp.pop %v5060
  %v5077 = vmul.f32 1.0, %v5076
  %v5078 = vrcp.pop %v5061
  %v5079 = vmul.f32 1.0, %v5078
  %v5080 = vrcp.pop %v5062
  %v5081 = vmul.f32 1.0, %v5080
  %v5082 = vrcp.pop %v5063
  %v5083 = vmul.f32 1.0, %v5082
  %v5084 = vrcp.pop %v5064
  %v5085 = vmul.f32 1.0, %v5084
  %v5086 = vrcp.pop %v5065
  %v5087 = vmul.f32 1.0, %v5086
  %v5088 = vrcp.pop %v5066
  %v5089 = vmul.f32 1.0, %v5088
  %v5090 = vrcp.pop %v5067
  %v5091 = vmul.f32 1.0, %v5090
  %v5092 = vrcp.pop %v5068
  %v5093 = vmul.f32 1.0, %v5092
  %v5094 = vrcp.pop %v5069
  %v5095 = vmul.f32 1.0, %v5094
  %v5096 = vrcp.pop %v5070
  %v5097 = vmul.f32 1.0, %v5096
  %v5098 = vrcp.pop %v5071
  %v5099 = vmul.f32 1.0, %v5098
  %v5100 = vrcp.pop %v5072
  %v5101 = vmul.f32 1.0, %v5100
  %v5102 = vrcp.pop %v5073
  %v5103 = vmul.f32 1.0, %v5102
  %v5104 = vrcp.pop %v5074
  %v5105 = vmul.f32 1.0, %v5104
  %v5106 = vrcp.pop %v5075
  %v5107 = vmul.f32 1.0, %v5106
  %v5108 = vtanh.pop %v4982
  %v5109 = vtanh.pop %v4986
  %v5110 = vtanh.pop %v4990
  %v5111 = vtanh.pop %v4994
  %v5112 = vtanh.pop %v4998
  %v5113 = vtanh.pop %v5002
  %v5114 = vtanh.pop %v5006
  %v5115 = vtanh.pop %v5010
  %v5116 = vxor.u32 %v4983, 2147483648
  %v5117 = vxor.u32 %v4987, 2147483648
  %v5118 = vxor.u32 %v4991, 2147483648
  %v5119 = vxor.u32 %v4995, 2147483648
  %v5120 = vxor.u32 %v4999, 2147483648
  %v5121 = vxor.u32 %v5003, 2147483648
  %v5122 = vxor.u32 %v5007, 2147483648
  %v5123 = vxor.u32 %v5011, 2147483648
  %v5124 = vmul.f32 %v5116, 1.442695
  %v5125 = vpow.pop %v5124
  %v5126 = vmul.f32 %v5117, 1.442695
  %v5127 = vpow.pop %v5126
  %v5128 = vmul.f32 %v5118, 1.442695
  %v5129 = vpow.pop %v5128
  %v5130 = vmul.f32 %v5119, 1.442695
  %v5131 = vpow.pop %v5130
  %v5132 = vmul.f32 %v5120, 1.442695
  %v5133 = vpow.pop %v5132
  %v5134 = vmul.f32 %v5121, 1.442695
  %v5135 = vpow.pop %v5134
  %v5136 = vmul.f32 %v5122, 1.442695
  %v5137 = vpow.pop %v5136
  %v5138 = vmul.f32 %v5123, 1.442695
  %v5139 = vpow.pop %v5138
  %v5140 = vadd.f32 %v5125, 1.0
  %v5141 = vadd.f32 %v5127, 1.0
  %v5142 = vadd.f32 %v5129, 1.0
  %v5143 = vadd.f32 %v5131, 1.0
  %v5144 = vadd.f32 %v5133, 1.0
  %v5145 = vadd.f32 %v5135, 1.0
  %v5146 = vadd.f32 %v5137, 1.0
  %v5147 = vadd.f32 %v5139, 1.0
  %v5148 = vrcp.pop %v5140
  %v5149 = vmul.f32 1.0, %v5148
  %v5150 = vrcp.pop %v5141
  %v5151 = vmul.f32 1.0, %v5150
  %v5152 = vrcp.pop %v5142
  %v5153 = vmul.f32 1.0, %v5152
  %v5154 = vrcp.pop %v5143
  %v5155 = vmul.f32 1.0, %v5154
  %v5156 = vrcp.pop %v5144
  %v5157 = vmul.f32 1.0, %v5156
  %v5158 = vrcp.pop %v5145
  %v5159 = vmul.f32 1.0, %v5158
  %v5160 = vrcp.pop %v5146
  %v5161 = vmul.f32 1.0, %v5160
  %v5162 = vrcp.pop %v5147
  %v5163 = vmul.f32 1.0, %v5162
  %v5172 = vrot.slane %v4698, 7
  %v5173 = vrot.slane %v4699, 7
  %v5174 = vrot.slane %v4700, 7
  %v5175 = vrot.slane %v4701, 7
  %v5176 = vrot.slane %v4702, 7
  %v5177 = vrot.slane %v4703, 7
  %v5178 = vrot.slane %v4704, 7
  %v5179 = vrot.slane %v4705, 7
  %v5188 = vmul.f32 %v5079, %v5172
  %v5189 = vmul.f32 %v5083, %v5173
  %v5190 = vmul.f32 %v5087, %v5174
  %v5191 = vmul.f32 %v5091, %v5175
  %v5192 = vmul.f32 %v5095, %v5176
  %v5193 = vmul.f32 %v5099, %v5177
  %v5194 = vmul.f32 %v5103, %v5178
  %v5195 = vmul.f32 %v5107, %v5179
  %v5196 = vmul.f32 %v5077, %v5108
  %v5197 = vmul.f32 %v5081, %v5109
  %v5198 = vmul.f32 %v5085, %v5110
  %v5199 = vmul.f32 %v5089, %v5111
  %v5200 = vmul.f32 %v5093, %v5112
  %v5201 = vmul.f32 %v5097, %v5113
  %v5202 = vmul.f32 %v5101, %v5114
  %v5203 = vmul.f32 %v5105, %v5115
  %v5204 = vadd.f32 %v5188, %v5196
  %v5205 = vadd.f32 %v5189, %v5197
  %v5206 = vadd.f32 %v5190, %v5198
  %v5207 = vadd.f32 %v5191, %v5199
  %v5208 = vadd.f32 %v5192, %v5200
  %v5209 = vadd.f32 %v5193, %v5201
  %v5210 = vadd.f32 %v5194, %v5202
  %v5211 = vadd.f32 %v5195, %v5203
  %v5212 = vtanh.pop %v5204
  %v5213 = vtanh.pop %v5205
  %v5214 = vtanh.pop %v5206
  %v5215 = vtanh.pop %v5207
  %v5216 = vtanh.pop %v5208
  %v5217 = vtanh.pop %v5209
  %v5218 = vtanh.pop %v5210
  %v5219 = vtanh.pop %v5211
  %v5220 = vmul.f32 %v5149, %v5212
  %v5221 = vmul.f32 %v5151, %v5213
  %v5222 = vmul.f32 %v5153, %v5214
  %v5223 = vmul.f32 %v5155, %v5215
  %v5224 = vmul.f32 %v5157, %v5216
  %v5225 = vmul.f32 %v5159, %v5217
  %v5226 = vmul.f32 %v5161, %v5218
  %v5227 = vmul.f32 %v5163, %v5219
  %v5228 = vpack.c.bf16 %v5220, %v5220
  %v5229 = vpack.c.bf16 %v5221, %v5221
  %v5230 = vpack.c.bf16 %v5222, %v5222
  %v5231 = vpack.c.bf16 %v5223, %v5223
  %v5232 = vpack.c.bf16 %v5224, %v5224
  %v5233 = vpack.c.bf16 %v5225, %v5225
  %v5234 = vpack.c.bf16 %v5226, %v5226
  %v5235 = vpack.c.bf16 %v5227, %v5227
  %v5236 = vld [vmem:[%s2 + $0x4] sm:$0x1]
  %v5237 = vsel %vm1172, %v5228, %v5236
  %5238 = vst [vmem:[%s2 + $0x4] sm:$0x1] %v5237
  %v5239 = vld [vmem:[%s2 + $0xc] sm:$0x1]
  %v5240 = vsel %vm1172, %v5229, %v5239
  %5241 = vst [vmem:[%s2 + $0xc] sm:$0x1] %v5240
  %v5242 = vld [vmem:[%s2 + $0x14] sm:$0x1]
  %v5243 = vsel %vm1172, %v5230, %v5242
  %5244 = vst [vmem:[%s2 + $0x14] sm:$0x1] %v5243
  %v5245 = vld [vmem:[%s2 + $0x1c] sm:$0x1]
  %v5246 = vsel %vm1172, %v5231, %v5245
  %5247 = vst [vmem:[%s2 + $0x1c] sm:$0x1] %v5246
  %v5248 = vld [vmem:[%s2 + $0x24] sm:$0x1]
  %v5249 = vsel %vm1172, %v5232, %v5248
  %5250 = vst [vmem:[%s2 + $0x24] sm:$0x1] %v5249
  %v5251 = vld [vmem:[%s2 + $0x2c] sm:$0x1]
  %v5252 = vsel %vm1172, %v5233, %v5251
  %5253 = vst [vmem:[%s2 + $0x2c] sm:$0x1] %v5252
  %v5254 = vld [vmem:[%s2 + $0x34] sm:$0x1]
  %v5255 = vsel %vm1172, %v5234, %v5254
  %5256 = vst [vmem:[%s2 + $0x34] sm:$0x1] %v5255
  %v5257 = vld [vmem:[%s2 + $0x3c] sm:$0x1]
  %v5258 = vsel %vm1172, %v5235, %v5257
  %5259 = vst [vmem:[%s2 + $0x3c] sm:$0x1] %v5258
  %v5260 = vld [vmem:[%s0 + $0x10] sm:$0x22]
  %v5261 = vld [vmem:[%s0 + $0x18] sm:$0x22]
  %v5262 = vld [vmem:[%s0 + $0x30] sm:$0x22]
  %v5263 = vld [vmem:[%s0 + $0x38] sm:$0x22]
  %v5264 = vld [vmem:[%s0 + $0x50] sm:$0x22]
  %v5265 = vld [vmem:[%s0 + $0x58] sm:$0x22]
  %v5266 = vld [vmem:[%s0 + $0x70] sm:$0x22]
  %v5267 = vld [vmem:[%s0 + $0x78] sm:$0x22]
  %v5268 = vld [vmem:[%s0 + $0x90] sm:$0x22]
  %v5269 = vld [vmem:[%s0 + $0x98] sm:$0x22]
  %v5270 = vld [vmem:[%s0 + $0xb0] sm:$0x22]
  %v5271 = vld [vmem:[%s0 + $0xb8] sm:$0x22]
  %v5272 = vld [vmem:[%s0 + $0xd0] sm:$0x22]
  %v5273 = vld [vmem:[%s0 + $0xd8] sm:$0x22]
  %v5274 = vld [vmem:[%s0 + $0xf0] sm:$0x22]
  %v5275 = vld [vmem:[%s0 + $0xf8] sm:$0x22]
  %v5276 = vunpack.c.l.bf16 %v5260
  %v5277 = vunpack.c.h.bf16 %v5260
  %v5278 = vunpack.c.l.bf16 %v5261
  %v5279 = vunpack.c.h.bf16 %v5261
  %v5280 = vunpack.c.l.bf16 %v5262
  %v5281 = vunpack.c.h.bf16 %v5262
  %v5282 = vunpack.c.l.bf16 %v5263
  %v5283 = vunpack.c.h.bf16 %v5263
  %v5284 = vunpack.c.l.bf16 %v5264
  %v5285 = vunpack.c.h.bf16 %v5264
  %v5286 = vunpack.c.l.bf16 %v5265
  %v5287 = vunpack.c.h.bf16 %v5265
  %v5288 = vunpack.c.l.bf16 %v5266
  %v5289 = vunpack.c.h.bf16 %v5266
  %v5290 = vunpack.c.l.bf16 %v5267
  %v5291 = vunpack.c.h.bf16 %v5267
  %v5292 = vunpack.c.l.bf16 %v5268
  %v5293 = vunpack.c.h.bf16 %v5268
  %v5294 = vunpack.c.l.bf16 %v5269
  %v5295 = vunpack.c.h.bf16 %v5269
  %v5296 = vunpack.c.l.bf16 %v5270
  %v5297 = vunpack.c.h.bf16 %v5270
  %v5298 = vunpack.c.l.bf16 %v5271
  %v5299 = vunpack.c.h.bf16 %v5271
  %v5300 = vunpack.c.l.bf16 %v5272
  %v5301 = vunpack.c.h.bf16 %v5272
  %v5302 = vunpack.c.l.bf16 %v5273
  %v5303 = vunpack.c.h.bf16 %v5273
  %v5304 = vunpack.c.l.bf16 %v5274
  %v5305 = vunpack.c.h.bf16 %v5274
  %v5306 = vunpack.c.l.bf16 %v5275
  %v5307 = vunpack.c.h.bf16 %v5275
  %v5316 = vunpack.c.l.b16 %v5228
  %v5317 = vunpack.c.l.b16 %v5229
  %v5318 = vunpack.c.l.b16 %v5230
  %v5319 = vunpack.c.l.b16 %v5231
  %v5320 = vunpack.c.l.b16 %v5232
  %v5321 = vunpack.c.l.b16 %v5233
  %v5322 = vunpack.c.l.b16 %v5234
  %v5323 = vunpack.c.l.b16 %v5235
  %v5324 = vrot.slane %v5316, 1
  %v5325 = vsel %vm747, %v5317, %v5324
  %v5326 = vrot.slane %v5318, 7
  %v5327 = vsel %vm750, %v5326, %v5325
  %v5328 = vrot.slane %v5319, 6
  %v5329 = vsel %vm753, %v5328, %v5327
  %v5330 = vrot.slane %v5320, 5
  %v5331 = vsel %vm756, %v5330, %v5329
  %v5332 = vrot.slane %v5321, 4
  %v5333 = vsel %vm759, %v5332, %v5331
  %v5334 = vrot.slane %v5322, 3
  %v5335 = vsel %vm762, %v5334, %v5333
  %v5336 = vrot.slane %v5323, 2
  %v5337 = vsel %vm765, %v5336, %v5335
  %v5338 = vpack.c.b16 %v5337, %v5337
  %5340 = vmatprep.subr.bf16.mxu0 %v226
  %5341 = vmatpush1.bf16.msra.mxu0 %v225
  %5342 = vmatprep.subr.bf16.mxu0 %v222
  %5343 = vmatpush1.bf16.msra.mxu0 %v221
  %5344 = vmatprep.subr.bf16.mxu0 %v218
  %5345 = vmatpush1.bf16.msra.mxu0 %v217
  %5346 = vmatprep.subr.bf16.mxu0 %v214
  %5347 = vmatpush1.bf16.msra.mxu0 %v213
  %5348 = vmatprep.subr.bf16.mxu0 %v210
  %5349 = vmatpush1.bf16.msra.mxu0 %v209
  %5350 = vmatprep.subr.bf16.mxu0 %v206
  %5351 = vmatpush1.bf16.msra.mxu0 %v205
  %5352 = vmatprep.subr.bf16.mxu0 %v202
  %5353 = vmatpush1.bf16.msra.mxu0 %v201
  %5354 = vmatprep.subr.bf16.mxu0 %v198
  %5355 = vmatpush1.bf16.msra.mxu0 %v197
  %5356 = vmatprep.subr.bf16.mxu0 0
  %5357 = vmatpush2.bf16.msra.mxu0 0
  %5358 = vmatprep.subr.bf16.mxu0 0
  %5359 = vmatpush2.bf16.msra.mxu0 0
  %5360 = vmatprep.subr.bf16.mxu0 0
  %5361 = vmatpush2.bf16.msra.mxu0 0
  %5362 = vmatprep.subr.bf16.mxu0 0
  %5363 = vmatpush2.bf16.msra.mxu0 0
  %5364 = vmatprep.subr.bf16.mxu0 0
  %5365 = vmatpush2.bf16.msra.mxu0 0
  %5366 = vmatprep.subr.bf16.mxu0 0
  %5367 = vmatpush2.bf16.msra.mxu0 0
  %5368 = vmatprep.subr.bf16.mxu0 0
  %5369 = vmatpush2.bf16.msra.mxu0 0
  %5370 = vmatprep.subr.bf16.mxu0 0
  %5371 = vmatpush2.bf16.msra.mxu0 0
  %5372 = vmatprep.mubr.bf16.mxu0 0
  %5373 = vmatmul.mubr.bf16.gmra.mxu0 %v5338
  %v5374 = vpop.f32.mrf.mxu0
  %v5375 = vadd.f32 0.0, %v5374
  %v5376 = vpop.f32.mrf.mxu0
  %v5377 = vadd.f32 0.0, %v5376
  %v5378 = vpop.f32.mrf.mxu0
  %v5379 = vpop.f32.mrf.mxu0
  %5380 = vdwg.mxu0
  %5381 = vmatprep.subr.bf16.mxu0 %v228
  %5382 = vmatpush1.bf16.msra.mxu0 %v227
  %5383 = vmatprep.subr.bf16.mxu0 %v224
  %5384 = vmatpush1.bf16.msra.mxu0 %v223
  %5385 = vmatprep.subr.bf16.mxu0 %v220
  %5386 = vmatpush1.bf16.msra.mxu0 %v219
  %5387 = vmatprep.subr.bf16.mxu0 %v216
  %5388 = vmatpush1.bf16.msra.mxu0 %v215
  %5389 = vmatprep.subr.bf16.mxu0 %v212
  %5390 = vmatpush1.bf16.msra.mxu0 %v211
  %5391 = vmatprep.subr.bf16.mxu0 %v208
  %5392 = vmatpush1.bf16.msra.mxu0 %v207
  %5393 = vmatprep.subr.bf16.mxu0 %v204
  %5394 = vmatpush1.bf16.msra.mxu0 %v203
  %5395 = vmatprep.subr.bf16.mxu0 %v200
  %5396 = vmatpush1.bf16.msra.mxu0 %v199
  %5397 = vmatprep.subr.bf16.mxu0 0
  %5398 = vmatpush2.bf16.msra.mxu0 0
  %5399 = vmatprep.subr.bf16.mxu0 0
  %5400 = vmatpush2.bf16.msra.mxu0 0
  %5401 = vmatprep.subr.bf16.mxu0 0
  %5402 = vmatpush2.bf16.msra.mxu0 0
  %5403 = vmatprep.subr.bf16.mxu0 0
  %5404 = vmatpush2.bf16.msra.mxu0 0
  %5405 = vmatprep.subr.bf16.mxu0 0
  %5406 = vmatpush2.bf16.msra.mxu0 0
  %5407 = vmatprep.subr.bf16.mxu0 0
  %5408 = vmatpush2.bf16.msra.mxu0 0
  %5409 = vmatprep.subr.bf16.mxu0 0
  %5410 = vmatpush2.bf16.msra.mxu0 0
  %5411 = vmatprep.subr.bf16.mxu0 0
  %5412 = vmatpush2.bf16.msra.mxu0 0
  %5413 = vmatprep.mubr.bf16.mxu0 0
  %5414 = vmatmul.mubr.bf16.gmra.mxu0 %v5338
  %v5415 = vpop.f32.mrf.mxu0
  %v5416 = vadd.f32 0.0, %v5415
  %v5417 = vpop.f32.mrf.mxu0
  %v5418 = vadd.f32 0.0, %v5417
  %v5419 = vpop.f32.mrf.mxu0
  %v5420 = vpop.f32.mrf.mxu0
  %5421 = vdwg.mxu0
  %v5426 = vrot.slane %v5375, 6
  %v5427 = vrot.slane %v5377, 6
  %v5428 = vrot.slane %v5416, 6
  %v5429 = vrot.slane %v5418, 6
  %v5430 = vrot.slane %v5375, 7
  %v5431 = vrot.slane %v5377, 7
  %v5432 = vrot.slane %v5416, 7
  %v5433 = vrot.slane %v5418, 7
  %v5434 = vrot.slane %v5375, 1
  %v5435 = vrot.slane %v5377, 1
  %v5436 = vrot.slane %v5416, 1
  %v5437 = vrot.slane %v5418, 1
  %v5438 = vrot.slane %v5375, 2
  %v5439 = vrot.slane %v5377, 2
  %v5440 = vrot.slane %v5416, 2
  %v5441 = vrot.slane %v5418, 2
  %v5442 = vrot.slane %v5375, 3
  %v5443 = vrot.slane %v5377, 3
  %v5444 = vrot.slane %v5416, 3
  %v5445 = vrot.slane %v5418, 3
  %v5446 = vrot.slane %v5375, 4
  %v5447 = vrot.slane %v5377, 4
  %v5448 = vrot.slane %v5416, 4
  %v5449 = vrot.slane %v5418, 4
  %v5450 = vrot.slane %v5375, 5
  %v5451 = vrot.slane %v5377, 5
  %v5452 = vrot.slane %v5416, 5
  %v5453 = vrot.slane %v5418, 5
  %v5486 = vadd.f32 %v5276, %v5426
  %v5487 = vadd.f32 %v5277, %v5427
  %v5488 = vadd.f32 %v5278, %v5428
  %v5489 = vadd.f32 %v5279, %v5429
  %v5490 = vadd.f32 %v5280, %v5430
  %v5491 = vadd.f32 %v5281, %v5431
  %v5492 = vadd.f32 %v5282, %v5432
  %v5493 = vadd.f32 %v5283, %v5433
  %v5494 = vadd.f32 %v5284, %v5375
  %v5495 = vadd.f32 %v5285, %v5377
  %v5496 = vadd.f32 %v5286, %v5416
  %v5497 = vadd.f32 %v5287, %v5418
  %v5498 = vadd.f32 %v5288, %v5434
  %v5499 = vadd.f32 %v5289, %v5435
  %v5500 = vadd.f32 %v5290, %v5436
  %v5501 = vadd.f32 %v5291, %v5437
  %v5502 = vadd.f32 %v5292, %v5438
  %v5503 = vadd.f32 %v5293, %v5439
  %v5504 = vadd.f32 %v5294, %v5440
  %v5505 = vadd.f32 %v5295, %v5441
  %v5506 = vadd.f32 %v5296, %v5442
  %v5507 = vadd.f32 %v5297, %v5443
  %v5508 = vadd.f32 %v5298, %v5444
  %v5509 = vadd.f32 %v5299, %v5445
  %v5510 = vadd.f32 %v5300, %v5446
  %v5511 = vadd.f32 %v5301, %v5447
  %v5512 = vadd.f32 %v5302, %v5448
  %v5513 = vadd.f32 %v5303, %v5449
  %v5514 = vadd.f32 %v5304, %v5450
  %v5515 = vadd.f32 %v5305, %v5451
  %v5516 = vadd.f32 %v5306, %v5452
  %v5517 = vadd.f32 %v5307, %v5453
  %v5518 = vxor.u32 %v5486, 2147483648
  %v5519 = vxor.u32 %v5487, 2147483648
  %v5520 = vxor.u32 %v5490, 2147483648
  %v5521 = vxor.u32 %v5491, 2147483648
  %v5522 = vxor.u32 %v5494, 2147483648
  %v5523 = vxor.u32 %v5495, 2147483648
  %v5524 = vxor.u32 %v5498, 2147483648
  %v5525 = vxor.u32 %v5499, 2147483648
  %v5526 = vxor.u32 %v5502, 2147483648
  %v5527 = vxor.u32 %v5503, 2147483648
  %v5528 = vxor.u32 %v5506, 2147483648
  %v5529 = vxor.u32 %v5507, 2147483648
  %v5530 = vxor.u32 %v5510, 2147483648
  %v5531 = vxor.u32 %v5511, 2147483648
  %v5532 = vxor.u32 %v5514, 2147483648
  %v5533 = vxor.u32 %v5515, 2147483648
  %v5534 = vmul.f32 %v5518, 1.442695
  %v5535 = vpow.pop %v5534
  %v5536 = vmul.f32 %v5519, 1.442695
  %v5537 = vpow.pop %v5536
  %v5538 = vmul.f32 %v5520, 1.442695
  %v5539 = vpow.pop %v5538
  %v5540 = vmul.f32 %v5521, 1.442695
  %v5541 = vpow.pop %v5540
  %v5542 = vmul.f32 %v5522, 1.442695
  %v5543 = vpow.pop %v5542
  %v5544 = vmul.f32 %v5523, 1.442695
  %v5545 = vpow.pop %v5544
  %v5546 = vmul.f32 %v5524, 1.442695
  %v5547 = vpow.pop %v5546
  %v5548 = vmul.f32 %v5525, 1.442695
  %v5549 = vpow.pop %v5548
  %v5550 = vmul.f32 %v5526, 1.442695
  %v5551 = vpow.pop %v5550
  %v5552 = vmul.f32 %v5527, 1.442695
  %v5553 = vpow.pop %v5552
  %v5554 = vmul.f32 %v5528, 1.442695
  %v5555 = vpow.pop %v5554
  %v5556 = vmul.f32 %v5529, 1.442695
  %v5557 = vpow.pop %v5556
  %v5558 = vmul.f32 %v5530, 1.442695
  %v5559 = vpow.pop %v5558
  %v5560 = vmul.f32 %v5531, 1.442695
  %v5561 = vpow.pop %v5560
  %v5562 = vmul.f32 %v5532, 1.442695
  %v5563 = vpow.pop %v5562
  %v5564 = vmul.f32 %v5533, 1.442695
  %v5565 = vpow.pop %v5564
  %v5566 = vadd.f32 %v5535, 1.0
  %v5567 = vadd.f32 %v5537, 1.0
  %v5568 = vadd.f32 %v5539, 1.0
  %v5569 = vadd.f32 %v5541, 1.0
  %v5570 = vadd.f32 %v5543, 1.0
  %v5571 = vadd.f32 %v5545, 1.0
  %v5572 = vadd.f32 %v5547, 1.0
  %v5573 = vadd.f32 %v5549, 1.0
  %v5574 = vadd.f32 %v5551, 1.0
  %v5575 = vadd.f32 %v5553, 1.0
  %v5576 = vadd.f32 %v5555, 1.0
  %v5577 = vadd.f32 %v5557, 1.0
  %v5578 = vadd.f32 %v5559, 1.0
  %v5579 = vadd.f32 %v5561, 1.0
  %v5580 = vadd.f32 %v5563, 1.0
  %v5581 = vadd.f32 %v5565, 1.0
  %v5582 = vrcp.pop %v5566
  %v5583 = vmul.f32 1.0, %v5582
  %v5584 = vrcp.pop %v5567
  %v5585 = vmul.f32 1.0, %v5584
  %v5586 = vrcp.pop %v5568
  %v5587 = vmul.f32 1.0, %v5586
  %v5588 = vrcp.pop %v5569
  %v5589 = vmul.f32 1.0, %v5588
  %v5590 = vrcp.pop %v5570
  %v5591 = vmul.f32 1.0, %v5590
  %v5592 = vrcp.pop %v5571
  %v5593 = vmul.f32 1.0, %v5592
  %v5594 = vrcp.pop %v5572
  %v5595 = vmul.f32 1.0, %v5594
  %v5596 = vrcp.pop %v5573
  %v5597 = vmul.f32 1.0, %v5596
  %v5598 = vrcp.pop %v5574
  %v5599 = vmul.f32 1.0, %v5598
  %v5600 = vrcp.pop %v5575
  %v5601 = vmul.f32 1.0, %v5600
  %v5602 = vrcp.pop %v5576
  %v5603 = vmul.f32 1.0, %v5602
  %v5604 = vrcp.pop %v5577
  %v5605 = vmul.f32 1.0, %v5604
  %v5606 = vrcp.pop %v5578
  %v5607 = vmul.f32 1.0, %v5606
  %v5608 = vrcp.pop %v5579
  %v5609 = vmul.f32 1.0, %v5608
  %v5610 = vrcp.pop %v5580
  %v5611 = vmul.f32 1.0, %v5610
  %v5612 = vrcp.pop %v5581
  %v5613 = vmul.f32 1.0, %v5612
  %v5614 = vtanh.pop %v5488
  %v5615 = vtanh.pop %v5492
  %v5616 = vtanh.pop %v5496
  %v5617 = vtanh.pop %v5500
  %v5618 = vtanh.pop %v5504
  %v5619 = vtanh.pop %v5508
  %v5620 = vtanh.pop %v5512
  %v5621 = vtanh.pop %v5516
  %v5622 = vxor.u32 %v5489, 2147483648
  %v5623 = vxor.u32 %v5493, 2147483648
  %v5624 = vxor.u32 %v5497, 2147483648
  %v5625 = vxor.u32 %v5501, 2147483648
  %v5626 = vxor.u32 %v5505, 2147483648
  %v5627 = vxor.u32 %v5509, 2147483648
  %v5628 = vxor.u32 %v5513, 2147483648
  %v5629 = vxor.u32 %v5517, 2147483648
  %v5630 = vmul.f32 %v5622, 1.442695
  %v5631 = vpow.pop %v5630
  %v5632 = vmul.f32 %v5623, 1.442695
  %v5633 = vpow.pop %v5632
  %v5634 = vmul.f32 %v5624, 1.442695
  %v5635 = vpow.pop %v5634
  %v5636 = vmul.f32 %v5625, 1.442695
  %v5637 = vpow.pop %v5636
  %v5638 = vmul.f32 %v5626, 1.442695
  %v5639 = vpow.pop %v5638
  %v5640 = vmul.f32 %v5627, 1.442695
  %v5641 = vpow.pop %v5640
  %v5642 = vmul.f32 %v5628, 1.442695
  %v5643 = vpow.pop %v5642
  %v5644 = vmul.f32 %v5629, 1.442695
  %v5645 = vpow.pop %v5644
  %v5646 = vadd.f32 %v5631, 1.0
  %v5647 = vadd.f32 %v5633, 1.0
  %v5648 = vadd.f32 %v5635, 1.0
  %v5649 = vadd.f32 %v5637, 1.0
  %v5650 = vadd.f32 %v5639, 1.0
  %v5651 = vadd.f32 %v5641, 1.0
  %v5652 = vadd.f32 %v5643, 1.0
  %v5653 = vadd.f32 %v5645, 1.0
  %v5654 = vrcp.pop %v5646
  %v5655 = vmul.f32 1.0, %v5654
  %v5656 = vrcp.pop %v5647
  %v5657 = vmul.f32 1.0, %v5656
  %v5658 = vrcp.pop %v5648
  %v5659 = vmul.f32 1.0, %v5658
  %v5660 = vrcp.pop %v5649
  %v5661 = vmul.f32 1.0, %v5660
  %v5662 = vrcp.pop %v5650
  %v5663 = vmul.f32 1.0, %v5662
  %v5664 = vrcp.pop %v5651
  %v5665 = vmul.f32 1.0, %v5664
  %v5666 = vrcp.pop %v5652
  %v5667 = vmul.f32 1.0, %v5666
  %v5668 = vrcp.pop %v5653
  %v5669 = vmul.f32 1.0, %v5668
  %v5678 = vrot.slane %v5204, 7
  %v5679 = vrot.slane %v5205, 7
  %v5680 = vrot.slane %v5206, 7
  %v5681 = vrot.slane %v5207, 7
  %v5682 = vrot.slane %v5208, 7
  %v5683 = vrot.slane %v5209, 7
  %v5684 = vrot.slane %v5210, 7
  %v5685 = vrot.slane %v5211, 7
  %v5694 = vmul.f32 %v5585, %v5678
  %v5695 = vmul.f32 %v5589, %v5679
  %v5696 = vmul.f32 %v5593, %v5680
  %v5697 = vmul.f32 %v5597, %v5681
  %v5698 = vmul.f32 %v5601, %v5682
  %v5699 = vmul.f32 %v5605, %v5683
  %v5700 = vmul.f32 %v5609, %v5684
  %v5701 = vmul.f32 %v5613, %v5685
  %v5702 = vmul.f32 %v5583, %v5614
  %v5703 = vmul.f32 %v5587, %v5615
  %v5704 = vmul.f32 %v5591, %v5616
  %v5705 = vmul.f32 %v5595, %v5617
  %v5706 = vmul.f32 %v5599, %v5618
  %v5707 = vmul.f32 %v5603, %v5619
  %v5708 = vmul.f32 %v5607, %v5620
  %v5709 = vmul.f32 %v5611, %v5621
  %v5710 = vadd.f32 %v5694, %v5702
  %v5711 = vadd.f32 %v5695, %v5703
  %v5712 = vadd.f32 %v5696, %v5704
  %v5713 = vadd.f32 %v5697, %v5705
  %v5714 = vadd.f32 %v5698, %v5706
  %v5715 = vadd.f32 %v5699, %v5707
  %v5716 = vadd.f32 %v5700, %v5708
  %v5717 = vadd.f32 %v5701, %v5709
  %v5718 = vtanh.pop %v5710
  %v5719 = vtanh.pop %v5711
  %v5720 = vtanh.pop %v5712
  %v5721 = vtanh.pop %v5713
  %v5722 = vtanh.pop %v5714
  %v5723 = vtanh.pop %v5715
  %v5724 = vtanh.pop %v5716
  %v5725 = vtanh.pop %v5717
  %v5726 = vmul.f32 %v5655, %v5718
  %v5727 = vmul.f32 %v5657, %v5719
  %v5728 = vmul.f32 %v5659, %v5720
  %v5729 = vmul.f32 %v5661, %v5721
  %v5730 = vmul.f32 %v5663, %v5722
  %v5731 = vmul.f32 %v5665, %v5723
  %v5732 = vmul.f32 %v5667, %v5724
  %v5733 = vmul.f32 %v5669, %v5725
  %v5734 = vpack.c.bf16 %v5726, %v5726
  %v5735 = vpack.c.bf16 %v5727, %v5727
  %v5736 = vpack.c.bf16 %v5728, %v5728
  %v5737 = vpack.c.bf16 %v5729, %v5729
  %v5738 = vpack.c.bf16 %v5730, %v5730
  %v5739 = vpack.c.bf16 %v5731, %v5731
  %v5740 = vpack.c.bf16 %v5732, %v5732
  %v5741 = vpack.c.bf16 %v5733, %v5733
  %v5742 = vld [vmem:[%s2 + $0x4] sm:$0x2]
  %v5743 = vsel %vm1681, %v5734, %v5742
  %5744 = vst [vmem:[%s2 + $0x4] sm:$0x2] %v5743
  %v5745 = vld [vmem:[%s2 + $0xc] sm:$0x2]
  %v5746 = vsel %vm1681, %v5735, %v5745
  %5747 = vst [vmem:[%s2 + $0xc] sm:$0x2] %v5746
  %v5748 = vld [vmem:[%s2 + $0x14] sm:$0x2]
  %v5749 = vsel %vm1681, %v5736, %v5748
  %5750 = vst [vmem:[%s2 + $0x14] sm:$0x2] %v5749
  %v5751 = vld [vmem:[%s2 + $0x1c] sm:$0x2]
  %v5752 = vsel %vm1681, %v5737, %v5751
  %5753 = vst [vmem:[%s2 + $0x1c] sm:$0x2] %v5752
  %v5754 = vld [vmem:[%s2 + $0x24] sm:$0x2]
  %v5755 = vsel %vm1681, %v5738, %v5754
  %5756 = vst [vmem:[%s2 + $0x24] sm:$0x2] %v5755
  %v5757 = vld [vmem:[%s2 + $0x2c] sm:$0x2]
  %v5758 = vsel %vm1681, %v5739, %v5757
  %5759 = vst [vmem:[%s2 + $0x2c] sm:$0x2] %v5758
  %v5760 = vld [vmem:[%s2 + $0x34] sm:$0x2]
  %v5761 = vsel %vm1681, %v5740, %v5760
  %5762 = vst [vmem:[%s2 + $0x34] sm:$0x2] %v5761
  %v5763 = vld [vmem:[%s2 + $0x3c] sm:$0x2]
  %v5764 = vsel %vm1681, %v5741, %v5763
  %5765 = vst [vmem:[%s2 + $0x3c] sm:$0x2] %v5764
  %v5766 = vld [vmem:[%s0 + $0x10] sm:$0x22]
  %v5767 = vld [vmem:[%s0 + $0x18] sm:$0x22]
  %v5768 = vld [vmem:[%s0 + $0x30] sm:$0x22]
  %v5769 = vld [vmem:[%s0 + $0x38] sm:$0x22]
  %v5770 = vld [vmem:[%s0 + $0x50] sm:$0x22]
  %v5771 = vld [vmem:[%s0 + $0x58] sm:$0x22]
  %v5772 = vld [vmem:[%s0 + $0x70] sm:$0x22]
  %v5773 = vld [vmem:[%s0 + $0x78] sm:$0x22]
  %v5774 = vld [vmem:[%s0 + $0x90] sm:$0x22]
  %v5775 = vld [vmem:[%s0 + $0x98] sm:$0x22]
  %v5776 = vld [vmem:[%s0 + $0xb0] sm:$0x22]
  %v5777 = vld [vmem:[%s0 + $0xb8] sm:$0x22]
  %v5778 = vld [vmem:[%s0 + $0xd0] sm:$0x22]
  %v5779 = vld [vmem:[%s0 + $0xd8] sm:$0x22]
  %v5780 = vld [vmem:[%s0 + $0xf0] sm:$0x22]
  %v5781 = vld [vmem:[%s0 + $0xf8] sm:$0x22]
  %v5782 = vunpack.c.l.bf16 %v5766
  %v5783 = vunpack.c.h.bf16 %v5766
  %v5784 = vunpack.c.l.bf16 %v5767
  %v5785 = vunpack.c.h.bf16 %v5767
  %v5786 = vunpack.c.l.bf16 %v5768
  %v5787 = vunpack.c.h.bf16 %v5768
  %v5788 = vunpack.c.l.bf16 %v5769
  %v5789 = vunpack.c.h.bf16 %v5769
  %v5790 = vunpack.c.l.bf16 %v5770
  %v5791 = vunpack.c.h.bf16 %v5770
  %v5792 = vunpack.c.l.bf16 %v5771
  %v5793 = vunpack.c.h.bf16 %v5771
  %v5794 = vunpack.c.l.bf16 %v5772
  %v5795 = vunpack.c.h.bf16 %v5772
  %v5796 = vunpack.c.l.bf16 %v5773
  %v5797 = vunpack.c.h.bf16 %v5773
  %v5798 = vunpack.c.l.bf16 %v5774
  %v5799 = vunpack.c.h.bf16 %v5774
  %v5800 = vunpack.c.l.bf16 %v5775
  %v5801 = vunpack.c.h.bf16 %v5775
  %v5802 = vunpack.c.l.bf16 %v5776
  %v5803 = vunpack.c.h.bf16 %v5776
  %v5804 = vunpack.c.l.bf16 %v5777
  %v5805 = vunpack.c.h.bf16 %v5777
  %v5806 = vunpack.c.l.bf16 %v5778
  %v5807 = vunpack.c.h.bf16 %v5778
  %v5808 = vunpack.c.l.bf16 %v5779
  %v5809 = vunpack.c.h.bf16 %v5779
  %v5810 = vunpack.c.l.bf16 %v5780
  %v5811 = vunpack.c.h.bf16 %v5780
  %v5812 = vunpack.c.l.bf16 %v5781
  %v5813 = vunpack.c.h.bf16 %v5781
  %v5822 = vunpack.c.l.b16 %v5734
  %v5823 = vunpack.c.l.b16 %v5735
  %v5824 = vunpack.c.l.b16 %v5736
  %v5825 = vunpack.c.l.b16 %v5737
  %v5826 = vunpack.c.l.b16 %v5738
  %v5827 = vunpack.c.l.b16 %v5739
  %v5828 = vunpack.c.l.b16 %v5740
  %v5829 = vunpack.c.l.b16 %v5741
  %v5830 = vrot.slane %v5822, 2
  %v5831 = vrot.slane %v5823, 1
  %v5832 = vsel %vm747, %v5831, %v5830
  %v5833 = vsel %vm750, %v5824, %v5832
  %v5834 = vrot.slane %v5825, 7
  %v5835 = vsel %vm753, %v5834, %v5833
  %v5836 = vrot.slane %v5826, 6
  %v5837 = vsel %vm756, %v5836, %v5835
  %v5838 = vrot.slane %v5827, 5
  %v5839 = vsel %vm759, %v5838, %v5837
  %v5840 = vrot.slane %v5828, 4
  %v5841 = vsel %vm762, %v5840, %v5839
  %v5842 = vrot.slane %v5829, 3
  %v5843 = vsel %vm765, %v5842, %v5841
  %v5844 = vpack.c.b16 %v5843, %v5843
  %5846 = vmatprep.subr.bf16.mxu0 %v226
  %5847 = vmatpush1.bf16.msra.mxu0 %v225
  %5848 = vmatprep.subr.bf16.mxu0 %v222
  %5849 = vmatpush1.bf16.msra.mxu0 %v221
  %5850 = vmatprep.subr.bf16.mxu0 %v218
  %5851 = vmatpush1.bf16.msra.mxu0 %v217
  %5852 = vmatprep.subr.bf16.mxu0 %v214
  %5853 = vmatpush1.bf16.msra.mxu0 %v213
  %5854 = vmatprep.subr.bf16.mxu0 %v210
  %5855 = vmatpush1.bf16.msra.mxu0 %v209
  %5856 = vmatprep.subr.bf16.mxu0 %v206
  %5857 = vmatpush1.bf16.msra.mxu0 %v205
  %5858 = vmatprep.subr.bf16.mxu0 %v202
  %5859 = vmatpush1.bf16.msra.mxu0 %v201
  %5860 = vmatprep.subr.bf16.mxu0 %v198
  %5861 = vmatpush1.bf16.msra.mxu0 %v197
  %5862 = vmatprep.subr.bf16.mxu0 0
  %5863 = vmatpush2.bf16.msra.mxu0 0
  %5864 = vmatprep.subr.bf16.mxu0 0
  %5865 = vmatpush2.bf16.msra.mxu0 0
  %5866 = vmatprep.subr.bf16.mxu0 0
  %5867 = vmatpush2.bf16.msra.mxu0 0
  %5868 = vmatprep.subr.bf16.mxu0 0
  %5869 = vmatpush2.bf16.msra.mxu0 0
  %5870 = vmatprep.subr.bf16.mxu0 0
  %5871 = vmatpush2.bf16.msra.mxu0 0
  %5872 = vmatprep.subr.bf16.mxu0 0
  %5873 = vmatpush2.bf16.msra.mxu0 0
  %5874 = vmatprep.subr.bf16.mxu0 0
  %5875 = vmatpush2.bf16.msra.mxu0 0
  %5876 = vmatprep.subr.bf16.mxu0 0
  %5877 = vmatpush2.bf16.msra.mxu0 0
  %5878 = vmatprep.mubr.bf16.mxu0 0
  %5879 = vmatmul.mubr.bf16.gmra.mxu0 %v5844
  %v5880 = vpop.f32.mrf.mxu0
  %v5881 = vadd.f32 0.0, %v5880
  %v5882 = vpop.f32.mrf.mxu0
  %v5883 = vadd.f32 0.0, %v5882
  %v5884 = vpop.f32.mrf.mxu0
  %v5885 = vpop.f32.mrf.mxu0
  %5886 = vdwg.mxu0
  %5887 = vmatprep.subr.bf16.mxu0 %v228
  %5888 = vmatpush1.bf16.msra.mxu0 %v227
  %5889 = vmatprep.subr.bf16.mxu0 %v224
  %5890 = vmatpush1.bf16.msra.mxu0 %v223
  %5891 = vmatprep.subr.bf16.mxu0 %v220
  %5892 = vmatpush1.bf16.msra.mxu0 %v219
  %5893 = vmatprep.subr.bf16.mxu0 %v216
  %5894 = vmatpush1.bf16.msra.mxu0 %v215
  %5895 = vmatprep.subr.bf16.mxu0 %v212
  %5896 = vmatpush1.bf16.msra.mxu0 %v211
  %5897 = vmatprep.subr.bf16.mxu0 %v208
  %5898 = vmatpush1.bf16.msra.mxu0 %v207
  %5899 = vmatprep.subr.bf16.mxu0 %v204
  %5900 = vmatpush1.bf16.msra.mxu0 %v203
  %5901 = vmatprep.subr.bf16.mxu0 %v200
  %5902 = vmatpush1.bf16.msra.mxu0 %v199
  %5903 = vmatprep.subr.bf16.mxu0 0
  %5904 = vmatpush2.bf16.msra.mxu0 0
  %5905 = vmatprep.subr.bf16.mxu0 0
  %5906 = vmatpush2.bf16.msra.mxu0 0
  %5907 = vmatprep.subr.bf16.mxu0 0
  %5908 = vmatpush2.bf16.msra.mxu0 0
  %5909 = vmatprep.subr.bf16.mxu0 0
  %5910 = vmatpush2.bf16.msra.mxu0 0
  %5911 = vmatprep.subr.bf16.mxu0 0
  %5912 = vmatpush2.bf16.msra.mxu0 0
  %5913 = vmatprep.subr.bf16.mxu0 0
  %5914 = vmatpush2.bf16.msra.mxu0 0
  %5915 = vmatprep.subr.bf16.mxu0 0
  %5916 = vmatpush2.bf16.msra.mxu0 0
  %5917 = vmatprep.subr.bf16.mxu0 0
  %5918 = vmatpush2.bf16.msra.mxu0 0
  %5919 = vmatprep.mubr.bf16.mxu0 0
  %5920 = vmatmul.mubr.bf16.gmra.mxu0 %v5844
  %v5921 = vpop.f32.mrf.mxu0
  %v5922 = vadd.f32 0.0, %v5921
  %v5923 = vpop.f32.mrf.mxu0
  %v5924 = vadd.f32 0.0, %v5923
  %v5925 = vpop.f32.mrf.mxu0
  %v5926 = vpop.f32.mrf.mxu0
  %5927 = vdwg.mxu0
  %v5932 = vrot.slane %v5881, 5
  %v5933 = vrot.slane %v5883, 5
  %v5934 = vrot.slane %v5922, 5
  %v5935 = vrot.slane %v5924, 5
  %v5936 = vrot.slane %v5881, 6
  %v5937 = vrot.slane %v5883, 6
  %v5938 = vrot.slane %v5922, 6
  %v5939 = vrot.slane %v5924, 6
  %v5940 = vrot.slane %v5881, 7
  %v5941 = vrot.slane %v5883, 7
  %v5942 = vrot.slane %v5922, 7
  %v5943 = vrot.slane %v5924, 7
  %v5944 = vrot.slane %v5881, 1
  %v5945 = vrot.slane %v5883, 1
  %v5946 = vrot.slane %v5922, 1
  %v5947 = vrot.slane %v5924, 1
  %v5948 = vrot.slane %v5881, 2
  %v5949 = vrot.slane %v5883, 2
  %v5950 = vrot.slane %v5922, 2
  %v5951 = vrot.slane %v5924, 2
  %v5952 = vrot.slane %v5881, 3
  %v5953 = vrot.slane %v5883, 3
  %v5954 = vrot.slane %v5922, 3
  %v5955 = vrot.slane %v5924, 3
  %v5956 = vrot.slane %v5881, 4
  %v5957 = vrot.slane %v5883, 4
  %v5958 = vrot.slane %v5922, 4
  %v5959 = vrot.slane %v5924, 4
  %v5992 = vadd.f32 %v5782, %v5932
  %v5993 = vadd.f32 %v5783, %v5933
  %v5994 = vadd.f32 %v5784, %v5934
  %v5995 = vadd.f32 %v5785, %v5935
  %v5996 = vadd.f32 %v5786, %v5936
  %v5997 = vadd.f32 %v5787, %v5937
  %v5998 = vadd.f32 %v5788, %v5938
  %v5999 = vadd.f32 %v5789, %v5939
  %v6000 = vadd.f32 %v5790, %v5940
  %v6001 = vadd.f32 %v5791, %v5941
  %v6002 = vadd.f32 %v5792, %v5942
  %v6003 = vadd.f32 %v5793, %v5943
  %v6004 = vadd.f32 %v5794, %v5881
  %v6005 = vadd.f32 %v5795, %v5883
  %v6006 = vadd.f32 %v5796, %v5922
  %v6007 = vadd.f32 %v5797, %v5924
  %v6008 = vadd.f32 %v5798, %v5944
  %v6009 = vadd.f32 %v5799, %v5945
  %v6010 = vadd.f32 %v5800, %v5946
  %v6011 = vadd.f32 %v5801, %v5947
  %v6012 = vadd.f32 %v5802, %v5948
  %v6013 = vadd.f32 %v5803, %v5949
  %v6014 = vadd.f32 %v5804, %v5950
  %v6015 = vadd.f32 %v5805, %v5951
  %v6016 = vadd.f32 %v5806, %v5952
  %v6017 = vadd.f32 %v5807, %v5953
  %v6018 = vadd.f32 %v5808, %v5954
  %v6019 = vadd.f32 %v5809, %v5955
  %v6020 = vadd.f32 %v5810, %v5956
  %v6021 = vadd.f32 %v5811, %v5957
  %v6022 = vadd.f32 %v5812, %v5958
  %v6023 = vadd.f32 %v5813, %v5959
  %v6024 = vxor.u32 %v5992, 2147483648
  %v6025 = vxor.u32 %v5993, 2147483648
  %v6026 = vxor.u32 %v5996, 2147483648
  %v6027 = vxor.u32 %v5997, 2147483648
  %v6028 = vxor.u32 %v6000, 2147483648
  %v6029 = vxor.u32 %v6001, 2147483648
  %v6030 = vxor.u32 %v6004, 2147483648
  %v6031 = vxor.u32 %v6005, 2147483648
  %v6032 = vxor.u32 %v6008, 2147483648
  %v6033 = vxor.u32 %v6009, 2147483648
  %v6034 = vxor.u32 %v6012, 2147483648
  %v6035 = vxor.u32 %v6013, 2147483648
  %v6036 = vxor.u32 %v6016, 2147483648
  %v6037 = vxor.u32 %v6017, 2147483648
  %v6038 = vxor.u32 %v6020, 2147483648
  %v6039 = vxor.u32 %v6021, 2147483648
  %v6040 = vmul.f32 %v6024, 1.442695
  %v6041 = vpow.pop %v6040
  %v6042 = vmul.f32 %v6025, 1.442695
  %v6043 = vpow.pop %v6042
  %v6044 = vmul.f32 %v6026, 1.442695
  %v6045 = vpow.pop %v6044
  %v6046 = vmul.f32 %v6027, 1.442695
  %v6047 = vpow.pop %v6046
  %v6048 = vmul.f32 %v6028, 1.442695
  %v6049 = vpow.pop %v6048
  %v6050 = vmul.f32 %v6029, 1.442695
  %v6051 = vpow.pop %v6050
  %v6052 = vmul.f32 %v6030, 1.442695
  %v6053 = vpow.pop %v6052
  %v6054 = vmul.f32 %v6031, 1.442695
  %v6055 = vpow.pop %v6054
  %v6056 = vmul.f32 %v6032, 1.442695
  %v6057 = vpow.pop %v6056
  %v6058 = vmul.f32 %v6033, 1.442695
  %v6059 = vpow.pop %v6058
  %v6060 = vmul.f32 %v6034, 1.442695
  %v6061 = vpow.pop %v6060
  %v6062 = vmul.f32 %v6035, 1.442695
  %v6063 = vpow.pop %v6062
  %v6064 = vmul.f32 %v6036, 1.442695
  %v6065 = vpow.pop %v6064
  %v6066 = vmul.f32 %v6037, 1.442695
  %v6067 = vpow.pop %v6066
  %v6068 = vmul.f32 %v6038, 1.442695
  %v6069 = vpow.pop %v6068
  %v6070 = vmul.f32 %v6039, 1.442695
  %v6071 = vpow.pop %v6070
  %v6072 = vadd.f32 %v6041, 1.0
  %v6073 = vadd.f32 %v6043, 1.0
  %v6074 = vadd.f32 %v6045, 1.0
  %v6075 = vadd.f32 %v6047, 1.0
  %v6076 = vadd.f32 %v6049, 1.0
  %v6077 = vadd.f32 %v6051, 1.0
  %v6078 = vadd.f32 %v6053, 1.0
  %v6079 = vadd.f32 %v6055, 1.0
  %v6080 = vadd.f32 %v6057, 1.0
  %v6081 = vadd.f32 %v6059, 1.0
  %v6082 = vadd.f32 %v6061, 1.0
  %v6083 = vadd.f32 %v6063, 1.0
  %v6084 = vadd.f32 %v6065, 1.0
  %v6085 = vadd.f32 %v6067, 1.0
  %v6086 = vadd.f32 %v6069, 1.0
  %v6087 = vadd.f32 %v6071, 1.0
  %v6088 = vrcp.pop %v6072
  %v6089 = vmul.f32 1.0, %v6088
  %v6090 = vrcp.pop %v6073
  %v6091 = vmul.f32 1.0, %v6090
  %v6092 = vrcp.pop %v6074
  %v6093 = vmul.f32 1.0, %v6092
  %v6094 = vrcp.pop %v6075
  %v6095 = vmul.f32 1.0, %v6094
  %v6096 = vrcp.pop %v6076
  %v6097 = vmul.f32 1.0, %v6096
  %v6098 = vrcp.pop %v6077
  %v6099 = vmul.f32 1.0, %v6098
  %v6100 = vrcp.pop %v6078
  %v6101 = vmul.f32 1.0, %v6100
  %v6102 = vrcp.pop %v6079
  %v6103 = vmul.f32 1.0, %v6102
  %v6104 = vrcp.pop %v6080
  %v6105 = vmul.f32 1.0, %v6104
  %v6106 = vrcp.pop %v6081
  %v6107 = vmul.f32 1.0, %v6106
  %v6108 = vrcp.pop %v6082
  %v6109 = vmul.f32 1.0, %v6108
  %v6110 = vrcp.pop %v6083
  %v6111 = vmul.f32 1.0, %v6110
  %v6112 = vrcp.pop %v6084
  %v6113 = vmul.f32 1.0, %v6112
  %v6114 = vrcp.pop %v6085
  %v6115 = vmul.f32 1.0, %v6114
  %v6116 = vrcp.pop %v6086
  %v6117 = vmul.f32 1.0, %v6116
  %v6118 = vrcp.pop %v6087
  %v6119 = vmul.f32 1.0, %v6118
  %v6120 = vtanh.pop %v5994
  %v6121 = vtanh.pop %v5998
  %v6122 = vtanh.pop %v6002
  %v6123 = vtanh.pop %v6006
  %v6124 = vtanh.pop %v6010
  %v6125 = vtanh.pop %v6014
  %v6126 = vtanh.pop %v6018
  %v6127 = vtanh.pop %v6022
  %v6128 = vxor.u32 %v5995, 2147483648
  %v6129 = vxor.u32 %v5999, 2147483648
  %v6130 = vxor.u32 %v6003, 2147483648
  %v6131 = vxor.u32 %v6007, 2147483648
  %v6132 = vxor.u32 %v6011, 2147483648
  %v6133 = vxor.u32 %v6015, 2147483648
  %v6134 = vxor.u32 %v6019, 2147483648
  %v6135 = vxor.u32 %v6023, 2147483648
  %v6136 = vmul.f32 %v6128, 1.442695
  %v6137 = vpow.pop %v6136
  %v6138 = vmul.f32 %v6129, 1.442695
  %v6139 = vpow.pop %v6138
  %v6140 = vmul.f32 %v6130, 1.442695
  %v6141 = vpow.pop %v6140
  %v6142 = vmul.f32 %v6131, 1.442695
  %v6143 = vpow.pop %v6142
  %v6144 = vmul.f32 %v6132, 1.442695
  %v6145 = vpow.pop %v6144
  %v6146 = vmul.f32 %v6133, 1.442695
  %v6147 = vpow.pop %v6146
  %v6148 = vmul.f32 %v6134, 1.442695
  %v6149 = vpow.pop %v6148
  %v6150 = vmul.f32 %v6135, 1.442695
  %v6151 = vpow.pop %v6150
  %v6152 = vadd.f32 %v6137, 1.0
  %v6153 = vadd.f32 %v6139, 1.0
  %v6154 = vadd.f32 %v6141, 1.0
  %v6155 = vadd.f32 %v6143, 1.0
  %v6156 = vadd.f32 %v6145, 1.0
  %v6157 = vadd.f32 %v6147, 1.0
  %v6158 = vadd.f32 %v6149, 1.0
  %v6159 = vadd.f32 %v6151, 1.0
  %v6160 = vrcp.pop %v6152
  %v6161 = vmul.f32 1.0, %v6160
  %v6162 = vrcp.pop %v6153
  %v6163 = vmul.f32 1.0, %v6162
  %v6164 = vrcp.pop %v6154
  %v6165 = vmul.f32 1.0, %v6164
  %v6166 = vrcp.pop %v6155
  %v6167 = vmul.f32 1.0, %v6166
  %v6168 = vrcp.pop %v6156
  %v6169 = vmul.f32 1.0, %v6168
  %v6170 = vrcp.pop %v6157
  %v6171 = vmul.f32 1.0, %v6170
  %v6172 = vrcp.pop %v6158
  %v6173 = vmul.f32 1.0, %v6172
  %v6174 = vrcp.pop %v6159
  %v6175 = vmul.f32 1.0, %v6174
  %v6184 = vrot.slane %v5710, 7
  %v6185 = vrot.slane %v5711, 7
  %v6186 = vrot.slane %v5712, 7
  %v6187 = vrot.slane %v5713, 7
  %v6188 = vrot.slane %v5714, 7
  %v6189 = vrot.slane %v5715, 7
  %v6190 = vrot.slane %v5716, 7
  %v6191 = vrot.slane %v5717, 7
  %v6200 = vmul.f32 %v6091, %v6184
  %v6201 = vmul.f32 %v6095, %v6185
  %v6202 = vmul.f32 %v6099, %v6186
  %v6203 = vmul.f32 %v6103, %v6187
  %v6204 = vmul.f32 %v6107, %v6188
  %v6205 = vmul.f32 %v6111, %v6189
  %v6206 = vmul.f32 %v6115, %v6190
  %v6207 = vmul.f32 %v6119, %v6191
  %v6208 = vmul.f32 %v6089, %v6120
  %v6209 = vmul.f32 %v6093, %v6121
  %v6210 = vmul.f32 %v6097, %v6122
  %v6211 = vmul.f32 %v6101, %v6123
  %v6212 = vmul.f32 %v6105, %v6124
  %v6213 = vmul.f32 %v6109, %v6125
  %v6214 = vmul.f32 %v6113, %v6126
  %v6215 = vmul.f32 %v6117, %v6127
  %v6216 = vadd.f32 %v6200, %v6208
  %v6217 = vadd.f32 %v6201, %v6209
  %v6218 = vadd.f32 %v6202, %v6210
  %v6219 = vadd.f32 %v6203, %v6211
  %v6220 = vadd.f32 %v6204, %v6212
  %v6221 = vadd.f32 %v6205, %v6213
  %v6222 = vadd.f32 %v6206, %v6214
  %v6223 = vadd.f32 %v6207, %v6215
  %v6224 = vtanh.pop %v6216
  %v6225 = vtanh.pop %v6217
  %v6226 = vtanh.pop %v6218
  %v6227 = vtanh.pop %v6219
  %v6228 = vtanh.pop %v6220
  %v6229 = vtanh.pop %v6221
  %v6230 = vtanh.pop %v6222
  %v6231 = vtanh.pop %v6223
  %v6232 = vmul.f32 %v6161, %v6224
  %v6233 = vmul.f32 %v6163, %v6225
  %v6234 = vmul.f32 %v6165, %v6226
  %v6235 = vmul.f32 %v6167, %v6227
  %v6236 = vmul.f32 %v6169, %v6228
  %v6237 = vmul.f32 %v6171, %v6229
  %v6238 = vmul.f32 %v6173, %v6230
  %v6239 = vmul.f32 %v6175, %v6231
  %v6240 = vpack.c.bf16 %v6232, %v6232
  %v6241 = vpack.c.bf16 %v6233, %v6233
  %v6242 = vpack.c.bf16 %v6234, %v6234
  %v6243 = vpack.c.bf16 %v6235, %v6235
  %v6244 = vpack.c.bf16 %v6236, %v6236
  %v6245 = vpack.c.bf16 %v6237, %v6237
  %v6246 = vpack.c.bf16 %v6238, %v6238
  %v6247 = vpack.c.bf16 %v6239, %v6239
  %v6248 = vld [vmem:[%s2 + $0x4] sm:$0x2]
  %v6249 = vsel %vm2189, %v6240, %v6248
  %6250 = vst [vmem:[%s2 + $0x4] sm:$0x2] %v6249
  %v6251 = vld [vmem:[%s2 + $0xc] sm:$0x2]
  %v6252 = vsel %vm2189, %v6241, %v6251
  %6253 = vst [vmem:[%s2 + $0xc] sm:$0x2] %v6252
  %v6254 = vld [vmem:[%s2 + $0x14] sm:$0x2]
  %v6255 = vsel %vm2189, %v6242, %v6254
  %6256 = vst [vmem:[%s2 + $0x14] sm:$0x2] %v6255
  %v6257 = vld [vmem:[%s2 + $0x1c] sm:$0x2]
  %v6258 = vsel %vm2189, %v6243, %v6257
  %6259 = vst [vmem:[%s2 + $0x1c] sm:$0x2] %v6258
  %v6260 = vld [vmem:[%s2 + $0x24] sm:$0x2]
  %v6261 = vsel %vm2189, %v6244, %v6260
  %6262 = vst [vmem:[%s2 + $0x24] sm:$0x2] %v6261
  %v6263 = vld [vmem:[%s2 + $0x2c] sm:$0x2]
  %v6264 = vsel %vm2189, %v6245, %v6263
  %6265 = vst [vmem:[%s2 + $0x2c] sm:$0x2] %v6264
  %v6266 = vld [vmem:[%s2 + $0x34] sm:$0x2]
  %v6267 = vsel %vm2189, %v6246, %v6266
  %6268 = vst [vmem:[%s2 + $0x34] sm:$0x2] %v6267
  %v6269 = vld [vmem:[%s2 + $0x3c] sm:$0x2]
  %v6270 = vsel %vm2189, %v6247, %v6269
  %6271 = vst [vmem:[%s2 + $0x3c] sm:$0x2] %v6270
  %v6272 = vld [vmem:[%s0 + $0x10] sm:$0x44]
  %v6273 = vld [vmem:[%s0 + $0x18] sm:$0x44]
  %v6274 = vld [vmem:[%s0 + $0x30] sm:$0x44]
  %v6275 = vld [vmem:[%s0 + $0x38] sm:$0x44]
  %v6276 = vld [vmem:[%s0 + $0x50] sm:$0x44]
  %v6277 = vld [vmem:[%s0 + $0x58] sm:$0x44]
  %v6278 = vld [vmem:[%s0 + $0x70] sm:$0x44]
  %v6279 = vld [vmem:[%s0 + $0x78] sm:$0x44]
  %v6280 = vld [vmem:[%s0 + $0x90] sm:$0x44]
  %v6281 = vld [vmem:[%s0 + $0x98] sm:$0x44]
  %v6282 = vld [vmem:[%s0 + $0xb0] sm:$0x44]
  %v6283 = vld [vmem:[%s0 + $0xb8] sm:$0x44]
  %v6284 = vld [vmem:[%s0 + $0xd0] sm:$0x44]
  %v6285 = vld [vmem:[%s0 + $0xd8] sm:$0x44]
  %v6286 = vld [vmem:[%s0 + $0xf0] sm:$0x44]
  %v6287 = vld [vmem:[%s0 + $0xf8] sm:$0x44]
  %v6288 = vunpack.c.l.bf16 %v6272
  %v6289 = vunpack.c.h.bf16 %v6272
  %v6290 = vunpack.c.l.bf16 %v6273
  %v6291 = vunpack.c.h.bf16 %v6273
  %v6292 = vunpack.c.l.bf16 %v6274
  %v6293 = vunpack.c.h.bf16 %v6274
  %v6294 = vunpack.c.l.bf16 %v6275
  %v6295 = vunpack.c.h.bf16 %v6275
  %v6296 = vunpack.c.l.bf16 %v6276
  %v6297 = vunpack.c.h.bf16 %v6276
  %v6298 = vunpack.c.l.bf16 %v6277
  %v6299 = vunpack.c.h.bf16 %v6277
  %v6300 = vunpack.c.l.bf16 %v6278
  %v6301 = vunpack.c.h.bf16 %v6278
  %v6302 = vunpack.c.l.bf16 %v6279
  %v6303 = vunpack.c.h.bf16 %v6279
  %v6304 = vunpack.c.l.bf16 %v6280
  %v6305 = vunpack.c.h.bf16 %v6280
  %v6306 = vunpack.c.l.bf16 %v6281
  %v6307 = vunpack.c.h.bf16 %v6281
  %v6308 = vunpack.c.l.bf16 %v6282
  %v6309 = vunpack.c.h.bf16 %v6282
  %v6310 = vunpack.c.l.bf16 %v6283
  %v6311 = vunpack.c.h.bf16 %v6283
  %v6312 = vunpack.c.l.bf16 %v6284
  %v6313 = vunpack.c.h.bf16 %v6284
  %v6314 = vunpack.c.l.bf16 %v6285
  %v6315 = vunpack.c.h.bf16 %v6285
  %v6316 = vunpack.c.l.bf16 %v6286
  %v6317 = vunpack.c.h.bf16 %v6286
  %v6318 = vunpack.c.l.bf16 %v6287
  %v6319 = vunpack.c.h.bf16 %v6287
  %v6328 = vunpack.c.l.b16 %v6240
  %v6329 = vunpack.c.l.b16 %v6241
  %v6330 = vunpack.c.l.b16 %v6242
  %v6331 = vunpack.c.l.b16 %v6243
  %v6332 = vunpack.c.l.b16 %v6244
  %v6333 = vunpack.c.l.b16 %v6245
  %v6334 = vunpack.c.l.b16 %v6246
  %v6335 = vunpack.c.l.b16 %v6247
  %v6336 = vrot.slane %v6328, 3
  %v6337 = vrot.slane %v6329, 2
  %v6338 = vsel %vm747, %v6337, %v6336
  %v6339 = vrot.slane %v6330, 1
  %v6340 = vsel %vm750, %v6339, %v6338
  %v6341 = vsel %vm753, %v6331, %v6340
  %v6342 = vrot.slane %v6332, 7
  %v6343 = vsel %vm756, %v6342, %v6341
  %v6344 = vrot.slane %v6333, 6
  %v6345 = vsel %vm759, %v6344, %v6343
  %v6346 = vrot.slane %v6334, 5
  %v6347 = vsel %vm762, %v6346, %v6345
  %v6348 = vrot.slane %v6335, 4
  %v6349 = vsel %vm765, %v6348, %v6347
  %v6350 = vpack.c.b16 %v6349, %v6349
  %6352 = vmatprep.subr.bf16.mxu0 %v226
  %6353 = vmatpush1.bf16.msra.mxu0 %v225
  %6354 = vmatprep.subr.bf16.mxu0 %v222
  %6355 = vmatpush1.bf16.msra.mxu0 %v221
  %6356 = vmatprep.subr.bf16.mxu0 %v218
  %6357 = vmatpush1.bf16.msra.mxu0 %v217
  %6358 = vmatprep.subr.bf16.mxu0 %v214
  %6359 = vmatpush1.bf16.msra.mxu0 %v213
  %6360 = vmatprep.subr.bf16.mxu0 %v210
  %6361 = vmatpush1.bf16.msra.mxu0 %v209
  %6362 = vmatprep.subr.bf16.mxu0 %v206
  %6363 = vmatpush1.bf16.msra.mxu0 %v205
  %6364 = vmatprep.subr.bf16.mxu0 %v202
  %6365 = vmatpush1.bf16.msra.mxu0 %v201
  %6366 = vmatprep.subr.bf16.mxu0 %v198
  %6367 = vmatpush1.bf16.msra.mxu0 %v197
  %6368 = vmatprep.subr.bf16.mxu0 0
  %6369 = vmatpush2.bf16.msra.mxu0 0
  %6370 = vmatprep.subr.bf16.mxu0 0
  %6371 = vmatpush2.bf16.msra.mxu0 0
  %6372 = vmatprep.subr.bf16.mxu0 0
  %6373 = vmatpush2.bf16.msra.mxu0 0
  %6374 = vmatprep.subr.bf16.mxu0 0
  %6375 = vmatpush2.bf16.msra.mxu0 0
  %6376 = vmatprep.subr.bf16.mxu0 0
  %6377 = vmatpush2.bf16.msra.mxu0 0
  %6378 = vmatprep.subr.bf16.mxu0 0
  %6379 = vmatpush2.bf16.msra.mxu0 0
  %6380 = vmatprep.subr.bf16.mxu0 0
  %6381 = vmatpush2.bf16.msra.mxu0 0
  %6382 = vmatprep.subr.bf16.mxu0 0
  %6383 = vmatpush2.bf16.msra.mxu0 0
  %6384 = vmatprep.mubr.bf16.mxu0 0
  %6385 = vmatmul.mubr.bf16.gmra.mxu0 %v6350
  %v6386 = vpop.f32.mrf.mxu0
  %v6387 = vadd.f32 0.0, %v6386
  %v6388 = vpop.f32.mrf.mxu0
  %v6389 = vadd.f32 0.0, %v6388
  %v6390 = vpop.f32.mrf.mxu0
  %v6391 = vpop.f32.mrf.mxu0
  %6392 = vdwg.mxu0
  %6393 = vmatprep.subr.bf16.mxu0 %v228
  %6394 = vmatpush1.bf16.msra.mxu0 %v227
  %6395 = vmatprep.subr.bf16.mxu0 %v224
  %6396 = vmatpush1.bf16.msra.mxu0 %v223
  %6397 = vmatprep.subr.bf16.mxu0 %v220
  %6398 = vmatpush1.bf16.msra.mxu0 %v219
  %6399 = vmatprep.subr.bf16.mxu0 %v216
  %6400 = vmatpush1.bf16.msra.mxu0 %v215
  %6401 = vmatprep.subr.bf16.mxu0 %v212
  %6402 = vmatpush1.bf16.msra.mxu0 %v211
  %6403 = vmatprep.subr.bf16.mxu0 %v208
  %6404 = vmatpush1.bf16.msra.mxu0 %v207
  %6405 = vmatprep.subr.bf16.mxu0 %v204
  %6406 = vmatpush1.bf16.msra.mxu0 %v203
  %6407 = vmatprep.subr.bf16.mxu0 %v200
  %6408 = vmatpush1.bf16.msra.mxu0 %v199
  %6409 = vmatprep.subr.bf16.mxu0 0
  %6410 = vmatpush2.bf16.msra.mxu0 0
  %6411 = vmatprep.subr.bf16.mxu0 0
  %6412 = vmatpush2.bf16.msra.mxu0 0
  %6413 = vmatprep.subr.bf16.mxu0 0
  %6414 = vmatpush2.bf16.msra.mxu0 0
  %6415 = vmatprep.subr.bf16.mxu0 0
  %6416 = vmatpush2.bf16.msra.mxu0 0
  %6417 = vmatprep.subr.bf16.mxu0 0
  %6418 = vmatpush2.bf16.msra.mxu0 0
  %6419 = vmatprep.subr.bf16.mxu0 0
  %6420 = vmatpush2.bf16.msra.mxu0 0
  %6421 = vmatprep.subr.bf16.mxu0 0
  %6422 = vmatpush2.bf16.msra.mxu0 0
  %6423 = vmatprep.subr.bf16.mxu0 0
  %6424 = vmatpush2.bf16.msra.mxu0 0
  %6425 = vmatprep.mubr.bf16.mxu0 0
  %6426 = vmatmul.mubr.bf16.gmra.mxu0 %v6350
  %v6427 = vpop.f32.mrf.mxu0
  %v6428 = vadd.f32 0.0, %v6427
  %v6429 = vpop.f32.mrf.mxu0
  %v6430 = vadd.f32 0.0, %v6429
  %v6431 = vpop.f32.mrf.mxu0
  %v6432 = vpop.f32.mrf.mxu0
  %6433 = vdwg.mxu0
  %v6438 = vrot.slane %v6387, 4
  %v6439 = vrot.slane %v6389, 4
  %v6440 = vrot.slane %v6428, 4
  %v6441 = vrot.slane %v6430, 4
  %v6442 = vrot.slane %v6387, 5
  %v6443 = vrot.slane %v6389, 5
  %v6444 = vrot.slane %v6428, 5
  %v6445 = vrot.slane %v6430, 5
  %v6446 = vrot.slane %v6387, 6
  %v6447 = vrot.slane %v6389, 6
  %v6448 = vrot.slane %v6428, 6
  %v6449 = vrot.slane %v6430, 6
  %v6450 = vrot.slane %v6387, 7
  %v6451 = vrot.slane %v6389, 7
  %v6452 = vrot.slane %v6428, 7
  %v6453 = vrot.slane %v6430, 7
  %v6454 = vrot.slane %v6387, 1
  %v6455 = vrot.slane %v6389, 1
  %v6456 = vrot.slane %v6428, 1
  %v6457 = vrot.slane %v6430, 1
  %v6458 = vrot.slane %v6387, 2
  %v6459 = vrot.slane %v6389, 2
  %v6460 = vrot.slane %v6428, 2
  %v6461 = vrot.slane %v6430, 2
  %v6462 = vrot.slane %v6387, 3
  %v6463 = vrot.slane %v6389, 3
  %v6464 = vrot.slane %v6428, 3
  %v6465 = vrot.slane %v6430, 3
  %v6498 = vadd.f32 %v6288, %v6438
  %v6499 = vadd.f32 %v6289, %v6439
  %v6500 = vadd.f32 %v6290, %v6440
  %v6501 = vadd.f32 %v6291, %v6441
  %v6502 = vadd.f32 %v6292, %v6442
  %v6503 = vadd.f32 %v6293, %v6443
  %v6504 = vadd.f32 %v6294, %v6444
  %v6505 = vadd.f32 %v6295, %v6445
  %v6506 = vadd.f32 %v6296, %v6446
  %v6507 = vadd.f32 %v6297, %v6447
  %v6508 = vadd.f32 %v6298, %v6448
  %v6509 = vadd.f32 %v6299, %v6449
  %v6510 = vadd.f32 %v6300, %v6450
  %v6511 = vadd.f32 %v6301, %v6451
  %v6512 = vadd.f32 %v6302, %v6452
  %v6513 = vadd.f32 %v6303, %v6453
  %v6514 = vadd.f32 %v6304, %v6387
  %v6515 = vadd.f32 %v6305, %v6389
  %v6516 = vadd.f32 %v6306, %v6428
  %v6517 = vadd.f32 %v6307, %v6430
  %v6518 = vadd.f32 %v6308, %v6454
  %v6519 = vadd.f32 %v6309, %v6455
  %v6520 = vadd.f32 %v6310, %v6456
  %v6521 = vadd.f32 %v6311, %v6457
  %v6522 = vadd.f32 %v6312, %v6458
  %v6523 = vadd.f32 %v6313, %v6459
  %v6524 = vadd.f32 %v6314, %v6460
  %v6525 = vadd.f32 %v6315, %v6461
  %v6526 = vadd.f32 %v6316, %v6462
  %v6527 = vadd.f32 %v6317, %v6463
  %v6528 = vadd.f32 %v6318, %v6464
  %v6529 = vadd.f32 %v6319, %v6465
  %v6530 = vxor.u32 %v6498, 2147483648
  %v6531 = vxor.u32 %v6499, 2147483648
  %v6532 = vxor.u32 %v6502, 2147483648
  %v6533 = vxor.u32 %v6503, 2147483648
  %v6534 = vxor.u32 %v6506, 2147483648
  %v6535 = vxor.u32 %v6507, 2147483648
  %v6536 = vxor.u32 %v6510, 2147483648
  %v6537 = vxor.u32 %v6511, 2147483648
  %v6538 = vxor.u32 %v6514, 2147483648
  %v6539 = vxor.u32 %v6515, 2147483648
  %v6540 = vxor.u32 %v6518, 2147483648
  %v6541 = vxor.u32 %v6519, 2147483648
  %v6542 = vxor.u32 %v6522, 2147483648
  %v6543 = vxor.u32 %v6523, 2147483648
  %v6544 = vxor.u32 %v6526, 2147483648
  %v6545 = vxor.u32 %v6527, 2147483648
  %v6546 = vmul.f32 %v6530, 1.442695
  %v6547 = vpow.pop %v6546
  %v6548 = vmul.f32 %v6531, 1.442695
  %v6549 = vpow.pop %v6548
  %v6550 = vmul.f32 %v6532, 1.442695
  %v6551 = vpow.pop %v6550
  %v6552 = vmul.f32 %v6533, 1.442695
  %v6553 = vpow.pop %v6552
  %v6554 = vmul.f32 %v6534, 1.442695
  %v6555 = vpow.pop %v6554
  %v6556 = vmul.f32 %v6535, 1.442695
  %v6557 = vpow.pop %v6556
  %v6558 = vmul.f32 %v6536, 1.442695
  %v6559 = vpow.pop %v6558
  %v6560 = vmul.f32 %v6537, 1.442695
  %v6561 = vpow.pop %v6560
  %v6562 = vmul.f32 %v6538, 1.442695
  %v6563 = vpow.pop %v6562
  %v6564 = vmul.f32 %v6539, 1.442695
  %v6565 = vpow.pop %v6564
  %v6566 = vmul.f32 %v6540, 1.442695
  %v6567 = vpow.pop %v6566
  %v6568 = vmul.f32 %v6541, 1.442695
  %v6569 = vpow.pop %v6568
  %v6570 = vmul.f32 %v6542, 1.442695
  %v6571 = vpow.pop %v6570
  %v6572 = vmul.f32 %v6543, 1.442695
  %v6573 = vpow.pop %v6572
  %v6574 = vmul.f32 %v6544, 1.442695
  %v6575 = vpow.pop %v6574
  %v6576 = vmul.f32 %v6545, 1.442695
  %v6577 = vpow.pop %v6576
  %v6578 = vadd.f32 %v6547, 1.0
  %v6579 = vadd.f32 %v6549, 1.0
  %v6580 = vadd.f32 %v6551, 1.0
  %v6581 = vadd.f32 %v6553, 1.0
  %v6582 = vadd.f32 %v6555, 1.0
  %v6583 = vadd.f32 %v6557, 1.0
  %v6584 = vadd.f32 %v6559, 1.0
  %v6585 = vadd.f32 %v6561, 1.0
  %v6586 = vadd.f32 %v6563, 1.0
  %v6587 = vadd.f32 %v6565, 1.0
  %v6588 = vadd.f32 %v6567, 1.0
  %v6589 = vadd.f32 %v6569, 1.0
  %v6590 = vadd.f32 %v6571, 1.0
  %v6591 = vadd.f32 %v6573, 1.0
  %v6592 = vadd.f32 %v6575, 1.0
  %v6593 = vadd.f32 %v6577, 1.0
  %v6594 = vrcp.pop %v6578
  %v6595 = vmul.f32 1.0, %v6594
  %v6596 = vrcp.pop %v6579
  %v6597 = vmul.f32 1.0, %v6596
  %v6598 = vrcp.pop %v6580
  %v6599 = vmul.f32 1.0, %v6598
  %v6600 = vrcp.pop %v6581
  %v6601 = vmul.f32 1.0, %v6600
  %v6602 = vrcp.pop %v6582
  %v6603 = vmul.f32 1.0, %v6602
  %v6604 = vrcp.pop %v6583
  %v6605 = vmul.f32 1.0, %v6604
  %v6606 = vrcp.pop %v6584
  %v6607 = vmul.f32 1.0, %v6606
  %v6608 = vrcp.pop %v6585
  %v6609 = vmul.f32 1.0, %v6608
  %v6610 = vrcp.pop %v6586
  %v6611 = vmul.f32 1.0, %v6610
  %v6612 = vrcp.pop %v6587
  %v6613 = vmul.f32 1.0, %v6612
  %v6614 = vrcp.pop %v6588
  %v6615 = vmul.f32 1.0, %v6614
  %v6616 = vrcp.pop %v6589
  %v6617 = vmul.f32 1.0, %v6616
  %v6618 = vrcp.pop %v6590
  %v6619 = vmul.f32 1.0, %v6618
  %v6620 = vrcp.pop %v6591
  %v6621 = vmul.f32 1.0, %v6620
  %v6622 = vrcp.pop %v6592
  %v6623 = vmul.f32 1.0, %v6622
  %v6624 = vrcp.pop %v6593
  %v6625 = vmul.f32 1.0, %v6624
  %v6626 = vtanh.pop %v6500
  %v6627 = vtanh.pop %v6504
  %v6628 = vtanh.pop %v6508
  %v6629 = vtanh.pop %v6512
  %v6630 = vtanh.pop %v6516
  %v6631 = vtanh.pop %v6520
  %v6632 = vtanh.pop %v6524
  %v6633 = vtanh.pop %v6528
  %v6634 = vxor.u32 %v6501, 2147483648
  %v6635 = vxor.u32 %v6505, 2147483648
  %v6636 = vxor.u32 %v6509, 2147483648
  %v6637 = vxor.u32 %v6513, 2147483648
  %v6638 = vxor.u32 %v6517, 2147483648
  %v6639 = vxor.u32 %v6521, 2147483648
  %v6640 = vxor.u32 %v6525, 2147483648
  %v6641 = vxor.u32 %v6529, 2147483648
  %v6642 = vmul.f32 %v6634, 1.442695
  %v6643 = vpow.pop %v6642
  %v6644 = vmul.f32 %v6635, 1.442695
  %v6645 = vpow.pop %v6644
  %v6646 = vmul.f32 %v6636, 1.442695
  %v6647 = vpow.pop %v6646
  %v6648 = vmul.f32 %v6637, 1.442695
  %v6649 = vpow.pop %v6648
  %v6650 = vmul.f32 %v6638, 1.442695
  %v6651 = vpow.pop %v6650
  %v6652 = vmul.f32 %v6639, 1.442695
  %v6653 = vpow.pop %v6652
  %v6654 = vmul.f32 %v6640, 1.442695
  %v6655 = vpow.pop %v6654
  %v6656 = vmul.f32 %v6641, 1.442695
  %v6657 = vpow.pop %v6656
  %v6658 = vadd.f32 %v6643, 1.0
  %v6659 = vadd.f32 %v6645, 1.0
  %v6660 = vadd.f32 %v6647, 1.0
  %v6661 = vadd.f32 %v6649, 1.0
  %v6662 = vadd.f32 %v6651, 1.0
  %v6663 = vadd.f32 %v6653, 1.0
  %v6664 = vadd.f32 %v6655, 1.0
  %v6665 = vadd.f32 %v6657, 1.0
  %v6666 = vrcp.pop %v6658
  %v6667 = vmul.f32 1.0, %v6666
  %v6668 = vrcp.pop %v6659
  %v6669 = vmul.f32 1.0, %v6668
  %v6670 = vrcp.pop %v6660
  %v6671 = vmul.f32 1.0, %v6670
  %v6672 = vrcp.pop %v6661
  %v6673 = vmul.f32 1.0, %v6672
  %v6674 = vrcp.pop %v6662
  %v6675 = vmul.f32 1.0, %v6674
  %v6676 = vrcp.pop %v6663
  %v6677 = vmul.f32 1.0, %v6676
  %v6678 = vrcp.pop %v6664
  %v6679 = vmul.f32 1.0, %v6678
  %v6680 = vrcp.pop %v6665
  %v6681 = vmul.f32 1.0, %v6680
  %v6690 = vrot.slane %v6216, 7
  %v6691 = vrot.slane %v6217, 7
  %v6692 = vrot.slane %v6218, 7
  %v6693 = vrot.slane %v6219, 7
  %v6694 = vrot.slane %v6220, 7
  %v6695 = vrot.slane %v6221, 7
  %v6696 = vrot.slane %v6222, 7
  %v6697 = vrot.slane %v6223, 7
  %v6706 = vmul.f32 %v6597, %v6690
  %v6707 = vmul.f32 %v6601, %v6691
  %v6708 = vmul.f32 %v6605, %v6692
  %v6709 = vmul.f32 %v6609, %v6693
  %v6710 = vmul.f32 %v6613, %v6694
  %v6711 = vmul.f32 %v6617, %v6695
  %v6712 = vmul.f32 %v6621, %v6696
  %v6713 = vmul.f32 %v6625, %v6697
  %v6714 = vmul.f32 %v6595, %v6626
  %v6715 = vmul.f32 %v6599, %v6627
  %v6716 = vmul.f32 %v6603, %v6628
  %v6717 = vmul.f32 %v6607, %v6629
  %v6718 = vmul.f32 %v6611, %v6630
  %v6719 = vmul.f32 %v6615, %v6631
  %v6720 = vmul.f32 %v6619, %v6632
  %v6721 = vmul.f32 %v6623, %v6633
  %v6722 = vadd.f32 %v6706, %v6714
  %v6723 = vadd.f32 %v6707, %v6715
  %v6724 = vadd.f32 %v6708, %v6716
  %v6725 = vadd.f32 %v6709, %v6717
  %v6726 = vadd.f32 %v6710, %v6718
  %v6727 = vadd.f32 %v6711, %v6719
  %v6728 = vadd.f32 %v6712, %v6720
  %v6729 = vadd.f32 %v6713, %v6721
  %v6730 = vtanh.pop %v6722
  %v6731 = vtanh.pop %v6723
  %v6732 = vtanh.pop %v6724
  %v6733 = vtanh.pop %v6725
  %v6734 = vtanh.pop %v6726
  %v6735 = vtanh.pop %v6727
  %v6736 = vtanh.pop %v6728
  %v6737 = vtanh.pop %v6729
  %v6738 = vmul.f32 %v6667, %v6730
  %v6739 = vmul.f32 %v6669, %v6731
  %v6740 = vmul.f32 %v6671, %v6732
  %v6741 = vmul.f32 %v6673, %v6733
  %v6742 = vmul.f32 %v6675, %v6734
  %v6743 = vmul.f32 %v6677, %v6735
  %v6744 = vmul.f32 %v6679, %v6736
  %v6745 = vmul.f32 %v6681, %v6737
  %v6746 = vpack.c.bf16 %v6738, %v6738
  %v6747 = vpack.c.bf16 %v6739, %v6739
  %v6748 = vpack.c.bf16 %v6740, %v6740
  %v6749 = vpack.c.bf16 %v6741, %v6741
  %v6750 = vpack.c.bf16 %v6742, %v6742
  %v6751 = vpack.c.bf16 %v6743, %v6743
  %v6752 = vpack.c.bf16 %v6744, %v6744
  %v6753 = vpack.c.bf16 %v6745, %v6745
  %v6754 = vld [vmem:[%s2 + $0x4] sm:$0x4]
  %v6755 = vsel %vm2698, %v6746, %v6754
  %6756 = vst [vmem:[%s2 + $0x4] sm:$0x4] %v6755
  %v6757 = vld [vmem:[%s2 + $0xc] sm:$0x4]
  %v6758 = vsel %vm2698, %v6747, %v6757
  %6759 = vst [vmem:[%s2 + $0xc] sm:$0x4] %v6758
  %v6760 = vld [vmem:[%s2 + $0x14] sm:$0x4]
  %v6761 = vsel %vm2698, %v6748, %v6760
  %6762 = vst [vmem:[%s2 + $0x14] sm:$0x4] %v6761
  %v6763 = vld [vmem:[%s2 + $0x1c] sm:$0x4]
  %v6764 = vsel %vm2698, %v6749, %v6763
  %6765 = vst [vmem:[%s2 + $0x1c] sm:$0x4] %v6764
  %v6766 = vld [vmem:[%s2 + $0x24] sm:$0x4]
  %v6767 = vsel %vm2698, %v6750, %v6766
  %6768 = vst [vmem:[%s2 + $0x24] sm:$0x4] %v6767
  %v6769 = vld [vmem:[%s2 + $0x2c] sm:$0x4]
  %v6770 = vsel %vm2698, %v6751, %v6769
  %6771 = vst [vmem:[%s2 + $0x2c] sm:$0x4] %v6770
  %v6772 = vld [vmem:[%s2 + $0x34] sm:$0x4]
  %v6773 = vsel %vm2698, %v6752, %v6772
  %6774 = vst [vmem:[%s2 + $0x34] sm:$0x4] %v6773
  %v6775 = vld [vmem:[%s2 + $0x3c] sm:$0x4]
  %v6776 = vsel %vm2698, %v6753, %v6775
  %6777 = vst [vmem:[%s2 + $0x3c] sm:$0x4] %v6776
  %v6778 = vld [vmem:[%s0 + $0x10] sm:$0x44]
  %v6779 = vld [vmem:[%s0 + $0x18] sm:$0x44]
  %v6780 = vld [vmem:[%s0 + $0x30] sm:$0x44]
  %v6781 = vld [vmem:[%s0 + $0x38] sm:$0x44]
  %v6782 = vld [vmem:[%s0 + $0x50] sm:$0x44]
  %v6783 = vld [vmem:[%s0 + $0x58] sm:$0x44]
  %v6784 = vld [vmem:[%s0 + $0x70] sm:$0x44]
  %v6785 = vld [vmem:[%s0 + $0x78] sm:$0x44]
  %v6786 = vld [vmem:[%s0 + $0x90] sm:$0x44]
  %v6787 = vld [vmem:[%s0 + $0x98] sm:$0x44]
  %v6788 = vld [vmem:[%s0 + $0xb0] sm:$0x44]
  %v6789 = vld [vmem:[%s0 + $0xb8] sm:$0x44]
  %v6790 = vld [vmem:[%s0 + $0xd0] sm:$0x44]
  %v6791 = vld [vmem:[%s0 + $0xd8] sm:$0x44]
  %v6792 = vld [vmem:[%s0 + $0xf0] sm:$0x44]
  %v6793 = vld [vmem:[%s0 + $0xf8] sm:$0x44]
  %v6794 = vunpack.c.l.bf16 %v6778
  %v6795 = vunpack.c.h.bf16 %v6778
  %v6796 = vunpack.c.l.bf16 %v6779
  %v6797 = vunpack.c.h.bf16 %v6779
  %v6798 = vunpack.c.l.bf16 %v6780
  %v6799 = vunpack.c.h.bf16 %v6780
  %v6800 = vunpack.c.l.bf16 %v6781
  %v6801 = vunpack.c.h.bf16 %v6781
  %v6802 = vunpack.c.l.bf16 %v6782
  %v6803 = vunpack.c.h.bf16 %v6782
  %v6804 = vunpack.c.l.bf16 %v6783
  %v6805 = vunpack.c.h.bf16 %v6783
  %v6806 = vunpack.c.l.bf16 %v6784
  %v6807 = vunpack.c.h.bf16 %v6784
  %v6808 = vunpack.c.l.bf16 %v6785
  %v6809 = vunpack.c.h.bf16 %v6785
  %v6810 = vunpack.c.l.bf16 %v6786
  %v6811 = vunpack.c.h.bf16 %v6786
  %v6812 = vunpack.c.l.bf16 %v6787
  %v6813 = vunpack.c.h.bf16 %v6787
  %v6814 = vunpack.c.l.bf16 %v6788
  %v6815 = vunpack.c.h.bf16 %v6788
  %v6816 = vunpack.c.l.bf16 %v6789
  %v6817 = vunpack.c.h.bf16 %v6789
  %v6818 = vunpack.c.l.bf16 %v6790
  %v6819 = vunpack.c.h.bf16 %v6790
  %v6820 = vunpack.c.l.bf16 %v6791
  %v6821 = vunpack.c.h.bf16 %v6791
  %v6822 = vunpack.c.l.bf16 %v6792
  %v6823 = vunpack.c.h.bf16 %v6792
  %v6824 = vunpack.c.l.bf16 %v6793
  %v6825 = vunpack.c.h.bf16 %v6793
  %v6834 = vunpack.c.l.b16 %v6746
  %v6835 = vunpack.c.l.b16 %v6747
  %v6836 = vunpack.c.l.b16 %v6748
  %v6837 = vunpack.c.l.b16 %v6749
  %v6838 = vunpack.c.l.b16 %v6750
  %v6839 = vunpack.c.l.b16 %v6751
  %v6840 = vunpack.c.l.b16 %v6752
  %v6841 = vunpack.c.l.b16 %v6753
  %v6842 = vrot.slane %v6834, 4
  %v6843 = vrot.slane %v6835, 3
  %v6844 = vsel %vm747, %v6843, %v6842
  %v6845 = vrot.slane %v6836, 2
  %v6846 = vsel %vm750, %v6845, %v6844
  %v6847 = vrot.slane %v6837, 1
  %v6848 = vsel %vm753, %v6847, %v6846
  %v6849 = vsel %vm756, %v6838, %v6848
  %v6850 = vrot.slane %v6839, 7
  %v6851 = vsel %vm759, %v6850, %v6849
  %v6852 = vrot.slane %v6840, 6
  %v6853 = vsel %vm762, %v6852, %v6851
  %v6854 = vrot.slane %v6841, 5
  %v6855 = vsel %vm765, %v6854, %v6853
  %v6856 = vpack.c.b16 %v6855, %v6855
  %6858 = vmatprep.subr.bf16.mxu0 %v226
  %6859 = vmatpush1.bf16.msra.mxu0 %v225
  %6860 = vmatprep.subr.bf16.mxu0 %v222
  %6861 = vmatpush1.bf16.msra.mxu0 %v221
  %6862 = vmatprep.subr.bf16.mxu0 %v218
  %6863 = vmatpush1.bf16.msra.mxu0 %v217
  %6864 = vmatprep.subr.bf16.mxu0 %v214
  %6865 = vmatpush1.bf16.msra.mxu0 %v213
  %6866 = vmatprep.subr.bf16.mxu0 %v210
  %6867 = vmatpush1.bf16.msra.mxu0 %v209
  %6868 = vmatprep.subr.bf16.mxu0 %v206
  %6869 = vmatpush1.bf16.msra.mxu0 %v205
  %6870 = vmatprep.subr.bf16.mxu0 %v202
  %6871 = vmatpush1.bf16.msra.mxu0 %v201
  %6872 = vmatprep.subr.bf16.mxu0 %v198
  %6873 = vmatpush1.bf16.msra.mxu0 %v197
  %6874 = vmatprep.subr.bf16.mxu0 0
  %6875 = vmatpush2.bf16.msra.mxu0 0
  %6876 = vmatprep.subr.bf16.mxu0 0
  %6877 = vmatpush2.bf16.msra.mxu0 0
  %6878 = vmatprep.subr.bf16.mxu0 0
  %6879 = vmatpush2.bf16.msra.mxu0 0
  %6880 = vmatprep.subr.bf16.mxu0 0
  %6881 = vmatpush2.bf16.msra.mxu0 0
  %6882 = vmatprep.subr.bf16.mxu0 0
  %6883 = vmatpush2.bf16.msra.mxu0 0
  %6884 = vmatprep.subr.bf16.mxu0 0
  %6885 = vmatpush2.bf16.msra.mxu0 0
  %6886 = vmatprep.subr.bf16.mxu0 0
  %6887 = vmatpush2.bf16.msra.mxu0 0
  %6888 = vmatprep.subr.bf16.mxu0 0
  %6889 = vmatpush2.bf16.msra.mxu0 0
  %6890 = vmatprep.mubr.bf16.mxu0 0
  %6891 = vmatmul.mubr.bf16.gmra.mxu0 %v6856
  %v6892 = vpop.f32.mrf.mxu0
  %v6893 = vadd.f32 0.0, %v6892
  %v6894 = vpop.f32.mrf.mxu0
  %v6895 = vadd.f32 0.0, %v6894
  %v6896 = vpop.f32.mrf.mxu0
  %v6897 = vpop.f32.mrf.mxu0
  %6898 = vdwg.mxu0
  %6899 = vmatprep.subr.bf16.mxu0 %v228
  %6900 = vmatpush1.bf16.msra.mxu0 %v227
  %6901 = vmatprep.subr.bf16.mxu0 %v224
  %6902 = vmatpush1.bf16.msra.mxu0 %v223
  %6903 = vmatprep.subr.bf16.mxu0 %v220
  %6904 = vmatpush1.bf16.msra.mxu0 %v219
  %6905 = vmatprep.subr.bf16.mxu0 %v216
  %6906 = vmatpush1.bf16.msra.mxu0 %v215
  %6907 = vmatprep.subr.bf16.mxu0 %v212
  %6908 = vmatpush1.bf16.msra.mxu0 %v211
  %6909 = vmatprep.subr.bf16.mxu0 %v208
  %6910 = vmatpush1.bf16.msra.mxu0 %v207
  %6911 = vmatprep.subr.bf16.mxu0 %v204
  %6912 = vmatpush1.bf16.msra.mxu0 %v203
  %6913 = vmatprep.subr.bf16.mxu0 %v200
  %6914 = vmatpush1.bf16.msra.mxu0 %v199
  %6915 = vmatprep.subr.bf16.mxu0 0
  %6916 = vmatpush2.bf16.msra.mxu0 0
  %6917 = vmatprep.subr.bf16.mxu0 0
  %6918 = vmatpush2.bf16.msra.mxu0 0
  %6919 = vmatprep.subr.bf16.mxu0 0
  %6920 = vmatpush2.bf16.msra.mxu0 0
  %6921 = vmatprep.subr.bf16.mxu0 0
  %6922 = vmatpush2.bf16.msra.mxu0 0
  %6923 = vmatprep.subr.bf16.mxu0 0
  %6924 = vmatpush2.bf16.msra.mxu0 0
  %6925 = vmatprep.subr.bf16.mxu0 0
  %6926 = vmatpush2.bf16.msra.mxu0 0
  %6927 = vmatprep.subr.bf16.mxu0 0
  %6928 = vmatpush2.bf16.msra.mxu0 0
  %6929 = vmatprep.subr.bf16.mxu0 0
  %6930 = vmatpush2.bf16.msra.mxu0 0
  %6931 = vmatprep.mubr.bf16.mxu0 0
  %6932 = vmatmul.mubr.bf16.gmra.mxu0 %v6856
  %v6933 = vpop.f32.mrf.mxu0
  %v6934 = vadd.f32 0.0, %v6933
  %v6935 = vpop.f32.mrf.mxu0
  %v6936 = vadd.f32 0.0, %v6935
  %v6937 = vpop.f32.mrf.mxu0
  %v6938 = vpop.f32.mrf.mxu0
  %6939 = vdwg.mxu0
  %v6944 = vrot.slane %v6893, 3
  %v6945 = vrot.slane %v6895, 3
  %v6946 = vrot.slane %v6934, 3
  %v6947 = vrot.slane %v6936, 3
  %v6948 = vrot.slane %v6893, 4
  %v6949 = vrot.slane %v6895, 4
  %v6950 = vrot.slane %v6934, 4
  %v6951 = vrot.slane %v6936, 4
  %v6952 = vrot.slane %v6893, 5
  %v6953 = vrot.slane %v6895, 5
  %v6954 = vrot.slane %v6934, 5
  %v6955 = vrot.slane %v6936, 5
  %v6956 = vrot.slane %v6893, 6
  %v6957 = vrot.slane %v6895, 6
  %v6958 = vrot.slane %v6934, 6
  %v6959 = vrot.slane %v6936, 6
  %v6960 = vrot.slane %v6893, 7
  %v6961 = vrot.slane %v6895, 7
  %v6962 = vrot.slane %v6934, 7
  %v6963 = vrot.slane %v6936, 7
  %v6964 = vrot.slane %v6893, 1
  %v6965 = vrot.slane %v6895, 1
  %v6966 = vrot.slane %v6934, 1
  %v6967 = vrot.slane %v6936, 1
  %v6968 = vrot.slane %v6893, 2
  %v6969 = vrot.slane %v6895, 2
  %v6970 = vrot.slane %v6934, 2
  %v6971 = vrot.slane %v6936, 2
  %v7004 = vadd.f32 %v6794, %v6944
  %v7005 = vadd.f32 %v6795, %v6945
  %v7006 = vadd.f32 %v6796, %v6946
  %v7007 = vadd.f32 %v6797, %v6947
  %v7008 = vadd.f32 %v6798, %v6948
  %v7009 = vadd.f32 %v6799, %v6949
  %v7010 = vadd.f32 %v6800, %v6950
  %v7011 = vadd.f32 %v6801, %v6951
  %v7012 = vadd.f32 %v6802, %v6952
  %v7013 = vadd.f32 %v6803, %v6953
  %v7014 = vadd.f32 %v6804, %v6954
  %v7015 = vadd.f32 %v6805, %v6955
  %v7016 = vadd.f32 %v6806, %v6956
  %v7017 = vadd.f32 %v6807, %v6957
  %v7018 = vadd.f32 %v6808, %v6958
  %v7019 = vadd.f32 %v6809, %v6959
  %v7020 = vadd.f32 %v6810, %v6960
  %v7021 = vadd.f32 %v6811, %v6961
  %v7022 = vadd.f32 %v6812, %v6962
  %v7023 = vadd.f32 %v6813, %v6963
  %v7024 = vadd.f32 %v6814, %v6893
  %v7025 = vadd.f32 %v6815, %v6895
  %v7026 = vadd.f32 %v6816, %v6934
  %v7027 = vadd.f32 %v6817, %v6936
  %v7028 = vadd.f32 %v6818, %v6964
  %v7029 = vadd.f32 %v6819, %v6965
  %v7030 = vadd.f32 %v6820, %v6966
  %v7031 = vadd.f32 %v6821, %v6967
  %v7032 = vadd.f32 %v6822, %v6968
  %v7033 = vadd.f32 %v6823, %v6969
  %v7034 = vadd.f32 %v6824, %v6970
  %v7035 = vadd.f32 %v6825, %v6971
  %v7036 = vxor.u32 %v7004, 2147483648
  %v7037 = vxor.u32 %v7005, 2147483648
  %v7038 = vxor.u32 %v7008, 2147483648
  %v7039 = vxor.u32 %v7009, 2147483648
  %v7040 = vxor.u32 %v7012, 2147483648
  %v7041 = vxor.u32 %v7013, 2147483648
  %v7042 = vxor.u32 %v7016, 2147483648
  %v7043 = vxor.u32 %v7017, 2147483648
  %v7044 = vxor.u32 %v7020, 2147483648
  %v7045 = vxor.u32 %v7021, 2147483648
  %v7046 = vxor.u32 %v7024, 2147483648
  %v7047 = vxor.u32 %v7025, 2147483648
  %v7048 = vxor.u32 %v7028, 2147483648
  %v7049 = vxor.u32 %v7029, 2147483648
  %v7050 = vxor.u32 %v7032, 2147483648
  %v7051 = vxor.u32 %v7033, 2147483648
  %v7052 = vmul.f32 %v7036, 1.442695
  %v7053 = vpow.pop %v7052
  %v7054 = vmul.f32 %v7037, 1.442695
  %v7055 = vpow.pop %v7054
  %v7056 = vmul.f32 %v7038, 1.442695
  %v7057 = vpow.pop %v7056
  %v7058 = vmul.f32 %v7039, 1.442695
  %v7059 = vpow.pop %v7058
  %v7060 = vmul.f32 %v7040, 1.442695
  %v7061 = vpow.pop %v7060
  %v7062 = vmul.f32 %v7041, 1.442695
  %v7063 = vpow.pop %v7062
  %v7064 = vmul.f32 %v7042, 1.442695
  %v7065 = vpow.pop %v7064
  %v7066 = vmul.f32 %v7043, 1.442695
  %v7067 = vpow.pop %v7066
  %v7068 = vmul.f32 %v7044, 1.442695
  %v7069 = vpow.pop %v7068
  %v7070 = vmul.f32 %v7045, 1.442695
  %v7071 = vpow.pop %v7070
  %v7072 = vmul.f32 %v7046, 1.442695
  %v7073 = vpow.pop %v7072
  %v7074 = vmul.f32 %v7047, 1.442695
  %v7075 = vpow.pop %v7074
  %v7076 = vmul.f32 %v7048, 1.442695
  %v7077 = vpow.pop %v7076
  %v7078 = vmul.f32 %v7049, 1.442695
  %v7079 = vpow.pop %v7078
  %v7080 = vmul.f32 %v7050, 1.442695
  %v7081 = vpow.pop %v7080
  %v7082 = vmul.f32 %v7051, 1.442695
  %v7083 = vpow.pop %v7082
  %v7084 = vadd.f32 %v7053, 1.0
  %v7085 = vadd.f32 %v7055, 1.0
  %v7086 = vadd.f32 %v7057, 1.0
  %v7087 = vadd.f32 %v7059, 1.0
  %v7088 = vadd.f32 %v7061, 1.0
  %v7089 = vadd.f32 %v7063, 1.0
  %v7090 = vadd.f32 %v7065, 1.0
  %v7091 = vadd.f32 %v7067, 1.0
  %v7092 = vadd.f32 %v7069, 1.0
  %v7093 = vadd.f32 %v7071, 1.0
  %v7094 = vadd.f32 %v7073, 1.0
  %v7095 = vadd.f32 %v7075, 1.0
  %v7096 = vadd.f32 %v7077, 1.0
  %v7097 = vadd.f32 %v7079, 1.0
  %v7098 = vadd.f32 %v7081, 1.0
  %v7099 = vadd.f32 %v7083, 1.0
  %v7100 = vrcp.pop %v7084
  %v7101 = vmul.f32 1.0, %v7100
  %v7102 = vrcp.pop %v7085
  %v7103 = vmul.f32 1.0, %v7102
  %v7104 = vrcp.pop %v7086
  %v7105 = vmul.f32 1.0, %v7104
  %v7106 = vrcp.pop %v7087
  %v7107 = vmul.f32 1.0, %v7106
  %v7108 = vrcp.pop %v7088
  %v7109 = vmul.f32 1.0, %v7108
  %v7110 = vrcp.pop %v7089
  %v7111 = vmul.f32 1.0, %v7110
  %v7112 = vrcp.pop %v7090
  %v7113 = vmul.f32 1.0, %v7112
  %v7114 = vrcp.pop %v7091
  %v7115 = vmul.f32 1.0, %v7114
  %v7116 = vrcp.pop %v7092
  %v7117 = vmul.f32 1.0, %v7116
  %v7118 = vrcp.pop %v7093
  %v7119 = vmul.f32 1.0, %v7118
  %v7120 = vrcp.pop %v7094
  %v7121 = vmul.f32 1.0, %v7120
  %v7122 = vrcp.pop %v7095
  %v7123 = vmul.f32 1.0, %v7122
  %v7124 = vrcp.pop %v7096
  %v7125 = vmul.f32 1.0, %v7124
  %v7126 = vrcp.pop %v7097
  %v7127 = vmul.f32 1.0, %v7126
  %v7128 = vrcp.pop %v7098
  %v7129 = vmul.f32 1.0, %v7128
  %v7130 = vrcp.pop %v7099
  %v7131 = vmul.f32 1.0, %v7130
  %v7132 = vtanh.pop %v7006
  %v7133 = vtanh.pop %v7010
  %v7134 = vtanh.pop %v7014
  %v7135 = vtanh.pop %v7018
  %v7136 = vtanh.pop %v7022
  %v7137 = vtanh.pop %v7026
  %v7138 = vtanh.pop %v7030
  %v7139 = vtanh.pop %v7034
  %v7140 = vxor.u32 %v7007, 2147483648
  %v7141 = vxor.u32 %v7011, 2147483648
  %v7142 = vxor.u32 %v7015, 2147483648
  %v7143 = vxor.u32 %v7019, 2147483648
  %v7144 = vxor.u32 %v7023, 2147483648
  %v7145 = vxor.u32 %v7027, 2147483648
  %v7146 = vxor.u32 %v7031, 2147483648
  %v7147 = vxor.u32 %v7035, 2147483648
  %v7148 = vmul.f32 %v7140, 1.442695
  %v7149 = vpow.pop %v7148
  %v7150 = vmul.f32 %v7141, 1.442695
  %v7151 = vpow.pop %v7150
  %v7152 = vmul.f32 %v7142, 1.442695
  %v7153 = vpow.pop %v7152
  %v7154 = vmul.f32 %v7143, 1.442695
  %v7155 = vpow.pop %v7154
  %v7156 = vmul.f32 %v7144, 1.442695
  %v7157 = vpow.pop %v7156
  %v7158 = vmul.f32 %v7145, 1.442695
  %v7159 = vpow.pop %v7158
  %v7160 = vmul.f32 %v7146, 1.442695
  %v7161 = vpow.pop %v7160
  %v7162 = vmul.f32 %v7147, 1.442695
  %v7163 = vpow.pop %v7162
  %v7164 = vadd.f32 %v7149, 1.0
  %v7165 = vadd.f32 %v7151, 1.0
  %v7166 = vadd.f32 %v7153, 1.0
  %v7167 = vadd.f32 %v7155, 1.0
  %v7168 = vadd.f32 %v7157, 1.0
  %v7169 = vadd.f32 %v7159, 1.0
  %v7170 = vadd.f32 %v7161, 1.0
  %v7171 = vadd.f32 %v7163, 1.0
  %v7172 = vrcp.pop %v7164
  %v7173 = vmul.f32 1.0, %v7172
  %v7174 = vrcp.pop %v7165
  %v7175 = vmul.f32 1.0, %v7174
  %v7176 = vrcp.pop %v7166
  %v7177 = vmul.f32 1.0, %v7176
  %v7178 = vrcp.pop %v7167
  %v7179 = vmul.f32 1.0, %v7178
  %v7180 = vrcp.pop %v7168
  %v7181 = vmul.f32 1.0, %v7180
  %v7182 = vrcp.pop %v7169
  %v7183 = vmul.f32 1.0, %v7182
  %v7184 = vrcp.pop %v7170
  %v7185 = vmul.f32 1.0, %v7184
  %v7186 = vrcp.pop %v7171
  %v7187 = vmul.f32 1.0, %v7186
  %v7196 = vrot.slane %v6722, 7
  %v7197 = vrot.slane %v6723, 7
  %v7198 = vrot.slane %v6724, 7
  %v7199 = vrot.slane %v6725, 7
  %v7200 = vrot.slane %v6726, 7
  %v7201 = vrot.slane %v6727, 7
  %v7202 = vrot.slane %v6728, 7
  %v7203 = vrot.slane %v6729, 7
  %v7212 = vmul.f32 %v7103, %v7196
  %v7213 = vmul.f32 %v7107, %v7197
  %v7214 = vmul.f32 %v7111, %v7198
  %v7215 = vmul.f32 %v7115, %v7199
  %v7216 = vmul.f32 %v7119, %v7200
  %v7217 = vmul.f32 %v7123, %v7201
  %v7218 = vmul.f32 %v7127, %v7202
  %v7219 = vmul.f32 %v7131, %v7203
  %v7220 = vmul.f32 %v7101, %v7132
  %v7221 = vmul.f32 %v7105, %v7133
  %v7222 = vmul.f32 %v7109, %v7134
  %v7223 = vmul.f32 %v7113, %v7135
  %v7224 = vmul.f32 %v7117, %v7136
  %v7225 = vmul.f32 %v7121, %v7137
  %v7226 = vmul.f32 %v7125, %v7138
  %v7227 = vmul.f32 %v7129, %v7139
  %v7228 = vadd.f32 %v7212, %v7220
  %v7229 = vadd.f32 %v7213, %v7221
  %v7230 = vadd.f32 %v7214, %v7222
  %v7231 = vadd.f32 %v7215, %v7223
  %v7232 = vadd.f32 %v7216, %v7224
  %v7233 = vadd.f32 %v7217, %v7225
  %v7234 = vadd.f32 %v7218, %v7226
  %v7235 = vadd.f32 %v7219, %v7227
  %v7236 = vtanh.pop %v7228
  %v7237 = vtanh.pop %v7229
  %v7238 = vtanh.pop %v7230
  %v7239 = vtanh.pop %v7231
  %v7240 = vtanh.pop %v7232
  %v7241 = vtanh.pop %v7233
  %v7242 = vtanh.pop %v7234
  %v7243 = vtanh.pop %v7235
  %v7244 = vmul.f32 %v7173, %v7236
  %v7245 = vmul.f32 %v7175, %v7237
  %v7246 = vmul.f32 %v7177, %v7238
  %v7247 = vmul.f32 %v7179, %v7239
  %v7248 = vmul.f32 %v7181, %v7240
  %v7249 = vmul.f32 %v7183, %v7241
  %v7250 = vmul.f32 %v7185, %v7242
  %v7251 = vmul.f32 %v7187, %v7243
  %v7252 = vpack.c.bf16 %v7244, %v7244
  %v7253 = vpack.c.bf16 %v7245, %v7245
  %v7254 = vpack.c.bf16 %v7246, %v7246
  %v7255 = vpack.c.bf16 %v7247, %v7247
  %v7256 = vpack.c.bf16 %v7248, %v7248
  %v7257 = vpack.c.bf16 %v7249, %v7249
  %v7258 = vpack.c.bf16 %v7250, %v7250
  %v7259 = vpack.c.bf16 %v7251, %v7251
  %v7260 = vld [vmem:[%s2 + $0x4] sm:$0x4]
  %v7261 = vsel %vm3206, %v7252, %v7260
  %7262 = vst [vmem:[%s2 + $0x4] sm:$0x4] %v7261
  %v7263 = vld [vmem:[%s2 + $0xc] sm:$0x4]
  %v7264 = vsel %vm3206, %v7253, %v7263
  %7265 = vst [vmem:[%s2 + $0xc] sm:$0x4] %v7264
  %v7266 = vld [vmem:[%s2 + $0x14] sm:$0x4]
  %v7267 = vsel %vm3206, %v7254, %v7266
  %7268 = vst [vmem:[%s2 + $0x14] sm:$0x4] %v7267
  %v7269 = vld [vmem:[%s2 + $0x1c] sm:$0x4]
  %v7270 = vsel %vm3206, %v7255, %v7269
  %7271 = vst [vmem:[%s2 + $0x1c] sm:$0x4] %v7270
  %v7272 = vld [vmem:[%s2 + $0x24] sm:$0x4]
  %v7273 = vsel %vm3206, %v7256, %v7272
  %7274 = vst [vmem:[%s2 + $0x24] sm:$0x4] %v7273
  %v7275 = vld [vmem:[%s2 + $0x2c] sm:$0x4]
  %v7276 = vsel %vm3206, %v7257, %v7275
  %7277 = vst [vmem:[%s2 + $0x2c] sm:$0x4] %v7276
  %v7278 = vld [vmem:[%s2 + $0x34] sm:$0x4]
  %v7279 = vsel %vm3206, %v7258, %v7278
  %7280 = vst [vmem:[%s2 + $0x34] sm:$0x4] %v7279
  %v7281 = vld [vmem:[%s2 + $0x3c] sm:$0x4]
  %v7282 = vsel %vm3206, %v7259, %v7281
  %7283 = vst [vmem:[%s2 + $0x3c] sm:$0x4] %v7282
  %v7284 = vld [vmem:[%s0 + $0x10] sm:$0x88]
  %v7285 = vld [vmem:[%s0 + $0x18] sm:$0x88]
  %v7286 = vld [vmem:[%s0 + $0x30] sm:$0x88]
  %v7287 = vld [vmem:[%s0 + $0x38] sm:$0x88]
  %v7288 = vld [vmem:[%s0 + $0x50] sm:$0x88]
  %v7289 = vld [vmem:[%s0 + $0x58] sm:$0x88]
  %v7290 = vld [vmem:[%s0 + $0x70] sm:$0x88]
  %v7291 = vld [vmem:[%s0 + $0x78] sm:$0x88]
  %v7292 = vld [vmem:[%s0 + $0x90] sm:$0x88]
  %v7293 = vld [vmem:[%s0 + $0x98] sm:$0x88]
  %v7294 = vld [vmem:[%s0 + $0xb0] sm:$0x88]
  %v7295 = vld [vmem:[%s0 + $0xb8] sm:$0x88]
  %v7296 = vld [vmem:[%s0 + $0xd0] sm:$0x88]
  %v7297 = vld [vmem:[%s0 + $0xd8] sm:$0x88]
  %v7298 = vld [vmem:[%s0 + $0xf0] sm:$0x88]
  %v7299 = vld [vmem:[%s0 + $0xf8] sm:$0x88]
  %v7300 = vunpack.c.l.bf16 %v7284
  %v7301 = vunpack.c.h.bf16 %v7284
  %v7302 = vunpack.c.l.bf16 %v7285
  %v7303 = vunpack.c.h.bf16 %v7285
  %v7304 = vunpack.c.l.bf16 %v7286
  %v7305 = vunpack.c.h.bf16 %v7286
  %v7306 = vunpack.c.l.bf16 %v7287
  %v7307 = vunpack.c.h.bf16 %v7287
  %v7308 = vunpack.c.l.bf16 %v7288
  %v7309 = vunpack.c.h.bf16 %v7288
  %v7310 = vunpack.c.l.bf16 %v7289
  %v7311 = vunpack.c.h.bf16 %v7289
  %v7312 = vunpack.c.l.bf16 %v7290
  %v7313 = vunpack.c.h.bf16 %v7290
  %v7314 = vunpack.c.l.bf16 %v7291
  %v7315 = vunpack.c.h.bf16 %v7291
  %v7316 = vunpack.c.l.bf16 %v7292
  %v7317 = vunpack.c.h.bf16 %v7292
  %v7318 = vunpack.c.l.bf16 %v7293
  %v7319 = vunpack.c.h.bf16 %v7293
  %v7320 = vunpack.c.l.bf16 %v7294
  %v7321 = vunpack.c.h.bf16 %v7294
  %v7322 = vunpack.c.l.bf16 %v7295
  %v7323 = vunpack.c.h.bf16 %v7295
  %v7324 = vunpack.c.l.bf16 %v7296
  %v7325 = vunpack.c.h.bf16 %v7296
  %v7326 = vunpack.c.l.bf16 %v7297
  %v7327 = vunpack.c.h.bf16 %v7297
  %v7328 = vunpack.c.l.bf16 %v7298
  %v7329 = vunpack.c.h.bf16 %v7298
  %v7330 = vunpack.c.l.bf16 %v7299
  %v7331 = vunpack.c.h.bf16 %v7299
  %v7340 = vunpack.c.l.b16 %v7252
  %v7341 = vunpack.c.l.b16 %v7253
  %v7342 = vunpack.c.l.b16 %v7254
  %v7343 = vunpack.c.l.b16 %v7255
  %v7344 = vunpack.c.l.b16 %v7256
  %v7345 = vunpack.c.l.b16 %v7257
  %v7346 = vunpack.c.l.b16 %v7258
  %v7347 = vunpack.c.l.b16 %v7259
  %v7348 = vrot.slane %v7340, 5
  %v7349 = vrot.slane %v7341, 4
  %v7350 = vsel %vm747, %v7349, %v7348
  %v7351 = vrot.slane %v7342, 3
  %v7352 = vsel %vm750, %v7351, %v7350
  %v7353 = vrot.slane %v7343, 2
  %v7354 = vsel %vm753, %v7353, %v7352
  %v7355 = vrot.slane %v7344, 1
  %v7356 = vsel %vm756, %v7355, %v7354
  %v7357 = vsel %vm759, %v7345, %v7356
  %v7358 = vrot.slane %v7346, 7
  %v7359 = vsel %vm762, %v7358, %v7357
  %v7360 = vrot.slane %v7347, 6
  %v7361 = vsel %vm765, %v7360, %v7359
  %v7362 = vpack.c.b16 %v7361, %v7361
  %7364 = vmatprep.subr.bf16.mxu0 %v226
  %7365 = vmatpush1.bf16.msra.mxu0 %v225
  %7366 = vmatprep.subr.bf16.mxu0 %v222
  %7367 = vmatpush1.bf16.msra.mxu0 %v221
  %7368 = vmatprep.subr.bf16.mxu0 %v218
  %7369 = vmatpush1.bf16.msra.mxu0 %v217
  %7370 = vmatprep.subr.bf16.mxu0 %v214
  %7371 = vmatpush1.bf16.msra.mxu0 %v213
  %7372 = vmatprep.subr.bf16.mxu0 %v210
  %7373 = vmatpush1.bf16.msra.mxu0 %v209
  %7374 = vmatprep.subr.bf16.mxu0 %v206
  %7375 = vmatpush1.bf16.msra.mxu0 %v205
  %7376 = vmatprep.subr.bf16.mxu0 %v202
  %7377 = vmatpush1.bf16.msra.mxu0 %v201
  %7378 = vmatprep.subr.bf16.mxu0 %v198
  %7379 = vmatpush1.bf16.msra.mxu0 %v197
  %7380 = vmatprep.subr.bf16.mxu0 0
  %7381 = vmatpush2.bf16.msra.mxu0 0
  %7382 = vmatprep.subr.bf16.mxu0 0
  %7383 = vmatpush2.bf16.msra.mxu0 0
  %7384 = vmatprep.subr.bf16.mxu0 0
  %7385 = vmatpush2.bf16.msra.mxu0 0
  %7386 = vmatprep.subr.bf16.mxu0 0
  %7387 = vmatpush2.bf16.msra.mxu0 0
  %7388 = vmatprep.subr.bf16.mxu0 0
  %7389 = vmatpush2.bf16.msra.mxu0 0
  %7390 = vmatprep.subr.bf16.mxu0 0
  %7391 = vmatpush2.bf16.msra.mxu0 0
  %7392 = vmatprep.subr.bf16.mxu0 0
  %7393 = vmatpush2.bf16.msra.mxu0 0
  %7394 = vmatprep.subr.bf16.mxu0 0
  %7395 = vmatpush2.bf16.msra.mxu0 0
  %7396 = vmatprep.mubr.bf16.mxu0 0
  %7397 = vmatmul.mubr.bf16.gmra.mxu0 %v7362
  %v7398 = vpop.f32.mrf.mxu0
  %v7399 = vadd.f32 0.0, %v7398
  %v7400 = vpop.f32.mrf.mxu0
  %v7401 = vadd.f32 0.0, %v7400
  %v7402 = vpop.f32.mrf.mxu0
  %v7403 = vpop.f32.mrf.mxu0
  %7404 = vdwg.mxu0
  %7405 = vmatprep.subr.bf16.mxu0 %v228
  %7406 = vmatpush1.bf16.msra.mxu0 %v227
  %7407 = vmatprep.subr.bf16.mxu0 %v224
  %7408 = vmatpush1.bf16.msra.mxu0 %v223
  %7409 = vmatprep.subr.bf16.mxu0 %v220
  %7410 = vmatpush1.bf16.msra.mxu0 %v219
  %7411 = vmatprep.subr.bf16.mxu0 %v216
  %7412 = vmatpush1.bf16.msra.mxu0 %v215
  %7413 = vmatprep.subr.bf16.mxu0 %v212
  %7414 = vmatpush1.bf16.msra.mxu0 %v211
  %7415 = vmatprep.subr.bf16.mxu0 %v208
  %7416 = vmatpush1.bf16.msra.mxu0 %v207
  %7417 = vmatprep.subr.bf16.mxu0 %v204
  %7418 = vmatpush1.bf16.msra.mxu0 %v203
  %7419 = vmatprep.subr.bf16.mxu0 %v200
  %7420 = vmatpush1.bf16.msra.mxu0 %v199
  %7421 = vmatprep.subr.bf16.mxu0 0
  %7422 = vmatpush2.bf16.msra.mxu0 0
  %7423 = vmatprep.subr.bf16.mxu0 0
  %7424 = vmatpush2.bf16.msra.mxu0 0
  %7425 = vmatprep.subr.bf16.mxu0 0
  %7426 = vmatpush2.bf16.msra.mxu0 0
  %7427 = vmatprep.subr.bf16.mxu0 0
  %7428 = vmatpush2.bf16.msra.mxu0 0
  %7429 = vmatprep.subr.bf16.mxu0 0
  %7430 = vmatpush2.bf16.msra.mxu0 0
  %7431 = vmatprep.subr.bf16.mxu0 0
  %7432 = vmatpush2.bf16.msra.mxu0 0
  %7433 = vmatprep.subr.bf16.mxu0 0
  %7434 = vmatpush2.bf16.msra.mxu0 0
  %7435 = vmatprep.subr.bf16.mxu0 0
  %7436 = vmatpush2.bf16.msra.mxu0 0
  %7437 = vmatprep.mubr.bf16.mxu0 0
  %7438 = vmatmul.mubr.bf16.gmra.mxu0 %v7362
  %v7439 = vpop.f32.mrf.mxu0
  %v7440 = vadd.f32 0.0, %v7439
  %v7441 = vpop.f32.mrf.mxu0
  %v7442 = vadd.f32 0.0, %v7441
  %v7443 = vpop.f32.mrf.mxu0
  %v7444 = vpop.f32.mrf.mxu0
  %7445 = vdwg.mxu0
  %v7450 = vrot.slane %v7399, 2
  %v7451 = vrot.slane %v7401, 2
  %v7452 = vrot.slane %v7440, 2
  %v7453 = vrot.slane %v7442, 2
  %v7454 = vrot.slane %v7399, 3
  %v7455 = vrot.slane %v7401, 3
  %v7456 = vrot.slane %v7440, 3
  %v7457 = vrot.slane %v7442, 3
  %v7458 = vrot.slane %v7399, 4
  %v7459 = vrot.slane %v7401, 4
  %v7460 = vrot.slane %v7440, 4
  %v7461 = vrot.slane %v7442, 4
  %v7462 = vrot.slane %v7399, 5
  %v7463 = vrot.slane %v7401, 5
  %v7464 = vrot.slane %v7440, 5
  %v7465 = vrot.slane %v7442, 5
  %v7466 = vrot.slane %v7399, 6
  %v7467 = vrot.slane %v7401, 6
  %v7468 = vrot.slane %v7440, 6
  %v7469 = vrot.slane %v7442, 6
  %v7470 = vrot.slane %v7399, 7
  %v7471 = vrot.slane %v7401, 7
  %v7472 = vrot.slane %v7440, 7
  %v7473 = vrot.slane %v7442, 7
  %v7474 = vrot.slane %v7399, 1
  %v7475 = vrot.slane %v7401, 1
  %v7476 = vrot.slane %v7440, 1
  %v7477 = vrot.slane %v7442, 1
  %v7510 = vadd.f32 %v7300, %v7450
  %v7511 = vadd.f32 %v7301, %v7451
  %v7512 = vadd.f32 %v7302, %v7452
  %v7513 = vadd.f32 %v7303, %v7453
  %v7514 = vadd.f32 %v7304, %v7454
  %v7515 = vadd.f32 %v7305, %v7455
  %v7516 = vadd.f32 %v7306, %v7456
  %v7517 = vadd.f32 %v7307, %v7457
  %v7518 = vadd.f32 %v7308, %v7458
  %v7519 = vadd.f32 %v7309, %v7459
  %v7520 = vadd.f32 %v7310, %v7460
  %v7521 = vadd.f32 %v7311, %v7461
  %v7522 = vadd.f32 %v7312, %v7462
  %v7523 = vadd.f32 %v7313, %v7463
  %v7524 = vadd.f32 %v7314, %v7464
  %v7525 = vadd.f32 %v7315, %v7465
  %v7526 = vadd.f32 %v7316, %v7466
  %v7527 = vadd.f32 %v7317, %v7467
  %v7528 = vadd.f32 %v7318, %v7468
  %v7529 = vadd.f32 %v7319, %v7469
  %v7530 = vadd.f32 %v7320, %v7470
  %v7531 = vadd.f32 %v7321, %v7471
  %v7532 = vadd.f32 %v7322, %v7472
  %v7533 = vadd.f32 %v7323, %v7473
  %v7534 = vadd.f32 %v7324, %v7399
  %v7535 = vadd.f32 %v7325, %v7401
  %v7536 = vadd.f32 %v7326, %v7440
  %v7537 = vadd.f32 %v7327, %v7442
  %v7538 = vadd.f32 %v7328, %v7474
  %v7539 = vadd.f32 %v7329, %v7475
  %v7540 = vadd.f32 %v7330, %v7476
  %v7541 = vadd.f32 %v7331, %v7477
  %v7542 = vxor.u32 %v7510, 2147483648
  %v7543 = vxor.u32 %v7511, 2147483648
  %v7544 = vxor.u32 %v7514, 2147483648
  %v7545 = vxor.u32 %v7515, 2147483648
  %v7546 = vxor.u32 %v7518, 2147483648
  %v7547 = vxor.u32 %v7519, 2147483648
  %v7548 = vxor.u32 %v7522, 2147483648
  %v7549 = vxor.u32 %v7523, 2147483648
  %v7550 = vxor.u32 %v7526, 2147483648
  %v7551 = vxor.u32 %v7527, 2147483648
  %v7552 = vxor.u32 %v7530, 2147483648
  %v7553 = vxor.u32 %v7531, 2147483648
  %v7554 = vxor.u32 %v7534, 2147483648
  %v7555 = vxor.u32 %v7535, 2147483648
  %v7556 = vxor.u32 %v7538, 2147483648
  %v7557 = vxor.u32 %v7539, 2147483648
  %v7558 = vmul.f32 %v7542, 1.442695
  %v7559 = vpow.pop %v7558
  %v7560 = vmul.f32 %v7543, 1.442695
  %v7561 = vpow.pop %v7560
  %v7562 = vmul.f32 %v7544, 1.442695
  %v7563 = vpow.pop %v7562
  %v7564 = vmul.f32 %v7545, 1.442695
  %v7565 = vpow.pop %v7564
  %v7566 = vmul.f32 %v7546, 1.442695
  %v7567 = vpow.pop %v7566
  %v7568 = vmul.f32 %v7547, 1.442695
  %v7569 = vpow.pop %v7568
  %v7570 = vmul.f32 %v7548, 1.442695
  %v7571 = vpow.pop %v7570
  %v7572 = vmul.f32 %v7549, 1.442695
  %v7573 = vpow.pop %v7572
  %v7574 = vmul.f32 %v7550, 1.442695
  %v7575 = vpow.pop %v7574
  %v7576 = vmul.f32 %v7551, 1.442695
  %v7577 = vpow.pop %v7576
  %v7578 = vmul.f32 %v7552, 1.442695
  %v7579 = vpow.pop %v7578
  %v7580 = vmul.f32 %v7553, 1.442695
  %v7581 = vpow.pop %v7580
  %v7582 = vmul.f32 %v7554, 1.442695
  %v7583 = vpow.pop %v7582
  %v7584 = vmul.f32 %v7555, 1.442695
  %v7585 = vpow.pop %v7584
  %v7586 = vmul.f32 %v7556, 1.442695
  %v7587 = vpow.pop %v7586
  %v7588 = vmul.f32 %v7557, 1.442695
  %v7589 = vpow.pop %v7588
  %v7590 = vadd.f32 %v7559, 1.0
  %v7591 = vadd.f32 %v7561, 1.0
  %v7592 = vadd.f32 %v7563, 1.0
  %v7593 = vadd.f32 %v7565, 1.0
  %v7594 = vadd.f32 %v7567, 1.0
  %v7595 = vadd.f32 %v7569, 1.0
  %v7596 = vadd.f32 %v7571, 1.0
  %v7597 = vadd.f32 %v7573, 1.0
  %v7598 = vadd.f32 %v7575, 1.0
  %v7599 = vadd.f32 %v7577, 1.0
  %v7600 = vadd.f32 %v7579, 1.0
  %v7601 = vadd.f32 %v7581, 1.0
  %v7602 = vadd.f32 %v7583, 1.0
  %v7603 = vadd.f32 %v7585, 1.0
  %v7604 = vadd.f32 %v7587, 1.0
  %v7605 = vadd.f32 %v7589, 1.0
  %v7606 = vrcp.pop %v7590
  %v7607 = vmul.f32 1.0, %v7606
  %v7608 = vrcp.pop %v7591
  %v7609 = vmul.f32 1.0, %v7608
  %v7610 = vrcp.pop %v7592
  %v7611 = vmul.f32 1.0, %v7610
  %v7612 = vrcp.pop %v7593
  %v7613 = vmul.f32 1.0, %v7612
  %v7614 = vrcp.pop %v7594
  %v7615 = vmul.f32 1.0, %v7614
  %v7616 = vrcp.pop %v7595
  %v7617 = vmul.f32 1.0, %v7616
  %v7618 = vrcp.pop %v7596
  %v7619 = vmul.f32 1.0, %v7618
  %v7620 = vrcp.pop %v7597
  %v7621 = vmul.f32 1.0, %v7620
  %v7622 = vrcp.pop %v7598
  %v7623 = vmul.f32 1.0, %v7622
  %v7624 = vrcp.pop %v7599
  %v7625 = vmul.f32 1.0, %v7624
  %v7626 = vrcp.pop %v7600
  %v7627 = vmul.f32 1.0, %v7626
  %v7628 = vrcp.pop %v7601
  %v7629 = vmul.f32 1.0, %v7628
  %v7630 = vrcp.pop %v7602
  %v7631 = vmul.f32 1.0, %v7630
  %v7632 = vrcp.pop %v7603
  %v7633 = vmul.f32 1.0, %v7632
  %v7634 = vrcp.pop %v7604
  %v7635 = vmul.f32 1.0, %v7634
  %v7636 = vrcp.pop %v7605
  %v7637 = vmul.f32 1.0, %v7636
  %v7638 = vtanh.pop %v7512
  %v7639 = vtanh.pop %v7516
  %v7640 = vtanh.pop %v7520
  %v7641 = vtanh.pop %v7524
  %v7642 = vtanh.pop %v7528
  %v7643 = vtanh.pop %v7532
  %v7644 = vtanh.pop %v7536
  %v7645 = vtanh.pop %v7540
  %v7646 = vxor.u32 %v7513, 2147483648
  %v7647 = vxor.u32 %v7517, 2147483648
  %v7648 = vxor.u32 %v7521, 2147483648
  %v7649 = vxor.u32 %v7525, 2147483648
  %v7650 = vxor.u32 %v7529, 2147483648
  %v7651 = vxor.u32 %v7533, 2147483648
  %v7652 = vxor.u32 %v7537, 2147483648
  %v7653 = vxor.u32 %v7541, 2147483648
  %v7654 = vmul.f32 %v7646, 1.442695
  %v7655 = vpow.pop %v7654
  %v7656 = vmul.f32 %v7647, 1.442695
  %v7657 = vpow.pop %v7656
  %v7658 = vmul.f32 %v7648, 1.442695
  %v7659 = vpow.pop %v7658
  %v7660 = vmul.f32 %v7649, 1.442695
  %v7661 = vpow.pop %v7660
  %v7662 = vmul.f32 %v7650, 1.442695
  %v7663 = vpow.pop %v7662
  %v7664 = vmul.f32 %v7651, 1.442695
  %v7665 = vpow.pop %v7664
  %v7666 = vmul.f32 %v7652, 1.442695
  %v7667 = vpow.pop %v7666
  %v7668 = vmul.f32 %v7653, 1.442695
  %v7669 = vpow.pop %v7668
  %v7670 = vadd.f32 %v7655, 1.0
  %v7671 = vadd.f32 %v7657, 1.0
  %v7672 = vadd.f32 %v7659, 1.0
  %v7673 = vadd.f32 %v7661, 1.0
  %v7674 = vadd.f32 %v7663, 1.0
  %v7675 = vadd.f32 %v7665, 1.0
  %v7676 = vadd.f32 %v7667, 1.0
  %v7677 = vadd.f32 %v7669, 1.0
  %v7678 = vrcp.pop %v7670
  %v7679 = vmul.f32 1.0, %v7678
  %v7680 = vrcp.pop %v7671
  %v7681 = vmul.f32 1.0, %v7680
  %v7682 = vrcp.pop %v7672
  %v7683 = vmul.f32 1.0, %v7682
  %v7684 = vrcp.pop %v7673
  %v7685 = vmul.f32 1.0, %v7684
  %v7686 = vrcp.pop %v7674
  %v7687 = vmul.f32 1.0, %v7686
  %v7688 = vrcp.pop %v7675
  %v7689 = vmul.f32 1.0, %v7688
  %v7690 = vrcp.pop %v7676
  %v7691 = vmul.f32 1.0, %v7690
  %v7692 = vrcp.pop %v7677
  %v7693 = vmul.f32 1.0, %v7692
  %v7702 = vrot.slane %v7228, 7
  %v7703 = vrot.slane %v7229, 7
  %v7704 = vrot.slane %v7230, 7
  %v7705 = vrot.slane %v7231, 7
  %v7706 = vrot.slane %v7232, 7
  %v7707 = vrot.slane %v7233, 7
  %v7708 = vrot.slane %v7234, 7
  %v7709 = vrot.slane %v7235, 7
  %v7718 = vmul.f32 %v7609, %v7702
  %v7719 = vmul.f32 %v7613, %v7703
  %v7720 = vmul.f32 %v7617, %v7704
  %v7721 = vmul.f32 %v7621, %v7705
  %v7722 = vmul.f32 %v7625, %v7706
  %v7723 = vmul.f32 %v7629, %v7707
  %v7724 = vmul.f32 %v7633, %v7708
  %v7725 = vmul.f32 %v7637, %v7709
  %v7726 = vmul.f32 %v7607, %v7638
  %v7727 = vmul.f32 %v7611, %v7639
  %v7728 = vmul.f32 %v7615, %v7640
  %v7729 = vmul.f32 %v7619, %v7641
  %v7730 = vmul.f32 %v7623, %v7642
  %v7731 = vmul.f32 %v7627, %v7643
  %v7732 = vmul.f32 %v7631, %v7644
  %v7733 = vmul.f32 %v7635, %v7645
  %v7734 = vadd.f32 %v7718, %v7726
  %v7735 = vadd.f32 %v7719, %v7727
  %v7736 = vadd.f32 %v7720, %v7728
  %v7737 = vadd.f32 %v7721, %v7729
  %v7738 = vadd.f32 %v7722, %v7730
  %v7739 = vadd.f32 %v7723, %v7731
  %v7740 = vadd.f32 %v7724, %v7732
  %v7741 = vadd.f32 %v7725, %v7733
  %v7742 = vtanh.pop %v7734
  %v7743 = vtanh.pop %v7735
  %v7744 = vtanh.pop %v7736
  %v7745 = vtanh.pop %v7737
  %v7746 = vtanh.pop %v7738
  %v7747 = vtanh.pop %v7739
  %v7748 = vtanh.pop %v7740
  %v7749 = vtanh.pop %v7741
  %v7750 = vmul.f32 %v7679, %v7742
  %v7751 = vmul.f32 %v7681, %v7743
  %v7752 = vmul.f32 %v7683, %v7744
  %v7753 = vmul.f32 %v7685, %v7745
  %v7754 = vmul.f32 %v7687, %v7746
  %v7755 = vmul.f32 %v7689, %v7747
  %v7756 = vmul.f32 %v7691, %v7748
  %v7757 = vmul.f32 %v7693, %v7749
  %v7758 = vpack.c.bf16 %v7750, %v7750
  %v7759 = vpack.c.bf16 %v7751, %v7751
  %v7760 = vpack.c.bf16 %v7752, %v7752
  %v7761 = vpack.c.bf16 %v7753, %v7753
  %v7762 = vpack.c.bf16 %v7754, %v7754
  %v7763 = vpack.c.bf16 %v7755, %v7755
  %v7764 = vpack.c.bf16 %v7756, %v7756
  %v7765 = vpack.c.bf16 %v7757, %v7757
  %v7766 = vld [vmem:[%s2 + $0x4] sm:$0x8]
  %v7767 = vsel %vm3715, %v7758, %v7766
  %7768 = vst [vmem:[%s2 + $0x4] sm:$0x8] %v7767
  %v7769 = vld [vmem:[%s2 + $0xc] sm:$0x8]
  %v7770 = vsel %vm3715, %v7759, %v7769
  %7771 = vst [vmem:[%s2 + $0xc] sm:$0x8] %v7770
  %v7772 = vld [vmem:[%s2 + $0x14] sm:$0x8]
  %v7773 = vsel %vm3715, %v7760, %v7772
  %7774 = vst [vmem:[%s2 + $0x14] sm:$0x8] %v7773
  %v7775 = vld [vmem:[%s2 + $0x1c] sm:$0x8]
  %v7776 = vsel %vm3715, %v7761, %v7775
  %7777 = vst [vmem:[%s2 + $0x1c] sm:$0x8] %v7776
  %v7778 = vld [vmem:[%s2 + $0x24] sm:$0x8]
  %v7779 = vsel %vm3715, %v7762, %v7778
  %7780 = vst [vmem:[%s2 + $0x24] sm:$0x8] %v7779
  %v7781 = vld [vmem:[%s2 + $0x2c] sm:$0x8]
  %v7782 = vsel %vm3715, %v7763, %v7781
  %7783 = vst [vmem:[%s2 + $0x2c] sm:$0x8] %v7782
  %v7784 = vld [vmem:[%s2 + $0x34] sm:$0x8]
  %v7785 = vsel %vm3715, %v7764, %v7784
  %7786 = vst [vmem:[%s2 + $0x34] sm:$0x8] %v7785
  %v7787 = vld [vmem:[%s2 + $0x3c] sm:$0x8]
  %v7788 = vsel %vm3715, %v7765, %v7787
  %7789 = vst [vmem:[%s2 + $0x3c] sm:$0x8] %v7788
  %v7790 = vld [vmem:[%s0 + $0x10] sm:$0x88]
  %v7791 = vld [vmem:[%s0 + $0x18] sm:$0x88]
  %v7792 = vld [vmem:[%s0 + $0x30] sm:$0x88]
  %v7793 = vld [vmem:[%s0 + $0x38] sm:$0x88]
  %v7794 = vld [vmem:[%s0 + $0x50] sm:$0x88]
  %v7795 = vld [vmem:[%s0 + $0x58] sm:$0x88]
  %v7796 = vld [vmem:[%s0 + $0x70] sm:$0x88]
  %v7797 = vld [vmem:[%s0 + $0x78] sm:$0x88]
  %v7798 = vld [vmem:[%s0 + $0x90] sm:$0x88]
  %v7799 = vld [vmem:[%s0 + $0x98] sm:$0x88]
  %v7800 = vld [vmem:[%s0 + $0xb0] sm:$0x88]
  %v7801 = vld [vmem:[%s0 + $0xb8] sm:$0x88]
  %v7802 = vld [vmem:[%s0 + $0xd0] sm:$0x88]
  %v7803 = vld [vmem:[%s0 + $0xd8] sm:$0x88]
  %v7804 = vld [vmem:[%s0 + $0xf0] sm:$0x88]
  %v7805 = vld [vmem:[%s0 + $0xf8] sm:$0x88]
  %v7806 = vunpack.c.l.bf16 %v7790
  %v7807 = vunpack.c.h.bf16 %v7790
  %v7808 = vunpack.c.l.bf16 %v7791
  %v7809 = vunpack.c.h.bf16 %v7791
  %v7810 = vunpack.c.l.bf16 %v7792
  %v7811 = vunpack.c.h.bf16 %v7792
  %v7812 = vunpack.c.l.bf16 %v7793
  %v7813 = vunpack.c.h.bf16 %v7793
  %v7814 = vunpack.c.l.bf16 %v7794
  %v7815 = vunpack.c.h.bf16 %v7794
  %v7816 = vunpack.c.l.bf16 %v7795
  %v7817 = vunpack.c.h.bf16 %v7795
  %v7818 = vunpack.c.l.bf16 %v7796
  %v7819 = vunpack.c.h.bf16 %v7796
  %v7820 = vunpack.c.l.bf16 %v7797
  %v7821 = vunpack.c.h.bf16 %v7797
  %v7822 = vunpack.c.l.bf16 %v7798
  %v7823 = vunpack.c.h.bf16 %v7798
  %v7824 = vunpack.c.l.bf16 %v7799
  %v7825 = vunpack.c.h.bf16 %v7799
  %v7826 = vunpack.c.l.bf16 %v7800
  %v7827 = vunpack.c.h.bf16 %v7800
  %v7828 = vunpack.c.l.bf16 %v7801
  %v7829 = vunpack.c.h.bf16 %v7801
  %v7830 = vunpack.c.l.bf16 %v7802
  %v7831 = vunpack.c.h.bf16 %v7802
  %v7832 = vunpack.c.l.bf16 %v7803
  %v7833 = vunpack.c.h.bf16 %v7803
  %v7834 = vunpack.c.l.bf16 %v7804
  %v7835 = vunpack.c.h.bf16 %v7804
  %v7836 = vunpack.c.l.bf16 %v7805
  %v7837 = vunpack.c.h.bf16 %v7805
  %v7846 = vunpack.c.l.b16 %v7758
  %v7847 = vunpack.c.l.b16 %v7759
  %v7848 = vunpack.c.l.b16 %v7760
  %v7849 = vunpack.c.l.b16 %v7761
  %v7850 = vunpack.c.l.b16 %v7762
  %v7851 = vunpack.c.l.b16 %v7763
  %v7852 = vunpack.c.l.b16 %v7764
  %v7853 = vunpack.c.l.b16 %v7765
  %v7854 = vrot.slane %v7846, 6
  %v7855 = vrot.slane %v7847, 5
  %v7856 = vsel %vm747, %v7855, %v7854
  %v7857 = vrot.slane %v7848, 4
  %v7858 = vsel %vm750, %v7857, %v7856
  %v7859 = vrot.slane %v7849, 3
  %v7860 = vsel %vm753, %v7859, %v7858
  %v7861 = vrot.slane %v7850, 2
  %v7862 = vsel %vm756, %v7861, %v7860
  %v7863 = vrot.slane %v7851, 1
  %v7864 = vsel %vm759, %v7863, %v7862
  %v7865 = vsel %vm762, %v7852, %v7864
  %v7866 = vrot.slane %v7853, 7
  %v7867 = vsel %vm765, %v7866, %v7865
  %v7868 = vpack.c.b16 %v7867, %v7867
  %7870 = vmatprep.subr.bf16.mxu0 %v226
  %7871 = vmatpush1.bf16.msra.mxu0 %v225
  %7872 = vmatprep.subr.bf16.mxu0 %v222
  %7873 = vmatpush1.bf16.msra.mxu0 %v221
  %7874 = vmatprep.subr.bf16.mxu0 %v218
  %7875 = vmatpush1.bf16.msra.mxu0 %v217
  %7876 = vmatprep.subr.bf16.mxu0 %v214
  %7877 = vmatpush1.bf16.msra.mxu0 %v213
  %7878 = vmatprep.subr.bf16.mxu0 %v210
  %7879 = vmatpush1.bf16.msra.mxu0 %v209
  %7880 = vmatprep.subr.bf16.mxu0 %v206
  %7881 = vmatpush1.bf16.msra.mxu0 %v205
  %7882 = vmatprep.subr.bf16.mxu0 %v202
  %7883 = vmatpush1.bf16.msra.mxu0 %v201
  %7884 = vmatprep.subr.bf16.mxu0 %v198
  %7885 = vmatpush1.bf16.msra.mxu0 %v197
  %7886 = vmatprep.subr.bf16.mxu0 0
  %7887 = vmatpush2.bf16.msra.mxu0 0
  %7888 = vmatprep.subr.bf16.mxu0 0
  %7889 = vmatpush2.bf16.msra.mxu0 0
  %7890 = vmatprep.subr.bf16.mxu0 0
  %7891 = vmatpush2.bf16.msra.mxu0 0
  %7892 = vmatprep.subr.bf16.mxu0 0
  %7893 = vmatpush2.bf16.msra.mxu0 0
  %7894 = vmatprep.subr.bf16.mxu0 0
  %7895 = vmatpush2.bf16.msra.mxu0 0
  %7896 = vmatprep.subr.bf16.mxu0 0
  %7897 = vmatpush2.bf16.msra.mxu0 0
  %7898 = vmatprep.subr.bf16.mxu0 0
  %7899 = vmatpush2.bf16.msra.mxu0 0
  %7900 = vmatprep.subr.bf16.mxu0 0
  %7901 = vmatpush2.bf16.msra.mxu0 0
  %7902 = vmatprep.mubr.bf16.mxu0 0
  %7903 = vmatmul.mubr.bf16.gmra.mxu0 %v7868
  %v7904 = vpop.f32.mrf.mxu0
  %v7905 = vadd.f32 0.0, %v7904
  %v7906 = vpop.f32.mrf.mxu0
  %v7907 = vadd.f32 0.0, %v7906
  %v7908 = vpop.f32.mrf.mxu0
  %v7909 = vpop.f32.mrf.mxu0
  %7910 = vdwg.mxu0
  %7911 = vmatprep.subr.bf16.mxu0 %v228
  %7912 = vmatpush1.bf16.msra.mxu0 %v227
  %7913 = vmatprep.subr.bf16.mxu0 %v224
  %7914 = vmatpush1.bf16.msra.mxu0 %v223
  %7915 = vmatprep.subr.bf16.mxu0 %v220
  %7916 = vmatpush1.bf16.msra.mxu0 %v219
  %7917 = vmatprep.subr.bf16.mxu0 %v216
  %7918 = vmatpush1.bf16.msra.mxu0 %v215
  %7919 = vmatprep.subr.bf16.mxu0 %v212
  %7920 = vmatpush1.bf16.msra.mxu0 %v211
  %7921 = vmatprep.subr.bf16.mxu0 %v208
  %7922 = vmatpush1.bf16.msra.mxu0 %v207
  %7923 = vmatprep.subr.bf16.mxu0 %v204
  %7924 = vmatpush1.bf16.msra.mxu0 %v203
  %7925 = vmatprep.subr.bf16.mxu0 %v200
  %7926 = vmatpush1.bf16.msra.mxu0 %v199
  %7927 = vmatprep.subr.bf16.mxu0 0
  %7928 = vmatpush2.bf16.msra.mxu0 0
  %7929 = vmatprep.subr.bf16.mxu0 0
  %7930 = vmatpush2.bf16.msra.mxu0 0
  %7931 = vmatprep.subr.bf16.mxu0 0
  %7932 = vmatpush2.bf16.msra.mxu0 0
  %7933 = vmatprep.subr.bf16.mxu0 0
  %7934 = vmatpush2.bf16.msra.mxu0 0
  %7935 = vmatprep.subr.bf16.mxu0 0
  %7936 = vmatpush2.bf16.msra.mxu0 0
  %7937 = vmatprep.subr.bf16.mxu0 0
  %7938 = vmatpush2.bf16.msra.mxu0 0
  %7939 = vmatprep.subr.bf16.mxu0 0
  %7940 = vmatpush2.bf16.msra.mxu0 0
  %7941 = vmatprep.subr.bf16.mxu0 0
  %7942 = vmatpush2.bf16.msra.mxu0 0
  %7943 = vmatprep.mubr.bf16.mxu0 0
  %7944 = vmatmul.mubr.bf16.gmra.mxu0 %v7868
  %v7945 = vpop.f32.mrf.mxu0
  %v7946 = vadd.f32 0.0, %v7945
  %v7947 = vpop.f32.mrf.mxu0
  %v7948 = vadd.f32 0.0, %v7947
  %v7949 = vpop.f32.mrf.mxu0
  %v7950 = vpop.f32.mrf.mxu0
  %7951 = vdwg.mxu0
  %v7956 = vrot.slane %v7905, 1
  %v7957 = vrot.slane %v7907, 1
  %v7958 = vrot.slane %v7946, 1
  %v7959 = vrot.slane %v7948, 1
  %v7960 = vrot.slane %v7905, 2
  %v7961 = vrot.slane %v7907, 2
  %v7962 = vrot.slane %v7946, 2
  %v7963 = vrot.slane %v7948, 2
  %v7964 = vrot.slane %v7905, 3
  %v7965 = vrot.slane %v7907, 3
  %v7966 = vrot.slane %v7946, 3
  %v7967 = vrot.slane %v7948, 3
  %v7968 = vrot.slane %v7905, 4
  %v7969 = vrot.slane %v7907, 4
  %v7970 = vrot.slane %v7946, 4
  %v7971 = vrot.slane %v7948, 4
  %v7972 = vrot.slane %v7905, 5
  %v7973 = vrot.slane %v7907, 5
  %v7974 = vrot.slane %v7946, 5
  %v7975 = vrot.slane %v7948, 5
  %v7976 = vrot.slane %v7905, 6
  %v7977 = vrot.slane %v7907, 6
  %v7978 = vrot.slane %v7946, 6
  %v7979 = vrot.slane %v7948, 6
  %v7980 = vrot.slane %v7905, 7
  %v7981 = vrot.slane %v7907, 7
  %v7982 = vrot.slane %v7946, 7
  %v7983 = vrot.slane %v7948, 7
  %v8016 = vadd.f32 %v7806, %v7956
  %v8017 = vadd.f32 %v7807, %v7957
  %v8018 = vadd.f32 %v7808, %v7958
  %v8019 = vadd.f32 %v7809, %v7959
  %v8020 = vadd.f32 %v7810, %v7960
  %v8021 = vadd.f32 %v7811, %v7961
  %v8022 = vadd.f32 %v7812, %v7962
  %v8023 = vadd.f32 %v7813, %v7963
  %v8024 = vadd.f32 %v7814, %v7964
  %v8025 = vadd.f32 %v7815, %v7965
  %v8026 = vadd.f32 %v7816, %v7966
  %v8027 = vadd.f32 %v7817, %v7967
  %v8028 = vadd.f32 %v7818, %v7968
  %v8029 = vadd.f32 %v7819, %v7969
  %v8030 = vadd.f32 %v7820, %v7970
  %v8031 = vadd.f32 %v7821, %v7971
  %v8032 = vadd.f32 %v7822, %v7972
  %v8033 = vadd.f32 %v7823, %v7973
  %v8034 = vadd.f32 %v7824, %v7974
  %v8035 = vadd.f32 %v7825, %v7975
  %v8036 = vadd.f32 %v7826, %v7976
  %v8037 = vadd.f32 %v7827, %v7977
  %v8038 = vadd.f32 %v7828, %v7978
  %v8039 = vadd.f32 %v7829, %v7979
  %v8040 = vadd.f32 %v7830, %v7980
  %v8041 = vadd.f32 %v7831, %v7981
  %v8042 = vadd.f32 %v7832, %v7982
  %v8043 = vadd.f32 %v7833, %v7983
  %v8044 = vadd.f32 %v7834, %v7905
  %v8045 = vadd.f32 %v7835, %v7907
  %v8046 = vadd.f32 %v7836, %v7946
  %v8047 = vadd.f32 %v7837, %v7948
  %v8048 = vxor.u32 %v8016, 2147483648
  %v8049 = vxor.u32 %v8017, 2147483648
  %v8050 = vxor.u32 %v8020, 2147483648
  %v8051 = vxor.u32 %v8021, 2147483648
  %v8052 = vxor.u32 %v8024, 2147483648
  %v8053 = vxor.u32 %v8025, 2147483648
  %v8054 = vxor.u32 %v8028, 2147483648
  %v8055 = vxor.u32 %v8029, 2147483648
  %v8056 = vxor.u32 %v8032, 2147483648
  %v8057 = vxor.u32 %v8033, 2147483648
  %v8058 = vxor.u32 %v8036, 2147483648
  %v8059 = vxor.u32 %v8037, 2147483648
  %v8060 = vxor.u32 %v8040, 2147483648
  %v8061 = vxor.u32 %v8041, 2147483648
  %v8062 = vxor.u32 %v8044, 2147483648
  %v8063 = vxor.u32 %v8045, 2147483648
  %v8064 = vmul.f32 %v8048, 1.442695
  %v8065 = vpow.pop %v8064
  %v8066 = vmul.f32 %v8049, 1.442695
  %v8067 = vpow.pop %v8066
  %v8068 = vmul.f32 %v8050, 1.442695
  %v8069 = vpow.pop %v8068
  %v8070 = vmul.f32 %v8051, 1.442695
  %v8071 = vpow.pop %v8070
  %v8072 = vmul.f32 %v8052, 1.442695
  %v8073 = vpow.pop %v8072
  %v8074 = vmul.f32 %v8053, 1.442695
  %v8075 = vpow.pop %v8074
  %v8076 = vmul.f32 %v8054, 1.442695
  %v8077 = vpow.pop %v8076
  %v8078 = vmul.f32 %v8055, 1.442695
  %v8079 = vpow.pop %v8078
  %v8080 = vmul.f32 %v8056, 1.442695
  %v8081 = vpow.pop %v8080
  %v8082 = vmul.f32 %v8057, 1.442695
  %v8083 = vpow.pop %v8082
  %v8084 = vmul.f32 %v8058, 1.442695
  %v8085 = vpow.pop %v8084
  %v8086 = vmul.f32 %v8059, 1.442695
  %v8087 = vpow.pop %v8086
  %v8088 = vmul.f32 %v8060, 1.442695
  %v8089 = vpow.pop %v8088
  %v8090 = vmul.f32 %v8061, 1.442695
  %v8091 = vpow.pop %v8090
  %v8092 = vmul.f32 %v8062, 1.442695
  %v8093 = vpow.pop %v8092
  %v8094 = vmul.f32 %v8063, 1.442695
  %v8095 = vpow.pop %v8094
  %v8096 = vadd.f32 %v8065, 1.0
  %v8097 = vadd.f32 %v8067, 1.0
  %v8098 = vadd.f32 %v8069, 1.0
  %v8099 = vadd.f32 %v8071, 1.0
  %v8100 = vadd.f32 %v8073, 1.0
  %v8101 = vadd.f32 %v8075, 1.0
  %v8102 = vadd.f32 %v8077, 1.0
  %v8103 = vadd.f32 %v8079, 1.0
  %v8104 = vadd.f32 %v8081, 1.0
  %v8105 = vadd.f32 %v8083, 1.0
  %v8106 = vadd.f32 %v8085, 1.0
  %v8107 = vadd.f32 %v8087, 1.0
  %v8108 = vadd.f32 %v8089, 1.0
  %v8109 = vadd.f32 %v8091, 1.0
  %v8110 = vadd.f32 %v8093, 1.0
  %v8111 = vadd.f32 %v8095, 1.0
  %v8112 = vrcp.pop %v8096
  %v8113 = vmul.f32 1.0, %v8112
  %v8114 = vrcp.pop %v8097
  %v8115 = vmul.f32 1.0, %v8114
  %v8116 = vrcp.pop %v8098
  %v8117 = vmul.f32 1.0, %v8116
  %v8118 = vrcp.pop %v8099
  %v8119 = vmul.f32 1.0, %v8118
  %v8120 = vrcp.pop %v8100
  %v8121 = vmul.f32 1.0, %v8120
  %v8122 = vrcp.pop %v8101
  %v8123 = vmul.f32 1.0, %v8122
  %v8124 = vrcp.pop %v8102
  %v8125 = vmul.f32 1.0, %v8124
  %v8126 = vrcp.pop %v8103
  %v8127 = vmul.f32 1.0, %v8126
  %v8128 = vrcp.pop %v8104
  %v8129 = vmul.f32 1.0, %v8128
  %v8130 = vrcp.pop %v8105
  %v8131 = vmul.f32 1.0, %v8130
  %v8132 = vrcp.pop %v8106
  %v8133 = vmul.f32 1.0, %v8132
  %v8134 = vrcp.pop %v8107
  %v8135 = vmul.f32 1.0, %v8134
  %v8136 = vrcp.pop %v8108
  %v8137 = vmul.f32 1.0, %v8136
  %v8138 = vrcp.pop %v8109
  %v8139 = vmul.f32 1.0, %v8138
  %v8140 = vrcp.pop %v8110
  %v8141 = vmul.f32 1.0, %v8140
  %v8142 = vrcp.pop %v8111
  %v8143 = vmul.f32 1.0, %v8142
  %v8144 = vtanh.pop %v8018
  %v8145 = vtanh.pop %v8022
  %v8146 = vtanh.pop %v8026
  %v8147 = vtanh.pop %v8030
  %v8148 = vtanh.pop %v8034
  %v8149 = vtanh.pop %v8038
  %v8150 = vtanh.pop %v8042
  %v8151 = vtanh.pop %v8046
  %v8152 = vxor.u32 %v8019, 2147483648
  %v8153 = vxor.u32 %v8023, 2147483648
  %v8154 = vxor.u32 %v8027, 2147483648
  %v8155 = vxor.u32 %v8031, 2147483648
  %v8156 = vxor.u32 %v8035, 2147483648
  %v8157 = vxor.u32 %v8039, 2147483648
  %v8158 = vxor.u32 %v8043, 2147483648
  %v8159 = vxor.u32 %v8047, 2147483648
  %v8160 = vmul.f32 %v8152, 1.442695
  %v8161 = vpow.pop %v8160
  %v8162 = vmul.f32 %v8153, 1.442695
  %v8163 = vpow.pop %v8162
  %v8164 = vmul.f32 %v8154, 1.442695
  %v8165 = vpow.pop %v8164
  %v8166 = vmul.f32 %v8155, 1.442695
  %v8167 = vpow.pop %v8166
  %v8168 = vmul.f32 %v8156, 1.442695
  %v8169 = vpow.pop %v8168
  %v8170 = vmul.f32 %v8157, 1.442695
  %v8171 = vpow.pop %v8170
  %v8172 = vmul.f32 %v8158, 1.442695
  %v8173 = vpow.pop %v8172
  %v8174 = vmul.f32 %v8159, 1.442695
  %v8175 = vpow.pop %v8174
  %v8176 = vadd.f32 %v8161, 1.0
  %v8177 = vadd.f32 %v8163, 1.0
  %v8178 = vadd.f32 %v8165, 1.0
  %v8179 = vadd.f32 %v8167, 1.0
  %v8180 = vadd.f32 %v8169, 1.0
  %v8181 = vadd.f32 %v8171, 1.0
  %v8182 = vadd.f32 %v8173, 1.0
  %v8183 = vadd.f32 %v8175, 1.0
  %v8184 = vrcp.pop %v8176
  %v8185 = vmul.f32 1.0, %v8184
  %v8186 = vrcp.pop %v8177
  %v8187 = vmul.f32 1.0, %v8186
  %v8188 = vrcp.pop %v8178
  %v8189 = vmul.f32 1.0, %v8188
  %v8190 = vrcp.pop %v8179
  %v8191 = vmul.f32 1.0, %v8190
  %v8192 = vrcp.pop %v8180
  %v8193 = vmul.f32 1.0, %v8192
  %v8194 = vrcp.pop %v8181
  %v8195 = vmul.f32 1.0, %v8194
  %v8196 = vrcp.pop %v8182
  %v8197 = vmul.f32 1.0, %v8196
  %v8198 = vrcp.pop %v8183
  %v8199 = vmul.f32 1.0, %v8198
  %v8208 = vrot.slane %v7734, 7
  %v8209 = vrot.slane %v7735, 7
  %v8210 = vrot.slane %v7736, 7
  %v8211 = vrot.slane %v7737, 7
  %v8212 = vrot.slane %v7738, 7
  %v8213 = vrot.slane %v7739, 7
  %v8214 = vrot.slane %v7740, 7
  %v8215 = vrot.slane %v7741, 7
  %v8224 = vmul.f32 %v8115, %v8208
  %v8225 = vmul.f32 %v8119, %v8209
  %v8226 = vmul.f32 %v8123, %v8210
  %v8227 = vmul.f32 %v8127, %v8211
  %v8228 = vmul.f32 %v8131, %v8212
  %v8229 = vmul.f32 %v8135, %v8213
  %v8230 = vmul.f32 %v8139, %v8214
  %v8231 = vmul.f32 %v8143, %v8215
  %v8232 = vmul.f32 %v8113, %v8144
  %v8233 = vmul.f32 %v8117, %v8145
  %v8234 = vmul.f32 %v8121, %v8146
  %v8235 = vmul.f32 %v8125, %v8147
  %v8236 = vmul.f32 %v8129, %v8148
  %v8237 = vmul.f32 %v8133, %v8149
  %v8238 = vmul.f32 %v8137, %v8150
  %v8239 = vmul.f32 %v8141, %v8151
  %v8240 = vadd.f32 %v8224, %v8232
  %v8241 = vadd.f32 %v8225, %v8233
  %v8242 = vadd.f32 %v8226, %v8234
  %v8243 = vadd.f32 %v8227, %v8235
  %v8244 = vadd.f32 %v8228, %v8236
  %v8245 = vadd.f32 %v8229, %v8237
  %v8246 = vadd.f32 %v8230, %v8238
  %v8247 = vadd.f32 %v8231, %v8239
  %v8248 = vtanh.pop %v8240
  %v8249 = vtanh.pop %v8241
  %v8250 = vtanh.pop %v8242
  %v8251 = vtanh.pop %v8243
  %v8252 = vtanh.pop %v8244
  %v8253 = vtanh.pop %v8245
  %v8254 = vtanh.pop %v8246
  %v8255 = vtanh.pop %v8247
  %v8256 = vmul.f32 %v8185, %v8248
  %v8257 = vmul.f32 %v8187, %v8249
  %v8258 = vmul.f32 %v8189, %v8250
  %v8259 = vmul.f32 %v8191, %v8251
  %v8260 = vmul.f32 %v8193, %v8252
  %v8261 = vmul.f32 %v8195, %v8253
  %v8262 = vmul.f32 %v8197, %v8254
  %v8263 = vmul.f32 %v8199, %v8255
  %v8264 = vpack.c.bf16 %v8256, %v8256
  %v8265 = vpack.c.bf16 %v8257, %v8257
  %v8266 = vpack.c.bf16 %v8258, %v8258
  %v8267 = vpack.c.bf16 %v8259, %v8259
  %v8268 = vpack.c.bf16 %v8260, %v8260
  %v8269 = vpack.c.bf16 %v8261, %v8261
  %v8270 = vpack.c.bf16 %v8262, %v8262
  %v8271 = vpack.c.bf16 %v8263, %v8263
  %v8272 = vld [vmem:[%s2 + $0x4] sm:$0x8]
  %v8273 = vsel %vm4223, %v8264, %v8272
  %8274 = vst [vmem:[%s2 + $0x4] sm:$0x8] %v8273
  %v8275 = vld [vmem:[%s2 + $0xc] sm:$0x8]
  %v8276 = vsel %vm4223, %v8265, %v8275
  %8277 = vst [vmem:[%s2 + $0xc] sm:$0x8] %v8276
  %v8278 = vld [vmem:[%s2 + $0x14] sm:$0x8]
  %v8279 = vsel %vm4223, %v8266, %v8278
  %8280 = vst [vmem:[%s2 + $0x14] sm:$0x8] %v8279
  %v8281 = vld [vmem:[%s2 + $0x1c] sm:$0x8]
  %v8282 = vsel %vm4223, %v8267, %v8281
  %8283 = vst [vmem:[%s2 + $0x1c] sm:$0x8] %v8282
  %v8284 = vld [vmem:[%s2 + $0x24] sm:$0x8]
  %v8285 = vsel %vm4223, %v8268, %v8284
  %8286 = vst [vmem:[%s2 + $0x24] sm:$0x8] %v8285
  %v8287 = vld [vmem:[%s2 + $0x2c] sm:$0x8]
  %v8288 = vsel %vm4223, %v8269, %v8287
  %8289 = vst [vmem:[%s2 + $0x2c] sm:$0x8] %v8288
  %v8290 = vld [vmem:[%s2 + $0x34] sm:$0x8]
  %v8291 = vsel %vm4223, %v8270, %v8290
  %8292 = vst [vmem:[%s2 + $0x34] sm:$0x8] %v8291
  %v8293 = vld [vmem:[%s2 + $0x3c] sm:$0x8]
  %v8294 = vsel %vm4223, %v8271, %v8293
  %8295 = vst [vmem:[%s2 + $0x3c] sm:$0x8] %v8294
  %v8304 = vrot.slane %v8257, 7
  %v8305 = vrot.slane %v8258, 6
  %v8306 = vsel %vm747, %v8305, %v8304
  %v8307 = vrot.slane %v8259, 5
  %v8308 = vsel %vm750, %v8307, %v8306
  %v8309 = vrot.slane %v8260, 4
  %v8310 = vsel %vm753, %v8309, %v8308
  %v8311 = vrot.slane %v8261, 3
  %v8312 = vsel %vm756, %v8311, %v8310
  %v8313 = vrot.slane %v8262, 2
  %v8314 = vsel %vm759, %v8313, %v8312
  %v8315 = vrot.slane %v8263, 1
  %v8316 = vsel %vm762, %v8315, %v8314
  %8319 = vst [vmem:[#allocation2 - $0x7] sm:$0x80] %v8256
  %8320 = vst [vmem:[#allocation2 + $0x1] sm:$0x7f] %v8316
  %v8329 = vrot.slane %v8241, 7
  %v8330 = vrot.slane %v8242, 6
  %v8331 = vsel %vm747, %v8330, %v8329
  %v8332 = vrot.slane %v8243, 5
  %v8333 = vsel %vm750, %v8332, %v8331
  %v8334 = vrot.slane %v8244, 4
  %v8335 = vsel %vm753, %v8334, %v8333
  %v8336 = vrot.slane %v8245, 3
  %v8337 = vsel %vm756, %v8336, %v8335
  %v8338 = vrot.slane %v8246, 2
  %v8339 = vsel %vm759, %v8338, %v8337
  %v8340 = vrot.slane %v8247, 1
  %v8341 = vsel %vm762, %v8340, %v8339
  %8344 = vst [vmem:[#allocation3 - $0x7] sm:$0x80] %v8240
  %8345 = vst [vmem:[#allocation3 + $0x1] sm:$0x7f] %v8341
  // Predicated region
  $region14: #{rnnlm_forward.4} parent=0 // pred_check
    _
  $region15: #{rnnlm_forward.4} parent=0 // pred_check_branch
    %8347 = sbr.rel (0) target = $region17
  $region16: #{rnnlm_forward.4} parent=0 // pred_region
    _
  $region17: #{rnnlm_forward.4} parent=0 // pred_fallthru
    _
  // Predicated region
  $region18: #{rnnlm_forward.4} parent=0 // pred_check
    _
  $region19: #{rnnlm_forward.4} parent=0 // pred_check_branch
    %8349 = sbr.rel (0) target = $region21
  $region20: #{rnnlm_forward.4} parent=0 // pred_region
    _
  $region21: #{rnnlm_forward.4} parent=0 // pred_fallthru
    _

</llo_original>
